<compile_context>
chip_gen: v7x
topology: tpu7x:2x2x1
jax: 0.10.0
libtpu: 0.0.40
codegen_flags: <defaults>
</compile_context>

<pallas_src>
import jax
import jax.numpy as jnp
import numpy as np
from jax.experimental import pallas as pl
from jax.experimental.pallas import tpu as pltpu


# --------------------------- init-time weight prep --------------------------- #
# Activation layout inside the kernel: rows = y*TILE_B + b, lanes = c*W + x.

def _band_matrices(w, w_in):
    """Fold (KW taps x channel mixing) of a conv into per-ky banded matrices.

    w: (OC, IC, KH, KW) -> (KH, IC*w_in, OC*w_out) with
    M[ky, ic*w_in + (xout+kx), oc*w_out + xout] = w[oc, ic, ky, kx]
    """
    oc, ic, kh, kw = w.shape
    w_out = w_in - kw + 1
    m = np.zeros((kh, ic * w_in, oc * w_out), np.float32)
    xo = np.arange(w_out)
    for ky in range(kh):
        for kx in range(kw):
            for i in range(ic):
                for o in range(oc):
                    m[ky, i * w_in + xo + kx, o * w_out + xo] = w[o, i, ky, kx]
    return m


def _col_selectors(c, w):
    """(2, c*w, c*(w//2)) 0/1 matrices selecting even / odd x within each channel block."""
    ow = w // 2
    s = np.zeros((2, c * w, c * ow), np.float32)
    ox = np.arange(ow)
    for ch in range(c):
        s[0, ch * w + 2 * ox, ch * ow + ox] = 1.0
        s[1, ch * w + 2 * ox + 1, ch * ow + ox] = 1.0
    return s


def prepare_params(params):
    """One-time (outside jit) rewrite of PyTorch-layout params into kernel-ready tensors.

    Matmul operands (weights, selectors) are stored in bfloat16 (MXU-native on v6e/v7x);
    biases stay float32 (added to float32 accumulators on the VPU).
    """
    bf = jnp.bfloat16
    w1 = np.asarray(params["conv1_w"], np.float32)   # (6,1,3,3)
    b1 = np.asarray(params["conv1_b"], np.float32)
    w2 = np.asarray(params["conv2_w"], np.float32)   # (16,6,5,5)
    b2 = np.asarray(params["conv2_b"], np.float32)
    f1w = np.asarray(params["fc1_w"], np.float32)    # (120,400)
    f1b = np.asarray(params["fc1_b"], np.float32)
    f2w = np.asarray(params["fc2_w"], np.float32)    # (84,120)
    f2b = np.asarray(params["fc2_b"], np.float32)
    f3w = np.asarray(params["fc3_w"], np.float32)    # (10,84)
    f3b = np.asarray(params["fc3_b"], np.float32)

    # fc1 with the NCHW (c, y, x) flatten order folded in, split per spatial row y:
    # v1[y, c*5 + x, n] = fc1_w[n, c*25 + y*5 + x]
    v1 = np.transpose(f1w.reshape(120, 16, 5, 5), (2, 1, 3, 0)).reshape(5, 80, 120)

    return (
        jnp.asarray(_band_matrices(w1, 30), bf),      # (3, 30, 168)  conv1 banded weights
        jnp.asarray(np.repeat(b1, 28)[None, :]),      # (1, 168) f32  conv1 bias (lane = oc*28+x)
        jnp.asarray(_col_selectors(6, 28), bf),       # (2, 168, 84)  pool1 column selectors
        jnp.asarray(_band_matrices(w2, 14), bf),      # (5, 84, 160)  conv2 banded weights
        jnp.asarray(np.repeat(b2, 10)[None, :]),      # (1, 160) f32  conv2 bias (lane = oc*10+x)
        jnp.asarray(_col_selectors(16, 10), bf),      # (2, 160, 80)  pool2 column selectors
        jnp.asarray(v1, bf),                          # (5, 80, 120)  fc1 (flatten folded, per y)
        jnp.asarray(f1b[None, :]),                    # (1, 120) f32
        jnp.asarray(np.ascontiguousarray(f2w.T), bf), # (120, 84)     fc2 pre-transposed
        jnp.asarray(f2b[None, :]),                    # (1, 84) f32
        jnp.asarray(np.ascontiguousarray(f3w.T), bf), # (84, 10)      fc3 pre-transposed
        jnp.asarray(f3b[None, :]),                    # (1, 10) f32
    )


# ------------------------------- fused kernel -------------------------------- #

def lenet_kernel(x_ref, w1_ref, b1_ref, s1_ref, w2_ref, b2_ref, s2_ref,
                 v1_ref, fb1_ref, w2f_ref, fb2_ref, w3f_ref, fb3_ref, out_ref):
    TB = x_ref.shape[1]                       # samples per grid step (multiple of 16)
    bf = jnp.bfloat16

    def mm(a, b):
        return jnp.dot(a, b, preferred_element_type=jnp.float32)

    # ---- conv1: 1->6, 3x3, pad 1 (pre-padded), 28x28 output -----------------
    # x_ref: (30, TB, 30) y-major -> rows = y*TB + b.
    xb = x_ref[...].reshape(30 * TB, 30).astype(bf)
    a1 = mm(xb[0:28 * TB], w1_ref[0])
    a1 = a1 + mm(xb[TB:29 * TB], w1_ref[1])
    a1 = a1 + mm(xb[2 * TB:30 * TB], w1_ref[2])
    a1 = a1 + b1_ref[...]                                        # (28*TB, 168) f32

    # ---- pool1: rows via VPU max of aligned sublane blocks, cols via selectors
    a1r = a1.reshape(14, 2 * TB, 168)
    rmax = jnp.maximum(a1r[:, :TB, :], a1r[:, TB:, :]).reshape(14 * TB, 168)
    rb = rmax.astype(bf)
    p1 = jnp.maximum(mm(rb, s1_ref[0]), mm(rb, s1_ref[1]))       # (14*TB, 84) f32
    p1b = p1.astype(bf)

    # ---- conv2: 6->16, 5x5, 14x14 -> 10x10 -----------------------------------
    a2 = mm(p1b[0:10 * TB], w2_ref[0])
    for ky in range(1, 5):
        a2 = a2 + mm(p1b[ky * TB:(ky + 10) * TB], w2_ref[ky])
    a2 = a2 + b2_ref[...]                                        # (10*TB, 160) f32

    # ---- pool2 ---------------------------------------------------------------
    a2r = a2.reshape(5, 2 * TB, 160)
    rmax2 = jnp.maximum(a2r[:, :TB, :], a2r[:, TB:, :]).reshape(5 * TB, 160)
    rb2 = rmax2.astype(bf)
    p2 = jnp.maximum(mm(rb2, s2_ref[0]), mm(rb2, s2_ref[1]))     # (5*TB, 80) f32
    p2b = p2.astype(bf)

    # ---- fc1 -> fc2 -> fc3 (NCHW flatten folded into fc1 weights) ------------
    h = mm(p2b[0:TB], v1_ref[0])
    for y in range(1, 5):
        h = h + mm(p2b[y * TB:(y + 1) * TB], v1_ref[y])
    h = h + fb1_ref[...]                                         # (TB, 120) f32
    h = mm(h.astype(bf), w2f_ref[...]) + fb2_ref[...]            # (TB, 84)
    h = mm(h.astype(bf), w3f_ref[...]) + fb3_ref[...]            # (TB, 10)
    out_ref[...] = h                                             # dense (TB, 10) store


def lenet_forward(prep, x, tile_b=128):
    """x: (B, 1, 28, 28) NCHW float32 -> logits (B, 10)."""
    B = x.shape[0]
    assert x.shape[1:] == (1, 28, 28)
    tb = int(tile_b)
    assert tb % 16 == 0, "tile_b must be a multiple of 16 (f32/bf16 sublane alignment)"
    n_tiles = -(-B // tb)
    Bp = n_tiles * tb

    # Only per-forward XLA work: batch pad + conv1 zero-pad + y-major relayout
    # (one tiny fused pad/transpose over the raw input).
    xT = jnp.transpose(jnp.pad(x[:, 0], ((0, Bp - B), (1, 1), (1, 1))), (1, 0, 2))  # (30, Bp, 30)

    def full_spec(a):
        nd = a.ndim
        return pl.BlockSpec(a.shape, lambda i, _nd=nd: (0,) * _nd)

    in_specs = [pl.BlockSpec((30, tb, 30), lambda i: (0, i, 0))]
    in_specs += [full_spec(p) for p in prep]

    out = pl.pallas_call(
        lenet_kernel,
        out_shape=jax.ShapeDtypeStruct((Bp, 10), jnp.float32),
        grid=(n_tiles,),
        in_specs=in_specs,
        out_specs=pl.BlockSpec((tb, 10), lambda i: (i, 0)),
        compiler_params=pltpu.CompilerParams(
            dimension_semantics=("parallel",)),
    )(xT, *prep)
    return out[:B]


# ------------------------------- parameters ---------------------------------- #

def init_params(key):
    # Deterministic synthetic init (PyTorch-style U(-1/sqrt(fan_in), 1/sqrt(fan_in))).
    def uniform(k, shape, fan_in):
        bound = 1.0 / np.sqrt(fan_in)
        return jax.random.uniform(k, shape, jnp.float32, -bound, bound)

    ks = jax.random.split(key, 10)
    return {
        "conv1_w": uniform(ks[0], (6, 1, 3, 3), 1 * 3 * 3),
        "conv1_b": uniform(ks[1], (6,), 1 * 3 * 3),
        "conv2_w": uniform(ks[2], (16, 6, 5, 5), 6 * 5 * 5),
        "conv2_b": uniform(ks[3], (16,), 6 * 5 * 5),
        "fc1_w": uniform(ks[4], (120, 400), 400),
        "fc1_b": uniform(ks[5], (120,), 400),
        "fc2_w": uniform(ks[6], (84, 120), 120),
        "fc2_b": uniform(ks[7], (84,), 120),
        "fc3_w": uniform(ks[8], (10, 84), 84),
        "fc3_b": uniform(ks[9], (10,), 84),
    }


def lenet_reference(params, x):
    """Pure-JAX f32 reference with identical (PyTorch) semantics, for a sanity check."""
    def conv_ref(x, w, b, padding):
        out = jax.lax.conv_general_dilated(
            x, w, (1, 1), [(padding, padding)] * 2,
            dimension_numbers=("NCHW", "OIHW", "NCHW"))
        return out + b.reshape(1, -1, 1, 1)

    def pool_ref(x):
        B, C, H, W = x.shape
        return x.reshape(B, C, H // 2, 2, W // 2, 2).max(axis=(3, 5))

    x = pool_ref(conv_ref(x, params["conv1_w"], params["conv1_b"], 1))
    x = pool_ref(conv_ref(x, params["conv2_w"], params["conv2_b"], 0))
    x = x.reshape(x.shape[0], -1)
    x = x @ params["fc1_w"].T + params["fc1_b"]
    x = x @ params["fc2_w"].T + params["fc2_b"]
    x = x @ params["fc3_w"].T + params["fc3_b"]
    return x


if __name__ == "__main__":
    key = jax.random.PRNGKey(0)
    pkey, xkey = jax.random.split(key)
    params = init_params(pkey)
    prep = prepare_params(params)          # one-time weight rewrite (outside jit)

    # Small test: batch 64, 32 samples per grid step -> grid=(2,) (even, feeds both
    # v7x TensorCores). fc1 (400 -> 120) pins the input to 1 channel of 28x28.
    B, TILE_B = 64, 32
    x = jax.random.normal(xkey, (B, 1, 28, 28), jnp.float32)

    fwd = jax.jit(lambda p, xx: lenet_forward(p, xx, tile_b=TILE_B))
    out = jax.block_until_ready(fwd(prep, x))
    assert out.shape == (B, 10) and out.dtype == jnp.float32

    ref = lenet_reference(params, x)
    # bf16 MXU operands with f32 accumulation vs. pure-f32 reference.
    np.testing.assert_allclose(np.asarray(out), np.asarray(ref), rtol=5e-2, atol=5e-2)

    print("KERNEL_OK")
</pallas_src>

<mosaic_0001>
module attributes {stable_mosaic.version = 11 : i64} {
  func.func @lenet_kernel(%arg0: i32, %arg1: memref<30x32x30xf32, #tpu.memory_space<vmem>>, %arg2: memref<3x30x168xbf16, #tpu.memory_space<vmem>>, %arg3: memref<1x168xf32, #tpu.memory_space<vmem>>, %arg4: memref<2x168x84xbf16, #tpu.memory_space<vmem>>, %arg5: memref<5x84x160xbf16, #tpu.memory_space<vmem>>, %arg6: memref<1x160xf32, #tpu.memory_space<vmem>>, %arg7: memref<2x160x80xbf16, #tpu.memory_space<vmem>>, %arg8: memref<5x80x120xbf16, #tpu.memory_space<vmem>>, %arg9: memref<1x120xf32, #tpu.memory_space<vmem>>, %arg10: memref<120x84xbf16, #tpu.memory_space<vmem>>, %arg11: memref<1x84xf32, #tpu.memory_space<vmem>>, %arg12: memref<84x10xbf16, #tpu.memory_space<vmem>>, %arg13: memref<1x10xf32, #tpu.memory_space<vmem>>, %arg14: memref<32x10xf32, #tpu.memory_space<vmem>>) attributes {dimension_semantics = [#tpu.dimension_semantics<parallel>], iteration_bounds = array<i64: 2>, scalar_prefetch = 0 : i64, scratch_operands = 0 : i64, tpu.core_type = #tpu.core_type<tc>, window_params = [{transform_indices = @transform_0, window_bounds = array<i64: 30, 32, 30>}, {pipeline_mode = #tpu.pipeline_mode<synchronous>, transform_indices = @transform_1, window_bounds = array<i64: 3, 30, 168>}, {pipeline_mode = #tpu.pipeline_mode<synchronous>, transform_indices = @transform_2, window_bounds = array<i64: 1, 168>}, {pipeline_mode = #tpu.pipeline_mode<synchronous>, transform_indices = @transform_3, window_bounds = array<i64: 2, 168, 84>}, {pipeline_mode = #tpu.pipeline_mode<synchronous>, transform_indices = @transform_4, window_bounds = array<i64: 5, 84, 160>}, {pipeline_mode = #tpu.pipeline_mode<synchronous>, transform_indices = @transform_5, window_bounds = array<i64: 1, 160>}, {pipeline_mode = #tpu.pipeline_mode<synchronous>, transform_indices = @transform_6, window_bounds = array<i64: 2, 160, 80>}, {pipeline_mode = #tpu.pipeline_mode<synchronous>, transform_indices = @transform_7, window_bounds = array<i64: 5, 80, 120>}, {pipeline_mode = #tpu.pipeline_mode<synchronous>, transform_indices = @transform_8, window_bounds = array<i64: 1, 120>}, {pipeline_mode = #tpu.pipeline_mode<synchronous>, transform_indices = @transform_9, window_bounds = array<i64: 120, 84>}, {pipeline_mode = #tpu.pipeline_mode<synchronous>, transform_indices = @transform_10, window_bounds = array<i64: 1, 84>}, {pipeline_mode = #tpu.pipeline_mode<synchronous>, transform_indices = @transform_11, window_bounds = array<i64: 84, 10>}, {pipeline_mode = #tpu.pipeline_mode<synchronous>, transform_indices = @transform_12, window_bounds = array<i64: 1, 10>}, {transform_indices = @transform_13, window_bounds = array<i64: 32, 10>}]} {
    %c0 = arith.constant 0 : index
    %c0_0 = arith.constant 0 : index
    %c0_1 = arith.constant 0 : index
    %0 = vector.load %arg1[%c0, %c0_0, %c0_1] : memref<30x32x30xf32, #tpu.memory_space<vmem>>, vector<30x32x30xf32>
    %1 = vector.shape_cast %0 : vector<30x32x30xf32> to vector<960x30xf32>
    %2 = arith.truncf %1 : vector<960x30xf32> to vector<960x30xbf16>
    %3 = vector.extract_strided_slice %2 {offsets = [0, 0], sizes = [896, 30], strides = [1, 1]} : vector<960x30xbf16> to vector<896x30xbf16>
    %c0_2 = arith.constant 0 : index
    %c0_3 = arith.constant 0 : index
    %c0_4 = arith.constant 0 : index
    %4 = vector.load %arg2[%c0_2, %c0_3, %c0_4] : memref<3x30x168xbf16, #tpu.memory_space<vmem>>, vector<1x30x168xbf16>
    %5 = vector.shape_cast %4 : vector<1x30x168xbf16> to vector<30x168xbf16>
    %cst = arith.constant dense<0.000000e+00> : vector<896x168xf32>
    %6 = tpu.matmul %3, %5, %cst {dimension_numbers = #tpu.dot_dimension_numbers<[1], [0], [0], [1], [0, 0, 1, 1], [], []>} : vector<896x30xbf16>, vector<30x168xbf16>, vector<896x168xf32> -> vector<896x168xf32>
    %7 = vector.extract_strided_slice %2 {offsets = [32, 0], sizes = [896, 30], strides = [1, 1]} : vector<960x30xbf16> to vector<896x30xbf16>
    %c1 = arith.constant 1 : index
    %c0_5 = arith.constant 0 : index
    %c0_6 = arith.constant 0 : index
    %8 = vector.load %arg2[%c1, %c0_5, %c0_6] : memref<3x30x168xbf16, #tpu.memory_space<vmem>>, vector<1x30x168xbf16>
    %9 = vector.shape_cast %8 : vector<1x30x168xbf16> to vector<30x168xbf16>
    %cst_7 = arith.constant dense<0.000000e+00> : vector<896x168xf32>
    %10 = tpu.matmul %7, %9, %cst_7 {dimension_numbers = #tpu.dot_dimension_numbers<[1], [0], [0], [1], [0, 0, 1, 1], [], []>} : vector<896x30xbf16>, vector<30x168xbf16>, vector<896x168xf32> -> vector<896x168xf32>
    %11 = arith.addf %6, %10 : vector<896x168xf32>
    %12 = vector.extract_strided_slice %2 {offsets = [64, 0], sizes = [896, 30], strides = [1, 1]} : vector<960x30xbf16> to vector<896x30xbf16>
    %c2 = arith.constant 2 : index
    %c0_8 = arith.constant 0 : index
    %c0_9 = arith.constant 0 : index
    %13 = vector.load %arg2[%c2, %c0_8, %c0_9] : memref<3x30x168xbf16, #tpu.memory_space<vmem>>, vector<1x30x168xbf16>
    %14 = vector.shape_cast %13 : vector<1x30x168xbf16> to vector<30x168xbf16>
    %cst_10 = arith.constant dense<0.000000e+00> : vector<896x168xf32>
    %15 = tpu.matmul %12, %14, %cst_10 {dimension_numbers = #tpu.dot_dimension_numbers<[1], [0], [0], [1], [0, 0, 1, 1], [], []>} : vector<896x30xbf16>, vector<30x168xbf16>, vector<896x168xf32> -> vector<896x168xf32>
    %16 = arith.addf %11, %15 : vector<896x168xf32>
    %c0_11 = arith.constant 0 : index
    %c0_12 = arith.constant 0 : index
    %17 = vector.load %arg3[%c0_11, %c0_12] : memref<1x168xf32, #tpu.memory_space<vmem>>, vector<1x168xf32>
    %18 = vector.broadcast %17 : vector<1x168xf32> to vector<896x168xf32>
    %19 = arith.addf %16, %18 : vector<896x168xf32>
    %20 = vector.shape_cast %19 : vector<896x168xf32> to vector<14x64x168xf32>
    %21 = vector.extract_strided_slice %20 {offsets = [0, 0, 0], sizes = [14, 32, 168], strides = [1, 1, 1]} : vector<14x64x168xf32> to vector<14x32x168xf32>
    %22 = vector.extract_strided_slice %20 {offsets = [0, 32, 0], sizes = [14, 32, 168], strides = [1, 1, 1]} : vector<14x64x168xf32> to vector<14x32x168xf32>
    %23 = arith.maximumf %21, %22 : vector<14x32x168xf32>
    %24 = vector.shape_cast %23 : vector<14x32x168xf32> to vector<448x168xf32>
    %25 = arith.truncf %24 : vector<448x168xf32> to vector<448x168xbf16>
    %c0_13 = arith.constant 0 : index
    %c0_14 = arith.constant 0 : index
    %c0_15 = arith.constant 0 : index
    %26 = vector.load %arg4[%c0_13, %c0_14, %c0_15] : memref<2x168x84xbf16, #tpu.memory_space<vmem>>, vector<1x168x84xbf16>
    %27 = vector.shape_cast %26 : vector<1x168x84xbf16> to vector<168x84xbf16>
    %cst_16 = arith.constant dense<0.000000e+00> : vector<448x84xf32>
    %28 = tpu.matmul %25, %27, %cst_16 {dimension_numbers = #tpu.dot_dimension_numbers<[1], [0], [0], [1], [0, 0, 1, 1], [], []>} : vector<448x168xbf16>, vector<168x84xbf16>, vector<448x84xf32> -> vector<448x84xf32>
    %c1_17 = arith.constant 1 : index
    %c0_18 = arith.constant 0 : index
    %c0_19 = arith.constant 0 : index
    %29 = vector.load %arg4[%c1_17, %c0_18, %c0_19] : memref<2x168x84xbf16, #tpu.memory_space<vmem>>, vector<1x168x84xbf16>
    %30 = vector.shape_cast %29 : vector<1x168x84xbf16> to vector<168x84xbf16>
    %cst_20 = arith.constant dense<0.000000e+00> : vector<448x84xf32>
    %31 = tpu.matmul %25, %30, %cst_20 {dimension_numbers = #tpu.dot_dimension_numbers<[1], [0], [0], [1], [0, 0, 1, 1], [], []>} : vector<448x168xbf16>, vector<168x84xbf16>, vector<448x84xf32> -> vector<448x84xf32>
    %32 = arith.maximumf %28, %31 : vector<448x84xf32>
    %33 = arith.truncf %32 : vector<448x84xf32> to vector<448x84xbf16>
    %34 = vector.extract_strided_slice %33 {offsets = [0, 0], sizes = [320, 84], strides = [1, 1]} : vector<448x84xbf16> to vector<320x84xbf16>
    %c0_21 = arith.constant 0 : index
    %c0_22 = arith.constant 0 : index
    %c0_23 = arith.constant 0 : index
    %35 = vector.load %arg5[%c0_21, %c0_22, %c0_23] : memref<5x84x160xbf16, #tpu.memory_space<vmem>>, vector<1x84x160xbf16>
    %36 = vector.shape_cast %35 : vector<1x84x160xbf16> to vector<84x160xbf16>
    %cst_24 = arith.constant dense<0.000000e+00> : vector<320x160xf32>
    %37 = tpu.matmul %34, %36, %cst_24 {dimension_numbers = #tpu.dot_dimension_numbers<[1], [0], [0], [1], [0, 0, 1, 1], [], []>} : vector<320x84xbf16>, vector<84x160xbf16>, vector<320x160xf32> -> vector<320x160xf32>
    %38 = vector.extract_strided_slice %33 {offsets = [32, 0], sizes = [320, 84], strides = [1, 1]} : vector<448x84xbf16> to vector<320x84xbf16>
    %c1_25 = arith.constant 1 : index
    %c0_26 = arith.constant 0 : index
    %c0_27 = arith.constant 0 : index
    %39 = vector.load %arg5[%c1_25, %c0_26, %c0_27] : memref<5x84x160xbf16, #tpu.memory_space<vmem>>, vector<1x84x160xbf16>
    %40 = vector.shape_cast %39 : vector<1x84x160xbf16> to vector<84x160xbf16>
    %cst_28 = arith.constant dense<0.000000e+00> : vector<320x160xf32>
    %41 = tpu.matmul %38, %40, %cst_28 {dimension_numbers = #tpu.dot_dimension_numbers<[1], [0], [0], [1], [0, 0, 1, 1], [], []>} : vector<320x84xbf16>, vector<84x160xbf16>, vector<320x160xf32> -> vector<320x160xf32>
    %42 = arith.addf %37, %41 : vector<320x160xf32>
    %43 = vector.extract_strided_slice %33 {offsets = [64, 0], sizes = [320, 84], strides = [1, 1]} : vector<448x84xbf16> to vector<320x84xbf16>
    %c2_29 = arith.constant 2 : index
    %c0_30 = arith.constant 0 : index
    %c0_31 = arith.constant 0 : index
    %44 = vector.load %arg5[%c2_29, %c0_30, %c0_31] : memref<5x84x160xbf16, #tpu.memory_space<vmem>>, vector<1x84x160xbf16>
    %45 = vector.shape_cast %44 : vector<1x84x160xbf16> to vector<84x160xbf16>
    %cst_32 = arith.constant dense<0.000000e+00> : vector<320x160xf32>
    %46 = tpu.matmul %43, %45, %cst_32 {dimension_numbers = #tpu.dot_dimension_numbers<[1], [0], [0], [1], [0, 0, 1, 1], [], []>} : vector<320x84xbf16>, vector<84x160xbf16>, vector<320x160xf32> -> vector<320x160xf32>
    %47 = arith.addf %42, %46 : vector<320x160xf32>
    %48 = vector.extract_strided_slice %33 {offsets = [96, 0], sizes = [320, 84], strides = [1, 1]} : vector<448x84xbf16> to vector<320x84xbf16>
    %c3 = arith.constant 3 : index
    %c0_33 = arith.constant 0 : index
    %c0_34 = arith.constant 0 : index
    %49 = vector.load %arg5[%c3, %c0_33, %c0_34] : memref<5x84x160xbf16, #tpu.memory_space<vmem>>, vector<1x84x160xbf16>
    %50 = vector.shape_cast %49 : vector<1x84x160xbf16> to vector<84x160xbf16>
    %cst_35 = arith.constant dense<0.000000e+00> : vector<320x160xf32>
    %51 = tpu.matmul %48, %50, %cst_35 {dimension_numbers = #tpu.dot_dimension_numbers<[1], [0], [0], [1], [0, 0, 1, 1], [], []>} : vector<320x84xbf16>, vector<84x160xbf16>, vector<320x160xf32> -> vector<320x160xf32>
    %52 = arith.addf %47, %51 : vector<320x160xf32>
    %53 = vector.extract_strided_slice %33 {offsets = [128, 0], sizes = [320, 84], strides = [1, 1]} : vector<448x84xbf16> to vector<320x84xbf16>
    %c4 = arith.constant 4 : index
    %c0_36 = arith.constant 0 : index
    %c0_37 = arith.constant 0 : index
    %54 = vector.load %arg5[%c4, %c0_36, %c0_37] : memref<5x84x160xbf16, #tpu.memory_space<vmem>>, vector<1x84x160xbf16>
    %55 = vector.shape_cast %54 : vector<1x84x160xbf16> to vector<84x160xbf16>
    %cst_38 = arith.constant dense<0.000000e+00> : vector<320x160xf32>
    %56 = tpu.matmul %53, %55, %cst_38 {dimension_numbers = #tpu.dot_dimension_numbers<[1], [0], [0], [1], [0, 0, 1, 1], [], []>} : vector<320x84xbf16>, vector<84x160xbf16>, vector<320x160xf32> -> vector<320x160xf32>
    %57 = arith.addf %52, %56 : vector<320x160xf32>
    %c0_39 = arith.constant 0 : index
    %c0_40 = arith.constant 0 : index
    %58 = vector.load %arg6[%c0_39, %c0_40] : memref<1x160xf32, #tpu.memory_space<vmem>>, vector<1x160xf32>
    %59 = vector.broadcast %58 : vector<1x160xf32> to vector<320x160xf32>
    %60 = arith.addf %57, %59 : vector<320x160xf32>
    %61 = vector.shape_cast %60 : vector<320x160xf32> to vector<5x64x160xf32>
    %62 = vector.extract_strided_slice %61 {offsets = [0, 0, 0], sizes = [5, 32, 160], strides = [1, 1, 1]} : vector<5x64x160xf32> to vector<5x32x160xf32>
    %63 = vector.extract_strided_slice %61 {offsets = [0, 32, 0], sizes = [5, 32, 160], strides = [1, 1, 1]} : vector<5x64x160xf32> to vector<5x32x160xf32>
    %64 = arith.maximumf %62, %63 : vector<5x32x160xf32>
    %65 = vector.shape_cast %64 : vector<5x32x160xf32> to vector<160x160xf32>
    %66 = arith.truncf %65 : vector<160x160xf32> to vector<160x160xbf16>
    %c0_41 = arith.constant 0 : index
    %c0_42 = arith.constant 0 : index
    %c0_43 = arith.constant 0 : index
    %67 = vector.load %arg7[%c0_41, %c0_42, %c0_43] : memref<2x160x80xbf16, #tpu.memory_space<vmem>>, vector<1x160x80xbf16>
    %68 = vector.shape_cast %67 : vector<1x160x80xbf16> to vector<160x80xbf16>
    %cst_44 = arith.constant dense<0.000000e+00> : vector<160x80xf32>
    %69 = tpu.matmul %66, %68, %cst_44 {dimension_numbers = #tpu.dot_dimension_numbers<[1], [0], [0], [1], [0, 0, 1, 1], [], []>} : vector<160x160xbf16>, vector<160x80xbf16>, vector<160x80xf32> -> vector<160x80xf32>
    %c1_45 = arith.constant 1 : index
    %c0_46 = arith.constant 0 : index
    %c0_47 = arith.constant 0 : index
    %70 = vector.load %arg7[%c1_45, %c0_46, %c0_47] : memref<2x160x80xbf16, #tpu.memory_space<vmem>>, vector<1x160x80xbf16>
    %71 = vector.shape_cast %70 : vector<1x160x80xbf16> to vector<160x80xbf16>
    %cst_48 = arith.constant dense<0.000000e+00> : vector<160x80xf32>
    %72 = tpu.matmul %66, %71, %cst_48 {dimension_numbers = #tpu.dot_dimension_numbers<[1], [0], [0], [1], [0, 0, 1, 1], [], []>} : vector<160x160xbf16>, vector<160x80xbf16>, vector<160x80xf32> -> vector<160x80xf32>
    %73 = arith.maximumf %69, %72 : vector<160x80xf32>
    %74 = arith.truncf %73 : vector<160x80xf32> to vector<160x80xbf16>
    %75 = vector.extract_strided_slice %74 {offsets = [0, 0], sizes = [32, 80], strides = [1, 1]} : vector<160x80xbf16> to vector<32x80xbf16>
    %c0_49 = arith.constant 0 : index
    %c0_50 = arith.constant 0 : index
    %c0_51 = arith.constant 0 : index
    %76 = vector.load %arg8[%c0_49, %c0_50, %c0_51] : memref<5x80x120xbf16, #tpu.memory_space<vmem>>, vector<1x80x120xbf16>
    %77 = vector.shape_cast %76 : vector<1x80x120xbf16> to vector<80x120xbf16>
    %cst_52 = arith.constant dense<0.000000e+00> : vector<32x120xf32>
    %78 = tpu.matmul %75, %77, %cst_52 {dimension_numbers = #tpu.dot_dimension_numbers<[1], [0], [0], [1], [0, 0, 1, 1], [], []>} : vector<32x80xbf16>, vector<80x120xbf16>, vector<32x120xf32> -> vector<32x120xf32>
    %79 = vector.extract_strided_slice %74 {offsets = [32, 0], sizes = [32, 80], strides = [1, 1]} : vector<160x80xbf16> to vector<32x80xbf16>
    %c1_53 = arith.constant 1 : index
    %c0_54 = arith.constant 0 : index
    %c0_55 = arith.constant 0 : index
    %80 = vector.load %arg8[%c1_53, %c0_54, %c0_55] : memref<5x80x120xbf16, #tpu.memory_space<vmem>>, vector<1x80x120xbf16>
    %81 = vector.shape_cast %80 : vector<1x80x120xbf16> to vector<80x120xbf16>
    %cst_56 = arith.constant dense<0.000000e+00> : vector<32x120xf32>
    %82 = tpu.matmul %79, %81, %cst_56 {dimension_numbers = #tpu.dot_dimension_numbers<[1], [0], [0], [1], [0, 0, 1, 1], [], []>} : vector<32x80xbf16>, vector<80x120xbf16>, vector<32x120xf32> -> vector<32x120xf32>
    %83 = arith.addf %78, %82 : vector<32x120xf32>
    %84 = vector.extract_strided_slice %74 {offsets = [64, 0], sizes = [32, 80], strides = [1, 1]} : vector<160x80xbf16> to vector<32x80xbf16>
    %c2_57 = arith.constant 2 : index
    %c0_58 = arith.constant 0 : index
    %c0_59 = arith.constant 0 : index
    %85 = vector.load %arg8[%c2_57, %c0_58, %c0_59] : memref<5x80x120xbf16, #tpu.memory_space<vmem>>, vector<1x80x120xbf16>
    %86 = vector.shape_cast %85 : vector<1x80x120xbf16> to vector<80x120xbf16>
    %cst_60 = arith.constant dense<0.000000e+00> : vector<32x120xf32>
    %87 = tpu.matmul %84, %86, %cst_60 {dimension_numbers = #tpu.dot_dimension_numbers<[1], [0], [0], [1], [0, 0, 1, 1], [], []>} : vector<32x80xbf16>, vector<80x120xbf16>, vector<32x120xf32> -> vector<32x120xf32>
    %88 = arith.addf %83, %87 : vector<32x120xf32>
    %89 = vector.extract_strided_slice %74 {offsets = [96, 0], sizes = [32, 80], strides = [1, 1]} : vector<160x80xbf16> to vector<32x80xbf16>
    %c3_61 = arith.constant 3 : index
    %c0_62 = arith.constant 0 : index
    %c0_63 = arith.constant 0 : index
    %90 = vector.load %arg8[%c3_61, %c0_62, %c0_63] : memref<5x80x120xbf16, #tpu.memory_space<vmem>>, vector<1x80x120xbf16>
    %91 = vector.shape_cast %90 : vector<1x80x120xbf16> to vector<80x120xbf16>
    %cst_64 = arith.constant dense<0.000000e+00> : vector<32x120xf32>
    %92 = tpu.matmul %89, %91, %cst_64 {dimension_numbers = #tpu.dot_dimension_numbers<[1], [0], [0], [1], [0, 0, 1, 1], [], []>} : vector<32x80xbf16>, vector<80x120xbf16>, vector<32x120xf32> -> vector<32x120xf32>
    %93 = arith.addf %88, %92 : vector<32x120xf32>
    %94 = vector.extract_strided_slice %74 {offsets = [128, 0], sizes = [32, 80], strides = [1, 1]} : vector<160x80xbf16> to vector<32x80xbf16>
    %c4_65 = arith.constant 4 : index
    %c0_66 = arith.constant 0 : index
    %c0_67 = arith.constant 0 : index
    %95 = vector.load %arg8[%c4_65, %c0_66, %c0_67] : memref<5x80x120xbf16, #tpu.memory_space<vmem>>, vector<1x80x120xbf16>
    %96 = vector.shape_cast %95 : vector<1x80x120xbf16> to vector<80x120xbf16>
    %cst_68 = arith.constant dense<0.000000e+00> : vector<32x120xf32>
    %97 = tpu.matmul %94, %96, %cst_68 {dimension_numbers = #tpu.dot_dimension_numbers<[1], [0], [0], [1], [0, 0, 1, 1], [], []>} : vector<32x80xbf16>, vector<80x120xbf16>, vector<32x120xf32> -> vector<32x120xf32>
    %98 = arith.addf %93, %97 : vector<32x120xf32>
    %c0_69 = arith.constant 0 : index
    %c0_70 = arith.constant 0 : index
    %99 = vector.load %arg9[%c0_69, %c0_70] : memref<1x120xf32, #tpu.memory_space<vmem>>, vector<1x120xf32>
    %100 = vector.broadcast %99 : vector<1x120xf32> to vector<32x120xf32>
    %101 = arith.addf %98, %100 : vector<32x120xf32>
    %102 = arith.truncf %101 : vector<32x120xf32> to vector<32x120xbf16>
    %c0_71 = arith.constant 0 : index
    %c0_72 = arith.constant 0 : index
    %103 = vector.load %arg10[%c0_71, %c0_72] : memref<120x84xbf16, #tpu.memory_space<vmem>>, vector<120x84xbf16>
    %cst_73 = arith.constant dense<0.000000e+00> : vector<32x84xf32>
    %104 = tpu.matmul %102, %103, %cst_73 {dimension_numbers = #tpu.dot_dimension_numbers<[1], [0], [0], [1], [0, 0, 1, 1], [], []>} : vector<32x120xbf16>, vector<120x84xbf16>, vector<32x84xf32> -> vector<32x84xf32>
    %c0_74 = arith.constant 0 : index
    %c0_75 = arith.constant 0 : index
    %105 = vector.load %arg11[%c0_74, %c0_75] : memref<1x84xf32, #tpu.memory_space<vmem>>, vector<1x84xf32>
    %106 = vector.broadcast %105 : vector<1x84xf32> to vector<32x84xf32>
    %107 = arith.addf %104, %106 : vector<32x84xf32>
    %108 = arith.truncf %107 : vector<32x84xf32> to vector<32x84xbf16>
    %c0_76 = arith.constant 0 : index
    %c0_77 = arith.constant 0 : index
    %109 = vector.load %arg12[%c0_76, %c0_77] : memref<84x10xbf16, #tpu.memory_space<vmem>>, vector<84x10xbf16>
    %cst_78 = arith.constant dense<0.000000e+00> : vector<32x10xf32>
    %110 = tpu.matmul %108, %109, %cst_78 {dimension_numbers = #tpu.dot_dimension_numbers<[1], [0], [0], [1], [0, 0, 1, 1], [], []>} : vector<32x84xbf16>, vector<84x10xbf16>, vector<32x10xf32> -> vector<32x10xf32>
    %c0_79 = arith.constant 0 : index
    %c0_80 = arith.constant 0 : index
    %111 = vector.load %arg13[%c0_79, %c0_80] : memref<1x10xf32, #tpu.memory_space<vmem>>, vector<1x10xf32>
    %112 = vector.broadcast %111 : vector<1x10xf32> to vector<32x10xf32>
    %113 = arith.addf %110, %112 : vector<32x10xf32>
    %c0_81 = arith.constant 0 : index
    %c0_82 = arith.constant 0 : index
    %114 = vector.load %arg14[%c0_81, %c0_82] : memref<32x10xf32, #tpu.memory_space<vmem>>, vector<32x10xf32>
    tpu.vector_store %arg14[%c0_81, %c0_82], %113 {strides = array<i32>} : memref<32x10xf32, #tpu.memory_space<vmem>>, vector<32x10xf32>,
    return
  }
  func.func @transform_0(%arg0: i32) -> (i32, i32, i32) {
    %c0_i32 = arith.constant 0 : i32
    %c0_i32_0 = arith.constant 0 : i32
    %c0_i32_1 = arith.constant 0 : i32
    return %c0_i32, %arg0, %c0_i32_0 : i32, i32, i32
  }
  func.func @transform_1(%arg0: i32) -> (i32, i32, i32) {
    %c0_i32 = arith.constant 0 : i32
    %c0_i32_0 = arith.constant 0 : i32
    %c0_i32_1 = arith.constant 0 : i32
    %c0_i32_2 = arith.constant 0 : i32
    return %c0_i32, %c0_i32_0, %c0_i32_1 : i32, i32, i32
  }
  func.func @transform_2(%arg0: i32) -> (i32, i32) {
    %c0_i32 = arith.constant 0 : i32
    %c0_i32_0 = arith.constant 0 : i32
    %c0_i32_1 = arith.constant 0 : i32
    return %c0_i32, %c0_i32_0 : i32, i32
  }
  func.func @transform_3(%arg0: i32) -> (i32, i32, i32) {
    %c0_i32 = arith.constant 0 : i32
    %c0_i32_0 = arith.constant 0 : i32
    %c0_i32_1 = arith.constant 0 : i32
    %c0_i32_2 = arith.constant 0 : i32
    return %c0_i32, %c0_i32_0, %c0_i32_1 : i32, i32, i32
  }
  func.func @transform_4(%arg0: i32) -> (i32, i32, i32) {
    %c0_i32 = arith.constant 0 : i32
    %c0_i32_0 = arith.constant 0 : i32
    %c0_i32_1 = arith.constant 0 : i32
    %c0_i32_2 = arith.constant 0 : i32
    return %c0_i32, %c0_i32_0, %c0_i32_1 : i32, i32, i32
  }
  func.func @transform_5(%arg0: i32) -> (i32, i32) {
    %c0_i32 = arith.constant 0 : i32
    %c0_i32_0 = arith.constant 0 : i32
    %c0_i32_1 = arith.constant 0 : i32
    return %c0_i32, %c0_i32_0 : i32, i32
  }
  func.func @transform_6(%arg0: i32) -> (i32, i32, i32) {
    %c0_i32 = arith.constant 0 : i32
    %c0_i32_0 = arith.constant 0 : i32
    %c0_i32_1 = arith.constant 0 : i32
    %c0_i32_2 = arith.constant 0 : i32
    return %c0_i32, %c0_i32_0, %c0_i32_1 : i32, i32, i32
  }
  func.func @transform_7(%arg0: i32) -> (i32, i32, i32) {
    %c0_i32 = arith.constant 0 : i32
    %c0_i32_0 = arith.constant 0 : i32
    %c0_i32_1 = arith.constant 0 : i32
    %c0_i32_2 = arith.constant 0 : i32
    return %c0_i32, %c0_i32_0, %c0_i32_1 : i32, i32, i32
  }
  func.func @transform_8(%arg0: i32) -> (i32, i32) {
    %c0_i32 = arith.constant 0 : i32
    %c0_i32_0 = arith.constant 0 : i32
    %c0_i32_1 = arith.constant 0 : i32
    return %c0_i32, %c0_i32_0 : i32, i32
  }
  func.func @transform_9(%arg0: i32) -> (i32, i32) {
    %c0_i32 = arith.constant 0 : i32
    %c0_i32_0 = arith.constant 0 : i32
    %c0_i32_1 = arith.constant 0 : i32
    return %c0_i32, %c0_i32_0 : i32, i32
  }
  func.func @transform_10(%arg0: i32) -> (i32, i32) {
    %c0_i32 = arith.constant 0 : i32
    %c0_i32_0 = arith.constant 0 : i32
    %c0_i32_1 = arith.constant 0 : i32
    return %c0_i32, %c0_i32_0 : i32, i32
  }
  func.func @transform_11(%arg0: i32) -> (i32, i32) {
    %c0_i32 = arith.constant 0 : i32
    %c0_i32_0 = arith.constant 0 : i32
    %c0_i32_1 = arith.constant 0 : i32
    return %c0_i32, %c0_i32_0 : i32, i32
  }
  func.func @transform_12(%arg0: i32) -> (i32, i32) {
    %c0_i32 = arith.constant 0 : i32
    %c0_i32_0 = arith.constant 0 : i32
    %c0_i32_1 = arith.constant 0 : i32
    return %c0_i32, %c0_i32_0 : i32, i32
  }
  func.func @transform_13(%arg0: i32) -> (i32, i32) {
    %c0_i32 = arith.constant 0 : i32
    %c0_i32_0 = arith.constant 0 : i32
    return %arg0, %c0_i32 : i32, i32
  }
}

</mosaic_0001>

<llo_original>
// kernel: _lambda_.1
$region0: #{_lambda_.1}
  #allocation0 [shape = 'u32[]', space=smem, size = 0x4, offset = 0x4, fixed_abs, tag = 'smem constant byte address 0x4 - core index']
  #allocation1 [shape = 'u32[144,128]{1,0:T(1,128)}', space=vmem, size = 0x12000, scoped, tag = 'internal scratch']
  %s0 = inlined_call_operand.vmem [shape: f32[30,64,30], index: 0, kind: input, shape index: {}]
  %s1 = inlined_call_operand.vmem [shape: bf16[3,30,168], index: 1, kind: input, shape index: {}]
  %s2 = inlined_call_operand.vmem [shape: f32[1,168], index: 2, kind: input, shape index: {}]
  %s3 = inlined_call_operand.vmem [shape: bf16[2,168,84], index: 3, kind: input, shape index: {}]
  %s4 = inlined_call_operand.vmem [shape: bf16[5,84,160], index: 4, kind: input, shape index: {}]
  %s5 = inlined_call_operand.vmem [shape: f32[1,160], index: 5, kind: input, shape index: {}]
  %s6 = inlined_call_operand.vmem [shape: bf16[2,160,80], index: 6, kind: input, shape index: {}]
  %s7 = inlined_call_operand.vmem [shape: bf16[5,80,120], index: 7, kind: input, shape index: {}]
  %s8 = inlined_call_operand.vmem [shape: f32[1,120], index: 8, kind: input, shape index: {}]
  %s9 = inlined_call_operand.vmem [shape: bf16[120,84], index: 9, kind: input, shape index: {}]
  %s10 = inlined_call_operand.vmem [shape: f32[1,84], index: 10, kind: input, shape index: {}]
  %s11 = inlined_call_operand.vmem [shape: bf16[84,10], index: 11, kind: input, shape index: {}]
  %s12 = inlined_call_operand.vmem [shape: f32[1,10], index: 12, kind: input, shape index: {}]
  %s13 = inlined_call_operand.vmem [shape: f32[64,10], index: 13, kind: output, shape index: {}]
  %s14 = sld [smem:[#allocation0]]
  $region123: #{_lambda_.1} parent=0
    _
  %s16 = ssub.s32 1, %s14
  %s17 = scalar_select 0, %s16, %s14
  $region1: #{_lambda_.1} parent=0
    #allocation2 [shape = 'u8[983040]{0}', space=vmem, size = 0xf0000, scoped, tag = 'input window, operand 0']
    loop: start=0, step=1, limit=4
    $region2: #{_lambda_.1} parent=1 // loop_pre_header
      _
    $region3: #{_lambda_.1} parent=1 // loop_header
      %s19 = sphi 0, %s23
      %p20 = scmp.ge.s32.totalorder %s19, 4
      %s29 = sphi 0, %s31
      %s32 = sphi 0, %s29
      %s33 = sphi 0, %s32
      %s49 = sphi 0, %s33
      %s53 = sphi 0, %s53
      %s55 = sphi 0, %s53
      %s56 = sphi 0, %s55
      %s70 = sphi 0, %s56
      %s74 = sphi 0, %s74
      %s76 = sphi 0, %s74
      %s77 = sphi 0, %s76
      %s91 = sphi 0, %s77
      %s95 = sphi 0, %s95
      %s97 = sphi 0, %s95
      %s98 = sphi 0, %s97
      %s112 = sphi 0, %s98
      %s116 = sphi 0, %s116
      %s118 = sphi 0, %s116
      %s119 = sphi 0, %s118
      %s133 = sphi 0, %s119
      %s137 = sphi 0, %s137
      %s139 = sphi 0, %s137
      %s140 = sphi 0, %s139
      %s154 = sphi 0, %s140
      %s158 = sphi 0, %s158
      %s160 = sphi 0, %s158
      %s161 = sphi 0, %s160
      %s175 = sphi 0, %s161
      %s179 = sphi 0, %s179
      %s181 = sphi 0, %s179
      %s182 = sphi 0, %s181
      %s196 = sphi 0, %s182
      %s200 = sphi 0, %s200
      %s202 = sphi 0, %s200
      %s203 = sphi 0, %s202
      %s217 = sphi 0, %s203
      %s221 = sphi 0, %s221
      %s223 = sphi 0, %s221
      %s224 = sphi 0, %s223
      %s238 = sphi 0, %s224
      %s242 = sphi 0, %s242
      %s244 = sphi 0, %s242
      %s245 = sphi 0, %s244
      %s259 = sphi 0, %s245
      %s263 = sphi 0, %s263
      %s265 = sphi 0, %s263
      %s266 = sphi 0, %s265
      %s280 = sphi 0, %s266
      %s284 = sphi 0, %s284
      %s286 = sphi 0, %s284
      %s287 = sphi 0, %s286
      %s301 = sphi 0, %s287
      %s307 = sphi 0, %s309
      %s310 = sphi 0, %s307
      %s311 = sphi 0, %s310
      %s327 = sphi 0, %s311
    $region4: #{_lambda_.1} parent=1 // loop_header_branch
      %22 = sbr.rel (%p20) target = $region8
    $region5: #{_lambda_.1} parent=1 // loop_body
      %s24 = ssub.s32 %s19, 1
      %s25 = ssub.s32 %s19, 2
      %s26 = sadd.s32 %s19, 1
      %s27 = ssub.s32 %s19, %s26
      %p28 = scmp.eq.s32.totalorder %s27, 0
      %s30 = sadd.s32 %s29, 1
      %s31 = scalar_select %p28, %s29, %s30
      %p34 = pneg %p28
      %p35 = scmp.eq.s32.totalorder %s19, 1
      %p36 = por %p34, %p35
      %p37 = scmp.ne.s32.totalorder %s29, %s32
      %p38 = scmp.eq.s32.totalorder %s19, 0
      %p39 = por %p37, %p38
      %p40 = scmp.ne.s32.totalorder %s29, %s32
      %p41 = scmp.eq.s32.totalorder %s24, 1
      %p42 = por %p40, %p41
      %p43 = scmp.ne.s32.totalorder %s32, %s33
      %p44 = scmp.eq.s32.totalorder %s24, 0
      %p45 = por %p43, %p44
      %p46 = scmp.ne.s32.totalorder %s32, %s33
      %p47 = scmp.eq.s32.totalorder %s25, 1
      %p48 = por %p46, %p47
      %p50 = scmp.ne.s32.totalorder %s33, %s49
      %p51 = scmp.eq.s32.totalorder %s25, 0
      %p52 = por %p50, %p51
      %s54 = sadd.s32 %s53, 1
      %p57 = scmp.eq.s32.totalorder %s19, 1
      %p58 = scmp.ne.s32.totalorder %s53, %s55
      %p59 = scmp.eq.s32.totalorder %s19, 0
      %p60 = por %p58, %p59
      %p61 = scmp.ne.s32.totalorder %s53, %s55
      %p62 = scmp.eq.s32.totalorder %s24, 1
      %p63 = por %p61, %p62
      %p64 = scmp.ne.s32.totalorder %s55, %s56
      %p65 = scmp.eq.s32.totalorder %s24, 0
      %p66 = por %p64, %p65
      %p67 = scmp.ne.s32.totalorder %s55, %s56
      %p68 = scmp.eq.s32.totalorder %s25, 1
      %p69 = por %p67, %p68
      %p71 = scmp.ne.s32.totalorder %s56, %s70
      %p72 = scmp.eq.s32.totalorder %s25, 0
      %p73 = por %p71, %p72
      %s75 = sadd.s32 %s74, 1
      %p78 = scmp.eq.s32.totalorder %s19, 1
      %p79 = scmp.ne.s32.totalorder %s74, %s76
      %p80 = scmp.eq.s32.totalorder %s19, 0
      %p81 = por %p79, %p80
      %p82 = scmp.ne.s32.totalorder %s74, %s76
      %p83 = scmp.eq.s32.totalorder %s24, 1
      %p84 = por %p82, %p83
      %p85 = scmp.ne.s32.totalorder %s76, %s77
      %p86 = scmp.eq.s32.totalorder %s24, 0
      %p87 = por %p85, %p86
      %p88 = scmp.ne.s32.totalorder %s76, %s77
      %p89 = scmp.eq.s32.totalorder %s25, 1
      %p90 = por %p88, %p89
      %p92 = scmp.ne.s32.totalorder %s77, %s91
      %p93 = scmp.eq.s32.totalorder %s25, 0
      %p94 = por %p92, %p93
      %s96 = sadd.s32 %s95, 1
      %p99 = scmp.eq.s32.totalorder %s19, 1
      %p100 = scmp.ne.s32.totalorder %s95, %s97
      %p101 = scmp.eq.s32.totalorder %s19, 0
      %p102 = por %p100, %p101
      %p103 = scmp.ne.s32.totalorder %s95, %s97
      %p104 = scmp.eq.s32.totalorder %s24, 1
      %p105 = por %p103, %p104
      %p106 = scmp.ne.s32.totalorder %s97, %s98
      %p107 = scmp.eq.s32.totalorder %s24, 0
      %p108 = por %p106, %p107
      %p109 = scmp.ne.s32.totalorder %s97, %s98
      %p110 = scmp.eq.s32.totalorder %s25, 1
      %p111 = por %p109, %p110
      %p113 = scmp.ne.s32.totalorder %s98, %s112
      %p114 = scmp.eq.s32.totalorder %s25, 0
      %p115 = por %p113, %p114
      %s117 = sadd.s32 %s116, 1
      %p120 = scmp.eq.s32.totalorder %s19, 1
      %p121 = scmp.ne.s32.totalorder %s116, %s118
      %p122 = scmp.eq.s32.totalorder %s19, 0
      %p123 = por %p121, %p122
      %p124 = scmp.ne.s32.totalorder %s116, %s118
      %p125 = scmp.eq.s32.totalorder %s24, 1
      %p126 = por %p124, %p125
      %p127 = scmp.ne.s32.totalorder %s118, %s119
      %p128 = scmp.eq.s32.totalorder %s24, 0
      %p129 = por %p127, %p128
      %p130 = scmp.ne.s32.totalorder %s118, %s119
      %p131 = scmp.eq.s32.totalorder %s25, 1
      %p132 = por %p130, %p131
      %p134 = scmp.ne.s32.totalorder %s119, %s133
      %p135 = scmp.eq.s32.totalorder %s25, 0
      %p136 = por %p134, %p135
      %s138 = sadd.s32 %s137, 1
      %p141 = scmp.eq.s32.totalorder %s19, 1
      %p142 = scmp.ne.s32.totalorder %s137, %s139
      %p143 = scmp.eq.s32.totalorder %s19, 0
      %p144 = por %p142, %p143
      %p145 = scmp.ne.s32.totalorder %s137, %s139
      %p146 = scmp.eq.s32.totalorder %s24, 1
      %p147 = por %p145, %p146
      %p148 = scmp.ne.s32.totalorder %s139, %s140
      %p149 = scmp.eq.s32.totalorder %s24, 0
      %p150 = por %p148, %p149
      %p151 = scmp.ne.s32.totalorder %s139, %s140
      %p152 = scmp.eq.s32.totalorder %s25, 1
      %p153 = por %p151, %p152
      %p155 = scmp.ne.s32.totalorder %s140, %s154
      %p156 = scmp.eq.s32.totalorder %s25, 0
      %p157 = por %p155, %p156
      %s159 = sadd.s32 %s158, 1
      %p162 = scmp.eq.s32.totalorder %s19, 1
      %p163 = scmp.ne.s32.totalorder %s158, %s160
      %p164 = scmp.eq.s32.totalorder %s19, 0
      %p165 = por %p163, %p164
      %p166 = scmp.ne.s32.totalorder %s158, %s160
      %p167 = scmp.eq.s32.totalorder %s24, 1
      %p168 = por %p166, %p167
      %p169 = scmp.ne.s32.totalorder %s160, %s161
      %p170 = scmp.eq.s32.totalorder %s24, 0
      %p171 = por %p169, %p170
      %p172 = scmp.ne.s32.totalorder %s160, %s161
      %p173 = scmp.eq.s32.totalorder %s25, 1
      %p174 = por %p172, %p173
      %p176 = scmp.ne.s32.totalorder %s161, %s175
      %p177 = scmp.eq.s32.totalorder %s25, 0
      %p178 = por %p176, %p177
      %s180 = sadd.s32 %s179, 1
      %p183 = scmp.eq.s32.totalorder %s19, 1
      %p184 = scmp.ne.s32.totalorder %s179, %s181
      %p185 = scmp.eq.s32.totalorder %s19, 0
      %p186 = por %p184, %p185
      %p187 = scmp.ne.s32.totalorder %s179, %s181
      %p188 = scmp.eq.s32.totalorder %s24, 1
      %p189 = por %p187, %p188
      %p190 = scmp.ne.s32.totalorder %s181, %s182
      %p191 = scmp.eq.s32.totalorder %s24, 0
      %p192 = por %p190, %p191
      %p193 = scmp.ne.s32.totalorder %s181, %s182
      %p194 = scmp.eq.s32.totalorder %s25, 1
      %p195 = por %p193, %p194
      %p197 = scmp.ne.s32.totalorder %s182, %s196
      %p198 = scmp.eq.s32.totalorder %s25, 0
      %p199 = por %p197, %p198
      %s201 = sadd.s32 %s200, 1
      %p204 = scmp.eq.s32.totalorder %s19, 1
      %p205 = scmp.ne.s32.totalorder %s200, %s202
      %p206 = scmp.eq.s32.totalorder %s19, 0
      %p207 = por %p205, %p206
      %p208 = scmp.ne.s32.totalorder %s200, %s202
      %p209 = scmp.eq.s32.totalorder %s24, 1
      %p210 = por %p208, %p209
      %p211 = scmp.ne.s32.totalorder %s202, %s203
      %p212 = scmp.eq.s32.totalorder %s24, 0
      %p213 = por %p211, %p212
      %p214 = scmp.ne.s32.totalorder %s202, %s203
      %p215 = scmp.eq.s32.totalorder %s25, 1
      %p216 = por %p214, %p215
      %p218 = scmp.ne.s32.totalorder %s203, %s217
      %p219 = scmp.eq.s32.totalorder %s25, 0
      %p220 = por %p218, %p219
      %s222 = sadd.s32 %s221, 1
      %p225 = scmp.eq.s32.totalorder %s19, 1
      %p226 = scmp.ne.s32.totalorder %s221, %s223
      %p227 = scmp.eq.s32.totalorder %s19, 0
      %p228 = por %p226, %p227
      %p229 = scmp.ne.s32.totalorder %s221, %s223
      %p230 = scmp.eq.s32.totalorder %s24, 1
      %p231 = por %p229, %p230
      %p232 = scmp.ne.s32.totalorder %s223, %s224
      %p233 = scmp.eq.s32.totalorder %s24, 0
      %p234 = por %p232, %p233
      %p235 = scmp.ne.s32.totalorder %s223, %s224
      %p236 = scmp.eq.s32.totalorder %s25, 1
      %p237 = por %p235, %p236
      %p239 = scmp.ne.s32.totalorder %s224, %s238
      %p240 = scmp.eq.s32.totalorder %s25, 0
      %p241 = por %p239, %p240
      %s243 = sadd.s32 %s242, 1
      %p246 = scmp.eq.s32.totalorder %s19, 1
      %p247 = scmp.ne.s32.totalorder %s242, %s244
      %p248 = scmp.eq.s32.totalorder %s19, 0
      %p249 = por %p247, %p248
      %p250 = scmp.ne.s32.totalorder %s242, %s244
      %p251 = scmp.eq.s32.totalorder %s24, 1
      %p252 = por %p250, %p251
      %p253 = scmp.ne.s32.totalorder %s244, %s245
      %p254 = scmp.eq.s32.totalorder %s24, 0
      %p255 = por %p253, %p254
      %p256 = scmp.ne.s32.totalorder %s244, %s245
      %p257 = scmp.eq.s32.totalorder %s25, 1
      %p258 = por %p256, %p257
      %p260 = scmp.ne.s32.totalorder %s245, %s259
      %p261 = scmp.eq.s32.totalorder %s25, 0
      %p262 = por %p260, %p261
      %s264 = sadd.s32 %s263, 1
      %p267 = scmp.eq.s32.totalorder %s19, 1
      %p268 = scmp.ne.s32.totalorder %s263, %s265
      %p269 = scmp.eq.s32.totalorder %s19, 0
      %p270 = por %p268, %p269
      %p271 = scmp.ne.s32.totalorder %s263, %s265
      %p272 = scmp.eq.s32.totalorder %s24, 1
      %p273 = por %p271, %p272
      %p274 = scmp.ne.s32.totalorder %s265, %s266
      %p275 = scmp.eq.s32.totalorder %s24, 0
      %p276 = por %p274, %p275
      %p277 = scmp.ne.s32.totalorder %s265, %s266
      %p278 = scmp.eq.s32.totalorder %s25, 1
      %p279 = por %p277, %p278
      %p281 = scmp.ne.s32.totalorder %s266, %s280
      %p282 = scmp.eq.s32.totalorder %s25, 0
      %p283 = por %p281, %p282
      %s285 = sadd.s32 %s284, 1
      %p288 = scmp.eq.s32.totalorder %s19, 1
      %p289 = scmp.ne.s32.totalorder %s284, %s286
      %p290 = scmp.eq.s32.totalorder %s19, 0
      %p291 = por %p289, %p290
      %p292 = scmp.ne.s32.totalorder %s284, %s286
      %p293 = scmp.eq.s32.totalorder %s24, 1
      %p294 = por %p292, %p293
      %p295 = scmp.ne.s32.totalorder %s286, %s287
      %p296 = scmp.eq.s32.totalorder %s24, 0
      %p297 = por %p295, %p296
      %p298 = scmp.ne.s32.totalorder %s286, %s287
      %p299 = scmp.eq.s32.totalorder %s25, 1
      %p300 = por %p298, %p299
      %p302 = scmp.ne.s32.totalorder %s287, %s301
      %p303 = scmp.eq.s32.totalorder %s25, 0
      %p304 = por %p302, %p303
      %s305 = ssub.s32 %s19, %s26
      %p306 = scmp.eq.s32.totalorder %s305, 0
      %s308 = sadd.s32 %s307, 1
      %s309 = scalar_select %p306, %s307, %s308
      %p312 = pneg %p306
      %p313 = scmp.eq.s32.totalorder %s19, 1
      %p314 = por %p312, %p313
      %p315 = scmp.ne.s32.totalorder %s307, %s310
      %p316 = scmp.eq.s32.totalorder %s19, 0
      %p317 = por %p315, %p316
      %p318 = scmp.ne.s32.totalorder %s307, %s310
      %p319 = scmp.eq.s32.totalorder %s24, 1
      %p320 = por %p318, %p319
      %p321 = scmp.ne.s32.totalorder %s310, %s311
      %p322 = scmp.eq.s32.totalorder %s24, 0
      %p323 = por %p321, %p322
      %p324 = scmp.ne.s32.totalorder %s310, %s311
      %p325 = scmp.eq.s32.totalorder %s25, 1
      %p326 = por %p324, %p325
      %p328 = scmp.ne.s32.totalorder %s311, %s327
      %p329 = scmp.eq.s32.totalorder %s25, 0
      %p330 = por %p328, %p329
      %p331 = scmp.le.s32.totalorder 1, %s19
      %p332 = scmp.lt.s32.totalorder %s19, 3
      %p333 = pnand %p331, %p332
      %p334 = pneg %p333
      // Predicated region
      $region9: #{_lambda_.1} parent=5 // pred_check
        _
      $region10: #{_lambda_.1} parent=5 // pred_check_branch
        %336 = sbr.rel (%p333) target = $region12
      $region11: #{_lambda_.1} parent=5 // pred_region
        %s337 = ssub.s32 %s19, 1
        // Predicated region
        $region13: #{_lambda_.1} parent=11 // pred_check
          %p338 = pneg %p66
        $region14: #{_lambda_.1} parent=11 // pred_check_branch
          %340 = sbr.rel (%p338) target = $region16
        $region15: #{_lambda_.1} parent=11 // pred_region
          _
        $region16: #{_lambda_.1} parent=11 // pred_fallthru
          _
        // Predicated region
        $region17: #{_lambda_.1} parent=11 // pred_check
          %p341 = pneg %p87
        $region18: #{_lambda_.1} parent=11 // pred_check_branch
          %343 = sbr.rel (%p341) target = $region20
        $region19: #{_lambda_.1} parent=11 // pred_region
          _
        $region20: #{_lambda_.1} parent=11 // pred_fallthru
          _
        // Predicated region
        $region21: #{_lambda_.1} parent=11 // pred_check
          %p344 = pneg %p108
        $region22: #{_lambda_.1} parent=11 // pred_check_branch
          %346 = sbr.rel (%p344) target = $region24
        $region23: #{_lambda_.1} parent=11 // pred_region
          _
        $region24: #{_lambda_.1} parent=11 // pred_fallthru
          _
        // Predicated region
        $region25: #{_lambda_.1} parent=11 // pred_check
          %p347 = pneg %p129
        $region26: #{_lambda_.1} parent=11 // pred_check_branch
          %349 = sbr.rel (%p347) target = $region28
        $region27: #{_lambda_.1} parent=11 // pred_region
          _
        $region28: #{_lambda_.1} parent=11 // pred_fallthru
          _
        // Predicated region
        $region29: #{_lambda_.1} parent=11 // pred_check
          %p350 = pneg %p150
        $region30: #{_lambda_.1} parent=11 // pred_check_branch
          %352 = sbr.rel (%p350) target = $region32
        $region31: #{_lambda_.1} parent=11 // pred_region
          _
        $region32: #{_lambda_.1} parent=11 // pred_fallthru
          _
        // Predicated region
        $region33: #{_lambda_.1} parent=11 // pred_check
          %p353 = pneg %p171
        $region34: #{_lambda_.1} parent=11 // pred_check_branch
          %355 = sbr.rel (%p353) target = $region36
        $region35: #{_lambda_.1} parent=11 // pred_region
          _
        $region36: #{_lambda_.1} parent=11 // pred_fallthru
          _
        // Predicated region
        $region37: #{_lambda_.1} parent=11 // pred_check
          %p356 = pneg %p192
        $region38: #{_lambda_.1} parent=11 // pred_check_branch
          %358 = sbr.rel (%p356) target = $region40
        $region39: #{_lambda_.1} parent=11 // pred_region
          _
        $region40: #{_lambda_.1} parent=11 // pred_fallthru
          _
        // Predicated region
        $region41: #{_lambda_.1} parent=11 // pred_check
          %p359 = pneg %p213
        $region42: #{_lambda_.1} parent=11 // pred_check_branch
          %361 = sbr.rel (%p359) target = $region44
        $region43: #{_lambda_.1} parent=11 // pred_region
          _
        $region44: #{_lambda_.1} parent=11 // pred_fallthru
          _
        // Predicated region
        $region45: #{_lambda_.1} parent=11 // pred_check
          %p362 = pneg %p234
        $region46: #{_lambda_.1} parent=11 // pred_check_branch
          %364 = sbr.rel (%p362) target = $region48
        $region47: #{_lambda_.1} parent=11 // pred_region
          _
        $region48: #{_lambda_.1} parent=11 // pred_fallthru
          _
        // Predicated region
        $region49: #{_lambda_.1} parent=11 // pred_check
          %p365 = pneg %p255
        $region50: #{_lambda_.1} parent=11 // pred_check_branch
          %367 = sbr.rel (%p365) target = $region52
        $region51: #{_lambda_.1} parent=11 // pred_region
          _
        $region52: #{_lambda_.1} parent=11 // pred_fallthru
          _
        // Predicated region
        $region53: #{_lambda_.1} parent=11 // pred_check
          %p368 = pneg %p276
        $region54: #{_lambda_.1} parent=11 // pred_check_branch
          %370 = sbr.rel (%p368) target = $region56
        $region55: #{_lambda_.1} parent=11 // pred_region
          _
        $region56: #{_lambda_.1} parent=11 // pred_fallthru
          _
        // Predicated region
        $region57: #{_lambda_.1} parent=11 // pred_check
          %p371 = pneg %p297
        $region58: #{_lambda_.1} parent=11 // pred_check_branch
          %373 = sbr.rel (%p371) target = $region60
        $region59: #{_lambda_.1} parent=11 // pred_region
          _
        $region60: #{_lambda_.1} parent=11 // pred_fallthru
          _
      $region12: #{_lambda_.1} parent=5 // pred_fallthru
        _
      %p374 = scmp.lt.s32.totalorder %s19, 2
      // Predicated region
      $region61: #{_lambda_.1} parent=5 // pred_check
        %p375 = pneg %p374
      $region62: #{_lambda_.1} parent=5 // pred_check_branch
        %377 = sbr.rel (%p375) target = $region64
      $region63: #{_lambda_.1} parent=5 // pred_region
        // Predicated region
        $region65: #{_lambda_.1} parent=63 // pred_check
          %p378 = pneg %p39
        $region66: #{_lambda_.1} parent=63 // pred_check_branch
          %380 = sbr.rel (%p378) target = $region68
        $region67: #{_lambda_.1} parent=63 // pred_region
          %s381 = sand.u32 %s29, 1
          %s382 = sand.u32 %s29, 1
          %s383 = smul.addr %s382, 960
          %s384 = scalar_lea.vmem [#allocation2], %s383
          %s385 = smul.u32 4, %s19
          %s386 = smul.addr %s385, 8
          %s387 = scalar_lea.vmem %s0, %s386
          // Predicated region
          $region69: #{_lambda_.1} parent=67 // pred_check
            _
          $region70: #{_lambda_.1} parent=67 // pred_check_branch
            %389 = sbr.rel (0) target = $region72
          $region71: #{_lambda_.1} parent=67 // pred_region
            // Predicated region
            $region73: #{_lambda_.1} parent=71 // pred_check
              _
            $region74: #{_lambda_.1} parent=71 // pred_check_branch
              %391 = sbr.rel (0) target = $region76
            $region75: #{_lambda_.1} parent=71 // pred_region
              // Predicated region
              $region88: #{_lambda_.1} parent=75 // pred_check
                _
              $region89: #{_lambda_.1} parent=75 // pred_check_branch
                %644 = sbr.rel (0) target = $region91
              $region90: #{_lambda_.1} parent=75 // pred_region
                loop: start=0, step=1, limit=1
                $region92: #{_lambda_.1} parent=90 // loop_pre_header
                  _
                $region93: #{_lambda_.1} parent=90 // loop_header
                  %s646 = sphi 0, %s650
                  %p647 = scmp.ge.s32.totalorder %s646, 1
                  %s651 = sphi %s387, %s387
                  %s652 = sphi %s384, %s384
                $region94: #{_lambda_.1} parent=90 // loop_header_branch
                  %649 = sbr.rel (%p647) target = $region98
                $region95: #{_lambda_.1} parent=90 // loop_body
                  %v653 = vld [vmem:[%s651] sm:$0xff]
                  %654 = vst [vmem:[%s652] sm:$0xff] %v653
                  %v655 = vld [vmem:[%s651 + $0x8] sm:$0xff]
                  %656 = vst [vmem:[%s652 + $0x8] sm:$0xff] %v655
                  %v657 = vld [vmem:[%s651 + $0x10] sm:$0xff]
                  %658 = vst [vmem:[%s652 + $0x10] sm:$0xff] %v657
                  %v659 = vld [vmem:[%s651 + $0x18] sm:$0xff]
                  %660 = vst [vmem:[%s652 + $0x18] sm:$0xff] %v659
                  %v661 = vld [vmem:[%s651 + $0x40] sm:$0xff]
                  %662 = vst [vmem:[%s652 + $0x20] sm:$0xff] %v661
                  %v663 = vld [vmem:[%s651 + $0x48] sm:$0xff]
                  %664 = vst [vmem:[%s652 + $0x28] sm:$0xff] %v663
                  %v665 = vld [vmem:[%s651 + $0x50] sm:$0xff]
                  %666 = vst [vmem:[%s652 + $0x30] sm:$0xff] %v665
                  %v667 = vld [vmem:[%s651 + $0x58] sm:$0xff]
                  %668 = vst [vmem:[%s652 + $0x38] sm:$0xff] %v667
                  %v669 = vld [vmem:[%s651 + $0x80] sm:$0xff]
                  %670 = vst [vmem:[%s652 + $0x40] sm:$0xff] %v669
                  %v671 = vld [vmem:[%s651 + $0x88] sm:$0xff]
                  %672 = vst [vmem:[%s652 + $0x48] sm:$0xff] %v671
                  %v673 = vld [vmem:[%s651 + $0x90] sm:$0xff]
                  %674 = vst [vmem:[%s652 + $0x50] sm:$0xff] %v673
                  %v675 = vld [vmem:[%s651 + $0x98] sm:$0xff]
                  %676 = vst [vmem:[%s652 + $0x58] sm:$0xff] %v675
                  %v677 = vld [vmem:[%s651 + $0xc0] sm:$0xff]
                  %678 = vst [vmem:[%s652 + $0x60] sm:$0xff] %v677
                  %v679 = vld [vmem:[%s651 + $0xc8] sm:$0xff]
                  %680 = vst [vmem:[%s652 + $0x68] sm:$0xff] %v679
                  %v681 = vld [vmem:[%s651 + $0xd0] sm:$0xff]
                  %682 = vst [vmem:[%s652 + $0x70] sm:$0xff] %v681
                  %v683 = vld [vmem:[%s651 + $0xd8] sm:$0xff]
                  %684 = vst [vmem:[%s652 + $0x78] sm:$0xff] %v683
                  %v685 = vld [vmem:[%s651 + $0x100] sm:$0xff]
                  %686 = vst [vmem:[%s652 + $0x80] sm:$0xff] %v685
                  %v687 = vld [vmem:[%s651 + $0x108] sm:$0xff]
                  %688 = vst [vmem:[%s652 + $0x88] sm:$0xff] %v687
                  %v689 = vld [vmem:[%s651 + $0x110] sm:$0xff]
                  %690 = vst [vmem:[%s652 + $0x90] sm:$0xff] %v689
                  %v691 = vld [vmem:[%s651 + $0x118] sm:$0xff]
                  %692 = vst [vmem:[%s652 + $0x98] sm:$0xff] %v691
                  %v693 = vld [vmem:[%s651 + $0x140] sm:$0xff]
                  %694 = vst [vmem:[%s652 + $0xa0] sm:$0xff] %v693
                  %v695 = vld [vmem:[%s651 + $0x148] sm:$0xff]
                  %696 = vst [vmem:[%s652 + $0xa8] sm:$0xff] %v695
                  %v697 = vld [vmem:[%s651 + $0x150] sm:$0xff]
                  %698 = vst [vmem:[%s652 + $0xb0] sm:$0xff] %v697
                  %v699 = vld [vmem:[%s651 + $0x158] sm:$0xff]
                  %700 = vst [vmem:[%s652 + $0xb8] sm:$0xff] %v699
                  %v701 = vld [vmem:[%s651 + $0x180] sm:$0xff]
                  %702 = vst [vmem:[%s652 + $0xc0] sm:$0xff] %v701
                  %v703 = vld [vmem:[%s651 + $0x188] sm:$0xff]
                  %704 = vst [vmem:[%s652 + $0xc8] sm:$0xff] %v703
                  %v705 = vld [vmem:[%s651 + $0x190] sm:$0xff]
                  %706 = vst [vmem:[%s652 + $0xd0] sm:$0xff] %v705
                  %v707 = vld [vmem:[%s651 + $0x198] sm:$0xff]
                  %708 = vst [vmem:[%s652 + $0xd8] sm:$0xff] %v707
                  %v709 = vld [vmem:[%s651 + $0x1c0] sm:$0xff]
                  %710 = vst [vmem:[%s652 + $0xe0] sm:$0xff] %v709
                  %v711 = vld [vmem:[%s651 + $0x1c8] sm:$0xff]
                  %712 = vst [vmem:[%s652 + $0xe8] sm:$0xff] %v711
                  %v713 = vld [vmem:[%s651 + $0x1d0] sm:$0xff]
                  %714 = vst [vmem:[%s652 + $0xf0] sm:$0xff] %v713
                  %v715 = vld [vmem:[%s651 + $0x1d8] sm:$0xff]
                  %716 = vst [vmem:[%s652 + $0xf8] sm:$0xff] %v715
                  %v717 = vld [vmem:[%s651 + $0x200] sm:$0xff]
                  %718 = vst [vmem:[%s652 + $0x100] sm:$0xff] %v717
                  %v719 = vld [vmem:[%s651 + $0x208] sm:$0xff]
                  %720 = vst [vmem:[%s652 + $0x108] sm:$0xff] %v719
                  %v721 = vld [vmem:[%s651 + $0x210] sm:$0xff]
                  %722 = vst [vmem:[%s652 + $0x110] sm:$0xff] %v721
                  %v723 = vld [vmem:[%s651 + $0x218] sm:$0xff]
                  %724 = vst [vmem:[%s652 + $0x118] sm:$0xff] %v723
                  %v725 = vld [vmem:[%s651 + $0x240] sm:$0xff]
                  %726 = vst [vmem:[%s652 + $0x120] sm:$0xff] %v725
                  %v727 = vld [vmem:[%s651 + $0x248] sm:$0xff]
                  %728 = vst [vmem:[%s652 + $0x128] sm:$0xff] %v727
                  %v729 = vld [vmem:[%s651 + $0x250] sm:$0xff]
                  %730 = vst [vmem:[%s652 + $0x130] sm:$0xff] %v729
                  %v731 = vld [vmem:[%s651 + $0x258] sm:$0xff]
                  %732 = vst [vmem:[%s652 + $0x138] sm:$0xff] %v731
                  %v733 = vld [vmem:[%s651 + $0x280] sm:$0xff]
                  %734 = vst [vmem:[%s652 + $0x140] sm:$0xff] %v733
                  %v735 = vld [vmem:[%s651 + $0x288] sm:$0xff]
                  %736 = vst [vmem:[%s652 + $0x148] sm:$0xff] %v735
                  %v737 = vld [vmem:[%s651 + $0x290] sm:$0xff]
                  %738 = vst [vmem:[%s652 + $0x150] sm:$0xff] %v737
                  %v739 = vld [vmem:[%s651 + $0x298] sm:$0xff]
                  %740 = vst [vmem:[%s652 + $0x158] sm:$0xff] %v739
                  %v741 = vld [vmem:[%s651 + $0x2c0] sm:$0xff]
                  %742 = vst [vmem:[%s652 + $0x160] sm:$0xff] %v741
                  %v743 = vld [vmem:[%s651 + $0x2c8] sm:$0xff]
                  %744 = vst [vmem:[%s652 + $0x168] sm:$0xff] %v743
                  %v745 = vld [vmem:[%s651 + $0x2d0] sm:$0xff]
                  %746 = vst [vmem:[%s652 + $0x170] sm:$0xff] %v745
                  %v747 = vld [vmem:[%s651 + $0x2d8] sm:$0xff]
                  %748 = vst [vmem:[%s652 + $0x178] sm:$0xff] %v747
                  %v749 = vld [vmem:[%s651 + $0x300] sm:$0xff]
                  %750 = vst [vmem:[%s652 + $0x180] sm:$0xff] %v749
                  %v751 = vld [vmem:[%s651 + $0x308] sm:$0xff]
                  %752 = vst [vmem:[%s652 + $0x188] sm:$0xff] %v751
                  %v753 = vld [vmem:[%s651 + $0x310] sm:$0xff]
                  %754 = vst [vmem:[%s652 + $0x190] sm:$0xff] %v753
                  %v755 = vld [vmem:[%s651 + $0x318] sm:$0xff]
                  %756 = vst [vmem:[%s652 + $0x198] sm:$0xff] %v755
                  %v757 = vld [vmem:[%s651 + $0x340] sm:$0xff]
                  %758 = vst [vmem:[%s652 + $0x1a0] sm:$0xff] %v757
                  %v759 = vld [vmem:[%s651 + $0x348] sm:$0xff]
                  %760 = vst [vmem:[%s652 + $0x1a8] sm:$0xff] %v759
                  %v761 = vld [vmem:[%s651 + $0x350] sm:$0xff]
                  %762 = vst [vmem:[%s652 + $0x1b0] sm:$0xff] %v761
                  %v763 = vld [vmem:[%s651 + $0x358] sm:$0xff]
                  %764 = vst [vmem:[%s652 + $0x1b8] sm:$0xff] %v763
                  %v765 = vld [vmem:[%s651 + $0x380] sm:$0xff]
                  %766 = vst [vmem:[%s652 + $0x1c0] sm:$0xff] %v765
                  %v767 = vld [vmem:[%s651 + $0x388] sm:$0xff]
                  %768 = vst [vmem:[%s652 + $0x1c8] sm:$0xff] %v767
                  %v769 = vld [vmem:[%s651 + $0x390] sm:$0xff]
                  %770 = vst [vmem:[%s652 + $0x1d0] sm:$0xff] %v769
                  %v771 = vld [vmem:[%s651 + $0x398] sm:$0xff]
                  %772 = vst [vmem:[%s652 + $0x1d8] sm:$0xff] %v771
                  %v773 = vld [vmem:[%s651 + $0x3c0] sm:$0xff]
                  %774 = vst [vmem:[%s652 + $0x1e0] sm:$0xff] %v773
                  %v775 = vld [vmem:[%s651 + $0x3c8] sm:$0xff]
                  %776 = vst [vmem:[%s652 + $0x1e8] sm:$0xff] %v775
                  %v777 = vld [vmem:[%s651 + $0x3d0] sm:$0xff]
                  %778 = vst [vmem:[%s652 + $0x1f0] sm:$0xff] %v777
                  %v779 = vld [vmem:[%s651 + $0x3d8] sm:$0xff]
                  %780 = vst [vmem:[%s652 + $0x1f8] sm:$0xff] %v779
                  %v781 = vld [vmem:[%s651 + $0x400] sm:$0xff]
                  %782 = vst [vmem:[%s652 + $0x200] sm:$0xff] %v781
                  %v783 = vld [vmem:[%s651 + $0x408] sm:$0xff]
                  %784 = vst [vmem:[%s652 + $0x208] sm:$0xff] %v783
                  %v785 = vld [vmem:[%s651 + $0x410] sm:$0xff]
                  %786 = vst [vmem:[%s652 + $0x210] sm:$0xff] %v785
                  %v787 = vld [vmem:[%s651 + $0x418] sm:$0xff]
                  %788 = vst [vmem:[%s652 + $0x218] sm:$0xff] %v787
                  %v789 = vld [vmem:[%s651 + $0x440] sm:$0xff]
                  %790 = vst [vmem:[%s652 + $0x220] sm:$0xff] %v789
                  %v791 = vld [vmem:[%s651 + $0x448] sm:$0xff]
                  %792 = vst [vmem:[%s652 + $0x228] sm:$0xff] %v791
                  %v793 = vld [vmem:[%s651 + $0x450] sm:$0xff]
                  %794 = vst [vmem:[%s652 + $0x230] sm:$0xff] %v793
                  %v795 = vld [vmem:[%s651 + $0x458] sm:$0xff]
                  %796 = vst [vmem:[%s652 + $0x238] sm:$0xff] %v795
                  %v797 = vld [vmem:[%s651 + $0x480] sm:$0xff]
                  %798 = vst [vmem:[%s652 + $0x240] sm:$0xff] %v797
                  %v799 = vld [vmem:[%s651 + $0x488] sm:$0xff]
                  %800 = vst [vmem:[%s652 + $0x248] sm:$0xff] %v799
                  %v801 = vld [vmem:[%s651 + $0x490] sm:$0xff]
                  %802 = vst [vmem:[%s652 + $0x250] sm:$0xff] %v801
                  %v803 = vld [vmem:[%s651 + $0x498] sm:$0xff]
                  %804 = vst [vmem:[%s652 + $0x258] sm:$0xff] %v803
                  %v805 = vld [vmem:[%s651 + $0x4c0] sm:$0xff]
                  %806 = vst [vmem:[%s652 + $0x260] sm:$0xff] %v805
                  %v807 = vld [vmem:[%s651 + $0x4c8] sm:$0xff]
                  %808 = vst [vmem:[%s652 + $0x268] sm:$0xff] %v807
                  %v809 = vld [vmem:[%s651 + $0x4d0] sm:$0xff]
                  %810 = vst [vmem:[%s652 + $0x270] sm:$0xff] %v809
                  %v811 = vld [vmem:[%s651 + $0x4d8] sm:$0xff]
                  %812 = vst [vmem:[%s652 + $0x278] sm:$0xff] %v811
                  %v813 = vld [vmem:[%s651 + $0x500] sm:$0xff]
                  %814 = vst [vmem:[%s652 + $0x280] sm:$0xff] %v813
                  %v815 = vld [vmem:[%s651 + $0x508] sm:$0xff]
                  %816 = vst [vmem:[%s652 + $0x288] sm:$0xff] %v815
                  %v817 = vld [vmem:[%s651 + $0x510] sm:$0xff]
                  %818 = vst [vmem:[%s652 + $0x290] sm:$0xff] %v817
                  %v819 = vld [vmem:[%s651 + $0x518] sm:$0xff]
                  %820 = vst [vmem:[%s652 + $0x298] sm:$0xff] %v819
                  %v821 = vld [vmem:[%s651 + $0x540] sm:$0xff]
                  %822 = vst [vmem:[%s652 + $0x2a0] sm:$0xff] %v821
                  %v823 = vld [vmem:[%s651 + $0x548] sm:$0xff]
                  %824 = vst [vmem:[%s652 + $0x2a8] sm:$0xff] %v823
                  %v825 = vld [vmem:[%s651 + $0x550] sm:$0xff]
                  %826 = vst [vmem:[%s652 + $0x2b0] sm:$0xff] %v825
                  %v827 = vld [vmem:[%s651 + $0x558] sm:$0xff]
                  %828 = vst [vmem:[%s652 + $0x2b8] sm:$0xff] %v827
                  %v829 = vld [vmem:[%s651 + $0x580] sm:$0xff]
                  %830 = vst [vmem:[%s652 + $0x2c0] sm:$0xff] %v829
                  %v831 = vld [vmem:[%s651 + $0x588] sm:$0xff]
                  %832 = vst [vmem:[%s652 + $0x2c8] sm:$0xff] %v831
                  %v833 = vld [vmem:[%s651 + $0x590] sm:$0xff]
                  %834 = vst [vmem:[%s652 + $0x2d0] sm:$0xff] %v833
                  %v835 = vld [vmem:[%s651 + $0x598] sm:$0xff]
                  %836 = vst [vmem:[%s652 + $0x2d8] sm:$0xff] %v835
                  %v837 = vld [vmem:[%s651 + $0x5c0] sm:$0xff]
                  %838 = vst [vmem:[%s652 + $0x2e0] sm:$0xff] %v837
                  %v839 = vld [vmem:[%s651 + $0x5c8] sm:$0xff]
                  %840 = vst [vmem:[%s652 + $0x2e8] sm:$0xff] %v839
                  %v841 = vld [vmem:[%s651 + $0x5d0] sm:$0xff]
                  %842 = vst [vmem:[%s652 + $0x2f0] sm:$0xff] %v841
                  %v843 = vld [vmem:[%s651 + $0x5d8] sm:$0xff]
                  %844 = vst [vmem:[%s652 + $0x2f8] sm:$0xff] %v843
                  %v845 = vld [vmem:[%s651 + $0x600] sm:$0xff]
                  %846 = vst [vmem:[%s652 + $0x300] sm:$0xff] %v845
                  %v847 = vld [vmem:[%s651 + $0x608] sm:$0xff]
                  %848 = vst [vmem:[%s652 + $0x308] sm:$0xff] %v847
                  %v849 = vld [vmem:[%s651 + $0x610] sm:$0xff]
                  %850 = vst [vmem:[%s652 + $0x310] sm:$0xff] %v849
                  %v851 = vld [vmem:[%s651 + $0x618] sm:$0xff]
                  %852 = vst [vmem:[%s652 + $0x318] sm:$0xff] %v851
                  %v853 = vld [vmem:[%s651 + $0x640] sm:$0xff]
                  %854 = vst [vmem:[%s652 + $0x320] sm:$0xff] %v853
                  %v855 = vld [vmem:[%s651 + $0x648] sm:$0xff]
                  %856 = vst [vmem:[%s652 + $0x328] sm:$0xff] %v855
                  %v857 = vld [vmem:[%s651 + $0x650] sm:$0xff]
                  %858 = vst [vmem:[%s652 + $0x330] sm:$0xff] %v857
                  %v859 = vld [vmem:[%s651 + $0x658] sm:$0xff]
                  %860 = vst [vmem:[%s652 + $0x338] sm:$0xff] %v859
                  %v861 = vld [vmem:[%s651 + $0x680] sm:$0xff]
                  %862 = vst [vmem:[%s652 + $0x340] sm:$0xff] %v861
                  %v863 = vld [vmem:[%s651 + $0x688] sm:$0xff]
                  %864 = vst [vmem:[%s652 + $0x348] sm:$0xff] %v863
                  %v865 = vld [vmem:[%s651 + $0x690] sm:$0xff]
                  %866 = vst [vmem:[%s652 + $0x350] sm:$0xff] %v865
                  %v867 = vld [vmem:[%s651 + $0x698] sm:$0xff]
                  %868 = vst [vmem:[%s652 + $0x358] sm:$0xff] %v867
                  %v869 = vld [vmem:[%s651 + $0x6c0] sm:$0xff]
                  %870 = vst [vmem:[%s652 + $0x360] sm:$0xff] %v869
                  %v871 = vld [vmem:[%s651 + $0x6c8] sm:$0xff]
                  %872 = vst [vmem:[%s652 + $0x368] sm:$0xff] %v871
                  %v873 = vld [vmem:[%s651 + $0x6d0] sm:$0xff]
                  %874 = vst [vmem:[%s652 + $0x370] sm:$0xff] %v873
                  %v875 = vld [vmem:[%s651 + $0x6d8] sm:$0xff]
                  %876 = vst [vmem:[%s652 + $0x378] sm:$0xff] %v875
                  %v877 = vld [vmem:[%s651 + $0x700] sm:$0xff]
                  %878 = vst [vmem:[%s652 + $0x380] sm:$0xff] %v877
                  %v879 = vld [vmem:[%s651 + $0x708] sm:$0xff]
                  %880 = vst [vmem:[%s652 + $0x388] sm:$0xff] %v879
                  %v881 = vld [vmem:[%s651 + $0x710] sm:$0xff]
                  %882 = vst [vmem:[%s652 + $0x390] sm:$0xff] %v881
                  %v883 = vld [vmem:[%s651 + $0x718] sm:$0xff]
                  %884 = vst [vmem:[%s652 + $0x398] sm:$0xff] %v883
                  %v885 = vld [vmem:[%s651 + $0x740] sm:$0xff]
                  %886 = vst [vmem:[%s652 + $0x3a0] sm:$0xff] %v885
                  %v887 = vld [vmem:[%s651 + $0x748] sm:$0xff]
                  %888 = vst [vmem:[%s652 + $0x3a8] sm:$0xff] %v887
                  %v889 = vld [vmem:[%s651 + $0x750] sm:$0xff]
                  %890 = vst [vmem:[%s652 + $0x3b0] sm:$0xff] %v889
                  %v891 = vld [vmem:[%s651 + $0x758] sm:$0xff]
                  %892 = vst [vmem:[%s652 + $0x3b8] sm:$0xff] %v891
                $region96: #{_lambda_.1} parent=90 // loop_footer
                  %s650 = sadd.s32 1, %s646
                $region97: #{_lambda_.1} parent=90 // loop_footer_branch
                  %645 = sbr.rel target = $region93
                $region98: #{_lambda_.1} parent=90 // loop_exit
                  _
              $region91: #{_lambda_.1} parent=75 // pred_fallthru
                _
              // Predicated region
              $region99: #{_lambda_.1} parent=75 // pred_check
                _
              $region100: #{_lambda_.1} parent=75 // pred_check_branch
                %894 = sbr.rel target = $region102
              $region101: #{_lambda_.1} parent=75 // pred_region
                _
              $region102: #{_lambda_.1} parent=75 // pred_fallthru
                _
            $region76: #{_lambda_.1} parent=71 // pred_fallthru
              _
            // Predicated region
            $region77: #{_lambda_.1} parent=71 // pred_check
              _
            $region78: #{_lambda_.1} parent=71 // pred_check_branch
              %393 = sbr.rel target = $region80
            $region79: #{_lambda_.1} parent=71 // pred_region
              loop: start=0, step=1, limit=1
              $region81: #{_lambda_.1} parent=79 // loop_pre_header
                _
              $region82: #{_lambda_.1} parent=79 // loop_header
                %s396 = sphi 0, %s400
                %p397 = scmp.ge.s32.totalorder %s396, 1
                %s401 = sphi %s387, %s387
                %s402 = sphi %s384, %s384
              $region83: #{_lambda_.1} parent=79 // loop_header_branch
                %399 = sbr.rel (%p397) target = $region87
              $region84: #{_lambda_.1} parent=79 // loop_body
                %v403 = vld [vmem:[%s401] sm:$0xff]
                %404 = vst [vmem:[%s402] sm:$0xff] %v403
                %v405 = vld [vmem:[%s401 + $0x8] sm:$0xff]
                %406 = vst [vmem:[%s402 + $0x8] sm:$0xff] %v405
                %v407 = vld [vmem:[%s401 + $0x10] sm:$0xff]
                %408 = vst [vmem:[%s402 + $0x10] sm:$0xff] %v407
                %v409 = vld [vmem:[%s401 + $0x18] sm:$0xff]
                %410 = vst [vmem:[%s402 + $0x18] sm:$0xff] %v409
                %v411 = vld [vmem:[%s401 + $0x40] sm:$0xff]
                %412 = vst [vmem:[%s402 + $0x20] sm:$0xff] %v411
                %v413 = vld [vmem:[%s401 + $0x48] sm:$0xff]
                %414 = vst [vmem:[%s402 + $0x28] sm:$0xff] %v413
                %v415 = vld [vmem:[%s401 + $0x50] sm:$0xff]
                %416 = vst [vmem:[%s402 + $0x30] sm:$0xff] %v415
                %v417 = vld [vmem:[%s401 + $0x58] sm:$0xff]
                %418 = vst [vmem:[%s402 + $0x38] sm:$0xff] %v417
                %v419 = vld [vmem:[%s401 + $0x80] sm:$0xff]
                %420 = vst [vmem:[%s402 + $0x40] sm:$0xff] %v419
                %v421 = vld [vmem:[%s401 + $0x88] sm:$0xff]
                %422 = vst [vmem:[%s402 + $0x48] sm:$0xff] %v421
                %v423 = vld [vmem:[%s401 + $0x90] sm:$0xff]
                %424 = vst [vmem:[%s402 + $0x50] sm:$0xff] %v423
                %v425 = vld [vmem:[%s401 + $0x98] sm:$0xff]
                %426 = vst [vmem:[%s402 + $0x58] sm:$0xff] %v425
                %v427 = vld [vmem:[%s401 + $0xc0] sm:$0xff]
                %428 = vst [vmem:[%s402 + $0x60] sm:$0xff] %v427
                %v429 = vld [vmem:[%s401 + $0xc8] sm:$0xff]
                %430 = vst [vmem:[%s402 + $0x68] sm:$0xff] %v429
                %v431 = vld [vmem:[%s401 + $0xd0] sm:$0xff]
                %432 = vst [vmem:[%s402 + $0x70] sm:$0xff] %v431
                %v433 = vld [vmem:[%s401 + $0xd8] sm:$0xff]
                %434 = vst [vmem:[%s402 + $0x78] sm:$0xff] %v433
                %v435 = vld [vmem:[%s401 + $0x100] sm:$0xff]
                %436 = vst [vmem:[%s402 + $0x80] sm:$0xff] %v435
                %v437 = vld [vmem:[%s401 + $0x108] sm:$0xff]
                %438 = vst [vmem:[%s402 + $0x88] sm:$0xff] %v437
                %v439 = vld [vmem:[%s401 + $0x110] sm:$0xff]
                %440 = vst [vmem:[%s402 + $0x90] sm:$0xff] %v439
                %v441 = vld [vmem:[%s401 + $0x118] sm:$0xff]
                %442 = vst [vmem:[%s402 + $0x98] sm:$0xff] %v441
                %v443 = vld [vmem:[%s401 + $0x140] sm:$0xff]
                %444 = vst [vmem:[%s402 + $0xa0] sm:$0xff] %v443
                %v445 = vld [vmem:[%s401 + $0x148] sm:$0xff]
                %446 = vst [vmem:[%s402 + $0xa8] sm:$0xff] %v445
                %v447 = vld [vmem:[%s401 + $0x150] sm:$0xff]
                %448 = vst [vmem:[%s402 + $0xb0] sm:$0xff] %v447
                %v449 = vld [vmem:[%s401 + $0x158] sm:$0xff]
                %450 = vst [vmem:[%s402 + $0xb8] sm:$0xff] %v449
                %v451 = vld [vmem:[%s401 + $0x180] sm:$0xff]
                %452 = vst [vmem:[%s402 + $0xc0] sm:$0xff] %v451
                %v453 = vld [vmem:[%s401 + $0x188] sm:$0xff]
                %454 = vst [vmem:[%s402 + $0xc8] sm:$0xff] %v453
                %v455 = vld [vmem:[%s401 + $0x190] sm:$0xff]
                %456 = vst [vmem:[%s402 + $0xd0] sm:$0xff] %v455
                %v457 = vld [vmem:[%s401 + $0x198] sm:$0xff]
                %458 = vst [vmem:[%s402 + $0xd8] sm:$0xff] %v457
                %v459 = vld [vmem:[%s401 + $0x1c0] sm:$0xff]
                %460 = vst [vmem:[%s402 + $0xe0] sm:$0xff] %v459
                %v461 = vld [vmem:[%s401 + $0x1c8] sm:$0xff]
                %462 = vst [vmem:[%s402 + $0xe8] sm:$0xff] %v461
                %v463 = vld [vmem:[%s401 + $0x1d0] sm:$0xff]
                %464 = vst [vmem:[%s402 + $0xf0] sm:$0xff] %v463
                %v465 = vld [vmem:[%s401 + $0x1d8] sm:$0xff]
                %466 = vst [vmem:[%s402 + $0xf8] sm:$0xff] %v465
                %v467 = vld [vmem:[%s401 + $0x200] sm:$0xff]
                %468 = vst [vmem:[%s402 + $0x100] sm:$0xff] %v467
                %v469 = vld [vmem:[%s401 + $0x208] sm:$0xff]
                %470 = vst [vmem:[%s402 + $0x108] sm:$0xff] %v469
                %v471 = vld [vmem:[%s401 + $0x210] sm:$0xff]
                %472 = vst [vmem:[%s402 + $0x110] sm:$0xff] %v471
                %v473 = vld [vmem:[%s401 + $0x218] sm:$0xff]
                %474 = vst [vmem:[%s402 + $0x118] sm:$0xff] %v473
                %v475 = vld [vmem:[%s401 + $0x240] sm:$0xff]
                %476 = vst [vmem:[%s402 + $0x120] sm:$0xff] %v475
                %v477 = vld [vmem:[%s401 + $0x248] sm:$0xff]
                %478 = vst [vmem:[%s402 + $0x128] sm:$0xff] %v477
                %v479 = vld [vmem:[%s401 + $0x250] sm:$0xff]
                %480 = vst [vmem:[%s402 + $0x130] sm:$0xff] %v479
                %v481 = vld [vmem:[%s401 + $0x258] sm:$0xff]
                %482 = vst [vmem:[%s402 + $0x138] sm:$0xff] %v481
                %v483 = vld [vmem:[%s401 + $0x280] sm:$0xff]
                %484 = vst [vmem:[%s402 + $0x140] sm:$0xff] %v483
                %v485 = vld [vmem:[%s401 + $0x288] sm:$0xff]
                %486 = vst [vmem:[%s402 + $0x148] sm:$0xff] %v485
                %v487 = vld [vmem:[%s401 + $0x290] sm:$0xff]
                %488 = vst [vmem:[%s402 + $0x150] sm:$0xff] %v487
                %v489 = vld [vmem:[%s401 + $0x298] sm:$0xff]
                %490 = vst [vmem:[%s402 + $0x158] sm:$0xff] %v489
                %v491 = vld [vmem:[%s401 + $0x2c0] sm:$0xff]
                %492 = vst [vmem:[%s402 + $0x160] sm:$0xff] %v491
                %v493 = vld [vmem:[%s401 + $0x2c8] sm:$0xff]
                %494 = vst [vmem:[%s402 + $0x168] sm:$0xff] %v493
                %v495 = vld [vmem:[%s401 + $0x2d0] sm:$0xff]
                %496 = vst [vmem:[%s402 + $0x170] sm:$0xff] %v495
                %v497 = vld [vmem:[%s401 + $0x2d8] sm:$0xff]
                %498 = vst [vmem:[%s402 + $0x178] sm:$0xff] %v497
                %v499 = vld [vmem:[%s401 + $0x300] sm:$0xff]
                %500 = vst [vmem:[%s402 + $0x180] sm:$0xff] %v499
                %v501 = vld [vmem:[%s401 + $0x308] sm:$0xff]
                %502 = vst [vmem:[%s402 + $0x188] sm:$0xff] %v501
                %v503 = vld [vmem:[%s401 + $0x310] sm:$0xff]
                %504 = vst [vmem:[%s402 + $0x190] sm:$0xff] %v503
                %v505 = vld [vmem:[%s401 + $0x318] sm:$0xff]
                %506 = vst [vmem:[%s402 + $0x198] sm:$0xff] %v505
                %v507 = vld [vmem:[%s401 + $0x340] sm:$0xff]
                %508 = vst [vmem:[%s402 + $0x1a0] sm:$0xff] %v507
                %v509 = vld [vmem:[%s401 + $0x348] sm:$0xff]
                %510 = vst [vmem:[%s402 + $0x1a8] sm:$0xff] %v509
                %v511 = vld [vmem:[%s401 + $0x350] sm:$0xff]
                %512 = vst [vmem:[%s402 + $0x1b0] sm:$0xff] %v511
                %v513 = vld [vmem:[%s401 + $0x358] sm:$0xff]
                %514 = vst [vmem:[%s402 + $0x1b8] sm:$0xff] %v513
                %v515 = vld [vmem:[%s401 + $0x380] sm:$0xff]
                %516 = vst [vmem:[%s402 + $0x1c0] sm:$0xff] %v515
                %v517 = vld [vmem:[%s401 + $0x388] sm:$0xff]
                %518 = vst [vmem:[%s402 + $0x1c8] sm:$0xff] %v517
                %v519 = vld [vmem:[%s401 + $0x390] sm:$0xff]
                %520 = vst [vmem:[%s402 + $0x1d0] sm:$0xff] %v519
                %v521 = vld [vmem:[%s401 + $0x398] sm:$0xff]
                %522 = vst [vmem:[%s402 + $0x1d8] sm:$0xff] %v521
                %v523 = vld [vmem:[%s401 + $0x3c0] sm:$0xff]
                %524 = vst [vmem:[%s402 + $0x1e0] sm:$0xff] %v523
                %v525 = vld [vmem:[%s401 + $0x3c8] sm:$0xff]
                %526 = vst [vmem:[%s402 + $0x1e8] sm:$0xff] %v525
                %v527 = vld [vmem:[%s401 + $0x3d0] sm:$0xff]
                %528 = vst [vmem:[%s402 + $0x1f0] sm:$0xff] %v527
                %v529 = vld [vmem:[%s401 + $0x3d8] sm:$0xff]
                %530 = vst [vmem:[%s402 + $0x1f8] sm:$0xff] %v529
                %v531 = vld [vmem:[%s401 + $0x400] sm:$0xff]
                %532 = vst [vmem:[%s402 + $0x200] sm:$0xff] %v531
                %v533 = vld [vmem:[%s401 + $0x408] sm:$0xff]
                %534 = vst [vmem:[%s402 + $0x208] sm:$0xff] %v533
                %v535 = vld [vmem:[%s401 + $0x410] sm:$0xff]
                %536 = vst [vmem:[%s402 + $0x210] sm:$0xff] %v535
                %v537 = vld [vmem:[%s401 + $0x418] sm:$0xff]
                %538 = vst [vmem:[%s402 + $0x218] sm:$0xff] %v537
                %v539 = vld [vmem:[%s401 + $0x440] sm:$0xff]
                %540 = vst [vmem:[%s402 + $0x220] sm:$0xff] %v539
                %v541 = vld [vmem:[%s401 + $0x448] sm:$0xff]
                %542 = vst [vmem:[%s402 + $0x228] sm:$0xff] %v541
                %v543 = vld [vmem:[%s401 + $0x450] sm:$0xff]
                %544 = vst [vmem:[%s402 + $0x230] sm:$0xff] %v543
                %v545 = vld [vmem:[%s401 + $0x458] sm:$0xff]
                %546 = vst [vmem:[%s402 + $0x238] sm:$0xff] %v545
                %v547 = vld [vmem:[%s401 + $0x480] sm:$0xff]
                %548 = vst [vmem:[%s402 + $0x240] sm:$0xff] %v547
                %v549 = vld [vmem:[%s401 + $0x488] sm:$0xff]
                %550 = vst [vmem:[%s402 + $0x248] sm:$0xff] %v549
                %v551 = vld [vmem:[%s401 + $0x490] sm:$0xff]
                %552 = vst [vmem:[%s402 + $0x250] sm:$0xff] %v551
                %v553 = vld [vmem:[%s401 + $0x498] sm:$0xff]
                %554 = vst [vmem:[%s402 + $0x258] sm:$0xff] %v553
                %v555 = vld [vmem:[%s401 + $0x4c0] sm:$0xff]
                %556 = vst [vmem:[%s402 + $0x260] sm:$0xff] %v555
                %v557 = vld [vmem:[%s401 + $0x4c8] sm:$0xff]
                %558 = vst [vmem:[%s402 + $0x268] sm:$0xff] %v557
                %v559 = vld [vmem:[%s401 + $0x4d0] sm:$0xff]
                %560 = vst [vmem:[%s402 + $0x270] sm:$0xff] %v559
                %v561 = vld [vmem:[%s401 + $0x4d8] sm:$0xff]
                %562 = vst [vmem:[%s402 + $0x278] sm:$0xff] %v561
                %v563 = vld [vmem:[%s401 + $0x500] sm:$0xff]
                %564 = vst [vmem:[%s402 + $0x280] sm:$0xff] %v563
                %v565 = vld [vmem:[%s401 + $0x508] sm:$0xff]
                %566 = vst [vmem:[%s402 + $0x288] sm:$0xff] %v565
                %v567 = vld [vmem:[%s401 + $0x510] sm:$0xff]
                %568 = vst [vmem:[%s402 + $0x290] sm:$0xff] %v567
                %v569 = vld [vmem:[%s401 + $0x518] sm:$0xff]
                %570 = vst [vmem:[%s402 + $0x298] sm:$0xff] %v569
                %v571 = vld [vmem:[%s401 + $0x540] sm:$0xff]
                %572 = vst [vmem:[%s402 + $0x2a0] sm:$0xff] %v571
                %v573 = vld [vmem:[%s401 + $0x548] sm:$0xff]
                %574 = vst [vmem:[%s402 + $0x2a8] sm:$0xff] %v573
                %v575 = vld [vmem:[%s401 + $0x550] sm:$0xff]
                %576 = vst [vmem:[%s402 + $0x2b0] sm:$0xff] %v575
                %v577 = vld [vmem:[%s401 + $0x558] sm:$0xff]
                %578 = vst [vmem:[%s402 + $0x2b8] sm:$0xff] %v577
                %v579 = vld [vmem:[%s401 + $0x580] sm:$0xff]
                %580 = vst [vmem:[%s402 + $0x2c0] sm:$0xff] %v579
                %v581 = vld [vmem:[%s401 + $0x588] sm:$0xff]
                %582 = vst [vmem:[%s402 + $0x2c8] sm:$0xff] %v581
                %v583 = vld [vmem:[%s401 + $0x590] sm:$0xff]
                %584 = vst [vmem:[%s402 + $0x2d0] sm:$0xff] %v583
                %v585 = vld [vmem:[%s401 + $0x598] sm:$0xff]
                %586 = vst [vmem:[%s402 + $0x2d8] sm:$0xff] %v585
                %v587 = vld [vmem:[%s401 + $0x5c0] sm:$0xff]
                %588 = vst [vmem:[%s402 + $0x2e0] sm:$0xff] %v587
                %v589 = vld [vmem:[%s401 + $0x5c8] sm:$0xff]
                %590 = vst [vmem:[%s402 + $0x2e8] sm:$0xff] %v589
                %v591 = vld [vmem:[%s401 + $0x5d0] sm:$0xff]
                %592 = vst [vmem:[%s402 + $0x2f0] sm:$0xff] %v591
                %v593 = vld [vmem:[%s401 + $0x5d8] sm:$0xff]
                %594 = vst [vmem:[%s402 + $0x2f8] sm:$0xff] %v593
                %v595 = vld [vmem:[%s401 + $0x600] sm:$0xff]
                %596 = vst [vmem:[%s402 + $0x300] sm:$0xff] %v595
                %v597 = vld [vmem:[%s401 + $0x608] sm:$0xff]
                %598 = vst [vmem:[%s402 + $0x308] sm:$0xff] %v597
                %v599 = vld [vmem:[%s401 + $0x610] sm:$0xff]
                %600 = vst [vmem:[%s402 + $0x310] sm:$0xff] %v599
                %v601 = vld [vmem:[%s401 + $0x618] sm:$0xff]
                %602 = vst [vmem:[%s402 + $0x318] sm:$0xff] %v601
                %v603 = vld [vmem:[%s401 + $0x640] sm:$0xff]
                %604 = vst [vmem:[%s402 + $0x320] sm:$0xff] %v603
                %v605 = vld [vmem:[%s401 + $0x648] sm:$0xff]
                %606 = vst [vmem:[%s402 + $0x328] sm:$0xff] %v605
                %v607 = vld [vmem:[%s401 + $0x650] sm:$0xff]
                %608 = vst [vmem:[%s402 + $0x330] sm:$0xff] %v607
                %v609 = vld [vmem:[%s401 + $0x658] sm:$0xff]
                %610 = vst [vmem:[%s402 + $0x338] sm:$0xff] %v609
                %v611 = vld [vmem:[%s401 + $0x680] sm:$0xff]
                %612 = vst [vmem:[%s402 + $0x340] sm:$0xff] %v611
                %v613 = vld [vmem:[%s401 + $0x688] sm:$0xff]
                %614 = vst [vmem:[%s402 + $0x348] sm:$0xff] %v613
                %v615 = vld [vmem:[%s401 + $0x690] sm:$0xff]
                %616 = vst [vmem:[%s402 + $0x350] sm:$0xff] %v615
                %v617 = vld [vmem:[%s401 + $0x698] sm:$0xff]
                %618 = vst [vmem:[%s402 + $0x358] sm:$0xff] %v617
                %v619 = vld [vmem:[%s401 + $0x6c0] sm:$0xff]
                %620 = vst [vmem:[%s402 + $0x360] sm:$0xff] %v619
                %v621 = vld [vmem:[%s401 + $0x6c8] sm:$0xff]
                %622 = vst [vmem:[%s402 + $0x368] sm:$0xff] %v621
                %v623 = vld [vmem:[%s401 + $0x6d0] sm:$0xff]
                %624 = vst [vmem:[%s402 + $0x370] sm:$0xff] %v623
                %v625 = vld [vmem:[%s401 + $0x6d8] sm:$0xff]
                %626 = vst [vmem:[%s402 + $0x378] sm:$0xff] %v625
                %v627 = vld [vmem:[%s401 + $0x700] sm:$0xff]
                %628 = vst [vmem:[%s402 + $0x380] sm:$0xff] %v627
                %v629 = vld [vmem:[%s401 + $0x708] sm:$0xff]
                %630 = vst [vmem:[%s402 + $0x388] sm:$0xff] %v629
                %v631 = vld [vmem:[%s401 + $0x710] sm:$0xff]
                %632 = vst [vmem:[%s402 + $0x390] sm:$0xff] %v631
                %v633 = vld [vmem:[%s401 + $0x718] sm:$0xff]
                %634 = vst [vmem:[%s402 + $0x398] sm:$0xff] %v633
                %v635 = vld [vmem:[%s401 + $0x740] sm:$0xff]
                %636 = vst [vmem:[%s402 + $0x3a0] sm:$0xff] %v635
                %v637 = vld [vmem:[%s401 + $0x748] sm:$0xff]
                %638 = vst [vmem:[%s402 + $0x3a8] sm:$0xff] %v637
                %v639 = vld [vmem:[%s401 + $0x750] sm:$0xff]
                %640 = vst [vmem:[%s402 + $0x3b0] sm:$0xff] %v639
                %v641 = vld [vmem:[%s401 + $0x758] sm:$0xff]
                %642 = vst [vmem:[%s402 + $0x3b8] sm:$0xff] %v641
              $region85: #{_lambda_.1} parent=79 // loop_footer
                %s400 = sadd.s32 1, %s396
              $region86: #{_lambda_.1} parent=79 // loop_footer_branch
                %395 = sbr.rel target = $region82
              $region87: #{_lambda_.1} parent=79 // loop_exit
                _
            $region80: #{_lambda_.1} parent=71 // pred_fallthru
              _
          $region72: #{_lambda_.1} parent=67 // pred_fallthru
            _
          %895 = vnop
        $region68: #{_lambda_.1} parent=63 // pred_fallthru
          _
      $region64: #{_lambda_.1} parent=5 // pred_fallthru
        _
      %p896 = scmp.le.s32.totalorder 1, %s19
      %p897 = scmp.lt.s32.totalorder %s19, 3
      %p898 = pnand %p896, %p897
      %p899 = pneg %p898
      // Predicated region
      $region103: #{_lambda_.1} parent=5 // pred_check
        _
      $region104: #{_lambda_.1} parent=5 // pred_check_branch
        %901 = sbr.rel (%p898) target = $region106
      $region105: #{_lambda_.1} parent=5 // pred_region
        %s902 = ssub.s32 %s19, 1
        %s903 = sand.u32 %s32, 1
        %s904 = sand.u32 %s32, 1
        %s905 = smul.addr %s904, 960
        %s906 = scalar_lea.vmem [#allocation2], %s905
        // Predicated region
        $region107: #{_lambda_.1} parent=105 // pred_check
          %p907 = pneg %p45
        $region108: #{_lambda_.1} parent=105 // pred_check_branch
          %909 = sbr.rel (%p907) target = $region110
        $region109: #{_lambda_.1} parent=105 // pred_region
          _
        $region110: #{_lambda_.1} parent=105 // pred_fallthru
          _
        %s910 = sand.u32 %s32, 1
        %s911 = sand.u32 %s32, 1
        %s912 = smul.addr %s911, 960
        %s913 = scalar_lea.vmem [#allocation2], %s912
        %p914 = pneg %p45
        %p915 = pneg %p42
        %p916 = pneg %p66
        %p917 = pneg %p63
        %p918 = pneg %p87
        %p919 = pneg %p84
        %p920 = pneg %p108
        %p921 = pneg %p105
        %p922 = pneg %p129
        %p923 = pneg %p126
        %p924 = pneg %p150
        %p925 = pneg %p147
        %p926 = pneg %p171
        %p927 = pneg %p168
        %p928 = pneg %p192
        %p929 = pneg %p189
        %p930 = pneg %p213
        %p931 = pneg %p210
        %p932 = pneg %p234
        %p933 = pneg %p231
        %p934 = pneg %p255
        %p935 = pneg %p252
        %p936 = pneg %p276
        %p937 = pneg %p273
        %p938 = pneg %p297
        %p939 = pneg %p294
        %p940 = pneg %p323
        %p941 = pneg %p320
        %s942 = smul.u32 4, %s24
        %p943 = scmp.lt.s32.totalorder %s942, 7
        %s944 = scalar_select %p943, %s942, 7
        %s945 = smul.addr %s944, 8
        %s946 = scalar_lea.vmem %s13, %s945
        %s947 = smul.u32 4, %s24
        %s948 = smul.u32 4, %s24
        %p949 = scmp.lt.s32.totalorder %s948, 7
        %s950 = scalar_select %p949, %s948, 7
        %s951 = smul.addr %s950, 8
        %s952 = scalar_lea.vmem %s13, %s951
        %s953 = smul.u32 4, %s24
        %v955 = vld [vmem:[%s906] sm:$0xff]
        %v956 = vld [vmem:[%s906 + $0x8] sm:$0xff]
        %v957 = vld [vmem:[%s906 + $0x10] sm:$0xff]
        %v958 = vld [vmem:[%s906 + $0x18] sm:$0xff]
        %v959 = vld [vmem:[%s906 + $0x20] sm:$0xff]
        %v960 = vld [vmem:[%s906 + $0x28] sm:$0xff]
        %v961 = vld [vmem:[%s906 + $0x30] sm:$0xff]
        %v962 = vld [vmem:[%s906 + $0x38] sm:$0xff]
        %v963 = vld [vmem:[%s906 + $0x40] sm:$0xff]
        %v964 = vld [vmem:[%s906 + $0x48] sm:$0xff]
        %v965 = vld [vmem:[%s906 + $0x50] sm:$0xff]
        %v966 = vld [vmem:[%s906 + $0x58] sm:$0xff]
        %v967 = vld [vmem:[%s906 + $0x60] sm:$0xff]
        %v968 = vld [vmem:[%s906 + $0x68] sm:$0xff]
        %v969 = vld [vmem:[%s906 + $0x70] sm:$0xff]
        %v970 = vld [vmem:[%s906 + $0x78] sm:$0xff]
        %v971 = vld [vmem:[%s906 + $0x80] sm:$0xff]
        %v972 = vld [vmem:[%s906 + $0x88] sm:$0xff]
        %v973 = vld [vmem:[%s906 + $0x90] sm:$0xff]
        %v974 = vld [vmem:[%s906 + $0x98] sm:$0xff]
        %v975 = vld [vmem:[%s906 + $0xa0] sm:$0xff]
        %v976 = vld [vmem:[%s906 + $0xa8] sm:$0xff]
        %v977 = vld [vmem:[%s906 + $0xb0] sm:$0xff]
        %v978 = vld [vmem:[%s906 + $0xb8] sm:$0xff]
        %v979 = vld [vmem:[%s906 + $0xc0] sm:$0xff]
        %v980 = vld [vmem:[%s906 + $0xc8] sm:$0xff]
        %v981 = vld [vmem:[%s906 + $0xd0] sm:$0xff]
        %v982 = vld [vmem:[%s906 + $0xd8] sm:$0xff]
        %v983 = vld [vmem:[%s906 + $0xe0] sm:$0xff]
        %v984 = vld [vmem:[%s906 + $0xe8] sm:$0xff]
        %v985 = vld [vmem:[%s906 + $0xf0] sm:$0xff]
        %v986 = vld [vmem:[%s906 + $0xf8] sm:$0xff]
        %v987 = vld [vmem:[%s906 + $0x100] sm:$0xff]
        %v988 = vld [vmem:[%s906 + $0x108] sm:$0xff]
        %v989 = vld [vmem:[%s906 + $0x110] sm:$0xff]
        %v990 = vld [vmem:[%s906 + $0x118] sm:$0xff]
        %v991 = vld [vmem:[%s906 + $0x120] sm:$0xff]
        %v992 = vld [vmem:[%s906 + $0x128] sm:$0xff]
        %v993 = vld [vmem:[%s906 + $0x130] sm:$0xff]
        %v994 = vld [vmem:[%s906 + $0x138] sm:$0xff]
        %v995 = vld [vmem:[%s906 + $0x140] sm:$0xff]
        %v996 = vld [vmem:[%s906 + $0x148] sm:$0xff]
        %v997 = vld [vmem:[%s906 + $0x150] sm:$0xff]
        %v998 = vld [vmem:[%s906 + $0x158] sm:$0xff]
        %v999 = vld [vmem:[%s906 + $0x160] sm:$0xff]
        %v1000 = vld [vmem:[%s906 + $0x168] sm:$0xff]
        %v1001 = vld [vmem:[%s906 + $0x170] sm:$0xff]
        %v1002 = vld [vmem:[%s906 + $0x178] sm:$0xff]
        %v1003 = vld [vmem:[%s906 + $0x180] sm:$0xff]
        %v1004 = vld [vmem:[%s906 + $0x188] sm:$0xff]
        %v1005 = vld [vmem:[%s906 + $0x190] sm:$0xff]
        %v1006 = vld [vmem:[%s906 + $0x198] sm:$0xff]
        %v1007 = vld [vmem:[%s906 + $0x1a0] sm:$0xff]
        %v1008 = vld [vmem:[%s906 + $0x1a8] sm:$0xff]
        %v1009 = vld [vmem:[%s906 + $0x1b0] sm:$0xff]
        %v1010 = vld [vmem:[%s906 + $0x1b8] sm:$0xff]
        %v1011 = vld [vmem:[%s906 + $0x1c0] sm:$0xff]
        %v1012 = vld [vmem:[%s906 + $0x1c8] sm:$0xff]
        %v1013 = vld [vmem:[%s906 + $0x1d0] sm:$0xff]
        %v1014 = vld [vmem:[%s906 + $0x1d8] sm:$0xff]
        %v1015 = vld [vmem:[%s906 + $0x1e0] sm:$0xff]
        %v1016 = vld [vmem:[%s906 + $0x1e8] sm:$0xff]
        %v1017 = vld [vmem:[%s906 + $0x1f0] sm:$0xff]
        %v1018 = vld [vmem:[%s906 + $0x1f8] sm:$0xff]
        %v1019 = vld [vmem:[%s906 + $0x200] sm:$0xff]
        %v1020 = vld [vmem:[%s906 + $0x208] sm:$0xff]
        %v1021 = vld [vmem:[%s906 + $0x210] sm:$0xff]
        %v1022 = vld [vmem:[%s906 + $0x218] sm:$0xff]
        %v1023 = vld [vmem:[%s906 + $0x220] sm:$0xff]
        %v1024 = vld [vmem:[%s906 + $0x228] sm:$0xff]
        %v1025 = vld [vmem:[%s906 + $0x230] sm:$0xff]
        %v1026 = vld [vmem:[%s906 + $0x238] sm:$0xff]
        %v1027 = vld [vmem:[%s906 + $0x240] sm:$0xff]
        %v1028 = vld [vmem:[%s906 + $0x248] sm:$0xff]
        %v1029 = vld [vmem:[%s906 + $0x250] sm:$0xff]
        %v1030 = vld [vmem:[%s906 + $0x258] sm:$0xff]
        %v1031 = vld [vmem:[%s906 + $0x260] sm:$0xff]
        %v1032 = vld [vmem:[%s906 + $0x268] sm:$0xff]
        %v1033 = vld [vmem:[%s906 + $0x270] sm:$0xff]
        %v1034 = vld [vmem:[%s906 + $0x278] sm:$0xff]
        %v1035 = vld [vmem:[%s906 + $0x280] sm:$0xff]
        %v1036 = vld [vmem:[%s906 + $0x288] sm:$0xff]
        %v1037 = vld [vmem:[%s906 + $0x290] sm:$0xff]
        %v1038 = vld [vmem:[%s906 + $0x298] sm:$0xff]
        %v1039 = vld [vmem:[%s906 + $0x2a0] sm:$0xff]
        %v1040 = vld [vmem:[%s906 + $0x2a8] sm:$0xff]
        %v1041 = vld [vmem:[%s906 + $0x2b0] sm:$0xff]
        %v1042 = vld [vmem:[%s906 + $0x2b8] sm:$0xff]
        %v1043 = vld [vmem:[%s906 + $0x2c0] sm:$0xff]
        %v1044 = vld [vmem:[%s906 + $0x2c8] sm:$0xff]
        %v1045 = vld [vmem:[%s906 + $0x2d0] sm:$0xff]
        %v1046 = vld [vmem:[%s906 + $0x2d8] sm:$0xff]
        %v1047 = vld [vmem:[%s906 + $0x2e0] sm:$0xff]
        %v1048 = vld [vmem:[%s906 + $0x2e8] sm:$0xff]
        %v1049 = vld [vmem:[%s906 + $0x2f0] sm:$0xff]
        %v1050 = vld [vmem:[%s906 + $0x2f8] sm:$0xff]
        %v1051 = vld [vmem:[%s906 + $0x300] sm:$0xff]
        %v1052 = vld [vmem:[%s906 + $0x308] sm:$0xff]
        %v1053 = vld [vmem:[%s906 + $0x310] sm:$0xff]
        %v1054 = vld [vmem:[%s906 + $0x318] sm:$0xff]
        %v1055 = vld [vmem:[%s906 + $0x320] sm:$0xff]
        %v1056 = vld [vmem:[%s906 + $0x328] sm:$0xff]
        %v1057 = vld [vmem:[%s906 + $0x330] sm:$0xff]
        %v1058 = vld [vmem:[%s906 + $0x338] sm:$0xff]
        %v1059 = vld [vmem:[%s906 + $0x340] sm:$0xff]
        %v1060 = vld [vmem:[%s906 + $0x348] sm:$0xff]
        %v1061 = vld [vmem:[%s906 + $0x350] sm:$0xff]
        %v1062 = vld [vmem:[%s906 + $0x358] sm:$0xff]
        %v1063 = vld [vmem:[%s906 + $0x360] sm:$0xff]
        %v1064 = vld [vmem:[%s906 + $0x368] sm:$0xff]
        %v1065 = vld [vmem:[%s906 + $0x370] sm:$0xff]
        %v1066 = vld [vmem:[%s906 + $0x378] sm:$0xff]
        %v1067 = vld [vmem:[%s906 + $0x380] sm:$0xff]
        %v1068 = vld [vmem:[%s906 + $0x388] sm:$0xff]
        %v1069 = vld [vmem:[%s906 + $0x390] sm:$0xff]
        %v1070 = vld [vmem:[%s906 + $0x398] sm:$0xff]
        %v1071 = vld [vmem:[%s906 + $0x3a0] sm:$0xff]
        %v1072 = vld [vmem:[%s906 + $0x3a8] sm:$0xff]
        %v1073 = vld [vmem:[%s906 + $0x3b0] sm:$0xff]
        %v1074 = vld [vmem:[%s906 + $0x3b8] sm:$0xff]
        %v1075 = vpack.c.bf16 %v956, %v955
        %v1076 = vpack.c.bf16 %v958, %v957
        %v1077 = vpack.c.bf16 %v960, %v959
        %v1078 = vpack.c.bf16 %v962, %v961
        %v1079 = vpack.c.bf16 %v964, %v963
        %v1080 = vpack.c.bf16 %v966, %v965
        %v1081 = vpack.c.bf16 %v968, %v967
        %v1082 = vpack.c.bf16 %v970, %v969
        %v1083 = vpack.c.bf16 %v972, %v971
        %v1084 = vpack.c.bf16 %v974, %v973
        %v1085 = vpack.c.bf16 %v976, %v975
        %v1086 = vpack.c.bf16 %v978, %v977
        %v1087 = vpack.c.bf16 %v980, %v979
        %v1088 = vpack.c.bf16 %v982, %v981
        %v1089 = vpack.c.bf16 %v984, %v983
        %v1090 = vpack.c.bf16 %v986, %v985
        %v1091 = vpack.c.bf16 %v988, %v987
        %v1092 = vpack.c.bf16 %v990, %v989
        %v1093 = vpack.c.bf16 %v992, %v991
        %v1094 = vpack.c.bf16 %v994, %v993
        %v1095 = vpack.c.bf16 %v996, %v995
        %v1096 = vpack.c.bf16 %v998, %v997
        %v1097 = vpack.c.bf16 %v1000, %v999
        %v1098 = vpack.c.bf16 %v1002, %v1001
        %v1099 = vpack.c.bf16 %v1004, %v1003
        %v1100 = vpack.c.bf16 %v1006, %v1005
        %v1101 = vpack.c.bf16 %v1008, %v1007
        %v1102 = vpack.c.bf16 %v1010, %v1009
        %v1103 = vpack.c.bf16 %v1012, %v1011
        %v1104 = vpack.c.bf16 %v1014, %v1013
        %v1105 = vpack.c.bf16 %v1016, %v1015
        %v1106 = vpack.c.bf16 %v1018, %v1017
        %v1107 = vpack.c.bf16 %v1020, %v1019
        %v1108 = vpack.c.bf16 %v1022, %v1021
        %v1109 = vpack.c.bf16 %v1024, %v1023
        %v1110 = vpack.c.bf16 %v1026, %v1025
        %v1111 = vpack.c.bf16 %v1028, %v1027
        %v1112 = vpack.c.bf16 %v1030, %v1029
        %v1113 = vpack.c.bf16 %v1032, %v1031
        %v1114 = vpack.c.bf16 %v1034, %v1033
        %v1115 = vpack.c.bf16 %v1036, %v1035
        %v1116 = vpack.c.bf16 %v1038, %v1037
        %v1117 = vpack.c.bf16 %v1040, %v1039
        %v1118 = vpack.c.bf16 %v1042, %v1041
        %v1119 = vpack.c.bf16 %v1044, %v1043
        %v1120 = vpack.c.bf16 %v1046, %v1045
        %v1121 = vpack.c.bf16 %v1048, %v1047
        %v1122 = vpack.c.bf16 %v1050, %v1049
        %v1123 = vpack.c.bf16 %v1052, %v1051
        %v1124 = vpack.c.bf16 %v1054, %v1053
        %v1125 = vpack.c.bf16 %v1056, %v1055
        %v1126 = vpack.c.bf16 %v1058, %v1057
        %v1127 = vpack.c.bf16 %v1060, %v1059
        %v1128 = vpack.c.bf16 %v1062, %v1061
        %v1129 = vpack.c.bf16 %v1064, %v1063
        %v1130 = vpack.c.bf16 %v1066, %v1065
        %v1131 = vpack.c.bf16 %v1068, %v1067
        %v1132 = vpack.c.bf16 %v1070, %v1069
        %v1133 = vpack.c.bf16 %v1072, %v1071
        %v1134 = vpack.c.bf16 %v1074, %v1073
        %v1135 = vld [vmem:[%s1] sm:$0xff]
        %v1136 = vld [vmem:[%s1 + $0x8] sm:$0xff]
        %v1137 = vld [vmem:[%s1 + $0x10] sm:$0xff]
        %v1138 = vld [vmem:[%s1 + $0x18] sm:$0x77]
        %s1139 = scalar_lea.vmem %s1, 32
        %v1140 = vld [vmem:[%s1139] sm:$0xff]
        %v1141 = vld [vmem:[%s1139 + $0x8] sm:$0xff]
        %v1142 = vld [vmem:[%s1139 + $0x10] sm:$0xff]
        %v1143 = vld [vmem:[%s1139 + $0x18] sm:$0x77]
        %v1148 = vunpack.c.l.b16 %v1140
        %v1149 = vunpack.c.h.b16 %v1140
        %v1150 = vunpack.c.l.b16 %v1141
        %v1151 = vunpack.c.h.b16 %v1141
        %v1152 = vunpack.c.l.b16 %v1142
        %v1153 = vunpack.c.h.b16 %v1142
        %v1154 = vunpack.c.l.b16 %v1143
        %v1155 = vunpack.c.h.b16 %v1143
        %v1156 = vpack.c.b16 %v1150, %v1148
        %v1157 = vpack.c.b16 %v1151, %v1149
        %v1158 = vpack.c.b16 %v1154, %v1152
        %v1159 = vpack.c.b16 %v1155, %v1153
        %vm1162 = vcmask 244736
        %v1164 = vsel %vm1162, %v1077, 0
        %v1167 = vsel %vm1162, %v1078, 0
        %v1170 = vsel %vm1162, %v1079, 0
        %v1173 = vsel %vm1162, %v1080, 0
        %v1176 = vsel %vm1162, %v1081, 0
        %v1179 = vsel %vm1162, %v1082, 0
        %v1182 = vsel %vm1162, %v1083, 0
        %v1185 = vsel %vm1162, %v1084, 0
        %v1188 = vsel %vm1162, %v1085, 0
        %v1191 = vsel %vm1162, %v1086, 0
        %v1194 = vsel %vm1162, %v1087, 0
        %v1197 = vsel %vm1162, %v1088, 0
        %v1200 = vsel %vm1162, %v1089, 0
        %v1203 = vsel %vm1162, %v1090, 0
        %v1206 = vsel %vm1162, %v1091, 0
        %v1209 = vsel %vm1162, %v1092, 0
        %v1212 = vsel %vm1162, %v1093, 0
        %v1215 = vsel %vm1162, %v1094, 0
        %v1218 = vsel %vm1162, %v1095, 0
        %v1221 = vsel %vm1162, %v1096, 0
        %v1224 = vsel %vm1162, %v1097, 0
        %v1227 = vsel %vm1162, %v1098, 0
        %v1230 = vsel %vm1162, %v1099, 0
        %v1233 = vsel %vm1162, %v1100, 0
        %v1236 = vsel %vm1162, %v1101, 0
        %v1239 = vsel %vm1162, %v1102, 0
        %v1242 = vsel %vm1162, %v1103, 0
        %v1245 = vsel %vm1162, %v1104, 0
        %v1248 = vsel %vm1162, %v1105, 0
        %v1251 = vsel %vm1162, %v1106, 0
        %v1254 = vsel %vm1162, %v1107, 0
        %v1257 = vsel %vm1162, %v1108, 0
        %v1260 = vsel %vm1162, %v1109, 0
        %v1263 = vsel %vm1162, %v1110, 0
        %v1266 = vsel %vm1162, %v1111, 0
        %v1269 = vsel %vm1162, %v1112, 0
        %v1272 = vsel %vm1162, %v1113, 0
        %v1275 = vsel %vm1162, %v1114, 0
        %v1278 = vsel %vm1162, %v1115, 0
        %v1281 = vsel %vm1162, %v1116, 0
        %v1284 = vsel %vm1162, %v1117, 0
        %v1287 = vsel %vm1162, %v1118, 0
        %v1290 = vsel %vm1162, %v1119, 0
        %v1293 = vsel %vm1162, %v1120, 0
        %v1296 = vsel %vm1162, %v1121, 0
        %v1299 = vsel %vm1162, %v1122, 0
        %v1302 = vsel %vm1162, %v1123, 0
        %v1305 = vsel %vm1162, %v1124, 0
        %v1308 = vsel %vm1162, %v1125, 0
        %v1311 = vsel %vm1162, %v1126, 0
        %v1314 = vsel %vm1162, %v1127, 0
        %v1317 = vsel %vm1162, %v1128, 0
        %v1320 = vsel %vm1162, %v1129, 0
        %v1323 = vsel %vm1162, %v1130, 0
        %v1326 = vsel %vm1162, %v1131, 0
        %v1329 = vsel %vm1162, %v1132, 0
        %vm1331 = vcmask 1046528
        %v1333 = vsel %vm1331, %v1158, 0
        %v1336 = vsel %vm1331, %v1159, 0
        %1338 = vmatprep.subr.bf16.mxu0 %v1157
        %1339 = vmatpush1.bf16.msra.mxu0 %v1156
        %1340 = vmatprep.subr.bf16.mxu0 %v1336
        %1341 = vmatpush1.bf16.msra.mxu0 %v1333
        %1342 = vmatprep.subr.bf16.mxu0 0
        %1343 = vmatpush1.bf16.msra.mxu0 0
        %1344 = vmatprep.subr.bf16.mxu0 0
        %1345 = vmatpush1.bf16.msra.mxu0 0
        %1346 = vmatprep.subr.bf16.mxu0 0
        %1347 = vmatpush1.bf16.msra.mxu0 0
        %1348 = vmatprep.subr.bf16.mxu0 0
        %1349 = vmatpush1.bf16.msra.mxu0 0
        %1350 = vmatprep.subr.bf16.mxu0 0
        %1351 = vmatpush1.bf16.msra.mxu0 0
        %1352 = vmatprep.subr.bf16.mxu0 0
        %1353 = vmatpush1.bf16.msra.mxu0 0
        %1354 = vmatprep.subr.bf16.mxu0 0
        %1355 = vmatpush1.bf16.msra.mxu0 0
        %1356 = vmatprep.subr.bf16.mxu0 0
        %1357 = vmatpush1.bf16.msra.mxu0 0
        %1358 = vmatprep.subr.bf16.mxu0 0
        %1359 = vmatpush1.bf16.msra.mxu0 0
        %1360 = vmatprep.subr.bf16.mxu0 0
        %1361 = vmatpush1.bf16.msra.mxu0 0
        %1362 = vmatprep.subr.bf16.mxu0 0
        %1363 = vmatpush1.bf16.msra.mxu0 0
        %1364 = vmatprep.subr.bf16.mxu0 0
        %1365 = vmatpush1.bf16.msra.mxu0 0
        %1366 = vmatprep.subr.bf16.mxu0 0
        %1367 = vmatpush1.bf16.msra.mxu0 0
        %1368 = vmatprep.subr.bf16.mxu0 0
        %1369 = vmatpush1.bf16.msra.mxu0 0
        %1370 = vmatprep.mubr.bf16.mxu0 0
        %1371 = vmatmul.mubr.bf16.gmra.mrb[0].mxu0 %v1164
        %v1372 = vpop.f32.mrb[0].mxu0
        %v1373 = vadd.f32 0.0, %v1372
        %v1374 = vpop.f32.mrb[0].mxu0
        %v1375 = vadd.f32 0.0, %v1374
        %v1376 = vpop.f32.mrb[0].mxu0
        %v1377 = vadd.f32 0.0, %v1376
        %v1378 = vpop.f32.mrb[0].mxu0
        %v1379 = vadd.f32 0.0, %v1378
        %1380 = vmatprep.mubr.bf16.mxu0 0
        %1381 = vmatmul.mubr.bf16.gmra.mrb[0].mxu0 %v1167
        %v1382 = vpop.f32.mrb[0].mxu0
        %v1383 = vadd.f32 0.0, %v1382
        %v1384 = vpop.f32.mrb[0].mxu0
        %v1385 = vadd.f32 0.0, %v1384
        %v1386 = vpop.f32.mrb[0].mxu0
        %v1387 = vadd.f32 0.0, %v1386
        %v1388 = vpop.f32.mrb[0].mxu0
        %v1389 = vadd.f32 0.0, %v1388
        %1390 = vmatprep.mubr.bf16.mxu0 0
        %1391 = vmatmul.mubr.bf16.gmra.mrb[0].mxu0 %v1170
        %v1392 = vpop.f32.mrb[0].mxu0
        %v1393 = vadd.f32 0.0, %v1392
        %v1394 = vpop.f32.mrb[0].mxu0
        %v1395 = vadd.f32 0.0, %v1394
        %v1396 = vpop.f32.mrb[0].mxu0
        %v1397 = vadd.f32 0.0, %v1396
        %v1398 = vpop.f32.mrb[0].mxu0
        %v1399 = vadd.f32 0.0, %v1398
        %1400 = vmatprep.mubr.bf16.mxu0 0
        %1401 = vmatmul.mubr.bf16.gmra.mrb[0].mxu0 %v1173
        %v1402 = vpop.f32.mrb[0].mxu0
        %v1403 = vadd.f32 0.0, %v1402
        %v1404 = vpop.f32.mrb[0].mxu0
        %v1405 = vadd.f32 0.0, %v1404
        %v1406 = vpop.f32.mrb[0].mxu0
        %v1407 = vadd.f32 0.0, %v1406
        %v1408 = vpop.f32.mrb[0].mxu0
        %v1409 = vadd.f32 0.0, %v1408
        %1410 = vmatprep.mubr.bf16.mxu0 0
        %1411 = vmatmul.mubr.bf16.gmra.mrb[0].mxu0 %v1176
        %v1412 = vpop.f32.mrb[0].mxu0
        %v1413 = vadd.f32 0.0, %v1412
        %v1414 = vpop.f32.mrb[0].mxu0
        %v1415 = vadd.f32 0.0, %v1414
        %v1416 = vpop.f32.mrb[0].mxu0
        %v1417 = vadd.f32 0.0, %v1416
        %v1418 = vpop.f32.mrb[0].mxu0
        %v1419 = vadd.f32 0.0, %v1418
        %1420 = vmatprep.mubr.bf16.mxu0 0
        %1421 = vmatmul.mubr.bf16.gmra.mrb[0].mxu0 %v1179
        %v1422 = vpop.f32.mrb[0].mxu0
        %v1423 = vadd.f32 0.0, %v1422
        %v1424 = vpop.f32.mrb[0].mxu0
        %v1425 = vadd.f32 0.0, %v1424
        %v1426 = vpop.f32.mrb[0].mxu0
        %v1427 = vadd.f32 0.0, %v1426
        %v1428 = vpop.f32.mrb[0].mxu0
        %v1429 = vadd.f32 0.0, %v1428
        %1430 = vmatprep.mubr.bf16.mxu0 0
        %1431 = vmatmul.mubr.bf16.gmra.mrb[0].mxu0 %v1182
        %v1432 = vpop.f32.mrb[0].mxu0
        %v1433 = vadd.f32 0.0, %v1432
        %v1434 = vpop.f32.mrb[0].mxu0
        %v1435 = vadd.f32 0.0, %v1434
        %v1436 = vpop.f32.mrb[0].mxu0
        %v1437 = vadd.f32 0.0, %v1436
        %v1438 = vpop.f32.mrb[0].mxu0
        %v1439 = vadd.f32 0.0, %v1438
        %1440 = vmatprep.mubr.bf16.mxu0 0
        %1441 = vmatmul.mubr.bf16.gmra.mrb[0].mxu0 %v1185
        %v1442 = vpop.f32.mrb[0].mxu0
        %v1443 = vadd.f32 0.0, %v1442
        %v1444 = vpop.f32.mrb[0].mxu0
        %v1445 = vadd.f32 0.0, %v1444
        %v1446 = vpop.f32.mrb[0].mxu0
        %v1447 = vadd.f32 0.0, %v1446
        %v1448 = vpop.f32.mrb[0].mxu0
        %v1449 = vadd.f32 0.0, %v1448
        %1450 = vmatprep.mubr.bf16.mxu0 0
        %1451 = vmatmul.mubr.bf16.gmra.mrb[0].mxu0 %v1188
        %v1452 = vpop.f32.mrb[0].mxu0
        %v1453 = vadd.f32 0.0, %v1452
        %v1454 = vpop.f32.mrb[0].mxu0
        %v1455 = vadd.f32 0.0, %v1454
        %v1456 = vpop.f32.mrb[0].mxu0
        %v1457 = vadd.f32 0.0, %v1456
        %v1458 = vpop.f32.mrb[0].mxu0
        %v1459 = vadd.f32 0.0, %v1458
        %1460 = vmatprep.mubr.bf16.mxu0 0
        %1461 = vmatmul.mubr.bf16.gmra.mrb[0].mxu0 %v1191
        %v1462 = vpop.f32.mrb[0].mxu0
        %v1463 = vadd.f32 0.0, %v1462
        %v1464 = vpop.f32.mrb[0].mxu0
        %v1465 = vadd.f32 0.0, %v1464
        %v1466 = vpop.f32.mrb[0].mxu0
        %v1467 = vadd.f32 0.0, %v1466
        %v1468 = vpop.f32.mrb[0].mxu0
        %v1469 = vadd.f32 0.0, %v1468
        %1470 = vmatprep.mubr.bf16.mxu0 0
        %1471 = vmatmul.mubr.bf16.gmra.mrb[0].mxu0 %v1194
        %v1472 = vpop.f32.mrb[0].mxu0
        %v1473 = vadd.f32 0.0, %v1472
        %v1474 = vpop.f32.mrb[0].mxu0
        %v1475 = vadd.f32 0.0, %v1474
        %v1476 = vpop.f32.mrb[0].mxu0
        %v1477 = vadd.f32 0.0, %v1476
        %v1478 = vpop.f32.mrb[0].mxu0
        %v1479 = vadd.f32 0.0, %v1478
        %1480 = vmatprep.mubr.bf16.mxu0 0
        %1481 = vmatmul.mubr.bf16.gmra.mrb[0].mxu0 %v1197
        %v1482 = vpop.f32.mrb[0].mxu0
        %v1483 = vadd.f32 0.0, %v1482
        %v1484 = vpop.f32.mrb[0].mxu0
        %v1485 = vadd.f32 0.0, %v1484
        %v1486 = vpop.f32.mrb[0].mxu0
        %v1487 = vadd.f32 0.0, %v1486
        %v1488 = vpop.f32.mrb[0].mxu0
        %v1489 = vadd.f32 0.0, %v1488
        %1490 = vmatprep.mubr.bf16.mxu0 0
        %1491 = vmatmul.mubr.bf16.gmra.mrb[0].mxu0 %v1200
        %v1492 = vpop.f32.mrb[0].mxu0
        %v1493 = vadd.f32 0.0, %v1492
        %v1494 = vpop.f32.mrb[0].mxu0
        %v1495 = vadd.f32 0.0, %v1494
        %v1496 = vpop.f32.mrb[0].mxu0
        %v1497 = vadd.f32 0.0, %v1496
        %v1498 = vpop.f32.mrb[0].mxu0
        %v1499 = vadd.f32 0.0, %v1498
        %1500 = vmatprep.mubr.bf16.mxu0 0
        %1501 = vmatmul.mubr.bf16.gmra.mrb[0].mxu0 %v1203
        %v1502 = vpop.f32.mrb[0].mxu0
        %v1503 = vadd.f32 0.0, %v1502
        %v1504 = vpop.f32.mrb[0].mxu0
        %v1505 = vadd.f32 0.0, %v1504
        %v1506 = vpop.f32.mrb[0].mxu0
        %v1507 = vadd.f32 0.0, %v1506
        %v1508 = vpop.f32.mrb[0].mxu0
        %v1509 = vadd.f32 0.0, %v1508
        %1510 = vmatprep.mubr.bf16.mxu0 0
        %1511 = vmatmul.mubr.bf16.gmra.mrb[0].mxu0 %v1206
        %v1512 = vpop.f32.mrb[0].mxu0
        %v1513 = vadd.f32 0.0, %v1512
        %v1514 = vpop.f32.mrb[0].mxu0
        %v1515 = vadd.f32 0.0, %v1514
        %v1516 = vpop.f32.mrb[0].mxu0
        %v1517 = vadd.f32 0.0, %v1516
        %v1518 = vpop.f32.mrb[0].mxu0
        %v1519 = vadd.f32 0.0, %v1518
        %1520 = vmatprep.mubr.bf16.mxu0 0
        %1521 = vmatmul.mubr.bf16.gmra.mrb[0].mxu0 %v1209
        %v1522 = vpop.f32.mrb[0].mxu0
        %v1523 = vadd.f32 0.0, %v1522
        %v1524 = vpop.f32.mrb[0].mxu0
        %v1525 = vadd.f32 0.0, %v1524
        %v1526 = vpop.f32.mrb[0].mxu0
        %v1527 = vadd.f32 0.0, %v1526
        %v1528 = vpop.f32.mrb[0].mxu0
        %v1529 = vadd.f32 0.0, %v1528
        %1530 = vmatprep.mubr.bf16.mxu0 0
        %1531 = vmatmul.mubr.bf16.gmra.mrb[0].mxu0 %v1212
        %v1532 = vpop.f32.mrb[0].mxu0
        %v1533 = vadd.f32 0.0, %v1532
        %v1534 = vpop.f32.mrb[0].mxu0
        %v1535 = vadd.f32 0.0, %v1534
        %v1536 = vpop.f32.mrb[0].mxu0
        %v1537 = vadd.f32 0.0, %v1536
        %v1538 = vpop.f32.mrb[0].mxu0
        %v1539 = vadd.f32 0.0, %v1538
        %1540 = vmatprep.mubr.bf16.mxu0 0
        %1541 = vmatmul.mubr.bf16.gmra.mrb[0].mxu0 %v1215
        %v1542 = vpop.f32.mrb[0].mxu0
        %v1543 = vadd.f32 0.0, %v1542
        %v1544 = vpop.f32.mrb[0].mxu0
        %v1545 = vadd.f32 0.0, %v1544
        %v1546 = vpop.f32.mrb[0].mxu0
        %v1547 = vadd.f32 0.0, %v1546
        %v1548 = vpop.f32.mrb[0].mxu0
        %v1549 = vadd.f32 0.0, %v1548
        %1550 = vmatprep.mubr.bf16.mxu0 0
        %1551 = vmatmul.mubr.bf16.gmra.mrb[0].mxu0 %v1218
        %v1552 = vpop.f32.mrb[0].mxu0
        %v1553 = vadd.f32 0.0, %v1552
        %v1554 = vpop.f32.mrb[0].mxu0
        %v1555 = vadd.f32 0.0, %v1554
        %v1556 = vpop.f32.mrb[0].mxu0
        %v1557 = vadd.f32 0.0, %v1556
        %v1558 = vpop.f32.mrb[0].mxu0
        %v1559 = vadd.f32 0.0, %v1558
        %1560 = vmatprep.mubr.bf16.mxu0 0
        %1561 = vmatmul.mubr.bf16.gmra.mrb[0].mxu0 %v1221
        %v1562 = vpop.f32.mrb[0].mxu0
        %v1563 = vadd.f32 0.0, %v1562
        %v1564 = vpop.f32.mrb[0].mxu0
        %v1565 = vadd.f32 0.0, %v1564
        %v1566 = vpop.f32.mrb[0].mxu0
        %v1567 = vadd.f32 0.0, %v1566
        %v1568 = vpop.f32.mrb[0].mxu0
        %v1569 = vadd.f32 0.0, %v1568
        %1570 = vmatprep.mubr.bf16.mxu0 0
        %1571 = vmatmul.mubr.bf16.gmra.mrb[0].mxu0 %v1224
        %v1572 = vpop.f32.mrb[0].mxu0
        %v1573 = vadd.f32 0.0, %v1572
        %v1574 = vpop.f32.mrb[0].mxu0
        %v1575 = vadd.f32 0.0, %v1574
        %v1576 = vpop.f32.mrb[0].mxu0
        %v1577 = vadd.f32 0.0, %v1576
        %v1578 = vpop.f32.mrb[0].mxu0
        %v1579 = vadd.f32 0.0, %v1578
        %1580 = vmatprep.mubr.bf16.mxu0 0
        %1581 = vmatmul.mubr.bf16.gmra.mrb[0].mxu0 %v1227
        %v1582 = vpop.f32.mrb[0].mxu0
        %v1583 = vadd.f32 0.0, %v1582
        %v1584 = vpop.f32.mrb[0].mxu0
        %v1585 = vadd.f32 0.0, %v1584
        %v1586 = vpop.f32.mrb[0].mxu0
        %v1587 = vadd.f32 0.0, %v1586
        %v1588 = vpop.f32.mrb[0].mxu0
        %v1589 = vadd.f32 0.0, %v1588
        %1590 = vmatprep.mubr.bf16.mxu0 0
        %1591 = vmatmul.mubr.bf16.gmra.mrb[0].mxu0 %v1230
        %v1592 = vpop.f32.mrb[0].mxu0
        %v1593 = vadd.f32 0.0, %v1592
        %v1594 = vpop.f32.mrb[0].mxu0
        %v1595 = vadd.f32 0.0, %v1594
        %v1596 = vpop.f32.mrb[0].mxu0
        %v1597 = vadd.f32 0.0, %v1596
        %v1598 = vpop.f32.mrb[0].mxu0
        %v1599 = vadd.f32 0.0, %v1598
        %1600 = vmatprep.mubr.bf16.mxu0 0
        %1601 = vmatmul.mubr.bf16.gmra.mrb[0].mxu0 %v1233
        %v1602 = vpop.f32.mrb[0].mxu0
        %v1603 = vadd.f32 0.0, %v1602
        %v1604 = vpop.f32.mrb[0].mxu0
        %v1605 = vadd.f32 0.0, %v1604
        %v1606 = vpop.f32.mrb[0].mxu0
        %v1607 = vadd.f32 0.0, %v1606
        %v1608 = vpop.f32.mrb[0].mxu0
        %v1609 = vadd.f32 0.0, %v1608
        %1610 = vmatprep.mubr.bf16.mxu0 0
        %1611 = vmatmul.mubr.bf16.gmra.mrb[0].mxu0 %v1236
        %v1612 = vpop.f32.mrb[0].mxu0
        %v1613 = vadd.f32 0.0, %v1612
        %v1614 = vpop.f32.mrb[0].mxu0
        %v1615 = vadd.f32 0.0, %v1614
        %v1616 = vpop.f32.mrb[0].mxu0
        %v1617 = vadd.f32 0.0, %v1616
        %v1618 = vpop.f32.mrb[0].mxu0
        %v1619 = vadd.f32 0.0, %v1618
        %1620 = vmatprep.mubr.bf16.mxu0 0
        %1621 = vmatmul.mubr.bf16.gmra.mrb[0].mxu0 %v1239
        %v1622 = vpop.f32.mrb[0].mxu0
        %v1623 = vadd.f32 0.0, %v1622
        %v1624 = vpop.f32.mrb[0].mxu0
        %v1625 = vadd.f32 0.0, %v1624
        %v1626 = vpop.f32.mrb[0].mxu0
        %v1627 = vadd.f32 0.0, %v1626
        %v1628 = vpop.f32.mrb[0].mxu0
        %v1629 = vadd.f32 0.0, %v1628
        %1630 = vmatprep.mubr.bf16.mxu0 0
        %1631 = vmatmul.mubr.bf16.gmra.mrb[0].mxu0 %v1242
        %v1632 = vpop.f32.mrb[0].mxu0
        %v1633 = vadd.f32 0.0, %v1632
        %v1634 = vpop.f32.mrb[0].mxu0
        %v1635 = vadd.f32 0.0, %v1634
        %v1636 = vpop.f32.mrb[0].mxu0
        %v1637 = vadd.f32 0.0, %v1636
        %v1638 = vpop.f32.mrb[0].mxu0
        %v1639 = vadd.f32 0.0, %v1638
        %1640 = vmatprep.mubr.bf16.mxu0 0
        %1641 = vmatmul.mubr.bf16.gmra.mrb[0].mxu0 %v1245
        %v1642 = vpop.f32.mrb[0].mxu0
        %v1643 = vadd.f32 0.0, %v1642
        %v1644 = vpop.f32.mrb[0].mxu0
        %v1645 = vadd.f32 0.0, %v1644
        %v1646 = vpop.f32.mrb[0].mxu0
        %v1647 = vadd.f32 0.0, %v1646
        %v1648 = vpop.f32.mrb[0].mxu0
        %v1649 = vadd.f32 0.0, %v1648
        %1650 = vmatprep.mubr.bf16.mxu0 0
        %1651 = vmatmul.mubr.bf16.gmra.mrb[0].mxu0 %v1248
        %v1652 = vpop.f32.mrb[0].mxu0
        %v1653 = vadd.f32 0.0, %v1652
        %v1654 = vpop.f32.mrb[0].mxu0
        %v1655 = vadd.f32 0.0, %v1654
        %v1656 = vpop.f32.mrb[0].mxu0
        %v1657 = vadd.f32 0.0, %v1656
        %v1658 = vpop.f32.mrb[0].mxu0
        %v1659 = vadd.f32 0.0, %v1658
        %1660 = vmatprep.mubr.bf16.mxu0 0
        %1661 = vmatmul.mubr.bf16.gmra.mrb[0].mxu0 %v1251
        %v1662 = vpop.f32.mrb[0].mxu0
        %v1663 = vadd.f32 0.0, %v1662
        %v1664 = vpop.f32.mrb[0].mxu0
        %v1665 = vadd.f32 0.0, %v1664
        %v1666 = vpop.f32.mrb[0].mxu0
        %v1667 = vadd.f32 0.0, %v1666
        %v1668 = vpop.f32.mrb[0].mxu0
        %v1669 = vadd.f32 0.0, %v1668
        %1670 = vmatprep.mubr.bf16.mxu0 0
        %1671 = vmatmul.mubr.bf16.gmra.mrb[0].mxu0 %v1254
        %v1672 = vpop.f32.mrb[0].mxu0
        %v1673 = vadd.f32 0.0, %v1672
        %v1674 = vpop.f32.mrb[0].mxu0
        %v1675 = vadd.f32 0.0, %v1674
        %v1676 = vpop.f32.mrb[0].mxu0
        %v1677 = vadd.f32 0.0, %v1676
        %v1678 = vpop.f32.mrb[0].mxu0
        %v1679 = vadd.f32 0.0, %v1678
        %1680 = vmatprep.mubr.bf16.mxu0 0
        %1681 = vmatmul.mubr.bf16.gmra.mrb[0].mxu0 %v1257
        %v1682 = vpop.f32.mrb[0].mxu0
        %v1683 = vadd.f32 0.0, %v1682
        %v1684 = vpop.f32.mrb[0].mxu0
        %v1685 = vadd.f32 0.0, %v1684
        %v1686 = vpop.f32.mrb[0].mxu0
        %v1687 = vadd.f32 0.0, %v1686
        %v1688 = vpop.f32.mrb[0].mxu0
        %v1689 = vadd.f32 0.0, %v1688
        %1690 = vmatprep.mubr.bf16.mxu0 0
        %1691 = vmatmul.mubr.bf16.gmra.mrb[0].mxu0 %v1260
        %v1692 = vpop.f32.mrb[0].mxu0
        %v1693 = vadd.f32 0.0, %v1692
        %v1694 = vpop.f32.mrb[0].mxu0
        %v1695 = vadd.f32 0.0, %v1694
        %v1696 = vpop.f32.mrb[0].mxu0
        %v1697 = vadd.f32 0.0, %v1696
        %v1698 = vpop.f32.mrb[0].mxu0
        %v1699 = vadd.f32 0.0, %v1698
        %1700 = vmatprep.mubr.bf16.mxu0 0
        %1701 = vmatmul.mubr.bf16.gmra.mrb[0].mxu0 %v1263
        %v1702 = vpop.f32.mrb[0].mxu0
        %v1703 = vadd.f32 0.0, %v1702
        %v1704 = vpop.f32.mrb[0].mxu0
        %v1705 = vadd.f32 0.0, %v1704
        %v1706 = vpop.f32.mrb[0].mxu0
        %v1707 = vadd.f32 0.0, %v1706
        %v1708 = vpop.f32.mrb[0].mxu0
        %v1709 = vadd.f32 0.0, %v1708
        %1710 = vmatprep.mubr.bf16.mxu0 0
        %1711 = vmatmul.mubr.bf16.gmra.mrb[0].mxu0 %v1266
        %v1712 = vpop.f32.mrb[0].mxu0
        %v1713 = vadd.f32 0.0, %v1712
        %v1714 = vpop.f32.mrb[0].mxu0
        %v1715 = vadd.f32 0.0, %v1714
        %v1716 = vpop.f32.mrb[0].mxu0
        %v1717 = vadd.f32 0.0, %v1716
        %v1718 = vpop.f32.mrb[0].mxu0
        %v1719 = vadd.f32 0.0, %v1718
        %1720 = vmatprep.mubr.bf16.mxu0 0
        %1721 = vmatmul.mubr.bf16.gmra.mrb[0].mxu0 %v1269
        %v1722 = vpop.f32.mrb[0].mxu0
        %v1723 = vadd.f32 0.0, %v1722
        %v1724 = vpop.f32.mrb[0].mxu0
        %v1725 = vadd.f32 0.0, %v1724
        %v1726 = vpop.f32.mrb[0].mxu0
        %v1727 = vadd.f32 0.0, %v1726
        %v1728 = vpop.f32.mrb[0].mxu0
        %v1729 = vadd.f32 0.0, %v1728
        %1730 = vmatprep.mubr.bf16.mxu0 0
        %1731 = vmatmul.mubr.bf16.gmra.mrb[0].mxu0 %v1272
        %v1732 = vpop.f32.mrb[0].mxu0
        %v1733 = vadd.f32 0.0, %v1732
        %v1734 = vpop.f32.mrb[0].mxu0
        %v1735 = vadd.f32 0.0, %v1734
        %v1736 = vpop.f32.mrb[0].mxu0
        %v1737 = vadd.f32 0.0, %v1736
        %v1738 = vpop.f32.mrb[0].mxu0
        %v1739 = vadd.f32 0.0, %v1738
        %1740 = vmatprep.mubr.bf16.mxu0 0
        %1741 = vmatmul.mubr.bf16.gmra.mrb[0].mxu0 %v1275
        %v1742 = vpop.f32.mrb[0].mxu0
        %v1743 = vadd.f32 0.0, %v1742
        %v1744 = vpop.f32.mrb[0].mxu0
        %v1745 = vadd.f32 0.0, %v1744
        %v1746 = vpop.f32.mrb[0].mxu0
        %v1747 = vadd.f32 0.0, %v1746
        %v1748 = vpop.f32.mrb[0].mxu0
        %v1749 = vadd.f32 0.0, %v1748
        %1750 = vmatprep.mubr.bf16.mxu0 0
        %1751 = vmatmul.mubr.bf16.gmra.mrb[0].mxu0 %v1278
        %v1752 = vpop.f32.mrb[0].mxu0
        %v1753 = vadd.f32 0.0, %v1752
        %v1754 = vpop.f32.mrb[0].mxu0
        %v1755 = vadd.f32 0.0, %v1754
        %v1756 = vpop.f32.mrb[0].mxu0
        %v1757 = vadd.f32 0.0, %v1756
        %v1758 = vpop.f32.mrb[0].mxu0
        %v1759 = vadd.f32 0.0, %v1758
        %1760 = vmatprep.mubr.bf16.mxu0 0
        %1761 = vmatmul.mubr.bf16.gmra.mrb[0].mxu0 %v1281
        %v1762 = vpop.f32.mrb[0].mxu0
        %v1763 = vadd.f32 0.0, %v1762
        %v1764 = vpop.f32.mrb[0].mxu0
        %v1765 = vadd.f32 0.0, %v1764
        %v1766 = vpop.f32.mrb[0].mxu0
        %v1767 = vadd.f32 0.0, %v1766
        %v1768 = vpop.f32.mrb[0].mxu0
        %v1769 = vadd.f32 0.0, %v1768
        %1770 = vmatprep.mubr.bf16.mxu0 0
        %1771 = vmatmul.mubr.bf16.gmra.mrb[0].mxu0 %v1284
        %v1772 = vpop.f32.mrb[0].mxu0
        %v1773 = vadd.f32 0.0, %v1772
        %v1774 = vpop.f32.mrb[0].mxu0
        %v1775 = vadd.f32 0.0, %v1774
        %v1776 = vpop.f32.mrb[0].mxu0
        %v1777 = vadd.f32 0.0, %v1776
        %v1778 = vpop.f32.mrb[0].mxu0
        %v1779 = vadd.f32 0.0, %v1778
        %1780 = vmatprep.mubr.bf16.mxu0 0
        %1781 = vmatmul.mubr.bf16.gmra.mrb[0].mxu0 %v1287
        %v1782 = vpop.f32.mrb[0].mxu0
        %v1783 = vadd.f32 0.0, %v1782
        %v1784 = vpop.f32.mrb[0].mxu0
        %v1785 = vadd.f32 0.0, %v1784
        %v1786 = vpop.f32.mrb[0].mxu0
        %v1787 = vadd.f32 0.0, %v1786
        %v1788 = vpop.f32.mrb[0].mxu0
        %v1789 = vadd.f32 0.0, %v1788
        %1790 = vmatprep.mubr.bf16.mxu0 0
        %1791 = vmatmul.mubr.bf16.gmra.mrb[0].mxu0 %v1290
        %v1792 = vpop.f32.mrb[0].mxu0
        %v1793 = vadd.f32 0.0, %v1792
        %v1794 = vpop.f32.mrb[0].mxu0
        %v1795 = vadd.f32 0.0, %v1794
        %v1796 = vpop.f32.mrb[0].mxu0
        %v1797 = vadd.f32 0.0, %v1796
        %v1798 = vpop.f32.mrb[0].mxu0
        %v1799 = vadd.f32 0.0, %v1798
        %1800 = vmatprep.mubr.bf16.mxu0 0
        %1801 = vmatmul.mubr.bf16.gmra.mrb[0].mxu0 %v1293
        %v1802 = vpop.f32.mrb[0].mxu0
        %v1803 = vadd.f32 0.0, %v1802
        %v1804 = vpop.f32.mrb[0].mxu0
        %v1805 = vadd.f32 0.0, %v1804
        %v1806 = vpop.f32.mrb[0].mxu0
        %v1807 = vadd.f32 0.0, %v1806
        %v1808 = vpop.f32.mrb[0].mxu0
        %v1809 = vadd.f32 0.0, %v1808
        %1810 = vmatprep.mubr.bf16.mxu0 0
        %1811 = vmatmul.mubr.bf16.gmra.mrb[0].mxu0 %v1296
        %v1812 = vpop.f32.mrb[0].mxu0
        %v1813 = vadd.f32 0.0, %v1812
        %v1814 = vpop.f32.mrb[0].mxu0
        %v1815 = vadd.f32 0.0, %v1814
        %v1816 = vpop.f32.mrb[0].mxu0
        %v1817 = vadd.f32 0.0, %v1816
        %v1818 = vpop.f32.mrb[0].mxu0
        %v1819 = vadd.f32 0.0, %v1818
        %1820 = vmatprep.mubr.bf16.mxu0 0
        %1821 = vmatmul.mubr.bf16.gmra.mrb[0].mxu0 %v1299
        %v1822 = vpop.f32.mrb[0].mxu0
        %v1823 = vadd.f32 0.0, %v1822
        %v1824 = vpop.f32.mrb[0].mxu0
        %v1825 = vadd.f32 0.0, %v1824
        %v1826 = vpop.f32.mrb[0].mxu0
        %v1827 = vadd.f32 0.0, %v1826
        %v1828 = vpop.f32.mrb[0].mxu0
        %v1829 = vadd.f32 0.0, %v1828
        %1830 = vmatprep.mubr.bf16.mxu0 0
        %1831 = vmatmul.mubr.bf16.gmra.mrb[0].mxu0 %v1302
        %v1832 = vpop.f32.mrb[0].mxu0
        %v1833 = vadd.f32 0.0, %v1832
        %v1834 = vpop.f32.mrb[0].mxu0
        %v1835 = vadd.f32 0.0, %v1834
        %v1836 = vpop.f32.mrb[0].mxu0
        %v1837 = vadd.f32 0.0, %v1836
        %v1838 = vpop.f32.mrb[0].mxu0
        %v1839 = vadd.f32 0.0, %v1838
        %1840 = vmatprep.mubr.bf16.mxu0 0
        %1841 = vmatmul.mubr.bf16.gmra.mrb[0].mxu0 %v1305
        %v1842 = vpop.f32.mrb[0].mxu0
        %v1843 = vadd.f32 0.0, %v1842
        %v1844 = vpop.f32.mrb[0].mxu0
        %v1845 = vadd.f32 0.0, %v1844
        %v1846 = vpop.f32.mrb[0].mxu0
        %v1847 = vadd.f32 0.0, %v1846
        %v1848 = vpop.f32.mrb[0].mxu0
        %v1849 = vadd.f32 0.0, %v1848
        %1850 = vmatprep.mubr.bf16.mxu0 0
        %1851 = vmatmul.mubr.bf16.gmra.mrb[0].mxu0 %v1308
        %v1852 = vpop.f32.mrb[0].mxu0
        %v1853 = vadd.f32 0.0, %v1852
        %v1854 = vpop.f32.mrb[0].mxu0
        %v1855 = vadd.f32 0.0, %v1854
        %v1856 = vpop.f32.mrb[0].mxu0
        %v1857 = vadd.f32 0.0, %v1856
        %v1858 = vpop.f32.mrb[0].mxu0
        %v1859 = vadd.f32 0.0, %v1858
        %1860 = vmatprep.mubr.bf16.mxu0 0
        %1861 = vmatmul.mubr.bf16.gmra.mrb[0].mxu0 %v1311
        %v1862 = vpop.f32.mrb[0].mxu0
        %v1863 = vadd.f32 0.0, %v1862
        %v1864 = vpop.f32.mrb[0].mxu0
        %v1865 = vadd.f32 0.0, %v1864
        %v1866 = vpop.f32.mrb[0].mxu0
        %v1867 = vadd.f32 0.0, %v1866
        %v1868 = vpop.f32.mrb[0].mxu0
        %v1869 = vadd.f32 0.0, %v1868
        %1870 = vmatprep.mubr.bf16.mxu0 0
        %1871 = vmatmul.mubr.bf16.gmra.mrb[0].mxu0 %v1314
        %v1872 = vpop.f32.mrb[0].mxu0
        %v1873 = vadd.f32 0.0, %v1872
        %v1874 = vpop.f32.mrb[0].mxu0
        %v1875 = vadd.f32 0.0, %v1874
        %v1876 = vpop.f32.mrb[0].mxu0
        %v1877 = vadd.f32 0.0, %v1876
        %v1878 = vpop.f32.mrb[0].mxu0
        %v1879 = vadd.f32 0.0, %v1878
        %1880 = vmatprep.mubr.bf16.mxu0 0
        %1881 = vmatmul.mubr.bf16.gmra.mrb[0].mxu0 %v1317
        %v1882 = vpop.f32.mrb[0].mxu0
        %v1883 = vadd.f32 0.0, %v1882
        %v1884 = vpop.f32.mrb[0].mxu0
        %v1885 = vadd.f32 0.0, %v1884
        %v1886 = vpop.f32.mrb[0].mxu0
        %v1887 = vadd.f32 0.0, %v1886
        %v1888 = vpop.f32.mrb[0].mxu0
        %v1889 = vadd.f32 0.0, %v1888
        %1890 = vmatprep.mubr.bf16.mxu0 0
        %1891 = vmatmul.mubr.bf16.gmra.mrb[0].mxu0 %v1320
        %v1892 = vpop.f32.mrb[0].mxu0
        %v1893 = vadd.f32 0.0, %v1892
        %v1894 = vpop.f32.mrb[0].mxu0
        %v1895 = vadd.f32 0.0, %v1894
        %v1896 = vpop.f32.mrb[0].mxu0
        %v1897 = vadd.f32 0.0, %v1896
        %v1898 = vpop.f32.mrb[0].mxu0
        %v1899 = vadd.f32 0.0, %v1898
        %1900 = vmatprep.mubr.bf16.mxu0 0
        %1901 = vmatmul.mubr.bf16.gmra.mrb[0].mxu0 %v1323
        %v1902 = vpop.f32.mrb[0].mxu0
        %v1903 = vadd.f32 0.0, %v1902
        %v1904 = vpop.f32.mrb[0].mxu0
        %v1905 = vadd.f32 0.0, %v1904
        %v1906 = vpop.f32.mrb[0].mxu0
        %v1907 = vadd.f32 0.0, %v1906
        %v1908 = vpop.f32.mrb[0].mxu0
        %v1909 = vadd.f32 0.0, %v1908
        %1910 = vmatprep.mubr.bf16.mxu0 0
        %1911 = vmatmul.mubr.bf16.gmra.mrb[0].mxu0 %v1326
        %v1912 = vpop.f32.mrb[0].mxu0
        %v1913 = vadd.f32 0.0, %v1912
        %v1914 = vpop.f32.mrb[0].mxu0
        %v1915 = vadd.f32 0.0, %v1914
        %v1916 = vpop.f32.mrb[0].mxu0
        %v1917 = vadd.f32 0.0, %v1916
        %v1918 = vpop.f32.mrb[0].mxu0
        %v1919 = vadd.f32 0.0, %v1918
        %1920 = vmatprep.mubr.bf16.mxu0 0
        %1921 = vmatmul.mubr.bf16.gmra.mrb[0].mxu0 %v1329
        %v1922 = vpop.f32.mrb[0].mxu0
        %v1923 = vadd.f32 0.0, %v1922
        %v1924 = vpop.f32.mrb[0].mxu0
        %v1925 = vadd.f32 0.0, %v1924
        %v1926 = vpop.f32.mrb[0].mxu0
        %v1927 = vadd.f32 0.0, %v1926
        %v1928 = vpop.f32.mrb[0].mxu0
        %v1929 = vadd.f32 0.0, %v1928
        %1930 = vdwg.mxu0
        %v1935 = vunpack.c.l.b16 %v1135
        %v1936 = vunpack.c.h.b16 %v1135
        %v1937 = vunpack.c.l.b16 %v1136
        %v1938 = vunpack.c.h.b16 %v1136
        %v1939 = vunpack.c.l.b16 %v1137
        %v1940 = vunpack.c.h.b16 %v1137
        %v1941 = vunpack.c.l.b16 %v1138
        %v1942 = vunpack.c.h.b16 %v1138
        %v1943 = vpack.c.b16 %v1937, %v1935
        %v1944 = vpack.c.b16 %v1938, %v1936
        %v1945 = vpack.c.b16 %v1941, %v1939
        %v1946 = vpack.c.b16 %v1942, %v1940
        %v1950 = vsel %vm1162, %v1075, 0
        %v1953 = vsel %vm1162, %v1076, 0
        %v1956 = vsel %vm1331, %v1945, 0
        %v1959 = vsel %vm1331, %v1946, 0
        %1961 = vmatprep.subr.bf16.mxu0 %v1944
        %1962 = vmatpush1.bf16.msra.mxu0 %v1943
        %1963 = vmatprep.subr.bf16.mxu0 %v1959
        %1964 = vmatpush1.bf16.msra.mxu0 %v1956
        %1965 = vmatprep.subr.bf16.mxu0 0
        %1966 = vmatpush1.bf16.msra.mxu0 0
        %1967 = vmatprep.subr.bf16.mxu0 0
        %1968 = vmatpush1.bf16.msra.mxu0 0
        %1969 = vmatprep.subr.bf16.mxu0 0
        %1970 = vmatpush1.bf16.msra.mxu0 0
        %1971 = vmatprep.subr.bf16.mxu0 0
        %1972 = vmatpush1.bf16.msra.mxu0 0
        %1973 = vmatprep.subr.bf16.mxu0 0
        %1974 = vmatpush1.bf16.msra.mxu0 0
        %1975 = vmatprep.subr.bf16.mxu0 0
        %1976 = vmatpush1.bf16.msra.mxu0 0
        %1977 = vmatprep.subr.bf16.mxu0 0
        %1978 = vmatpush1.bf16.msra.mxu0 0
        %1979 = vmatprep.subr.bf16.mxu0 0
        %1980 = vmatpush1.bf16.msra.mxu0 0
        %1981 = vmatprep.subr.bf16.mxu0 0
        %1982 = vmatpush1.bf16.msra.mxu0 0
        %1983 = vmatprep.subr.bf16.mxu0 0
        %1984 = vmatpush1.bf16.msra.mxu0 0
        %1985 = vmatprep.subr.bf16.mxu0 0
        %1986 = vmatpush1.bf16.msra.mxu0 0
        %1987 = vmatprep.subr.bf16.mxu0 0
        %1988 = vmatpush1.bf16.msra.mxu0 0
        %1989 = vmatprep.subr.bf16.mxu0 0
        %1990 = vmatpush1.bf16.msra.mxu0 0
        %1991 = vmatprep.subr.bf16.mxu0 0
        %1992 = vmatpush1.bf16.msra.mxu0 0
        %1993 = vmatprep.mubr.bf16.mxu0 0
        %1994 = vmatmul.mubr.bf16.gmra.mrb[0].mxu0 %v1950
        %v1995 = vpop.f32.mrb[0].mxu0
        %v1996 = vadd.f32 %v1373, %v1995
        %v1997 = vpop.f32.mrb[0].mxu0
        %v1998 = vadd.f32 %v1375, %v1997
        %v1999 = vpop.f32.mrb[0].mxu0
        %v2000 = vadd.f32 %v1377, %v1999
        %v2001 = vpop.f32.mrb[0].mxu0
        %v2002 = vadd.f32 %v1379, %v2001
        %2003 = vmatprep.mubr.bf16.mxu0 0
        %2004 = vmatmul.mubr.bf16.gmra.mrb[0].mxu0 %v1953
        %v2005 = vpop.f32.mrb[0].mxu0
        %v2006 = vadd.f32 %v1383, %v2005
        %v2007 = vpop.f32.mrb[0].mxu0
        %v2008 = vadd.f32 %v1385, %v2007
        %v2009 = vpop.f32.mrb[0].mxu0
        %v2010 = vadd.f32 %v1387, %v2009
        %v2011 = vpop.f32.mrb[0].mxu0
        %v2012 = vadd.f32 %v1389, %v2011
        %2013 = vmatprep.mubr.bf16.mxu0 0
        %2014 = vmatmul.mubr.bf16.gmra.mrb[0].mxu0 %v1164
        %v2015 = vpop.f32.mrb[0].mxu0
        %v2016 = vadd.f32 %v1393, %v2015
        %v2017 = vpop.f32.mrb[0].mxu0
        %v2018 = vadd.f32 %v1395, %v2017
        %v2019 = vpop.f32.mrb[0].mxu0
        %v2020 = vadd.f32 %v1397, %v2019
        %v2021 = vpop.f32.mrb[0].mxu0
        %v2022 = vadd.f32 %v1399, %v2021
        %2023 = vmatprep.mubr.bf16.mxu0 0
        %2024 = vmatmul.mubr.bf16.gmra.mrb[0].mxu0 %v1167
        %v2025 = vpop.f32.mrb[0].mxu0
        %v2026 = vadd.f32 %v1403, %v2025
        %v2027 = vpop.f32.mrb[0].mxu0
        %v2028 = vadd.f32 %v1405, %v2027
        %v2029 = vpop.f32.mrb[0].mxu0
        %v2030 = vadd.f32 %v1407, %v2029
        %v2031 = vpop.f32.mrb[0].mxu0
        %v2032 = vadd.f32 %v1409, %v2031
        %2033 = vmatprep.mubr.bf16.mxu0 0
        %2034 = vmatmul.mubr.bf16.gmra.mrb[0].mxu0 %v1170
        %v2035 = vpop.f32.mrb[0].mxu0
        %v2036 = vadd.f32 %v1413, %v2035
        %v2037 = vpop.f32.mrb[0].mxu0
        %v2038 = vadd.f32 %v1415, %v2037
        %v2039 = vpop.f32.mrb[0].mxu0
        %v2040 = vadd.f32 %v1417, %v2039
        %v2041 = vpop.f32.mrb[0].mxu0
        %v2042 = vadd.f32 %v1419, %v2041
        %2043 = vmatprep.mubr.bf16.mxu0 0
        %2044 = vmatmul.mubr.bf16.gmra.mrb[0].mxu0 %v1173
        %v2045 = vpop.f32.mrb[0].mxu0
        %v2046 = vadd.f32 %v1423, %v2045
        %v2047 = vpop.f32.mrb[0].mxu0
        %v2048 = vadd.f32 %v1425, %v2047
        %v2049 = vpop.f32.mrb[0].mxu0
        %v2050 = vadd.f32 %v1427, %v2049
        %v2051 = vpop.f32.mrb[0].mxu0
        %v2052 = vadd.f32 %v1429, %v2051
        %2053 = vmatprep.mubr.bf16.mxu0 0
        %2054 = vmatmul.mubr.bf16.gmra.mrb[0].mxu0 %v1176
        %v2055 = vpop.f32.mrb[0].mxu0
        %v2056 = vadd.f32 %v1433, %v2055
        %v2057 = vpop.f32.mrb[0].mxu0
        %v2058 = vadd.f32 %v1435, %v2057
        %v2059 = vpop.f32.mrb[0].mxu0
        %v2060 = vadd.f32 %v1437, %v2059
        %v2061 = vpop.f32.mrb[0].mxu0
        %v2062 = vadd.f32 %v1439, %v2061
        %2063 = vmatprep.mubr.bf16.mxu0 0
        %2064 = vmatmul.mubr.bf16.gmra.mrb[0].mxu0 %v1179
        %v2065 = vpop.f32.mrb[0].mxu0
        %v2066 = vadd.f32 %v1443, %v2065
        %v2067 = vpop.f32.mrb[0].mxu0
        %v2068 = vadd.f32 %v1445, %v2067
        %v2069 = vpop.f32.mrb[0].mxu0
        %v2070 = vadd.f32 %v1447, %v2069
        %v2071 = vpop.f32.mrb[0].mxu0
        %v2072 = vadd.f32 %v1449, %v2071
        %2073 = vmatprep.mubr.bf16.mxu0 0
        %2074 = vmatmul.mubr.bf16.gmra.mrb[0].mxu0 %v1182
        %v2075 = vpop.f32.mrb[0].mxu0
        %v2076 = vadd.f32 %v1453, %v2075
        %v2077 = vpop.f32.mrb[0].mxu0
        %v2078 = vadd.f32 %v1455, %v2077
        %v2079 = vpop.f32.mrb[0].mxu0
        %v2080 = vadd.f32 %v1457, %v2079
        %v2081 = vpop.f32.mrb[0].mxu0
        %v2082 = vadd.f32 %v1459, %v2081
        %2083 = vmatprep.mubr.bf16.mxu0 0
        %2084 = vmatmul.mubr.bf16.gmra.mrb[0].mxu0 %v1185
        %v2085 = vpop.f32.mrb[0].mxu0
        %v2086 = vadd.f32 %v1463, %v2085
        %v2087 = vpop.f32.mrb[0].mxu0
        %v2088 = vadd.f32 %v1465, %v2087
        %v2089 = vpop.f32.mrb[0].mxu0
        %v2090 = vadd.f32 %v1467, %v2089
        %v2091 = vpop.f32.mrb[0].mxu0
        %v2092 = vadd.f32 %v1469, %v2091
        %2093 = vmatprep.mubr.bf16.mxu0 0
        %2094 = vmatmul.mubr.bf16.gmra.mrb[0].mxu0 %v1188
        %v2095 = vpop.f32.mrb[0].mxu0
        %v2096 = vadd.f32 %v1473, %v2095
        %v2097 = vpop.f32.mrb[0].mxu0
        %v2098 = vadd.f32 %v1475, %v2097
        %v2099 = vpop.f32.mrb[0].mxu0
        %v2100 = vadd.f32 %v1477, %v2099
        %v2101 = vpop.f32.mrb[0].mxu0
        %v2102 = vadd.f32 %v1479, %v2101
        %2103 = vmatprep.mubr.bf16.mxu0 0
        %2104 = vmatmul.mubr.bf16.gmra.mrb[0].mxu0 %v1191
        %v2105 = vpop.f32.mrb[0].mxu0
        %v2106 = vadd.f32 %v1483, %v2105
        %v2107 = vpop.f32.mrb[0].mxu0
        %v2108 = vadd.f32 %v1485, %v2107
        %v2109 = vpop.f32.mrb[0].mxu0
        %v2110 = vadd.f32 %v1487, %v2109
        %v2111 = vpop.f32.mrb[0].mxu0
        %v2112 = vadd.f32 %v1489, %v2111
        %2113 = vmatprep.mubr.bf16.mxu0 0
        %2114 = vmatmul.mubr.bf16.gmra.mrb[0].mxu0 %v1194
        %v2115 = vpop.f32.mrb[0].mxu0
        %v2116 = vadd.f32 %v1493, %v2115
        %v2117 = vpop.f32.mrb[0].mxu0
        %v2118 = vadd.f32 %v1495, %v2117
        %v2119 = vpop.f32.mrb[0].mxu0
        %v2120 = vadd.f32 %v1497, %v2119
        %v2121 = vpop.f32.mrb[0].mxu0
        %v2122 = vadd.f32 %v1499, %v2121
        %2123 = vmatprep.mubr.bf16.mxu0 0
        %2124 = vmatmul.mubr.bf16.gmra.mrb[0].mxu0 %v1197
        %v2125 = vpop.f32.mrb[0].mxu0
        %v2126 = vadd.f32 %v1503, %v2125
        %v2127 = vpop.f32.mrb[0].mxu0
        %v2128 = vadd.f32 %v1505, %v2127
        %v2129 = vpop.f32.mrb[0].mxu0
        %v2130 = vadd.f32 %v1507, %v2129
        %v2131 = vpop.f32.mrb[0].mxu0
        %v2132 = vadd.f32 %v1509, %v2131
        %2133 = vmatprep.mubr.bf16.mxu0 0
        %2134 = vmatmul.mubr.bf16.gmra.mrb[0].mxu0 %v1200
        %v2135 = vpop.f32.mrb[0].mxu0
        %v2136 = vadd.f32 %v1513, %v2135
        %v2137 = vpop.f32.mrb[0].mxu0
        %v2138 = vadd.f32 %v1515, %v2137
        %v2139 = vpop.f32.mrb[0].mxu0
        %v2140 = vadd.f32 %v1517, %v2139
        %v2141 = vpop.f32.mrb[0].mxu0
        %v2142 = vadd.f32 %v1519, %v2141
        %2143 = vmatprep.mubr.bf16.mxu0 0
        %2144 = vmatmul.mubr.bf16.gmra.mrb[0].mxu0 %v1203
        %v2145 = vpop.f32.mrb[0].mxu0
        %v2146 = vadd.f32 %v1523, %v2145
        %v2147 = vpop.f32.mrb[0].mxu0
        %v2148 = vadd.f32 %v1525, %v2147
        %v2149 = vpop.f32.mrb[0].mxu0
        %v2150 = vadd.f32 %v1527, %v2149
        %v2151 = vpop.f32.mrb[0].mxu0
        %v2152 = vadd.f32 %v1529, %v2151
        %2153 = vmatprep.mubr.bf16.mxu0 0
        %2154 = vmatmul.mubr.bf16.gmra.mrb[0].mxu0 %v1206
        %v2155 = vpop.f32.mrb[0].mxu0
        %v2156 = vadd.f32 %v1533, %v2155
        %v2157 = vpop.f32.mrb[0].mxu0
        %v2158 = vadd.f32 %v1535, %v2157
        %v2159 = vpop.f32.mrb[0].mxu0
        %v2160 = vadd.f32 %v1537, %v2159
        %v2161 = vpop.f32.mrb[0].mxu0
        %v2162 = vadd.f32 %v1539, %v2161
        %2163 = vmatprep.mubr.bf16.mxu0 0
        %2164 = vmatmul.mubr.bf16.gmra.mrb[0].mxu0 %v1209
        %v2165 = vpop.f32.mrb[0].mxu0
        %v2166 = vadd.f32 %v1543, %v2165
        %v2167 = vpop.f32.mrb[0].mxu0
        %v2168 = vadd.f32 %v1545, %v2167
        %v2169 = vpop.f32.mrb[0].mxu0
        %v2170 = vadd.f32 %v1547, %v2169
        %v2171 = vpop.f32.mrb[0].mxu0
        %v2172 = vadd.f32 %v1549, %v2171
        %2173 = vmatprep.mubr.bf16.mxu0 0
        %2174 = vmatmul.mubr.bf16.gmra.mrb[0].mxu0 %v1212
        %v2175 = vpop.f32.mrb[0].mxu0
        %v2176 = vadd.f32 %v1553, %v2175
        %v2177 = vpop.f32.mrb[0].mxu0
        %v2178 = vadd.f32 %v1555, %v2177
        %v2179 = vpop.f32.mrb[0].mxu0
        %v2180 = vadd.f32 %v1557, %v2179
        %v2181 = vpop.f32.mrb[0].mxu0
        %v2182 = vadd.f32 %v1559, %v2181
        %2183 = vmatprep.mubr.bf16.mxu0 0
        %2184 = vmatmul.mubr.bf16.gmra.mrb[0].mxu0 %v1215
        %v2185 = vpop.f32.mrb[0].mxu0
        %v2186 = vadd.f32 %v1563, %v2185
        %v2187 = vpop.f32.mrb[0].mxu0
        %v2188 = vadd.f32 %v1565, %v2187
        %v2189 = vpop.f32.mrb[0].mxu0
        %v2190 = vadd.f32 %v1567, %v2189
        %v2191 = vpop.f32.mrb[0].mxu0
        %v2192 = vadd.f32 %v1569, %v2191
        %2193 = vmatprep.mubr.bf16.mxu0 0
        %2194 = vmatmul.mubr.bf16.gmra.mrb[0].mxu0 %v1218
        %v2195 = vpop.f32.mrb[0].mxu0
        %v2196 = vadd.f32 %v1573, %v2195
        %v2197 = vpop.f32.mrb[0].mxu0
        %v2198 = vadd.f32 %v1575, %v2197
        %v2199 = vpop.f32.mrb[0].mxu0
        %v2200 = vadd.f32 %v1577, %v2199
        %v2201 = vpop.f32.mrb[0].mxu0
        %v2202 = vadd.f32 %v1579, %v2201
        %2203 = vmatprep.mubr.bf16.mxu0 0
        %2204 = vmatmul.mubr.bf16.gmra.mrb[0].mxu0 %v1221
        %v2205 = vpop.f32.mrb[0].mxu0
        %v2206 = vadd.f32 %v1583, %v2205
        %v2207 = vpop.f32.mrb[0].mxu0
        %v2208 = vadd.f32 %v1585, %v2207
        %v2209 = vpop.f32.mrb[0].mxu0
        %v2210 = vadd.f32 %v1587, %v2209
        %v2211 = vpop.f32.mrb[0].mxu0
        %v2212 = vadd.f32 %v1589, %v2211
        %2213 = vmatprep.mubr.bf16.mxu0 0
        %2214 = vmatmul.mubr.bf16.gmra.mrb[0].mxu0 %v1224
        %v2215 = vpop.f32.mrb[0].mxu0
        %v2216 = vadd.f32 %v1593, %v2215
        %v2217 = vpop.f32.mrb[0].mxu0
        %v2218 = vadd.f32 %v1595, %v2217
        %v2219 = vpop.f32.mrb[0].mxu0
        %v2220 = vadd.f32 %v1597, %v2219
        %v2221 = vpop.f32.mrb[0].mxu0
        %v2222 = vadd.f32 %v1599, %v2221
        %2223 = vmatprep.mubr.bf16.mxu0 0
        %2224 = vmatmul.mubr.bf16.gmra.mrb[0].mxu0 %v1227
        %v2225 = vpop.f32.mrb[0].mxu0
        %v2226 = vadd.f32 %v1603, %v2225
        %v2227 = vpop.f32.mrb[0].mxu0
        %v2228 = vadd.f32 %v1605, %v2227
        %v2229 = vpop.f32.mrb[0].mxu0
        %v2230 = vadd.f32 %v1607, %v2229
        %v2231 = vpop.f32.mrb[0].mxu0
        %v2232 = vadd.f32 %v1609, %v2231
        %2233 = vmatprep.mubr.bf16.mxu0 0
        %2234 = vmatmul.mubr.bf16.gmra.mrb[0].mxu0 %v1230
        %v2235 = vpop.f32.mrb[0].mxu0
        %v2236 = vadd.f32 %v1613, %v2235
        %v2237 = vpop.f32.mrb[0].mxu0
        %v2238 = vadd.f32 %v1615, %v2237
        %v2239 = vpop.f32.mrb[0].mxu0
        %v2240 = vadd.f32 %v1617, %v2239
        %v2241 = vpop.f32.mrb[0].mxu0
        %v2242 = vadd.f32 %v1619, %v2241
        %2243 = vmatprep.mubr.bf16.mxu0 0
        %2244 = vmatmul.mubr.bf16.gmra.mrb[0].mxu0 %v1233
        %v2245 = vpop.f32.mrb[0].mxu0
        %v2246 = vadd.f32 %v1623, %v2245
        %v2247 = vpop.f32.mrb[0].mxu0
        %v2248 = vadd.f32 %v1625, %v2247
        %v2249 = vpop.f32.mrb[0].mxu0
        %v2250 = vadd.f32 %v1627, %v2249
        %v2251 = vpop.f32.mrb[0].mxu0
        %v2252 = vadd.f32 %v1629, %v2251
        %2253 = vmatprep.mubr.bf16.mxu0 0
        %2254 = vmatmul.mubr.bf16.gmra.mrb[0].mxu0 %v1236
        %v2255 = vpop.f32.mrb[0].mxu0
        %v2256 = vadd.f32 %v1633, %v2255
        %v2257 = vpop.f32.mrb[0].mxu0
        %v2258 = vadd.f32 %v1635, %v2257
        %v2259 = vpop.f32.mrb[0].mxu0
        %v2260 = vadd.f32 %v1637, %v2259
        %v2261 = vpop.f32.mrb[0].mxu0
        %v2262 = vadd.f32 %v1639, %v2261
        %2263 = vmatprep.mubr.bf16.mxu0 0
        %2264 = vmatmul.mubr.bf16.gmra.mrb[0].mxu0 %v1239
        %v2265 = vpop.f32.mrb[0].mxu0
        %v2266 = vadd.f32 %v1643, %v2265
        %v2267 = vpop.f32.mrb[0].mxu0
        %v2268 = vadd.f32 %v1645, %v2267
        %v2269 = vpop.f32.mrb[0].mxu0
        %v2270 = vadd.f32 %v1647, %v2269
        %v2271 = vpop.f32.mrb[0].mxu0
        %v2272 = vadd.f32 %v1649, %v2271
        %2273 = vmatprep.mubr.bf16.mxu0 0
        %2274 = vmatmul.mubr.bf16.gmra.mrb[0].mxu0 %v1242
        %v2275 = vpop.f32.mrb[0].mxu0
        %v2276 = vadd.f32 %v1653, %v2275
        %v2277 = vpop.f32.mrb[0].mxu0
        %v2278 = vadd.f32 %v1655, %v2277
        %v2279 = vpop.f32.mrb[0].mxu0
        %v2280 = vadd.f32 %v1657, %v2279
        %v2281 = vpop.f32.mrb[0].mxu0
        %v2282 = vadd.f32 %v1659, %v2281
        %2283 = vmatprep.mubr.bf16.mxu0 0
        %2284 = vmatmul.mubr.bf16.gmra.mrb[0].mxu0 %v1245
        %v2285 = vpop.f32.mrb[0].mxu0
        %v2286 = vadd.f32 %v1663, %v2285
        %v2287 = vpop.f32.mrb[0].mxu0
        %v2288 = vadd.f32 %v1665, %v2287
        %v2289 = vpop.f32.mrb[0].mxu0
        %v2290 = vadd.f32 %v1667, %v2289
        %v2291 = vpop.f32.mrb[0].mxu0
        %v2292 = vadd.f32 %v1669, %v2291
        %2293 = vmatprep.mubr.bf16.mxu0 0
        %2294 = vmatmul.mubr.bf16.gmra.mrb[0].mxu0 %v1248
        %v2295 = vpop.f32.mrb[0].mxu0
        %v2296 = vadd.f32 %v1673, %v2295
        %v2297 = vpop.f32.mrb[0].mxu0
        %v2298 = vadd.f32 %v1675, %v2297
        %v2299 = vpop.f32.mrb[0].mxu0
        %v2300 = vadd.f32 %v1677, %v2299
        %v2301 = vpop.f32.mrb[0].mxu0
        %v2302 = vadd.f32 %v1679, %v2301
        %2303 = vmatprep.mubr.bf16.mxu0 0
        %2304 = vmatmul.mubr.bf16.gmra.mrb[0].mxu0 %v1251
        %v2305 = vpop.f32.mrb[0].mxu0
        %v2306 = vadd.f32 %v1683, %v2305
        %v2307 = vpop.f32.mrb[0].mxu0
        %v2308 = vadd.f32 %v1685, %v2307
        %v2309 = vpop.f32.mrb[0].mxu0
        %v2310 = vadd.f32 %v1687, %v2309
        %v2311 = vpop.f32.mrb[0].mxu0
        %v2312 = vadd.f32 %v1689, %v2311
        %2313 = vmatprep.mubr.bf16.mxu0 0
        %2314 = vmatmul.mubr.bf16.gmra.mrb[0].mxu0 %v1254
        %v2315 = vpop.f32.mrb[0].mxu0
        %v2316 = vadd.f32 %v1693, %v2315
        %v2317 = vpop.f32.mrb[0].mxu0
        %v2318 = vadd.f32 %v1695, %v2317
        %v2319 = vpop.f32.mrb[0].mxu0
        %v2320 = vadd.f32 %v1697, %v2319
        %v2321 = vpop.f32.mrb[0].mxu0
        %v2322 = vadd.f32 %v1699, %v2321
        %2323 = vmatprep.mubr.bf16.mxu0 0
        %2324 = vmatmul.mubr.bf16.gmra.mrb[0].mxu0 %v1257
        %v2325 = vpop.f32.mrb[0].mxu0
        %v2326 = vadd.f32 %v1703, %v2325
        %v2327 = vpop.f32.mrb[0].mxu0
        %v2328 = vadd.f32 %v1705, %v2327
        %v2329 = vpop.f32.mrb[0].mxu0
        %v2330 = vadd.f32 %v1707, %v2329
        %v2331 = vpop.f32.mrb[0].mxu0
        %v2332 = vadd.f32 %v1709, %v2331
        %2333 = vmatprep.mubr.bf16.mxu0 0
        %2334 = vmatmul.mubr.bf16.gmra.mrb[0].mxu0 %v1260
        %v2335 = vpop.f32.mrb[0].mxu0
        %v2336 = vadd.f32 %v1713, %v2335
        %v2337 = vpop.f32.mrb[0].mxu0
        %v2338 = vadd.f32 %v1715, %v2337
        %v2339 = vpop.f32.mrb[0].mxu0
        %v2340 = vadd.f32 %v1717, %v2339
        %v2341 = vpop.f32.mrb[0].mxu0
        %v2342 = vadd.f32 %v1719, %v2341
        %2343 = vmatprep.mubr.bf16.mxu0 0
        %2344 = vmatmul.mubr.bf16.gmra.mrb[0].mxu0 %v1263
        %v2345 = vpop.f32.mrb[0].mxu0
        %v2346 = vadd.f32 %v1723, %v2345
        %v2347 = vpop.f32.mrb[0].mxu0
        %v2348 = vadd.f32 %v1725, %v2347
        %v2349 = vpop.f32.mrb[0].mxu0
        %v2350 = vadd.f32 %v1727, %v2349
        %v2351 = vpop.f32.mrb[0].mxu0
        %v2352 = vadd.f32 %v1729, %v2351
        %2353 = vmatprep.mubr.bf16.mxu0 0
        %2354 = vmatmul.mubr.bf16.gmra.mrb[0].mxu0 %v1266
        %v2355 = vpop.f32.mrb[0].mxu0
        %v2356 = vadd.f32 %v1733, %v2355
        %v2357 = vpop.f32.mrb[0].mxu0
        %v2358 = vadd.f32 %v1735, %v2357
        %v2359 = vpop.f32.mrb[0].mxu0
        %v2360 = vadd.f32 %v1737, %v2359
        %v2361 = vpop.f32.mrb[0].mxu0
        %v2362 = vadd.f32 %v1739, %v2361
        %2363 = vmatprep.mubr.bf16.mxu0 0
        %2364 = vmatmul.mubr.bf16.gmra.mrb[0].mxu0 %v1269
        %v2365 = vpop.f32.mrb[0].mxu0
        %v2366 = vadd.f32 %v1743, %v2365
        %v2367 = vpop.f32.mrb[0].mxu0
        %v2368 = vadd.f32 %v1745, %v2367
        %v2369 = vpop.f32.mrb[0].mxu0
        %v2370 = vadd.f32 %v1747, %v2369
        %v2371 = vpop.f32.mrb[0].mxu0
        %v2372 = vadd.f32 %v1749, %v2371
        %2373 = vmatprep.mubr.bf16.mxu0 0
        %2374 = vmatmul.mubr.bf16.gmra.mrb[0].mxu0 %v1272
        %v2375 = vpop.f32.mrb[0].mxu0
        %v2376 = vadd.f32 %v1753, %v2375
        %v2377 = vpop.f32.mrb[0].mxu0
        %v2378 = vadd.f32 %v1755, %v2377
        %v2379 = vpop.f32.mrb[0].mxu0
        %v2380 = vadd.f32 %v1757, %v2379
        %v2381 = vpop.f32.mrb[0].mxu0
        %v2382 = vadd.f32 %v1759, %v2381
        %2383 = vmatprep.mubr.bf16.mxu0 0
        %2384 = vmatmul.mubr.bf16.gmra.mrb[0].mxu0 %v1275
        %v2385 = vpop.f32.mrb[0].mxu0
        %v2386 = vadd.f32 %v1763, %v2385
        %v2387 = vpop.f32.mrb[0].mxu0
        %v2388 = vadd.f32 %v1765, %v2387
        %v2389 = vpop.f32.mrb[0].mxu0
        %v2390 = vadd.f32 %v1767, %v2389
        %v2391 = vpop.f32.mrb[0].mxu0
        %v2392 = vadd.f32 %v1769, %v2391
        %2393 = vmatprep.mubr.bf16.mxu0 0
        %2394 = vmatmul.mubr.bf16.gmra.mrb[0].mxu0 %v1278
        %v2395 = vpop.f32.mrb[0].mxu0
        %v2396 = vadd.f32 %v1773, %v2395
        %v2397 = vpop.f32.mrb[0].mxu0
        %v2398 = vadd.f32 %v1775, %v2397
        %v2399 = vpop.f32.mrb[0].mxu0
        %v2400 = vadd.f32 %v1777, %v2399
        %v2401 = vpop.f32.mrb[0].mxu0
        %v2402 = vadd.f32 %v1779, %v2401
        %2403 = vmatprep.mubr.bf16.mxu0 0
        %2404 = vmatmul.mubr.bf16.gmra.mrb[0].mxu0 %v1281
        %v2405 = vpop.f32.mrb[0].mxu0
        %v2406 = vadd.f32 %v1783, %v2405
        %v2407 = vpop.f32.mrb[0].mxu0
        %v2408 = vadd.f32 %v1785, %v2407
        %v2409 = vpop.f32.mrb[0].mxu0
        %v2410 = vadd.f32 %v1787, %v2409
        %v2411 = vpop.f32.mrb[0].mxu0
        %v2412 = vadd.f32 %v1789, %v2411
        %2413 = vmatprep.mubr.bf16.mxu0 0
        %2414 = vmatmul.mubr.bf16.gmra.mrb[0].mxu0 %v1284
        %v2415 = vpop.f32.mrb[0].mxu0
        %v2416 = vadd.f32 %v1793, %v2415
        %v2417 = vpop.f32.mrb[0].mxu0
        %v2418 = vadd.f32 %v1795, %v2417
        %v2419 = vpop.f32.mrb[0].mxu0
        %v2420 = vadd.f32 %v1797, %v2419
        %v2421 = vpop.f32.mrb[0].mxu0
        %v2422 = vadd.f32 %v1799, %v2421
        %2423 = vmatprep.mubr.bf16.mxu0 0
        %2424 = vmatmul.mubr.bf16.gmra.mrb[0].mxu0 %v1287
        %v2425 = vpop.f32.mrb[0].mxu0
        %v2426 = vadd.f32 %v1803, %v2425
        %v2427 = vpop.f32.mrb[0].mxu0
        %v2428 = vadd.f32 %v1805, %v2427
        %v2429 = vpop.f32.mrb[0].mxu0
        %v2430 = vadd.f32 %v1807, %v2429
        %v2431 = vpop.f32.mrb[0].mxu0
        %v2432 = vadd.f32 %v1809, %v2431
        %2433 = vmatprep.mubr.bf16.mxu0 0
        %2434 = vmatmul.mubr.bf16.gmra.mrb[0].mxu0 %v1290
        %v2435 = vpop.f32.mrb[0].mxu0
        %v2436 = vadd.f32 %v1813, %v2435
        %v2437 = vpop.f32.mrb[0].mxu0
        %v2438 = vadd.f32 %v1815, %v2437
        %v2439 = vpop.f32.mrb[0].mxu0
        %v2440 = vadd.f32 %v1817, %v2439
        %v2441 = vpop.f32.mrb[0].mxu0
        %v2442 = vadd.f32 %v1819, %v2441
        %2443 = vmatprep.mubr.bf16.mxu0 0
        %2444 = vmatmul.mubr.bf16.gmra.mrb[0].mxu0 %v1293
        %v2445 = vpop.f32.mrb[0].mxu0
        %v2446 = vadd.f32 %v1823, %v2445
        %v2447 = vpop.f32.mrb[0].mxu0
        %v2448 = vadd.f32 %v1825, %v2447
        %v2449 = vpop.f32.mrb[0].mxu0
        %v2450 = vadd.f32 %v1827, %v2449
        %v2451 = vpop.f32.mrb[0].mxu0
        %v2452 = vadd.f32 %v1829, %v2451
        %2453 = vmatprep.mubr.bf16.mxu0 0
        %2454 = vmatmul.mubr.bf16.gmra.mrb[0].mxu0 %v1296
        %v2455 = vpop.f32.mrb[0].mxu0
        %v2456 = vadd.f32 %v1833, %v2455
        %v2457 = vpop.f32.mrb[0].mxu0
        %v2458 = vadd.f32 %v1835, %v2457
        %v2459 = vpop.f32.mrb[0].mxu0
        %v2460 = vadd.f32 %v1837, %v2459
        %v2461 = vpop.f32.mrb[0].mxu0
        %v2462 = vadd.f32 %v1839, %v2461
        %2463 = vmatprep.mubr.bf16.mxu0 0
        %2464 = vmatmul.mubr.bf16.gmra.mrb[0].mxu0 %v1299
        %v2465 = vpop.f32.mrb[0].mxu0
        %v2466 = vadd.f32 %v1843, %v2465
        %v2467 = vpop.f32.mrb[0].mxu0
        %v2468 = vadd.f32 %v1845, %v2467
        %v2469 = vpop.f32.mrb[0].mxu0
        %v2470 = vadd.f32 %v1847, %v2469
        %v2471 = vpop.f32.mrb[0].mxu0
        %v2472 = vadd.f32 %v1849, %v2471
        %2473 = vmatprep.mubr.bf16.mxu0 0
        %2474 = vmatmul.mubr.bf16.gmra.mrb[0].mxu0 %v1302
        %v2475 = vpop.f32.mrb[0].mxu0
        %v2476 = vadd.f32 %v1853, %v2475
        %v2477 = vpop.f32.mrb[0].mxu0
        %v2478 = vadd.f32 %v1855, %v2477
        %v2479 = vpop.f32.mrb[0].mxu0
        %v2480 = vadd.f32 %v1857, %v2479
        %v2481 = vpop.f32.mrb[0].mxu0
        %v2482 = vadd.f32 %v1859, %v2481
        %2483 = vmatprep.mubr.bf16.mxu0 0
        %2484 = vmatmul.mubr.bf16.gmra.mrb[0].mxu0 %v1305
        %v2485 = vpop.f32.mrb[0].mxu0
        %v2486 = vadd.f32 %v1863, %v2485
        %v2487 = vpop.f32.mrb[0].mxu0
        %v2488 = vadd.f32 %v1865, %v2487
        %v2489 = vpop.f32.mrb[0].mxu0
        %v2490 = vadd.f32 %v1867, %v2489
        %v2491 = vpop.f32.mrb[0].mxu0
        %v2492 = vadd.f32 %v1869, %v2491
        %2493 = vmatprep.mubr.bf16.mxu0 0
        %2494 = vmatmul.mubr.bf16.gmra.mrb[0].mxu0 %v1308
        %v2495 = vpop.f32.mrb[0].mxu0
        %v2496 = vadd.f32 %v1873, %v2495
        %v2497 = vpop.f32.mrb[0].mxu0
        %v2498 = vadd.f32 %v1875, %v2497
        %v2499 = vpop.f32.mrb[0].mxu0
        %v2500 = vadd.f32 %v1877, %v2499
        %v2501 = vpop.f32.mrb[0].mxu0
        %v2502 = vadd.f32 %v1879, %v2501
        %2503 = vmatprep.mubr.bf16.mxu0 0
        %2504 = vmatmul.mubr.bf16.gmra.mrb[0].mxu0 %v1311
        %v2505 = vpop.f32.mrb[0].mxu0
        %v2506 = vadd.f32 %v1883, %v2505
        %v2507 = vpop.f32.mrb[0].mxu0
        %v2508 = vadd.f32 %v1885, %v2507
        %v2509 = vpop.f32.mrb[0].mxu0
        %v2510 = vadd.f32 %v1887, %v2509
        %v2511 = vpop.f32.mrb[0].mxu0
        %v2512 = vadd.f32 %v1889, %v2511
        %2513 = vmatprep.mubr.bf16.mxu0 0
        %2514 = vmatmul.mubr.bf16.gmra.mrb[0].mxu0 %v1314
        %v2515 = vpop.f32.mrb[0].mxu0
        %v2516 = vadd.f32 %v1893, %v2515
        %v2517 = vpop.f32.mrb[0].mxu0
        %v2518 = vadd.f32 %v1895, %v2517
        %v2519 = vpop.f32.mrb[0].mxu0
        %v2520 = vadd.f32 %v1897, %v2519
        %v2521 = vpop.f32.mrb[0].mxu0
        %v2522 = vadd.f32 %v1899, %v2521
        %2523 = vmatprep.mubr.bf16.mxu0 0
        %2524 = vmatmul.mubr.bf16.gmra.mrb[0].mxu0 %v1317
        %v2525 = vpop.f32.mrb[0].mxu0
        %v2526 = vadd.f32 %v1903, %v2525
        %v2527 = vpop.f32.mrb[0].mxu0
        %v2528 = vadd.f32 %v1905, %v2527
        %v2529 = vpop.f32.mrb[0].mxu0
        %v2530 = vadd.f32 %v1907, %v2529
        %v2531 = vpop.f32.mrb[0].mxu0
        %v2532 = vadd.f32 %v1909, %v2531
        %2533 = vmatprep.mubr.bf16.mxu0 0
        %2534 = vmatmul.mubr.bf16.gmra.mrb[0].mxu0 %v1320
        %v2535 = vpop.f32.mrb[0].mxu0
        %v2536 = vadd.f32 %v1913, %v2535
        %v2537 = vpop.f32.mrb[0].mxu0
        %v2538 = vadd.f32 %v1915, %v2537
        %v2539 = vpop.f32.mrb[0].mxu0
        %v2540 = vadd.f32 %v1917, %v2539
        %v2541 = vpop.f32.mrb[0].mxu0
        %v2542 = vadd.f32 %v1919, %v2541
        %2543 = vmatprep.mubr.bf16.mxu0 0
        %2544 = vmatmul.mubr.bf16.gmra.mrb[0].mxu0 %v1323
        %v2545 = vpop.f32.mrb[0].mxu0
        %v2546 = vadd.f32 %v1923, %v2545
        %v2547 = vpop.f32.mrb[0].mxu0
        %v2548 = vadd.f32 %v1925, %v2547
        %v2549 = vpop.f32.mrb[0].mxu0
        %v2550 = vadd.f32 %v1927, %v2549
        %v2551 = vpop.f32.mrb[0].mxu0
        %v2552 = vadd.f32 %v1929, %v2551
        %2553 = vdwg.mxu0
        %s2554 = scalar_lea.vmem %s1, 64
        %v2555 = vld [vmem:[%s2554] sm:$0xff]
        %v2556 = vld [vmem:[%s2554 + $0x8] sm:$0xff]
        %v2557 = vld [vmem:[%s2554 + $0x10] sm:$0xff]
        %v2558 = vld [vmem:[%s2554 + $0x18] sm:$0x77]
        %v2563 = vunpack.c.l.b16 %v2555
        %v2564 = vunpack.c.h.b16 %v2555
        %v2565 = vunpack.c.l.b16 %v2556
        %v2566 = vunpack.c.h.b16 %v2556
        %v2567 = vunpack.c.l.b16 %v2557
        %v2568 = vunpack.c.h.b16 %v2557
        %v2569 = vunpack.c.l.b16 %v2558
        %v2570 = vunpack.c.h.b16 %v2558
        %v2571 = vpack.c.b16 %v2565, %v2563
        %v2572 = vpack.c.b16 %v2566, %v2564
        %v2573 = vpack.c.b16 %v2569, %v2567
        %v2574 = vpack.c.b16 %v2570, %v2568
        %v2578 = vsel %vm1162, %v1133, 0
        %v2581 = vsel %vm1162, %v1134, 0
        %v2584 = vsel %vm1331, %v2573, 0
        %v2587 = vsel %vm1331, %v2574, 0
        %2589 = vmatprep.subr.bf16.mxu0 %v2572
        %2590 = vmatpush1.bf16.msra.mxu0 %v2571
        %2591 = vmatprep.subr.bf16.mxu0 %v2587
        %2592 = vmatpush1.bf16.msra.mxu0 %v2584
        %2593 = vmatprep.subr.bf16.mxu0 0
        %2594 = vmatpush1.bf16.msra.mxu0 0
        %2595 = vmatprep.subr.bf16.mxu0 0
        %2596 = vmatpush1.bf16.msra.mxu0 0
        %2597 = vmatprep.subr.bf16.mxu0 0
        %2598 = vmatpush1.bf16.msra.mxu0 0
        %2599 = vmatprep.subr.bf16.mxu0 0
        %2600 = vmatpush1.bf16.msra.mxu0 0
        %2601 = vmatprep.subr.bf16.mxu0 0
        %2602 = vmatpush1.bf16.msra.mxu0 0
        %2603 = vmatprep.subr.bf16.mxu0 0
        %2604 = vmatpush1.bf16.msra.mxu0 0
        %2605 = vmatprep.subr.bf16.mxu0 0
        %2606 = vmatpush1.bf16.msra.mxu0 0
        %2607 = vmatprep.subr.bf16.mxu0 0
        %2608 = vmatpush1.bf16.msra.mxu0 0
        %2609 = vmatprep.subr.bf16.mxu0 0
        %2610 = vmatpush1.bf16.msra.mxu0 0
        %2611 = vmatprep.subr.bf16.mxu0 0
        %2612 = vmatpush1.bf16.msra.mxu0 0
        %2613 = vmatprep.subr.bf16.mxu0 0
        %2614 = vmatpush1.bf16.msra.mxu0 0
        %2615 = vmatprep.subr.bf16.mxu0 0
        %2616 = vmatpush1.bf16.msra.mxu0 0
        %2617 = vmatprep.subr.bf16.mxu0 0
        %2618 = vmatpush1.bf16.msra.mxu0 0
        %2619 = vmatprep.subr.bf16.mxu0 0
        %2620 = vmatpush1.bf16.msra.mxu0 0
        %2621 = vmatprep.mubr.bf16.mxu0 0
        %2622 = vmatmul.mubr.bf16.gmra.mrb[0].mxu0 %v1170
        %v2623 = vpop.f32.mrb[0].mxu0
        %v2624 = vadd.f32 0.0, %v2623
        %v2625 = vpop.f32.mrb[0].mxu0
        %v2626 = vadd.f32 0.0, %v2625
        %v2627 = vpop.f32.mrb[0].mxu0
        %v2628 = vadd.f32 0.0, %v2627
        %v2629 = vpop.f32.mrb[0].mxu0
        %v2630 = vadd.f32 0.0, %v2629
        %2631 = vmatprep.mubr.bf16.mxu0 0
        %2632 = vmatmul.mubr.bf16.gmra.mrb[0].mxu0 %v1173
        %v2633 = vpop.f32.mrb[0].mxu0
        %v2634 = vadd.f32 0.0, %v2633
        %v2635 = vpop.f32.mrb[0].mxu0
        %v2636 = vadd.f32 0.0, %v2635
        %v2637 = vpop.f32.mrb[0].mxu0
        %v2638 = vadd.f32 0.0, %v2637
        %v2639 = vpop.f32.mrb[0].mxu0
        %v2640 = vadd.f32 0.0, %v2639
        %2641 = vmatprep.mubr.bf16.mxu0 0
        %2642 = vmatmul.mubr.bf16.gmra.mrb[0].mxu0 %v1176
        %v2643 = vpop.f32.mrb[0].mxu0
        %v2644 = vadd.f32 0.0, %v2643
        %v2645 = vpop.f32.mrb[0].mxu0
        %v2646 = vadd.f32 0.0, %v2645
        %v2647 = vpop.f32.mrb[0].mxu0
        %v2648 = vadd.f32 0.0, %v2647
        %v2649 = vpop.f32.mrb[0].mxu0
        %v2650 = vadd.f32 0.0, %v2649
        %2651 = vmatprep.mubr.bf16.mxu0 0
        %2652 = vmatmul.mubr.bf16.gmra.mrb[0].mxu0 %v1179
        %v2653 = vpop.f32.mrb[0].mxu0
        %v2654 = vadd.f32 0.0, %v2653
        %v2655 = vpop.f32.mrb[0].mxu0
        %v2656 = vadd.f32 0.0, %v2655
        %v2657 = vpop.f32.mrb[0].mxu0
        %v2658 = vadd.f32 0.0, %v2657
        %v2659 = vpop.f32.mrb[0].mxu0
        %v2660 = vadd.f32 0.0, %v2659
        %2661 = vmatprep.mubr.bf16.mxu0 0
        %2662 = vmatmul.mubr.bf16.gmra.mrb[0].mxu0 %v1182
        %v2663 = vpop.f32.mrb[0].mxu0
        %v2664 = vadd.f32 0.0, %v2663
        %v2665 = vpop.f32.mrb[0].mxu0
        %v2666 = vadd.f32 0.0, %v2665
        %v2667 = vpop.f32.mrb[0].mxu0
        %v2668 = vadd.f32 0.0, %v2667
        %v2669 = vpop.f32.mrb[0].mxu0
        %v2670 = vadd.f32 0.0, %v2669
        %2671 = vmatprep.mubr.bf16.mxu0 0
        %2672 = vmatmul.mubr.bf16.gmra.mrb[0].mxu0 %v1185
        %v2673 = vpop.f32.mrb[0].mxu0
        %v2674 = vadd.f32 0.0, %v2673
        %v2675 = vpop.f32.mrb[0].mxu0
        %v2676 = vadd.f32 0.0, %v2675
        %v2677 = vpop.f32.mrb[0].mxu0
        %v2678 = vadd.f32 0.0, %v2677
        %v2679 = vpop.f32.mrb[0].mxu0
        %v2680 = vadd.f32 0.0, %v2679
        %2681 = vmatprep.mubr.bf16.mxu0 0
        %2682 = vmatmul.mubr.bf16.gmra.mrb[0].mxu0 %v1188
        %v2683 = vpop.f32.mrb[0].mxu0
        %v2684 = vadd.f32 0.0, %v2683
        %v2685 = vpop.f32.mrb[0].mxu0
        %v2686 = vadd.f32 0.0, %v2685
        %v2687 = vpop.f32.mrb[0].mxu0
        %v2688 = vadd.f32 0.0, %v2687
        %v2689 = vpop.f32.mrb[0].mxu0
        %v2690 = vadd.f32 0.0, %v2689
        %2691 = vmatprep.mubr.bf16.mxu0 0
        %2692 = vmatmul.mubr.bf16.gmra.mrb[0].mxu0 %v1191
        %v2693 = vpop.f32.mrb[0].mxu0
        %v2694 = vadd.f32 0.0, %v2693
        %v2695 = vpop.f32.mrb[0].mxu0
        %v2696 = vadd.f32 0.0, %v2695
        %v2697 = vpop.f32.mrb[0].mxu0
        %v2698 = vadd.f32 0.0, %v2697
        %v2699 = vpop.f32.mrb[0].mxu0
        %v2700 = vadd.f32 0.0, %v2699
        %2701 = vmatprep.mubr.bf16.mxu0 0
        %2702 = vmatmul.mubr.bf16.gmra.mrb[0].mxu0 %v1194
        %v2703 = vpop.f32.mrb[0].mxu0
        %v2704 = vadd.f32 0.0, %v2703
        %v2705 = vpop.f32.mrb[0].mxu0
        %v2706 = vadd.f32 0.0, %v2705
        %v2707 = vpop.f32.mrb[0].mxu0
        %v2708 = vadd.f32 0.0, %v2707
        %v2709 = vpop.f32.mrb[0].mxu0
        %v2710 = vadd.f32 0.0, %v2709
        %2711 = vmatprep.mubr.bf16.mxu0 0
        %2712 = vmatmul.mubr.bf16.gmra.mrb[0].mxu0 %v1197
        %v2713 = vpop.f32.mrb[0].mxu0
        %v2714 = vadd.f32 0.0, %v2713
        %v2715 = vpop.f32.mrb[0].mxu0
        %v2716 = vadd.f32 0.0, %v2715
        %v2717 = vpop.f32.mrb[0].mxu0
        %v2718 = vadd.f32 0.0, %v2717
        %v2719 = vpop.f32.mrb[0].mxu0
        %v2720 = vadd.f32 0.0, %v2719
        %2721 = vmatprep.mubr.bf16.mxu0 0
        %2722 = vmatmul.mubr.bf16.gmra.mrb[0].mxu0 %v1200
        %v2723 = vpop.f32.mrb[0].mxu0
        %v2724 = vadd.f32 0.0, %v2723
        %v2725 = vpop.f32.mrb[0].mxu0
        %v2726 = vadd.f32 0.0, %v2725
        %v2727 = vpop.f32.mrb[0].mxu0
        %v2728 = vadd.f32 0.0, %v2727
        %v2729 = vpop.f32.mrb[0].mxu0
        %v2730 = vadd.f32 0.0, %v2729
        %2731 = vmatprep.mubr.bf16.mxu0 0
        %2732 = vmatmul.mubr.bf16.gmra.mrb[0].mxu0 %v1203
        %v2733 = vpop.f32.mrb[0].mxu0
        %v2734 = vadd.f32 0.0, %v2733
        %v2735 = vpop.f32.mrb[0].mxu0
        %v2736 = vadd.f32 0.0, %v2735
        %v2737 = vpop.f32.mrb[0].mxu0
        %v2738 = vadd.f32 0.0, %v2737
        %v2739 = vpop.f32.mrb[0].mxu0
        %v2740 = vadd.f32 0.0, %v2739
        %2741 = vmatprep.mubr.bf16.mxu0 0
        %2742 = vmatmul.mubr.bf16.gmra.mrb[0].mxu0 %v1206
        %v2743 = vpop.f32.mrb[0].mxu0
        %v2744 = vadd.f32 0.0, %v2743
        %v2745 = vpop.f32.mrb[0].mxu0
        %v2746 = vadd.f32 0.0, %v2745
        %v2747 = vpop.f32.mrb[0].mxu0
        %v2748 = vadd.f32 0.0, %v2747
        %v2749 = vpop.f32.mrb[0].mxu0
        %v2750 = vadd.f32 0.0, %v2749
        %2751 = vmatprep.mubr.bf16.mxu0 0
        %2752 = vmatmul.mubr.bf16.gmra.mrb[0].mxu0 %v1209
        %v2753 = vpop.f32.mrb[0].mxu0
        %v2754 = vadd.f32 0.0, %v2753
        %v2755 = vpop.f32.mrb[0].mxu0
        %v2756 = vadd.f32 0.0, %v2755
        %v2757 = vpop.f32.mrb[0].mxu0
        %v2758 = vadd.f32 0.0, %v2757
        %v2759 = vpop.f32.mrb[0].mxu0
        %v2760 = vadd.f32 0.0, %v2759
        %2761 = vmatprep.mubr.bf16.mxu0 0
        %2762 = vmatmul.mubr.bf16.gmra.mrb[0].mxu0 %v1212
        %v2763 = vpop.f32.mrb[0].mxu0
        %v2764 = vadd.f32 0.0, %v2763
        %v2765 = vpop.f32.mrb[0].mxu0
        %v2766 = vadd.f32 0.0, %v2765
        %v2767 = vpop.f32.mrb[0].mxu0
        %v2768 = vadd.f32 0.0, %v2767
        %v2769 = vpop.f32.mrb[0].mxu0
        %v2770 = vadd.f32 0.0, %v2769
        %2771 = vmatprep.mubr.bf16.mxu0 0
        %2772 = vmatmul.mubr.bf16.gmra.mrb[0].mxu0 %v1215
        %v2773 = vpop.f32.mrb[0].mxu0
        %v2774 = vadd.f32 0.0, %v2773
        %v2775 = vpop.f32.mrb[0].mxu0
        %v2776 = vadd.f32 0.0, %v2775
        %v2777 = vpop.f32.mrb[0].mxu0
        %v2778 = vadd.f32 0.0, %v2777
        %v2779 = vpop.f32.mrb[0].mxu0
        %v2780 = vadd.f32 0.0, %v2779
        %2781 = vmatprep.mubr.bf16.mxu0 0
        %2782 = vmatmul.mubr.bf16.gmra.mrb[0].mxu0 %v1218
        %v2783 = vpop.f32.mrb[0].mxu0
        %v2784 = vadd.f32 0.0, %v2783
        %v2785 = vpop.f32.mrb[0].mxu0
        %v2786 = vadd.f32 0.0, %v2785
        %v2787 = vpop.f32.mrb[0].mxu0
        %v2788 = vadd.f32 0.0, %v2787
        %v2789 = vpop.f32.mrb[0].mxu0
        %v2790 = vadd.f32 0.0, %v2789
        %2791 = vmatprep.mubr.bf16.mxu0 0
        %2792 = vmatmul.mubr.bf16.gmra.mrb[0].mxu0 %v1221
        %v2793 = vpop.f32.mrb[0].mxu0
        %v2794 = vadd.f32 0.0, %v2793
        %v2795 = vpop.f32.mrb[0].mxu0
        %v2796 = vadd.f32 0.0, %v2795
        %v2797 = vpop.f32.mrb[0].mxu0
        %v2798 = vadd.f32 0.0, %v2797
        %v2799 = vpop.f32.mrb[0].mxu0
        %v2800 = vadd.f32 0.0, %v2799
        %2801 = vmatprep.mubr.bf16.mxu0 0
        %2802 = vmatmul.mubr.bf16.gmra.mrb[0].mxu0 %v1224
        %v2803 = vpop.f32.mrb[0].mxu0
        %v2804 = vadd.f32 0.0, %v2803
        %v2805 = vpop.f32.mrb[0].mxu0
        %v2806 = vadd.f32 0.0, %v2805
        %v2807 = vpop.f32.mrb[0].mxu0
        %v2808 = vadd.f32 0.0, %v2807
        %v2809 = vpop.f32.mrb[0].mxu0
        %v2810 = vadd.f32 0.0, %v2809
        %2811 = vmatprep.mubr.bf16.mxu0 0
        %2812 = vmatmul.mubr.bf16.gmra.mrb[0].mxu0 %v1227
        %v2813 = vpop.f32.mrb[0].mxu0
        %v2814 = vadd.f32 0.0, %v2813
        %v2815 = vpop.f32.mrb[0].mxu0
        %v2816 = vadd.f32 0.0, %v2815
        %v2817 = vpop.f32.mrb[0].mxu0
        %v2818 = vadd.f32 0.0, %v2817
        %v2819 = vpop.f32.mrb[0].mxu0
        %v2820 = vadd.f32 0.0, %v2819
        %2821 = vmatprep.mubr.bf16.mxu0 0
        %2822 = vmatmul.mubr.bf16.gmra.mrb[0].mxu0 %v1230
        %v2823 = vpop.f32.mrb[0].mxu0
        %v2824 = vadd.f32 0.0, %v2823
        %v2825 = vpop.f32.mrb[0].mxu0
        %v2826 = vadd.f32 0.0, %v2825
        %v2827 = vpop.f32.mrb[0].mxu0
        %v2828 = vadd.f32 0.0, %v2827
        %v2829 = vpop.f32.mrb[0].mxu0
        %v2830 = vadd.f32 0.0, %v2829
        %2831 = vmatprep.mubr.bf16.mxu0 0
        %2832 = vmatmul.mubr.bf16.gmra.mrb[0].mxu0 %v1233
        %v2833 = vpop.f32.mrb[0].mxu0
        %v2834 = vadd.f32 0.0, %v2833
        %v2835 = vpop.f32.mrb[0].mxu0
        %v2836 = vadd.f32 0.0, %v2835
        %v2837 = vpop.f32.mrb[0].mxu0
        %v2838 = vadd.f32 0.0, %v2837
        %v2839 = vpop.f32.mrb[0].mxu0
        %v2840 = vadd.f32 0.0, %v2839
        %2841 = vmatprep.mubr.bf16.mxu0 0
        %2842 = vmatmul.mubr.bf16.gmra.mrb[0].mxu0 %v1236
        %v2843 = vpop.f32.mrb[0].mxu0
        %v2844 = vadd.f32 0.0, %v2843
        %v2845 = vpop.f32.mrb[0].mxu0
        %v2846 = vadd.f32 0.0, %v2845
        %v2847 = vpop.f32.mrb[0].mxu0
        %v2848 = vadd.f32 0.0, %v2847
        %v2849 = vpop.f32.mrb[0].mxu0
        %v2850 = vadd.f32 0.0, %v2849
        %2851 = vmatprep.mubr.bf16.mxu0 0
        %2852 = vmatmul.mubr.bf16.gmra.mrb[0].mxu0 %v1239
        %v2853 = vpop.f32.mrb[0].mxu0
        %v2854 = vadd.f32 0.0, %v2853
        %v2855 = vpop.f32.mrb[0].mxu0
        %v2856 = vadd.f32 0.0, %v2855
        %v2857 = vpop.f32.mrb[0].mxu0
        %v2858 = vadd.f32 0.0, %v2857
        %v2859 = vpop.f32.mrb[0].mxu0
        %v2860 = vadd.f32 0.0, %v2859
        %2861 = vmatprep.mubr.bf16.mxu0 0
        %2862 = vmatmul.mubr.bf16.gmra.mrb[0].mxu0 %v1242
        %v2863 = vpop.f32.mrb[0].mxu0
        %v2864 = vadd.f32 0.0, %v2863
        %v2865 = vpop.f32.mrb[0].mxu0
        %v2866 = vadd.f32 0.0, %v2865
        %v2867 = vpop.f32.mrb[0].mxu0
        %v2868 = vadd.f32 0.0, %v2867
        %v2869 = vpop.f32.mrb[0].mxu0
        %v2870 = vadd.f32 0.0, %v2869
        %2871 = vmatprep.mubr.bf16.mxu0 0
        %2872 = vmatmul.mubr.bf16.gmra.mrb[0].mxu0 %v1245
        %v2873 = vpop.f32.mrb[0].mxu0
        %v2874 = vadd.f32 0.0, %v2873
        %v2875 = vpop.f32.mrb[0].mxu0
        %v2876 = vadd.f32 0.0, %v2875
        %v2877 = vpop.f32.mrb[0].mxu0
        %v2878 = vadd.f32 0.0, %v2877
        %v2879 = vpop.f32.mrb[0].mxu0
        %v2880 = vadd.f32 0.0, %v2879
        %2881 = vmatprep.mubr.bf16.mxu0 0
        %2882 = vmatmul.mubr.bf16.gmra.mrb[0].mxu0 %v1248
        %v2883 = vpop.f32.mrb[0].mxu0
        %v2884 = vadd.f32 0.0, %v2883
        %v2885 = vpop.f32.mrb[0].mxu0
        %v2886 = vadd.f32 0.0, %v2885
        %v2887 = vpop.f32.mrb[0].mxu0
        %v2888 = vadd.f32 0.0, %v2887
        %v2889 = vpop.f32.mrb[0].mxu0
        %v2890 = vadd.f32 0.0, %v2889
        %2891 = vmatprep.mubr.bf16.mxu0 0
        %2892 = vmatmul.mubr.bf16.gmra.mrb[0].mxu0 %v1251
        %v2893 = vpop.f32.mrb[0].mxu0
        %v2894 = vadd.f32 0.0, %v2893
        %v2895 = vpop.f32.mrb[0].mxu0
        %v2896 = vadd.f32 0.0, %v2895
        %v2897 = vpop.f32.mrb[0].mxu0
        %v2898 = vadd.f32 0.0, %v2897
        %v2899 = vpop.f32.mrb[0].mxu0
        %v2900 = vadd.f32 0.0, %v2899
        %2901 = vmatprep.mubr.bf16.mxu0 0
        %2902 = vmatmul.mubr.bf16.gmra.mrb[0].mxu0 %v1254
        %v2903 = vpop.f32.mrb[0].mxu0
        %v2904 = vadd.f32 0.0, %v2903
        %v2905 = vpop.f32.mrb[0].mxu0
        %v2906 = vadd.f32 0.0, %v2905
        %v2907 = vpop.f32.mrb[0].mxu0
        %v2908 = vadd.f32 0.0, %v2907
        %v2909 = vpop.f32.mrb[0].mxu0
        %v2910 = vadd.f32 0.0, %v2909
        %2911 = vmatprep.mubr.bf16.mxu0 0
        %2912 = vmatmul.mubr.bf16.gmra.mrb[0].mxu0 %v1257
        %v2913 = vpop.f32.mrb[0].mxu0
        %v2914 = vadd.f32 0.0, %v2913
        %v2915 = vpop.f32.mrb[0].mxu0
        %v2916 = vadd.f32 0.0, %v2915
        %v2917 = vpop.f32.mrb[0].mxu0
        %v2918 = vadd.f32 0.0, %v2917
        %v2919 = vpop.f32.mrb[0].mxu0
        %v2920 = vadd.f32 0.0, %v2919
        %2921 = vmatprep.mubr.bf16.mxu0 0
        %2922 = vmatmul.mubr.bf16.gmra.mrb[0].mxu0 %v1260
        %v2923 = vpop.f32.mrb[0].mxu0
        %v2924 = vadd.f32 0.0, %v2923
        %v2925 = vpop.f32.mrb[0].mxu0
        %v2926 = vadd.f32 0.0, %v2925
        %v2927 = vpop.f32.mrb[0].mxu0
        %v2928 = vadd.f32 0.0, %v2927
        %v2929 = vpop.f32.mrb[0].mxu0
        %v2930 = vadd.f32 0.0, %v2929
        %2931 = vmatprep.mubr.bf16.mxu0 0
        %2932 = vmatmul.mubr.bf16.gmra.mrb[0].mxu0 %v1263
        %v2933 = vpop.f32.mrb[0].mxu0
        %v2934 = vadd.f32 0.0, %v2933
        %v2935 = vpop.f32.mrb[0].mxu0
        %v2936 = vadd.f32 0.0, %v2935
        %v2937 = vpop.f32.mrb[0].mxu0
        %v2938 = vadd.f32 0.0, %v2937
        %v2939 = vpop.f32.mrb[0].mxu0
        %v2940 = vadd.f32 0.0, %v2939
        %2941 = vmatprep.mubr.bf16.mxu0 0
        %2942 = vmatmul.mubr.bf16.gmra.mrb[0].mxu0 %v1266
        %v2943 = vpop.f32.mrb[0].mxu0
        %v2944 = vadd.f32 0.0, %v2943
        %v2945 = vpop.f32.mrb[0].mxu0
        %v2946 = vadd.f32 0.0, %v2945
        %v2947 = vpop.f32.mrb[0].mxu0
        %v2948 = vadd.f32 0.0, %v2947
        %v2949 = vpop.f32.mrb[0].mxu0
        %v2950 = vadd.f32 0.0, %v2949
        %2951 = vmatprep.mubr.bf16.mxu0 0
        %2952 = vmatmul.mubr.bf16.gmra.mrb[0].mxu0 %v1269
        %v2953 = vpop.f32.mrb[0].mxu0
        %v2954 = vadd.f32 0.0, %v2953
        %v2955 = vpop.f32.mrb[0].mxu0
        %v2956 = vadd.f32 0.0, %v2955
        %v2957 = vpop.f32.mrb[0].mxu0
        %v2958 = vadd.f32 0.0, %v2957
        %v2959 = vpop.f32.mrb[0].mxu0
        %v2960 = vadd.f32 0.0, %v2959
        %2961 = vmatprep.mubr.bf16.mxu0 0
        %2962 = vmatmul.mubr.bf16.gmra.mrb[0].mxu0 %v1272
        %v2963 = vpop.f32.mrb[0].mxu0
        %v2964 = vadd.f32 0.0, %v2963
        %v2965 = vpop.f32.mrb[0].mxu0
        %v2966 = vadd.f32 0.0, %v2965
        %v2967 = vpop.f32.mrb[0].mxu0
        %v2968 = vadd.f32 0.0, %v2967
        %v2969 = vpop.f32.mrb[0].mxu0
        %v2970 = vadd.f32 0.0, %v2969
        %2971 = vmatprep.mubr.bf16.mxu0 0
        %2972 = vmatmul.mubr.bf16.gmra.mrb[0].mxu0 %v1275
        %v2973 = vpop.f32.mrb[0].mxu0
        %v2974 = vadd.f32 0.0, %v2973
        %v2975 = vpop.f32.mrb[0].mxu0
        %v2976 = vadd.f32 0.0, %v2975
        %v2977 = vpop.f32.mrb[0].mxu0
        %v2978 = vadd.f32 0.0, %v2977
        %v2979 = vpop.f32.mrb[0].mxu0
        %v2980 = vadd.f32 0.0, %v2979
        %2981 = vmatprep.mubr.bf16.mxu0 0
        %2982 = vmatmul.mubr.bf16.gmra.mrb[0].mxu0 %v1278
        %v2983 = vpop.f32.mrb[0].mxu0
        %v2984 = vadd.f32 0.0, %v2983
        %v2985 = vpop.f32.mrb[0].mxu0
        %v2986 = vadd.f32 0.0, %v2985
        %v2987 = vpop.f32.mrb[0].mxu0
        %v2988 = vadd.f32 0.0, %v2987
        %v2989 = vpop.f32.mrb[0].mxu0
        %v2990 = vadd.f32 0.0, %v2989
        %2991 = vmatprep.mubr.bf16.mxu0 0
        %2992 = vmatmul.mubr.bf16.gmra.mrb[0].mxu0 %v1281
        %v2993 = vpop.f32.mrb[0].mxu0
        %v2994 = vadd.f32 0.0, %v2993
        %v2995 = vpop.f32.mrb[0].mxu0
        %v2996 = vadd.f32 0.0, %v2995
        %v2997 = vpop.f32.mrb[0].mxu0
        %v2998 = vadd.f32 0.0, %v2997
        %v2999 = vpop.f32.mrb[0].mxu0
        %v3000 = vadd.f32 0.0, %v2999
        %3001 = vmatprep.mubr.bf16.mxu0 0
        %3002 = vmatmul.mubr.bf16.gmra.mrb[0].mxu0 %v1284
        %v3003 = vpop.f32.mrb[0].mxu0
        %v3004 = vadd.f32 0.0, %v3003
        %v3005 = vpop.f32.mrb[0].mxu0
        %v3006 = vadd.f32 0.0, %v3005
        %v3007 = vpop.f32.mrb[0].mxu0
        %v3008 = vadd.f32 0.0, %v3007
        %v3009 = vpop.f32.mrb[0].mxu0
        %v3010 = vadd.f32 0.0, %v3009
        %3011 = vmatprep.mubr.bf16.mxu0 0
        %3012 = vmatmul.mubr.bf16.gmra.mrb[0].mxu0 %v1287
        %v3013 = vpop.f32.mrb[0].mxu0
        %v3014 = vadd.f32 0.0, %v3013
        %v3015 = vpop.f32.mrb[0].mxu0
        %v3016 = vadd.f32 0.0, %v3015
        %v3017 = vpop.f32.mrb[0].mxu0
        %v3018 = vadd.f32 0.0, %v3017
        %v3019 = vpop.f32.mrb[0].mxu0
        %v3020 = vadd.f32 0.0, %v3019
        %3021 = vmatprep.mubr.bf16.mxu0 0
        %3022 = vmatmul.mubr.bf16.gmra.mrb[0].mxu0 %v1290
        %v3023 = vpop.f32.mrb[0].mxu0
        %v3024 = vadd.f32 0.0, %v3023
        %v3025 = vpop.f32.mrb[0].mxu0
        %v3026 = vadd.f32 0.0, %v3025
        %v3027 = vpop.f32.mrb[0].mxu0
        %v3028 = vadd.f32 0.0, %v3027
        %v3029 = vpop.f32.mrb[0].mxu0
        %v3030 = vadd.f32 0.0, %v3029
        %3031 = vmatprep.mubr.bf16.mxu0 0
        %3032 = vmatmul.mubr.bf16.gmra.mrb[0].mxu0 %v1293
        %v3033 = vpop.f32.mrb[0].mxu0
        %v3034 = vadd.f32 0.0, %v3033
        %v3035 = vpop.f32.mrb[0].mxu0
        %v3036 = vadd.f32 0.0, %v3035
        %v3037 = vpop.f32.mrb[0].mxu0
        %v3038 = vadd.f32 0.0, %v3037
        %v3039 = vpop.f32.mrb[0].mxu0
        %v3040 = vadd.f32 0.0, %v3039
        %3041 = vmatprep.mubr.bf16.mxu0 0
        %3042 = vmatmul.mubr.bf16.gmra.mrb[0].mxu0 %v1296
        %v3043 = vpop.f32.mrb[0].mxu0
        %v3044 = vadd.f32 0.0, %v3043
        %v3045 = vpop.f32.mrb[0].mxu0
        %v3046 = vadd.f32 0.0, %v3045
        %v3047 = vpop.f32.mrb[0].mxu0
        %v3048 = vadd.f32 0.0, %v3047
        %v3049 = vpop.f32.mrb[0].mxu0
        %v3050 = vadd.f32 0.0, %v3049
        %3051 = vmatprep.mubr.bf16.mxu0 0
        %3052 = vmatmul.mubr.bf16.gmra.mrb[0].mxu0 %v1299
        %v3053 = vpop.f32.mrb[0].mxu0
        %v3054 = vadd.f32 0.0, %v3053
        %v3055 = vpop.f32.mrb[0].mxu0
        %v3056 = vadd.f32 0.0, %v3055
        %v3057 = vpop.f32.mrb[0].mxu0
        %v3058 = vadd.f32 0.0, %v3057
        %v3059 = vpop.f32.mrb[0].mxu0
        %v3060 = vadd.f32 0.0, %v3059
        %3061 = vmatprep.mubr.bf16.mxu0 0
        %3062 = vmatmul.mubr.bf16.gmra.mrb[0].mxu0 %v1302
        %v3063 = vpop.f32.mrb[0].mxu0
        %v3064 = vadd.f32 0.0, %v3063
        %v3065 = vpop.f32.mrb[0].mxu0
        %v3066 = vadd.f32 0.0, %v3065
        %v3067 = vpop.f32.mrb[0].mxu0
        %v3068 = vadd.f32 0.0, %v3067
        %v3069 = vpop.f32.mrb[0].mxu0
        %v3070 = vadd.f32 0.0, %v3069
        %3071 = vmatprep.mubr.bf16.mxu0 0
        %3072 = vmatmul.mubr.bf16.gmra.mrb[0].mxu0 %v1305
        %v3073 = vpop.f32.mrb[0].mxu0
        %v3074 = vadd.f32 0.0, %v3073
        %v3075 = vpop.f32.mrb[0].mxu0
        %v3076 = vadd.f32 0.0, %v3075
        %v3077 = vpop.f32.mrb[0].mxu0
        %v3078 = vadd.f32 0.0, %v3077
        %v3079 = vpop.f32.mrb[0].mxu0
        %v3080 = vadd.f32 0.0, %v3079
        %3081 = vmatprep.mubr.bf16.mxu0 0
        %3082 = vmatmul.mubr.bf16.gmra.mrb[0].mxu0 %v1308
        %v3083 = vpop.f32.mrb[0].mxu0
        %v3084 = vadd.f32 0.0, %v3083
        %v3085 = vpop.f32.mrb[0].mxu0
        %v3086 = vadd.f32 0.0, %v3085
        %v3087 = vpop.f32.mrb[0].mxu0
        %v3088 = vadd.f32 0.0, %v3087
        %v3089 = vpop.f32.mrb[0].mxu0
        %v3090 = vadd.f32 0.0, %v3089
        %3091 = vmatprep.mubr.bf16.mxu0 0
        %3092 = vmatmul.mubr.bf16.gmra.mrb[0].mxu0 %v1311
        %v3093 = vpop.f32.mrb[0].mxu0
        %v3094 = vadd.f32 0.0, %v3093
        %v3095 = vpop.f32.mrb[0].mxu0
        %v3096 = vadd.f32 0.0, %v3095
        %v3097 = vpop.f32.mrb[0].mxu0
        %v3098 = vadd.f32 0.0, %v3097
        %v3099 = vpop.f32.mrb[0].mxu0
        %v3100 = vadd.f32 0.0, %v3099
        %3101 = vmatprep.mubr.bf16.mxu0 0
        %3102 = vmatmul.mubr.bf16.gmra.mrb[0].mxu0 %v1314
        %v3103 = vpop.f32.mrb[0].mxu0
        %v3104 = vadd.f32 0.0, %v3103
        %v3105 = vpop.f32.mrb[0].mxu0
        %v3106 = vadd.f32 0.0, %v3105
        %v3107 = vpop.f32.mrb[0].mxu0
        %v3108 = vadd.f32 0.0, %v3107
        %v3109 = vpop.f32.mrb[0].mxu0
        %v3110 = vadd.f32 0.0, %v3109
        %3111 = vmatprep.mubr.bf16.mxu0 0
        %3112 = vmatmul.mubr.bf16.gmra.mrb[0].mxu0 %v1317
        %v3113 = vpop.f32.mrb[0].mxu0
        %v3114 = vadd.f32 0.0, %v3113
        %v3115 = vpop.f32.mrb[0].mxu0
        %v3116 = vadd.f32 0.0, %v3115
        %v3117 = vpop.f32.mrb[0].mxu0
        %v3118 = vadd.f32 0.0, %v3117
        %v3119 = vpop.f32.mrb[0].mxu0
        %v3120 = vadd.f32 0.0, %v3119
        %3121 = vmatprep.mubr.bf16.mxu0 0
        %3122 = vmatmul.mubr.bf16.gmra.mrb[0].mxu0 %v1320
        %v3123 = vpop.f32.mrb[0].mxu0
        %v3124 = vadd.f32 0.0, %v3123
        %v3125 = vpop.f32.mrb[0].mxu0
        %v3126 = vadd.f32 0.0, %v3125
        %v3127 = vpop.f32.mrb[0].mxu0
        %v3128 = vadd.f32 0.0, %v3127
        %v3129 = vpop.f32.mrb[0].mxu0
        %v3130 = vadd.f32 0.0, %v3129
        %3131 = vmatprep.mubr.bf16.mxu0 0
        %3132 = vmatmul.mubr.bf16.gmra.mrb[0].mxu0 %v1323
        %v3133 = vpop.f32.mrb[0].mxu0
        %v3134 = vadd.f32 0.0, %v3133
        %v3135 = vpop.f32.mrb[0].mxu0
        %v3136 = vadd.f32 0.0, %v3135
        %v3137 = vpop.f32.mrb[0].mxu0
        %v3138 = vadd.f32 0.0, %v3137
        %v3139 = vpop.f32.mrb[0].mxu0
        %v3140 = vadd.f32 0.0, %v3139
        %3141 = vmatprep.mubr.bf16.mxu0 0
        %3142 = vmatmul.mubr.bf16.gmra.mrb[0].mxu0 %v1326
        %v3143 = vpop.f32.mrb[0].mxu0
        %v3144 = vadd.f32 0.0, %v3143
        %v3145 = vpop.f32.mrb[0].mxu0
        %v3146 = vadd.f32 0.0, %v3145
        %v3147 = vpop.f32.mrb[0].mxu0
        %v3148 = vadd.f32 0.0, %v3147
        %v3149 = vpop.f32.mrb[0].mxu0
        %v3150 = vadd.f32 0.0, %v3149
        %3151 = vmatprep.mubr.bf16.mxu0 0
        %3152 = vmatmul.mubr.bf16.gmra.mrb[0].mxu0 %v1329
        %v3153 = vpop.f32.mrb[0].mxu0
        %v3154 = vadd.f32 0.0, %v3153
        %v3155 = vpop.f32.mrb[0].mxu0
        %v3156 = vadd.f32 0.0, %v3155
        %v3157 = vpop.f32.mrb[0].mxu0
        %v3158 = vadd.f32 0.0, %v3157
        %v3159 = vpop.f32.mrb[0].mxu0
        %v3160 = vadd.f32 0.0, %v3159
        %3161 = vmatprep.mubr.bf16.mxu0 0
        %3162 = vmatmul.mubr.bf16.gmra.mrb[0].mxu0 %v2578
        %v3163 = vpop.f32.mrb[0].mxu0
        %v3164 = vadd.f32 0.0, %v3163
        %v3165 = vpop.f32.mrb[0].mxu0
        %v3166 = vadd.f32 0.0, %v3165
        %v3167 = vpop.f32.mrb[0].mxu0
        %v3168 = vadd.f32 0.0, %v3167
        %v3169 = vpop.f32.mrb[0].mxu0
        %v3170 = vadd.f32 0.0, %v3169
        %3171 = vmatprep.mubr.bf16.mxu0 0
        %3172 = vmatmul.mubr.bf16.gmra.mrb[0].mxu0 %v2581
        %v3173 = vpop.f32.mrb[0].mxu0
        %v3174 = vadd.f32 0.0, %v3173
        %v3175 = vpop.f32.mrb[0].mxu0
        %v3176 = vadd.f32 0.0, %v3175
        %v3177 = vpop.f32.mrb[0].mxu0
        %v3178 = vadd.f32 0.0, %v3177
        %v3179 = vpop.f32.mrb[0].mxu0
        %v3180 = vadd.f32 0.0, %v3179
        %3181 = vdwg.mxu0
        %v3182 = vadd.f32 %v1996, %v2624
        %v3183 = vadd.f32 %v1998, %v2626
        %v3184 = vadd.f32 %v2000, %v2628
        %v3185 = vadd.f32 %v2002, %v2630
        %v3186 = vadd.f32 %v2006, %v2634
        %v3187 = vadd.f32 %v2008, %v2636
        %v3188 = vadd.f32 %v2010, %v2638
        %v3189 = vadd.f32 %v2012, %v2640
        %v3190 = vadd.f32 %v2016, %v2644
        %v3191 = vadd.f32 %v2018, %v2646
        %v3192 = vadd.f32 %v2020, %v2648
        %v3193 = vadd.f32 %v2022, %v2650
        %v3194 = vadd.f32 %v2026, %v2654
        %v3195 = vadd.f32 %v2028, %v2656
        %v3196 = vadd.f32 %v2030, %v2658
        %v3197 = vadd.f32 %v2032, %v2660
        %v3198 = vadd.f32 %v2036, %v2664
        %v3199 = vadd.f32 %v2038, %v2666
        %v3200 = vadd.f32 %v2040, %v2668
        %v3201 = vadd.f32 %v2042, %v2670
        %v3202 = vadd.f32 %v2046, %v2674
        %v3203 = vadd.f32 %v2048, %v2676
        %v3204 = vadd.f32 %v2050, %v2678
        %v3205 = vadd.f32 %v2052, %v2680
        %v3206 = vadd.f32 %v2056, %v2684
        %v3207 = vadd.f32 %v2058, %v2686
        %v3208 = vadd.f32 %v2060, %v2688
        %v3209 = vadd.f32 %v2062, %v2690
        %v3210 = vadd.f32 %v2066, %v2694
        %v3211 = vadd.f32 %v2068, %v2696
        %v3212 = vadd.f32 %v2070, %v2698
        %v3213 = vadd.f32 %v2072, %v2700
        %v3214 = vadd.f32 %v2076, %v2704
        %v3215 = vadd.f32 %v2078, %v2706
        %v3216 = vadd.f32 %v2080, %v2708
        %v3217 = vadd.f32 %v2082, %v2710
        %v3218 = vadd.f32 %v2086, %v2714
        %v3219 = vadd.f32 %v2088, %v2716
        %v3220 = vadd.f32 %v2090, %v2718
        %v3221 = vadd.f32 %v2092, %v2720
        %v3222 = vadd.f32 %v2096, %v2724
        %v3223 = vadd.f32 %v2098, %v2726
        %v3224 = vadd.f32 %v2100, %v2728
        %v3225 = vadd.f32 %v2102, %v2730
        %v3226 = vadd.f32 %v2106, %v2734
        %v3227 = vadd.f32 %v2108, %v2736
        %v3228 = vadd.f32 %v2110, %v2738
        %v3229 = vadd.f32 %v2112, %v2740
        %v3230 = vadd.f32 %v2116, %v2744
        %v3231 = vadd.f32 %v2118, %v2746
        %v3232 = vadd.f32 %v2120, %v2748
        %v3233 = vadd.f32 %v2122, %v2750
        %v3234 = vadd.f32 %v2126, %v2754
        %v3235 = vadd.f32 %v2128, %v2756
        %v3236 = vadd.f32 %v2130, %v2758
        %v3237 = vadd.f32 %v2132, %v2760
        %v3238 = vadd.f32 %v2136, %v2764
        %v3239 = vadd.f32 %v2138, %v2766
        %v3240 = vadd.f32 %v2140, %v2768
        %v3241 = vadd.f32 %v2142, %v2770
        %v3242 = vadd.f32 %v2146, %v2774
        %v3243 = vadd.f32 %v2148, %v2776
        %v3244 = vadd.f32 %v2150, %v2778
        %v3245 = vadd.f32 %v2152, %v2780
        %v3246 = vadd.f32 %v2156, %v2784
        %v3247 = vadd.f32 %v2158, %v2786
        %v3248 = vadd.f32 %v2160, %v2788
        %v3249 = vadd.f32 %v2162, %v2790
        %v3250 = vadd.f32 %v2166, %v2794
        %v3251 = vadd.f32 %v2168, %v2796
        %v3252 = vadd.f32 %v2170, %v2798
        %v3253 = vadd.f32 %v2172, %v2800
        %v3254 = vadd.f32 %v2176, %v2804
        %v3255 = vadd.f32 %v2178, %v2806
        %v3256 = vadd.f32 %v2180, %v2808
        %v3257 = vadd.f32 %v2182, %v2810
        %v3258 = vadd.f32 %v2186, %v2814
        %v3259 = vadd.f32 %v2188, %v2816
        %v3260 = vadd.f32 %v2190, %v2818
        %v3261 = vadd.f32 %v2192, %v2820
        %v3262 = vadd.f32 %v2196, %v2824
        %v3263 = vadd.f32 %v2198, %v2826
        %v3264 = vadd.f32 %v2200, %v2828
        %v3265 = vadd.f32 %v2202, %v2830
        %v3266 = vadd.f32 %v2206, %v2834
        %v3267 = vadd.f32 %v2208, %v2836
        %v3268 = vadd.f32 %v2210, %v2838
        %v3269 = vadd.f32 %v2212, %v2840
        %v3270 = vadd.f32 %v2216, %v2844
        %v3271 = vadd.f32 %v2218, %v2846
        %v3272 = vadd.f32 %v2220, %v2848
        %v3273 = vadd.f32 %v2222, %v2850
        %v3274 = vadd.f32 %v2226, %v2854
        %v3275 = vadd.f32 %v2228, %v2856
        %v3276 = vadd.f32 %v2230, %v2858
        %v3277 = vadd.f32 %v2232, %v2860
        %v3278 = vadd.f32 %v2236, %v2864
        %v3279 = vadd.f32 %v2238, %v2866
        %v3280 = vadd.f32 %v2240, %v2868
        %v3281 = vadd.f32 %v2242, %v2870
        %v3282 = vadd.f32 %v2246, %v2874
        %v3283 = vadd.f32 %v2248, %v2876
        %v3284 = vadd.f32 %v2250, %v2878
        %v3285 = vadd.f32 %v2252, %v2880
        %v3286 = vadd.f32 %v2256, %v2884
        %v3287 = vadd.f32 %v2258, %v2886
        %v3288 = vadd.f32 %v2260, %v2888
        %v3289 = vadd.f32 %v2262, %v2890
        %v3290 = vadd.f32 %v2266, %v2894
        %v3291 = vadd.f32 %v2268, %v2896
        %v3292 = vadd.f32 %v2270, %v2898
        %v3293 = vadd.f32 %v2272, %v2900
        %v3294 = vadd.f32 %v2276, %v2904
        %v3295 = vadd.f32 %v2278, %v2906
        %v3296 = vadd.f32 %v2280, %v2908
        %v3297 = vadd.f32 %v2282, %v2910
        %v3298 = vadd.f32 %v2286, %v2914
        %v3299 = vadd.f32 %v2288, %v2916
        %v3300 = vadd.f32 %v2290, %v2918
        %v3301 = vadd.f32 %v2292, %v2920
        %v3302 = vadd.f32 %v2296, %v2924
        %v3303 = vadd.f32 %v2298, %v2926
        %v3304 = vadd.f32 %v2300, %v2928
        %v3305 = vadd.f32 %v2302, %v2930
        %v3306 = vadd.f32 %v2306, %v2934
        %v3307 = vadd.f32 %v2308, %v2936
        %v3308 = vadd.f32 %v2310, %v2938
        %v3309 = vadd.f32 %v2312, %v2940
        %v3310 = vadd.f32 %v2316, %v2944
        %v3311 = vadd.f32 %v2318, %v2946
        %v3312 = vadd.f32 %v2320, %v2948
        %v3313 = vadd.f32 %v2322, %v2950
        %v3314 = vadd.f32 %v2326, %v2954
        %v3315 = vadd.f32 %v2328, %v2956
        %v3316 = vadd.f32 %v2330, %v2958
        %v3317 = vadd.f32 %v2332, %v2960
        %v3318 = vadd.f32 %v2336, %v2964
        %v3319 = vadd.f32 %v2338, %v2966
        %v3320 = vadd.f32 %v2340, %v2968
        %v3321 = vadd.f32 %v2342, %v2970
        %v3322 = vadd.f32 %v2346, %v2974
        %v3323 = vadd.f32 %v2348, %v2976
        %v3324 = vadd.f32 %v2350, %v2978
        %v3325 = vadd.f32 %v2352, %v2980
        %v3326 = vadd.f32 %v2356, %v2984
        %v3327 = vadd.f32 %v2358, %v2986
        %v3328 = vadd.f32 %v2360, %v2988
        %v3329 = vadd.f32 %v2362, %v2990
        %v3330 = vadd.f32 %v2366, %v2994
        %v3331 = vadd.f32 %v2368, %v2996
        %v3332 = vadd.f32 %v2370, %v2998
        %v3333 = vadd.f32 %v2372, %v3000
        %v3334 = vadd.f32 %v2376, %v3004
        %v3335 = vadd.f32 %v2378, %v3006
        %v3336 = vadd.f32 %v2380, %v3008
        %v3337 = vadd.f32 %v2382, %v3010
        %v3338 = vadd.f32 %v2386, %v3014
        %v3339 = vadd.f32 %v2388, %v3016
        %v3340 = vadd.f32 %v2390, %v3018
        %v3341 = vadd.f32 %v2392, %v3020
        %v3342 = vadd.f32 %v2396, %v3024
        %v3343 = vadd.f32 %v2398, %v3026
        %v3344 = vadd.f32 %v2400, %v3028
        %v3345 = vadd.f32 %v2402, %v3030
        %v3346 = vadd.f32 %v2406, %v3034
        %v3347 = vadd.f32 %v2408, %v3036
        %v3348 = vadd.f32 %v2410, %v3038
        %v3349 = vadd.f32 %v2412, %v3040
        %v3350 = vadd.f32 %v2416, %v3044
        %v3351 = vadd.f32 %v2418, %v3046
        %v3352 = vadd.f32 %v2420, %v3048
        %v3353 = vadd.f32 %v2422, %v3050
        %v3354 = vadd.f32 %v2426, %v3054
        %v3355 = vadd.f32 %v2428, %v3056
        %v3356 = vadd.f32 %v2430, %v3058
        %v3357 = vadd.f32 %v2432, %v3060
        %v3358 = vadd.f32 %v2436, %v3064
        %v3359 = vadd.f32 %v2438, %v3066
        %v3360 = vadd.f32 %v2440, %v3068
        %v3361 = vadd.f32 %v2442, %v3070
        %v3362 = vadd.f32 %v2446, %v3074
        %v3363 = vadd.f32 %v2448, %v3076
        %v3364 = vadd.f32 %v2450, %v3078
        %v3365 = vadd.f32 %v2452, %v3080
        %v3366 = vadd.f32 %v2456, %v3084
        %v3367 = vadd.f32 %v2458, %v3086
        %v3368 = vadd.f32 %v2460, %v3088
        %v3369 = vadd.f32 %v2462, %v3090
        %v3370 = vadd.f32 %v2466, %v3094
        %v3371 = vadd.f32 %v2468, %v3096
        %v3372 = vadd.f32 %v2470, %v3098
        %v3373 = vadd.f32 %v2472, %v3100
        %v3374 = vadd.f32 %v2476, %v3104
        %v3375 = vadd.f32 %v2478, %v3106
        %v3376 = vadd.f32 %v2480, %v3108
        %v3377 = vadd.f32 %v2482, %v3110
        %v3378 = vadd.f32 %v2486, %v3114
        %v3379 = vadd.f32 %v2488, %v3116
        %v3380 = vadd.f32 %v2490, %v3118
        %v3381 = vadd.f32 %v2492, %v3120
        %v3382 = vadd.f32 %v2496, %v3124
        %v3383 = vadd.f32 %v2498, %v3126
        %v3384 = vadd.f32 %v2500, %v3128
        %v3385 = vadd.f32 %v2502, %v3130
        %v3386 = vadd.f32 %v2506, %v3134
        %v3387 = vadd.f32 %v2508, %v3136
        %v3388 = vadd.f32 %v2510, %v3138
        %v3389 = vadd.f32 %v2512, %v3140
        %v3390 = vadd.f32 %v2516, %v3144
        %v3391 = vadd.f32 %v2518, %v3146
        %v3392 = vadd.f32 %v2520, %v3148
        %v3393 = vadd.f32 %v2522, %v3150
        %v3394 = vadd.f32 %v2526, %v3154
        %v3395 = vadd.f32 %v2528, %v3156
        %v3396 = vadd.f32 %v2530, %v3158
        %v3397 = vadd.f32 %v2532, %v3160
        %v3398 = vadd.f32 %v2536, %v3164
        %v3399 = vadd.f32 %v2538, %v3166
        %v3400 = vadd.f32 %v2540, %v3168
        %v3401 = vadd.f32 %v2542, %v3170
        %v3402 = vadd.f32 %v2546, %v3174
        %v3403 = vadd.f32 %v2548, %v3176
        %v3404 = vadd.f32 %v2550, %v3178
        %v3405 = vadd.f32 %v2552, %v3180
        %v3406 = vld [vmem:[%s2] sm:$0x3]
        %v3408 = vlaneseq
        %v3409 = vshrl.u32 %v3408, 7
        %v3410 = vsub.s32 0, %v3409
        %v3411 = vrot.slane %v3406, %v3410
        %v3412 = vlaneseq
        %v3413 = vshrl.u32 %v3412, 7
        %v3414 = vsub.s32 1, %v3413
        %v3415 = vrot.slane %v3406, %v3414
        %v3418 = vadd.f32 %v3182, %v3411
        %v3419 = vadd.f32 %v3183, %v3415
        %v3420 = vadd.f32 %v3184, %v3411
        %v3421 = vadd.f32 %v3185, %v3415
        %v3422 = vadd.f32 %v3186, %v3411
        %v3423 = vadd.f32 %v3187, %v3415
        %v3424 = vadd.f32 %v3188, %v3411
        %v3425 = vadd.f32 %v3189, %v3415
        %v3426 = vadd.f32 %v3190, %v3411
        %v3427 = vadd.f32 %v3191, %v3415
        %v3428 = vadd.f32 %v3192, %v3411
        %v3429 = vadd.f32 %v3193, %v3415
        %v3430 = vadd.f32 %v3194, %v3411
        %v3431 = vadd.f32 %v3195, %v3415
        %v3432 = vadd.f32 %v3196, %v3411
        %v3433 = vadd.f32 %v3197, %v3415
        %v3434 = vadd.f32 %v3198, %v3411
        %v3435 = vadd.f32 %v3199, %v3415
        %v3436 = vadd.f32 %v3200, %v3411
        %v3437 = vadd.f32 %v3201, %v3415
        %v3438 = vadd.f32 %v3202, %v3411
        %v3439 = vadd.f32 %v3203, %v3415
        %v3440 = vadd.f32 %v3204, %v3411
        %v3441 = vadd.f32 %v3205, %v3415
        %v3442 = vadd.f32 %v3206, %v3411
        %v3443 = vadd.f32 %v3207, %v3415
        %v3444 = vadd.f32 %v3208, %v3411
        %v3445 = vadd.f32 %v3209, %v3415
        %v3446 = vadd.f32 %v3210, %v3411
        %v3447 = vadd.f32 %v3211, %v3415
        %v3448 = vadd.f32 %v3212, %v3411
        %v3449 = vadd.f32 %v3213, %v3415
        %v3450 = vadd.f32 %v3214, %v3411
        %v3451 = vadd.f32 %v3215, %v3415
        %v3452 = vadd.f32 %v3216, %v3411
        %v3453 = vadd.f32 %v3217, %v3415
        %v3454 = vadd.f32 %v3218, %v3411
        %v3455 = vadd.f32 %v3219, %v3415
        %v3456 = vadd.f32 %v3220, %v3411
        %v3457 = vadd.f32 %v3221, %v3415
        %v3458 = vadd.f32 %v3222, %v3411
        %v3459 = vadd.f32 %v3223, %v3415
        %v3460 = vadd.f32 %v3224, %v3411
        %v3461 = vadd.f32 %v3225, %v3415
        %v3462 = vadd.f32 %v3226, %v3411
        %v3463 = vadd.f32 %v3227, %v3415
        %v3464 = vadd.f32 %v3228, %v3411
        %v3465 = vadd.f32 %v3229, %v3415
        %v3466 = vadd.f32 %v3230, %v3411
        %v3467 = vadd.f32 %v3231, %v3415
        %v3468 = vadd.f32 %v3232, %v3411
        %v3469 = vadd.f32 %v3233, %v3415
        %v3470 = vadd.f32 %v3234, %v3411
        %v3471 = vadd.f32 %v3235, %v3415
        %v3472 = vadd.f32 %v3236, %v3411
        %v3473 = vadd.f32 %v3237, %v3415
        %v3474 = vadd.f32 %v3238, %v3411
        %v3475 = vadd.f32 %v3239, %v3415
        %v3476 = vadd.f32 %v3240, %v3411
        %v3477 = vadd.f32 %v3241, %v3415
        %v3478 = vadd.f32 %v3242, %v3411
        %v3479 = vadd.f32 %v3243, %v3415
        %v3480 = vadd.f32 %v3244, %v3411
        %v3481 = vadd.f32 %v3245, %v3415
        %v3482 = vadd.f32 %v3246, %v3411
        %v3483 = vadd.f32 %v3247, %v3415
        %v3484 = vadd.f32 %v3248, %v3411
        %v3485 = vadd.f32 %v3249, %v3415
        %v3486 = vadd.f32 %v3250, %v3411
        %v3487 = vadd.f32 %v3251, %v3415
        %v3488 = vadd.f32 %v3252, %v3411
        %v3489 = vadd.f32 %v3253, %v3415
        %v3490 = vadd.f32 %v3254, %v3411
        %v3491 = vadd.f32 %v3255, %v3415
        %v3492 = vadd.f32 %v3256, %v3411
        %v3493 = vadd.f32 %v3257, %v3415
        %v3494 = vadd.f32 %v3258, %v3411
        %v3495 = vadd.f32 %v3259, %v3415
        %v3496 = vadd.f32 %v3260, %v3411
        %v3497 = vadd.f32 %v3261, %v3415
        %v3498 = vadd.f32 %v3262, %v3411
        %v3499 = vadd.f32 %v3263, %v3415
        %v3500 = vadd.f32 %v3264, %v3411
        %v3501 = vadd.f32 %v3265, %v3415
        %v3502 = vadd.f32 %v3266, %v3411
        %v3503 = vadd.f32 %v3267, %v3415
        %v3504 = vadd.f32 %v3268, %v3411
        %v3505 = vadd.f32 %v3269, %v3415
        %v3506 = vadd.f32 %v3270, %v3411
        %v3507 = vadd.f32 %v3271, %v3415
        %v3508 = vadd.f32 %v3272, %v3411
        %v3509 = vadd.f32 %v3273, %v3415
        %v3510 = vadd.f32 %v3274, %v3411
        %v3511 = vadd.f32 %v3275, %v3415
        %v3512 = vadd.f32 %v3276, %v3411
        %v3513 = vadd.f32 %v3277, %v3415
        %v3514 = vadd.f32 %v3278, %v3411
        %v3515 = vadd.f32 %v3279, %v3415
        %v3516 = vadd.f32 %v3280, %v3411
        %v3517 = vadd.f32 %v3281, %v3415
        %v3518 = vadd.f32 %v3282, %v3411
        %v3519 = vadd.f32 %v3283, %v3415
        %v3520 = vadd.f32 %v3284, %v3411
        %v3521 = vadd.f32 %v3285, %v3415
        %v3522 = vadd.f32 %v3286, %v3411
        %v3523 = vadd.f32 %v3287, %v3415
        %v3524 = vadd.f32 %v3288, %v3411
        %v3525 = vadd.f32 %v3289, %v3415
        %v3526 = vadd.f32 %v3290, %v3411
        %v3527 = vadd.f32 %v3291, %v3415
        %v3528 = vadd.f32 %v3292, %v3411
        %v3529 = vadd.f32 %v3293, %v3415
        %v3530 = vadd.f32 %v3294, %v3411
        %v3531 = vadd.f32 %v3295, %v3415
        %v3532 = vadd.f32 %v3296, %v3411
        %v3533 = vadd.f32 %v3297, %v3415
        %v3534 = vadd.f32 %v3298, %v3411
        %v3535 = vadd.f32 %v3299, %v3415
        %v3536 = vadd.f32 %v3300, %v3411
        %v3537 = vadd.f32 %v3301, %v3415
        %v3538 = vadd.f32 %v3302, %v3411
        %v3539 = vadd.f32 %v3303, %v3415
        %v3540 = vadd.f32 %v3304, %v3411
        %v3541 = vadd.f32 %v3305, %v3415
        %v3542 = vadd.f32 %v3306, %v3411
        %v3543 = vadd.f32 %v3307, %v3415
        %v3544 = vadd.f32 %v3308, %v3411
        %v3545 = vadd.f32 %v3309, %v3415
        %v3546 = vadd.f32 %v3310, %v3411
        %v3547 = vadd.f32 %v3311, %v3415
        %v3548 = vadd.f32 %v3312, %v3411
        %v3549 = vadd.f32 %v3313, %v3415
        %v3550 = vadd.f32 %v3314, %v3411
        %v3551 = vadd.f32 %v3315, %v3415
        %v3552 = vadd.f32 %v3316, %v3411
        %v3553 = vadd.f32 %v3317, %v3415
        %v3554 = vadd.f32 %v3318, %v3411
        %v3555 = vadd.f32 %v3319, %v3415
        %v3556 = vadd.f32 %v3320, %v3411
        %v3557 = vadd.f32 %v3321, %v3415
        %v3558 = vadd.f32 %v3322, %v3411
        %v3559 = vadd.f32 %v3323, %v3415
        %v3560 = vadd.f32 %v3324, %v3411
        %v3561 = vadd.f32 %v3325, %v3415
        %v3562 = vadd.f32 %v3326, %v3411
        %v3563 = vadd.f32 %v3327, %v3415
        %v3564 = vadd.f32 %v3328, %v3411
        %v3565 = vadd.f32 %v3329, %v3415
        %v3566 = vadd.f32 %v3330, %v3411
        %v3567 = vadd.f32 %v3331, %v3415
        %v3568 = vadd.f32 %v3332, %v3411
        %v3569 = vadd.f32 %v3333, %v3415
        %v3570 = vadd.f32 %v3334, %v3411
        %v3571 = vadd.f32 %v3335, %v3415
        %v3572 = vadd.f32 %v3336, %v3411
        %v3573 = vadd.f32 %v3337, %v3415
        %v3574 = vadd.f32 %v3338, %v3411
        %v3575 = vadd.f32 %v3339, %v3415
        %v3576 = vadd.f32 %v3340, %v3411
        %v3577 = vadd.f32 %v3341, %v3415
        %v3578 = vadd.f32 %v3342, %v3411
        %v3579 = vadd.f32 %v3343, %v3415
        %v3580 = vadd.f32 %v3344, %v3411
        %v3581 = vadd.f32 %v3345, %v3415
        %v3582 = vadd.f32 %v3346, %v3411
        %v3583 = vadd.f32 %v3347, %v3415
        %v3584 = vadd.f32 %v3348, %v3411
        %v3585 = vadd.f32 %v3349, %v3415
        %v3586 = vadd.f32 %v3350, %v3411
        %v3587 = vadd.f32 %v3351, %v3415
        %v3588 = vadd.f32 %v3352, %v3411
        %v3589 = vadd.f32 %v3353, %v3415
        %v3590 = vadd.f32 %v3354, %v3411
        %v3591 = vadd.f32 %v3355, %v3415
        %v3592 = vadd.f32 %v3356, %v3411
        %v3593 = vadd.f32 %v3357, %v3415
        %v3594 = vadd.f32 %v3358, %v3411
        %v3595 = vadd.f32 %v3359, %v3415
        %v3596 = vadd.f32 %v3360, %v3411
        %v3597 = vadd.f32 %v3361, %v3415
        %v3598 = vadd.f32 %v3362, %v3411
        %v3599 = vadd.f32 %v3363, %v3415
        %v3600 = vadd.f32 %v3364, %v3411
        %v3601 = vadd.f32 %v3365, %v3415
        %v3602 = vadd.f32 %v3366, %v3411
        %v3603 = vadd.f32 %v3367, %v3415
        %v3604 = vadd.f32 %v3368, %v3411
        %v3605 = vadd.f32 %v3369, %v3415
        %v3606 = vadd.f32 %v3370, %v3411
        %v3607 = vadd.f32 %v3371, %v3415
        %v3608 = vadd.f32 %v3372, %v3411
        %v3609 = vadd.f32 %v3373, %v3415
        %v3610 = vadd.f32 %v3374, %v3411
        %v3611 = vadd.f32 %v3375, %v3415
        %v3612 = vadd.f32 %v3376, %v3411
        %v3613 = vadd.f32 %v3377, %v3415
        %v3614 = vadd.f32 %v3378, %v3411
        %v3615 = vadd.f32 %v3379, %v3415
        %v3616 = vadd.f32 %v3380, %v3411
        %v3617 = vadd.f32 %v3381, %v3415
        %v3618 = vadd.f32 %v3382, %v3411
        %v3619 = vadd.f32 %v3383, %v3415
        %v3620 = vadd.f32 %v3384, %v3411
        %v3621 = vadd.f32 %v3385, %v3415
        %v3622 = vadd.f32 %v3386, %v3411
        %v3623 = vadd.f32 %v3387, %v3415
        %v3624 = vadd.f32 %v3388, %v3411
        %v3625 = vadd.f32 %v3389, %v3415
        %v3626 = vadd.f32 %v3390, %v3411
        %v3627 = vadd.f32 %v3391, %v3415
        %v3628 = vadd.f32 %v3392, %v3411
        %v3629 = vadd.f32 %v3393, %v3415
        %v3630 = vadd.f32 %v3394, %v3411
        %v3631 = vadd.f32 %v3395, %v3415
        %v3632 = vadd.f32 %v3396, %v3411
        %v3633 = vadd.f32 %v3397, %v3415
        %v3634 = vadd.f32 %v3398, %v3411
        %v3635 = vadd.f32 %v3399, %v3415
        %v3636 = vadd.f32 %v3400, %v3411
        %v3637 = vadd.f32 %v3401, %v3415
        %v3638 = vadd.f32 %v3402, %v3411
        %v3639 = vadd.f32 %v3403, %v3415
        %v3640 = vadd.f32 %v3404, %v3411
        %v3641 = vadd.f32 %v3405, %v3415
        %v3642 = vmax.f32 %v3418, %v3426
        %v3643 = vmax.f32 %v3419, %v3427
        %v3644 = vmax.f32 %v3420, %v3428
        %v3645 = vmax.f32 %v3421, %v3429
        %v3646 = vmax.f32 %v3422, %v3430
        %v3647 = vmax.f32 %v3423, %v3431
        %v3648 = vmax.f32 %v3424, %v3432
        %v3649 = vmax.f32 %v3425, %v3433
        %v3650 = vmax.f32 %v3434, %v3442
        %v3651 = vmax.f32 %v3435, %v3443
        %v3652 = vmax.f32 %v3436, %v3444
        %v3653 = vmax.f32 %v3437, %v3445
        %v3654 = vmax.f32 %v3438, %v3446
        %v3655 = vmax.f32 %v3439, %v3447
        %v3656 = vmax.f32 %v3440, %v3448
        %v3657 = vmax.f32 %v3441, %v3449
        %v3658 = vmax.f32 %v3450, %v3458
        %v3659 = vmax.f32 %v3451, %v3459
        %v3660 = vmax.f32 %v3452, %v3460
        %v3661 = vmax.f32 %v3453, %v3461
        %v3662 = vmax.f32 %v3454, %v3462
        %v3663 = vmax.f32 %v3455, %v3463
        %v3664 = vmax.f32 %v3456, %v3464
        %v3665 = vmax.f32 %v3457, %v3465
        %v3666 = vmax.f32 %v3466, %v3474
        %v3667 = vmax.f32 %v3467, %v3475
        %v3668 = vmax.f32 %v3468, %v3476
        %v3669 = vmax.f32 %v3469, %v3477
        %v3670 = vmax.f32 %v3470, %v3478
        %v3671 = vmax.f32 %v3471, %v3479
        %v3672 = vmax.f32 %v3472, %v3480
        %v3673 = vmax.f32 %v3473, %v3481
        %v3674 = vmax.f32 %v3482, %v3490
        %v3675 = vmax.f32 %v3483, %v3491
        %v3676 = vmax.f32 %v3484, %v3492
        %v3677 = vmax.f32 %v3485, %v3493
        %v3678 = vmax.f32 %v3486, %v3494
        %v3679 = vmax.f32 %v3487, %v3495
        %v3680 = vmax.f32 %v3488, %v3496
        %v3681 = vmax.f32 %v3489, %v3497
        %v3682 = vmax.f32 %v3498, %v3506
        %v3683 = vmax.f32 %v3499, %v3507
        %v3684 = vmax.f32 %v3500, %v3508
        %v3685 = vmax.f32 %v3501, %v3509
        %v3686 = vmax.f32 %v3502, %v3510
        %v3687 = vmax.f32 %v3503, %v3511
        %v3688 = vmax.f32 %v3504, %v3512
        %v3689 = vmax.f32 %v3505, %v3513
        %v3690 = vmax.f32 %v3514, %v3522
        %v3691 = vmax.f32 %v3515, %v3523
        %v3692 = vmax.f32 %v3516, %v3524
        %v3693 = vmax.f32 %v3517, %v3525
        %v3694 = vmax.f32 %v3518, %v3526
        %v3695 = vmax.f32 %v3519, %v3527
        %v3696 = vmax.f32 %v3520, %v3528
        %v3697 = vmax.f32 %v3521, %v3529
        %v3698 = vmax.f32 %v3530, %v3538
        %v3699 = vmax.f32 %v3531, %v3539
        %v3700 = vmax.f32 %v3532, %v3540
        %v3701 = vmax.f32 %v3533, %v3541
        %v3702 = vmax.f32 %v3534, %v3542
        %v3703 = vmax.f32 %v3535, %v3543
        %v3704 = vmax.f32 %v3536, %v3544
        %v3705 = vmax.f32 %v3537, %v3545
        %v3706 = vmax.f32 %v3546, %v3554
        %v3707 = vmax.f32 %v3547, %v3555
        %v3708 = vmax.f32 %v3548, %v3556
        %v3709 = vmax.f32 %v3549, %v3557
        %v3710 = vmax.f32 %v3550, %v3558
        %v3711 = vmax.f32 %v3551, %v3559
        %v3712 = vmax.f32 %v3552, %v3560
        %v3713 = vmax.f32 %v3553, %v3561
        %v3714 = vmax.f32 %v3562, %v3570
        %v3715 = vmax.f32 %v3563, %v3571
        %v3716 = vmax.f32 %v3564, %v3572
        %v3717 = vmax.f32 %v3565, %v3573
        %v3718 = vmax.f32 %v3566, %v3574
        %v3719 = vmax.f32 %v3567, %v3575
        %v3720 = vmax.f32 %v3568, %v3576
        %v3721 = vmax.f32 %v3569, %v3577
        %v3722 = vmax.f32 %v3578, %v3586
        %v3723 = vmax.f32 %v3579, %v3587
        %v3724 = vmax.f32 %v3580, %v3588
        %v3725 = vmax.f32 %v3581, %v3589
        %v3726 = vmax.f32 %v3582, %v3590
        %v3727 = vmax.f32 %v3583, %v3591
        %v3728 = vmax.f32 %v3584, %v3592
        %v3729 = vmax.f32 %v3585, %v3593
        %v3730 = vmax.f32 %v3594, %v3602
        %v3731 = vmax.f32 %v3595, %v3603
        %v3732 = vmax.f32 %v3596, %v3604
        %v3733 = vmax.f32 %v3597, %v3605
        %v3734 = vmax.f32 %v3598, %v3606
        %v3735 = vmax.f32 %v3599, %v3607
        %v3736 = vmax.f32 %v3600, %v3608
        %v3737 = vmax.f32 %v3601, %v3609
        %v3738 = vmax.f32 %v3610, %v3618
        %v3739 = vmax.f32 %v3611, %v3619
        %v3740 = vmax.f32 %v3612, %v3620
        %v3741 = vmax.f32 %v3613, %v3621
        %v3742 = vmax.f32 %v3614, %v3622
        %v3743 = vmax.f32 %v3615, %v3623
        %v3744 = vmax.f32 %v3616, %v3624
        %v3745 = vmax.f32 %v3617, %v3625
        %v3746 = vmax.f32 %v3626, %v3634
        %v3747 = vmax.f32 %v3627, %v3635
        %v3748 = vmax.f32 %v3628, %v3636
        %v3749 = vmax.f32 %v3629, %v3637
        %v3750 = vmax.f32 %v3630, %v3638
        %v3751 = vmax.f32 %v3631, %v3639
        %v3752 = vmax.f32 %v3632, %v3640
        %v3753 = vmax.f32 %v3633, %v3641
        %v3754 = vpack.c.bf16 %v3644, %v3642
        %v3755 = vpack.c.bf16 %v3645, %v3643
        %v3756 = vpack.c.bf16 %v3648, %v3646
        %v3757 = vpack.c.bf16 %v3649, %v3647
        %v3758 = vpack.c.bf16 %v3652, %v3650
        %v3759 = vpack.c.bf16 %v3653, %v3651
        %v3760 = vpack.c.bf16 %v3656, %v3654
        %v3761 = vpack.c.bf16 %v3657, %v3655
        %v3762 = vpack.c.bf16 %v3660, %v3658
        %v3763 = vpack.c.bf16 %v3661, %v3659
        %v3764 = vpack.c.bf16 %v3664, %v3662
        %v3765 = vpack.c.bf16 %v3665, %v3663
        %v3766 = vpack.c.bf16 %v3668, %v3666
        %v3767 = vpack.c.bf16 %v3669, %v3667
        %v3768 = vpack.c.bf16 %v3672, %v3670
        %v3769 = vpack.c.bf16 %v3673, %v3671
        %v3770 = vpack.c.bf16 %v3676, %v3674
        %v3771 = vpack.c.bf16 %v3677, %v3675
        %v3772 = vpack.c.bf16 %v3680, %v3678
        %v3773 = vpack.c.bf16 %v3681, %v3679
        %v3774 = vpack.c.bf16 %v3684, %v3682
        %v3775 = vpack.c.bf16 %v3685, %v3683
        %v3776 = vpack.c.bf16 %v3688, %v3686
        %v3777 = vpack.c.bf16 %v3689, %v3687
        %v3778 = vpack.c.bf16 %v3692, %v3690
        %v3779 = vpack.c.bf16 %v3693, %v3691
        %v3780 = vpack.c.bf16 %v3696, %v3694
        %v3781 = vpack.c.bf16 %v3697, %v3695
        %v3782 = vpack.c.bf16 %v3700, %v3698
        %v3783 = vpack.c.bf16 %v3701, %v3699
        %v3784 = vpack.c.bf16 %v3704, %v3702
        %v3785 = vpack.c.bf16 %v3705, %v3703
        %v3786 = vpack.c.bf16 %v3708, %v3706
        %v3787 = vpack.c.bf16 %v3709, %v3707
        %v3788 = vpack.c.bf16 %v3712, %v3710
        %v3789 = vpack.c.bf16 %v3713, %v3711
        %v3790 = vpack.c.bf16 %v3716, %v3714
        %v3791 = vpack.c.bf16 %v3717, %v3715
        %v3792 = vpack.c.bf16 %v3720, %v3718
        %v3793 = vpack.c.bf16 %v3721, %v3719
        %v3794 = vpack.c.bf16 %v3724, %v3722
        %v3795 = vpack.c.bf16 %v3725, %v3723
        %v3796 = vpack.c.bf16 %v3728, %v3726
        %v3797 = vpack.c.bf16 %v3729, %v3727
        %v3798 = vpack.c.bf16 %v3732, %v3730
        %v3799 = vpack.c.bf16 %v3733, %v3731
        %v3800 = vpack.c.bf16 %v3736, %v3734
        %v3801 = vpack.c.bf16 %v3737, %v3735
        %v3802 = vpack.c.bf16 %v3740, %v3738
        %v3803 = vpack.c.bf16 %v3741, %v3739
        %v3804 = vpack.c.bf16 %v3744, %v3742
        %v3805 = vpack.c.bf16 %v3745, %v3743
        %v3806 = vpack.c.bf16 %v3748, %v3746
        %v3807 = vpack.c.bf16 %v3749, %v3747
        %v3808 = vpack.c.bf16 %v3752, %v3750
        %v3809 = vpack.c.bf16 %v3753, %v3751
        %v3810 = vld [vmem:[%s3] sm:$0xf]
        %v3811 = vld [vmem:[%s3 + $0x4] sm:$0xf]
        %v3812 = vld [vmem:[%s3 + $0x8] sm:$0xf]
        %v3813 = vld [vmem:[%s3 + $0xc] sm:$0xf]
        %v3814 = vld [vmem:[%s3 + $0x10] sm:$0xf]
        %v3815 = vld [vmem:[%s3 + $0x14] sm:$0xf]
        %v3816 = vld [vmem:[%s3 + $0x18] sm:$0xf]
        %v3817 = vld [vmem:[%s3 + $0x1c] sm:$0xf]
        %v3818 = vld [vmem:[%s3 + $0x20] sm:$0xf]
        %v3819 = vld [vmem:[%s3 + $0x24] sm:$0xf]
        %v3820 = vld [vmem:[%s3 + $0x28] sm:$0xf]
        %v3821 = vld [vmem:[%s3 + $0x2c] sm:$0xf]
        %v3822 = vld [vmem:[%s3 + $0x30] sm:$0xf]
        %v3823 = vld [vmem:[%s3 + $0x34] sm:$0xf]
        %v3824 = vld [vmem:[%s3 + $0x38] sm:$0xf]
        %v3825 = vld [vmem:[%s3 + $0x3c] sm:$0xf]
        %v3826 = vld [vmem:[%s3 + $0x40] sm:$0xf]
        %v3827 = vld [vmem:[%s3 + $0x44] sm:$0xf]
        %v3828 = vld [vmem:[%s3 + $0x48] sm:$0xf]
        %v3829 = vld [vmem:[%s3 + $0x4c] sm:$0xf]
        %v3830 = vld [vmem:[%s3 + $0x50] sm:$0xf]
        %v3852 = vunpack.c.l.b16 %v3810
        %v3853 = vunpack.c.l.b16 %v3811
        %v3854 = vunpack.c.l.b16 %v3812
        %v3855 = vunpack.c.l.b16 %v3813
        %v3856 = vunpack.c.l.b16 %v3814
        %v3857 = vunpack.c.l.b16 %v3815
        %v3858 = vunpack.c.l.b16 %v3816
        %v3859 = vunpack.c.l.b16 %v3817
        %v3860 = vunpack.c.l.b16 %v3818
        %v3861 = vunpack.c.l.b16 %v3819
        %v3862 = vunpack.c.l.b16 %v3820
        %v3863 = vunpack.c.l.b16 %v3821
        %v3864 = vunpack.c.l.b16 %v3822
        %v3865 = vunpack.c.l.b16 %v3823
        %v3866 = vunpack.c.l.b16 %v3824
        %v3867 = vunpack.c.l.b16 %v3825
        %v3868 = vunpack.c.l.b16 %v3826
        %v3869 = vunpack.c.l.b16 %v3827
        %v3870 = vunpack.c.l.b16 %v3828
        %v3871 = vunpack.c.l.b16 %v3829
        %v3872 = vunpack.c.l.b16 %v3830
        %v3873 = vpack.c.b16 %v3853, %v3852
        %v3874 = vpack.c.b16 %v3855, %v3854
        %v3875 = vpack.c.b16 %v3857, %v3856
        %v3876 = vpack.c.b16 %v3859, %v3858
        %v3877 = vpack.c.b16 %v3861, %v3860
        %v3878 = vpack.c.b16 %v3863, %v3862
        %v3879 = vpack.c.b16 %v3865, %v3864
        %v3880 = vpack.c.b16 %v3867, %v3866
        %v3881 = vpack.c.b16 %v3869, %v3868
        %v3882 = vpack.c.b16 %v3871, %v3870
        %v3883 = vpack.c.b16 %v3872, %v3872
        %vm3894 = vcmask 326656
        %v3896 = vsel %vm3894, %v3755, 0
        %v3899 = vsel %vm3894, %v3757, 0
        %v3902 = vsel %vm3894, %v3759, 0
        %v3905 = vsel %vm3894, %v3761, 0
        %v3908 = vsel %vm3894, %v3763, 0
        %v3911 = vsel %vm3894, %v3765, 0
        %v3914 = vsel %vm3894, %v3767, 0
        %v3917 = vsel %vm3894, %v3769, 0
        %v3920 = vsel %vm3894, %v3771, 0
        %v3923 = vsel %vm3894, %v3773, 0
        %v3926 = vsel %vm3894, %v3775, 0
        %v3929 = vsel %vm3894, %v3777, 0
        %v3932 = vsel %vm3894, %v3779, 0
        %v3935 = vsel %vm3894, %v3781, 0
        %v3938 = vsel %vm3894, %v3783, 0
        %v3941 = vsel %vm3894, %v3785, 0
        %v3944 = vsel %vm3894, %v3787, 0
        %v3947 = vsel %vm3894, %v3789, 0
        %v3950 = vsel %vm3894, %v3791, 0
        %v3953 = vsel %vm3894, %v3793, 0
        %v3956 = vsel %vm3894, %v3795, 0
        %v3959 = vsel %vm3894, %v3797, 0
        %v3962 = vsel %vm3894, %v3799, 0
        %v3965 = vsel %vm3894, %v3801, 0
        %v3968 = vsel %vm3894, %v3803, 0
        %v3971 = vsel %vm3894, %v3805, 0
        %v3974 = vsel %vm3894, %v3807, 0
        %v3977 = vsel %vm3894, %v3809, 0
        %vm3979 = vcmask 1043456
        %v3981 = vsel %vm3979, %v3883, 0
        %3983 = vmatprep.subr.bf16.mxu0 0
        %3984 = vmatpush1.bf16.msra.mxu0 %v3873
        %3985 = vmatprep.subr.bf16.mxu0 0
        %3986 = vmatpush1.bf16.msra.mxu0 %v3874
        %3987 = vmatprep.subr.bf16.mxu0 0
        %3988 = vmatpush1.bf16.msra.mxu0 %v3875
        %3989 = vmatprep.subr.bf16.mxu0 0
        %3990 = vmatpush1.bf16.msra.mxu0 %v3876
        %3991 = vmatprep.subr.bf16.mxu0 0
        %3992 = vmatpush1.bf16.msra.mxu0 %v3877
        %3993 = vmatprep.subr.bf16.mxu0 0
        %3994 = vmatpush1.bf16.msra.mxu0 %v3878
        %3995 = vmatprep.subr.bf16.mxu0 0
        %3996 = vmatpush1.bf16.msra.mxu0 %v3879
        %3997 = vmatprep.subr.bf16.mxu0 0
        %3998 = vmatpush1.bf16.msra.mxu0 %v3880
        %3999 = vmatprep.subr.bf16.mxu0 0
        %4000 = vmatpush1.bf16.msra.mxu0 %v3881
        %4001 = vmatprep.subr.bf16.mxu0 0
        %4002 = vmatpush1.bf16.msra.mxu0 %v3882
        %4003 = vmatprep.subr.bf16.mxu0 0
        %4004 = vmatpush1.bf16.msra.mxu0 %v3981
        %4005 = vmatprep.subr.bf16.mxu0 0
        %4006 = vmatpush1.bf16.msra.mxu0 0
        %4007 = vmatprep.subr.bf16.mxu0 0
        %4008 = vmatpush1.bf16.msra.mxu0 0
        %4009 = vmatprep.subr.bf16.mxu0 0
        %4010 = vmatpush1.bf16.msra.mxu0 0
        %4011 = vmatprep.subr.bf16.mxu0 0
        %4012 = vmatpush1.bf16.msra.mxu0 0
        %4013 = vmatprep.subr.bf16.mxu0 0
        %4014 = vmatpush1.bf16.msra.mxu0 0
        %4015 = vmatprep.mubr.bf16.mxu0 %v3896
        %4016 = vmatmul.mubr.bf16.gmra.mrb[0].mxu0 %v3754
        %v4017 = vpop.f32.mrb[0].mxu0
        %v4018 = vadd.f32 0.0, %v4017
        %v4019 = vpop.f32.mrb[0].mxu0
        %v4020 = vpop.f32.mrb[0].mxu0
        %v4021 = vadd.f32 0.0, %v4020
        %v4022 = vpop.f32.mrb[0].mxu0
        %4023 = vmatprep.mubr.bf16.mxu0 %v3899
        %4024 = vmatmul.mubr.bf16.gmra.mrb[0].mxu0 %v3756
        %v4025 = vpop.f32.mrb[0].mxu0
        %v4026 = vadd.f32 0.0, %v4025
        %v4027 = vpop.f32.mrb[0].mxu0
        %v4028 = vpop.f32.mrb[0].mxu0
        %v4029 = vadd.f32 0.0, %v4028
        %v4030 = vpop.f32.mrb[0].mxu0
        %4031 = vmatprep.mubr.bf16.mxu0 %v3902
        %4032 = vmatmul.mubr.bf16.gmra.mrb[0].mxu0 %v3758
        %v4033 = vpop.f32.mrb[0].mxu0
        %v4034 = vadd.f32 0.0, %v4033
        %v4035 = vpop.f32.mrb[0].mxu0
        %v4036 = vpop.f32.mrb[0].mxu0
        %v4037 = vadd.f32 0.0, %v4036
        %v4038 = vpop.f32.mrb[0].mxu0
        %4039 = vmatprep.mubr.bf16.mxu0 %v3905
        %4040 = vmatmul.mubr.bf16.gmra.mrb[0].mxu0 %v3760
        %v4041 = vpop.f32.mrb[0].mxu0
        %v4042 = vadd.f32 0.0, %v4041
        %v4043 = vpop.f32.mrb[0].mxu0
        %v4044 = vpop.f32.mrb[0].mxu0
        %v4045 = vadd.f32 0.0, %v4044
        %v4046 = vpop.f32.mrb[0].mxu0
        %4047 = vmatprep.mubr.bf16.mxu0 %v3908
        %4048 = vmatmul.mubr.bf16.gmra.mrb[0].mxu0 %v3762
        %v4049 = vpop.f32.mrb[0].mxu0
        %v4050 = vadd.f32 0.0, %v4049
        %v4051 = vpop.f32.mrb[0].mxu0
        %v4052 = vpop.f32.mrb[0].mxu0
        %v4053 = vadd.f32 0.0, %v4052
        %v4054 = vpop.f32.mrb[0].mxu0
        %4055 = vmatprep.mubr.bf16.mxu0 %v3911
        %4056 = vmatmul.mubr.bf16.gmra.mrb[0].mxu0 %v3764
        %v4057 = vpop.f32.mrb[0].mxu0
        %v4058 = vadd.f32 0.0, %v4057
        %v4059 = vpop.f32.mrb[0].mxu0
        %v4060 = vpop.f32.mrb[0].mxu0
        %v4061 = vadd.f32 0.0, %v4060
        %v4062 = vpop.f32.mrb[0].mxu0
        %4063 = vmatprep.mubr.bf16.mxu0 %v3914
        %4064 = vmatmul.mubr.bf16.gmra.mrb[0].mxu0 %v3766
        %v4065 = vpop.f32.mrb[0].mxu0
        %v4066 = vadd.f32 0.0, %v4065
        %v4067 = vpop.f32.mrb[0].mxu0
        %v4068 = vpop.f32.mrb[0].mxu0
        %v4069 = vadd.f32 0.0, %v4068
        %v4070 = vpop.f32.mrb[0].mxu0
        %4071 = vmatprep.mubr.bf16.mxu0 %v3917
        %4072 = vmatmul.mubr.bf16.gmra.mrb[0].mxu0 %v3768
        %v4073 = vpop.f32.mrb[0].mxu0
        %v4074 = vadd.f32 0.0, %v4073
        %v4075 = vpop.f32.mrb[0].mxu0
        %v4076 = vpop.f32.mrb[0].mxu0
        %v4077 = vadd.f32 0.0, %v4076
        %v4078 = vpop.f32.mrb[0].mxu0
        %4079 = vmatprep.mubr.bf16.mxu0 %v3920
        %4080 = vmatmul.mubr.bf16.gmra.mrb[0].mxu0 %v3770
        %v4081 = vpop.f32.mrb[0].mxu0
        %v4082 = vadd.f32 0.0, %v4081
        %v4083 = vpop.f32.mrb[0].mxu0
        %v4084 = vpop.f32.mrb[0].mxu0
        %v4085 = vadd.f32 0.0, %v4084
        %v4086 = vpop.f32.mrb[0].mxu0
        %4087 = vmatprep.mubr.bf16.mxu0 %v3923
        %4088 = vmatmul.mubr.bf16.gmra.mrb[0].mxu0 %v3772
        %v4089 = vpop.f32.mrb[0].mxu0
        %v4090 = vadd.f32 0.0, %v4089
        %v4091 = vpop.f32.mrb[0].mxu0
        %v4092 = vpop.f32.mrb[0].mxu0
        %v4093 = vadd.f32 0.0, %v4092
        %v4094 = vpop.f32.mrb[0].mxu0
        %4095 = vmatprep.mubr.bf16.mxu0 %v3926
        %4096 = vmatmul.mubr.bf16.gmra.mrb[0].mxu0 %v3774
        %v4097 = vpop.f32.mrb[0].mxu0
        %v4098 = vadd.f32 0.0, %v4097
        %v4099 = vpop.f32.mrb[0].mxu0
        %v4100 = vpop.f32.mrb[0].mxu0
        %v4101 = vadd.f32 0.0, %v4100
        %v4102 = vpop.f32.mrb[0].mxu0
        %4103 = vmatprep.mubr.bf16.mxu0 %v3929
        %4104 = vmatmul.mubr.bf16.gmra.mrb[0].mxu0 %v3776
        %v4105 = vpop.f32.mrb[0].mxu0
        %v4106 = vadd.f32 0.0, %v4105
        %v4107 = vpop.f32.mrb[0].mxu0
        %v4108 = vpop.f32.mrb[0].mxu0
        %v4109 = vadd.f32 0.0, %v4108
        %v4110 = vpop.f32.mrb[0].mxu0
        %4111 = vmatprep.mubr.bf16.mxu0 %v3932
        %4112 = vmatmul.mubr.bf16.gmra.mrb[0].mxu0 %v3778
        %v4113 = vpop.f32.mrb[0].mxu0
        %v4114 = vadd.f32 0.0, %v4113
        %v4115 = vpop.f32.mrb[0].mxu0
        %v4116 = vpop.f32.mrb[0].mxu0
        %v4117 = vadd.f32 0.0, %v4116
        %v4118 = vpop.f32.mrb[0].mxu0
        %4119 = vmatprep.mubr.bf16.mxu0 %v3935
        %4120 = vmatmul.mubr.bf16.gmra.mrb[0].mxu0 %v3780
        %v4121 = vpop.f32.mrb[0].mxu0
        %v4122 = vadd.f32 0.0, %v4121
        %v4123 = vpop.f32.mrb[0].mxu0
        %v4124 = vpop.f32.mrb[0].mxu0
        %v4125 = vadd.f32 0.0, %v4124
        %v4126 = vpop.f32.mrb[0].mxu0
        %4127 = vmatprep.mubr.bf16.mxu0 %v3938
        %4128 = vmatmul.mubr.bf16.gmra.mrb[0].mxu0 %v3782
        %v4129 = vpop.f32.mrb[0].mxu0
        %v4130 = vadd.f32 0.0, %v4129
        %v4131 = vpop.f32.mrb[0].mxu0
        %v4132 = vpop.f32.mrb[0].mxu0
        %v4133 = vadd.f32 0.0, %v4132
        %v4134 = vpop.f32.mrb[0].mxu0
        %4135 = vmatprep.mubr.bf16.mxu0 %v3941
        %4136 = vmatmul.mubr.bf16.gmra.mrb[0].mxu0 %v3784
        %v4137 = vpop.f32.mrb[0].mxu0
        %v4138 = vadd.f32 0.0, %v4137
        %v4139 = vpop.f32.mrb[0].mxu0
        %v4140 = vpop.f32.mrb[0].mxu0
        %v4141 = vadd.f32 0.0, %v4140
        %v4142 = vpop.f32.mrb[0].mxu0
        %4143 = vmatprep.mubr.bf16.mxu0 %v3944
        %4144 = vmatmul.mubr.bf16.gmra.mrb[0].mxu0 %v3786
        %v4145 = vpop.f32.mrb[0].mxu0
        %v4146 = vadd.f32 0.0, %v4145
        %v4147 = vpop.f32.mrb[0].mxu0
        %v4148 = vpop.f32.mrb[0].mxu0
        %v4149 = vadd.f32 0.0, %v4148
        %v4150 = vpop.f32.mrb[0].mxu0
        %4151 = vmatprep.mubr.bf16.mxu0 %v3947
        %4152 = vmatmul.mubr.bf16.gmra.mrb[0].mxu0 %v3788
        %v4153 = vpop.f32.mrb[0].mxu0
        %v4154 = vadd.f32 0.0, %v4153
        %v4155 = vpop.f32.mrb[0].mxu0
        %v4156 = vpop.f32.mrb[0].mxu0
        %v4157 = vadd.f32 0.0, %v4156
        %v4158 = vpop.f32.mrb[0].mxu0
        %4159 = vmatprep.mubr.bf16.mxu0 %v3950
        %4160 = vmatmul.mubr.bf16.gmra.mrb[0].mxu0 %v3790
        %v4161 = vpop.f32.mrb[0].mxu0
        %v4162 = vadd.f32 0.0, %v4161
        %v4163 = vpop.f32.mrb[0].mxu0
        %v4164 = vpop.f32.mrb[0].mxu0
        %v4165 = vadd.f32 0.0, %v4164
        %v4166 = vpop.f32.mrb[0].mxu0
        %4167 = vmatprep.mubr.bf16.mxu0 %v3953
        %4168 = vmatmul.mubr.bf16.gmra.mrb[0].mxu0 %v3792
        %v4169 = vpop.f32.mrb[0].mxu0
        %v4170 = vadd.f32 0.0, %v4169
        %v4171 = vpop.f32.mrb[0].mxu0
        %v4172 = vpop.f32.mrb[0].mxu0
        %v4173 = vadd.f32 0.0, %v4172
        %v4174 = vpop.f32.mrb[0].mxu0
        %4175 = vmatprep.mubr.bf16.mxu0 %v3956
        %4176 = vmatmul.mubr.bf16.gmra.mrb[0].mxu0 %v3794
        %v4177 = vpop.f32.mrb[0].mxu0
        %v4178 = vadd.f32 0.0, %v4177
        %v4179 = vpop.f32.mrb[0].mxu0
        %v4180 = vpop.f32.mrb[0].mxu0
        %v4181 = vadd.f32 0.0, %v4180
        %v4182 = vpop.f32.mrb[0].mxu0
        %4183 = vmatprep.mubr.bf16.mxu0 %v3959
        %4184 = vmatmul.mubr.bf16.gmra.mrb[0].mxu0 %v3796
        %v4185 = vpop.f32.mrb[0].mxu0
        %v4186 = vadd.f32 0.0, %v4185
        %v4187 = vpop.f32.mrb[0].mxu0
        %v4188 = vpop.f32.mrb[0].mxu0
        %v4189 = vadd.f32 0.0, %v4188
        %v4190 = vpop.f32.mrb[0].mxu0
        %4191 = vmatprep.mubr.bf16.mxu0 %v3962
        %4192 = vmatmul.mubr.bf16.gmra.mrb[0].mxu0 %v3798
        %v4193 = vpop.f32.mrb[0].mxu0
        %v4194 = vadd.f32 0.0, %v4193
        %v4195 = vpop.f32.mrb[0].mxu0
        %v4196 = vpop.f32.mrb[0].mxu0
        %v4197 = vadd.f32 0.0, %v4196
        %v4198 = vpop.f32.mrb[0].mxu0
        %4199 = vmatprep.mubr.bf16.mxu0 %v3965
        %4200 = vmatmul.mubr.bf16.gmra.mrb[0].mxu0 %v3800
        %v4201 = vpop.f32.mrb[0].mxu0
        %v4202 = vadd.f32 0.0, %v4201
        %v4203 = vpop.f32.mrb[0].mxu0
        %v4204 = vpop.f32.mrb[0].mxu0
        %v4205 = vadd.f32 0.0, %v4204
        %v4206 = vpop.f32.mrb[0].mxu0
        %4207 = vmatprep.mubr.bf16.mxu0 %v3968
        %4208 = vmatmul.mubr.bf16.gmra.mrb[0].mxu0 %v3802
        %v4209 = vpop.f32.mrb[0].mxu0
        %v4210 = vadd.f32 0.0, %v4209
        %v4211 = vpop.f32.mrb[0].mxu0
        %v4212 = vpop.f32.mrb[0].mxu0
        %v4213 = vadd.f32 0.0, %v4212
        %v4214 = vpop.f32.mrb[0].mxu0
        %4215 = vmatprep.mubr.bf16.mxu0 %v3971
        %4216 = vmatmul.mubr.bf16.gmra.mrb[0].mxu0 %v3804
        %v4217 = vpop.f32.mrb[0].mxu0
        %v4218 = vadd.f32 0.0, %v4217
        %v4219 = vpop.f32.mrb[0].mxu0
        %v4220 = vpop.f32.mrb[0].mxu0
        %v4221 = vadd.f32 0.0, %v4220
        %v4222 = vpop.f32.mrb[0].mxu0
        %4223 = vmatprep.mubr.bf16.mxu0 %v3974
        %4224 = vmatmul.mubr.bf16.gmra.mrb[0].mxu0 %v3806
        %v4225 = vpop.f32.mrb[0].mxu0
        %v4226 = vadd.f32 0.0, %v4225
        %v4227 = vpop.f32.mrb[0].mxu0
        %v4228 = vpop.f32.mrb[0].mxu0
        %v4229 = vadd.f32 0.0, %v4228
        %v4230 = vpop.f32.mrb[0].mxu0
        %4231 = vmatprep.mubr.bf16.mxu0 %v3977
        %4232 = vmatmul.mubr.bf16.gmra.mrb[0].mxu0 %v3808
        %v4233 = vpop.f32.mrb[0].mxu0
        %v4234 = vadd.f32 0.0, %v4233
        %v4235 = vpop.f32.mrb[0].mxu0
        %v4236 = vpop.f32.mrb[0].mxu0
        %v4237 = vadd.f32 0.0, %v4236
        %v4238 = vpop.f32.mrb[0].mxu0
        %4239 = vdwg.mxu0
        %s4240 = scalar_lea.vmem %s3, 84
        %v4241 = vld [vmem:[%s4240] sm:$0xf]
        %v4242 = vld [vmem:[%s4240 + $0x4] sm:$0xf]
        %v4243 = vld [vmem:[%s4240 + $0x8] sm:$0xf]
        %v4244 = vld [vmem:[%s4240 + $0xc] sm:$0xf]
        %v4245 = vld [vmem:[%s4240 + $0x10] sm:$0xf]
        %v4246 = vld [vmem:[%s4240 + $0x14] sm:$0xf]
        %v4247 = vld [vmem:[%s4240 + $0x18] sm:$0xf]
        %v4248 = vld [vmem:[%s4240 + $0x1c] sm:$0xf]
        %v4249 = vld [vmem:[%s4240 + $0x20] sm:$0xf]
        %v4250 = vld [vmem:[%s4240 + $0x24] sm:$0xf]
        %v4251 = vld [vmem:[%s4240 + $0x28] sm:$0xf]
        %v4252 = vld [vmem:[%s4240 + $0x2c] sm:$0xf]
        %v4253 = vld [vmem:[%s4240 + $0x30] sm:$0xf]
        %v4254 = vld [vmem:[%s4240 + $0x34] sm:$0xf]
        %v4255 = vld [vmem:[%s4240 + $0x38] sm:$0xf]
        %v4256 = vld [vmem:[%s4240 + $0x3c] sm:$0xf]
        %v4257 = vld [vmem:[%s4240 + $0x40] sm:$0xf]
        %v4258 = vld [vmem:[%s4240 + $0x44] sm:$0xf]
        %v4259 = vld [vmem:[%s4240 + $0x48] sm:$0xf]
        %v4260 = vld [vmem:[%s4240 + $0x4c] sm:$0xf]
        %v4261 = vld [vmem:[%s4240 + $0x50] sm:$0xf]
        %v4283 = vunpack.c.l.b16 %v4241
        %v4284 = vunpack.c.l.b16 %v4242
        %v4285 = vunpack.c.l.b16 %v4243
        %v4286 = vunpack.c.l.b16 %v4244
        %v4287 = vunpack.c.l.b16 %v4245
        %v4288 = vunpack.c.l.b16 %v4246
        %v4289 = vunpack.c.l.b16 %v4247
        %v4290 = vunpack.c.l.b16 %v4248
        %v4291 = vunpack.c.l.b16 %v4249
        %v4292 = vunpack.c.l.b16 %v4250
        %v4293 = vunpack.c.l.b16 %v4251
        %v4294 = vunpack.c.l.b16 %v4252
        %v4295 = vunpack.c.l.b16 %v4253
        %v4296 = vunpack.c.l.b16 %v4254
        %v4297 = vunpack.c.l.b16 %v4255
        %v4298 = vunpack.c.l.b16 %v4256
        %v4299 = vunpack.c.l.b16 %v4257
        %v4300 = vunpack.c.l.b16 %v4258
        %v4301 = vunpack.c.l.b16 %v4259
        %v4302 = vunpack.c.l.b16 %v4260
        %v4303 = vunpack.c.l.b16 %v4261
        %v4304 = vpack.c.b16 %v4284, %v4283
        %v4305 = vpack.c.b16 %v4286, %v4285
        %v4306 = vpack.c.b16 %v4288, %v4287
        %v4307 = vpack.c.b16 %v4290, %v4289
        %v4308 = vpack.c.b16 %v4292, %v4291
        %v4309 = vpack.c.b16 %v4294, %v4293
        %v4310 = vpack.c.b16 %v4296, %v4295
        %v4311 = vpack.c.b16 %v4298, %v4297
        %v4312 = vpack.c.b16 %v4300, %v4299
        %v4313 = vpack.c.b16 %v4302, %v4301
        %v4314 = vpack.c.b16 %v4303, %v4303
        %v4326 = vsel %vm3979, %v4314, 0
        %4328 = vmatprep.subr.bf16.mxu0 0
        %4329 = vmatpush1.bf16.msra.mxu0 %v4304
        %4330 = vmatprep.subr.bf16.mxu0 0
        %4331 = vmatpush1.bf16.msra.mxu0 %v4305
        %4332 = vmatprep.subr.bf16.mxu0 0
        %4333 = vmatpush1.bf16.msra.mxu0 %v4306
        %4334 = vmatprep.subr.bf16.mxu0 0
        %4335 = vmatpush1.bf16.msra.mxu0 %v4307
        %4336 = vmatprep.subr.bf16.mxu0 0
        %4337 = vmatpush1.bf16.msra.mxu0 %v4308
        %4338 = vmatprep.subr.bf16.mxu0 0
        %4339 = vmatpush1.bf16.msra.mxu0 %v4309
        %4340 = vmatprep.subr.bf16.mxu0 0
        %4341 = vmatpush1.bf16.msra.mxu0 %v4310
        %4342 = vmatprep.subr.bf16.mxu0 0
        %4343 = vmatpush1.bf16.msra.mxu0 %v4311
        %4344 = vmatprep.subr.bf16.mxu0 0
        %4345 = vmatpush1.bf16.msra.mxu0 %v4312
        %4346 = vmatprep.subr.bf16.mxu0 0
        %4347 = vmatpush1.bf16.msra.mxu0 %v4313
        %4348 = vmatprep.subr.bf16.mxu0 0
        %4349 = vmatpush1.bf16.msra.mxu0 %v4326
        %4350 = vmatprep.subr.bf16.mxu0 0
        %4351 = vmatpush1.bf16.msra.mxu0 0
        %4352 = vmatprep.subr.bf16.mxu0 0
        %4353 = vmatpush1.bf16.msra.mxu0 0
        %4354 = vmatprep.subr.bf16.mxu0 0
        %4355 = vmatpush1.bf16.msra.mxu0 0
        %4356 = vmatprep.subr.bf16.mxu0 0
        %4357 = vmatpush1.bf16.msra.mxu0 0
        %4358 = vmatprep.subr.bf16.mxu0 0
        %4359 = vmatpush1.bf16.msra.mxu0 0
        %4360 = vmatprep.mubr.bf16.mxu0 %v3896
        %4361 = vmatmul.mubr.bf16.gmra.mrb[0].mxu0 %v3754
        %v4362 = vpop.f32.mrb[0].mxu0
        %v4363 = vadd.f32 0.0, %v4362
        %v4364 = vpop.f32.mrb[0].mxu0
        %v4365 = vpop.f32.mrb[0].mxu0
        %v4366 = vadd.f32 0.0, %v4365
        %v4367 = vpop.f32.mrb[0].mxu0
        %4368 = vmatprep.mubr.bf16.mxu0 %v3899
        %4369 = vmatmul.mubr.bf16.gmra.mrb[0].mxu0 %v3756
        %v4370 = vpop.f32.mrb[0].mxu0
        %v4371 = vadd.f32 0.0, %v4370
        %v4372 = vpop.f32.mrb[0].mxu0
        %v4373 = vpop.f32.mrb[0].mxu0
        %v4374 = vadd.f32 0.0, %v4373
        %v4375 = vpop.f32.mrb[0].mxu0
        %4376 = vmatprep.mubr.bf16.mxu0 %v3902
        %4377 = vmatmul.mubr.bf16.gmra.mrb[0].mxu0 %v3758
        %v4378 = vpop.f32.mrb[0].mxu0
        %v4379 = vadd.f32 0.0, %v4378
        %v4380 = vpop.f32.mrb[0].mxu0
        %v4381 = vpop.f32.mrb[0].mxu0
        %v4382 = vadd.f32 0.0, %v4381
        %v4383 = vpop.f32.mrb[0].mxu0
        %4384 = vmatprep.mubr.bf16.mxu0 %v3905
        %4385 = vmatmul.mubr.bf16.gmra.mrb[0].mxu0 %v3760
        %v4386 = vpop.f32.mrb[0].mxu0
        %v4387 = vadd.f32 0.0, %v4386
        %v4388 = vpop.f32.mrb[0].mxu0
        %v4389 = vpop.f32.mrb[0].mxu0
        %v4390 = vadd.f32 0.0, %v4389
        %v4391 = vpop.f32.mrb[0].mxu0
        %4392 = vmatprep.mubr.bf16.mxu0 %v3908
        %4393 = vmatmul.mubr.bf16.gmra.mrb[0].mxu0 %v3762
        %v4394 = vpop.f32.mrb[0].mxu0
        %v4395 = vadd.f32 0.0, %v4394
        %v4396 = vpop.f32.mrb[0].mxu0
        %v4397 = vpop.f32.mrb[0].mxu0
        %v4398 = vadd.f32 0.0, %v4397
        %v4399 = vpop.f32.mrb[0].mxu0
        %4400 = vmatprep.mubr.bf16.mxu0 %v3911
        %4401 = vmatmul.mubr.bf16.gmra.mrb[0].mxu0 %v3764
        %v4402 = vpop.f32.mrb[0].mxu0
        %v4403 = vadd.f32 0.0, %v4402
        %v4404 = vpop.f32.mrb[0].mxu0
        %v4405 = vpop.f32.mrb[0].mxu0
        %v4406 = vadd.f32 0.0, %v4405
        %v4407 = vpop.f32.mrb[0].mxu0
        %4408 = vmatprep.mubr.bf16.mxu0 %v3914
        %4409 = vmatmul.mubr.bf16.gmra.mrb[0].mxu0 %v3766
        %v4410 = vpop.f32.mrb[0].mxu0
        %v4411 = vadd.f32 0.0, %v4410
        %v4412 = vpop.f32.mrb[0].mxu0
        %v4413 = vpop.f32.mrb[0].mxu0
        %v4414 = vadd.f32 0.0, %v4413
        %v4415 = vpop.f32.mrb[0].mxu0
        %4416 = vmatprep.mubr.bf16.mxu0 %v3917
        %4417 = vmatmul.mubr.bf16.gmra.mrb[0].mxu0 %v3768
        %v4418 = vpop.f32.mrb[0].mxu0
        %v4419 = vadd.f32 0.0, %v4418
        %v4420 = vpop.f32.mrb[0].mxu0
        %v4421 = vpop.f32.mrb[0].mxu0
        %v4422 = vadd.f32 0.0, %v4421
        %v4423 = vpop.f32.mrb[0].mxu0
        %4424 = vmatprep.mubr.bf16.mxu0 %v3920
        %4425 = vmatmul.mubr.bf16.gmra.mrb[0].mxu0 %v3770
        %v4426 = vpop.f32.mrb[0].mxu0
        %v4427 = vadd.f32 0.0, %v4426
        %v4428 = vpop.f32.mrb[0].mxu0
        %v4429 = vpop.f32.mrb[0].mxu0
        %v4430 = vadd.f32 0.0, %v4429
        %v4431 = vpop.f32.mrb[0].mxu0
        %4432 = vmatprep.mubr.bf16.mxu0 %v3923
        %4433 = vmatmul.mubr.bf16.gmra.mrb[0].mxu0 %v3772
        %v4434 = vpop.f32.mrb[0].mxu0
        %v4435 = vadd.f32 0.0, %v4434
        %v4436 = vpop.f32.mrb[0].mxu0
        %v4437 = vpop.f32.mrb[0].mxu0
        %v4438 = vadd.f32 0.0, %v4437
        %v4439 = vpop.f32.mrb[0].mxu0
        %4440 = vmatprep.mubr.bf16.mxu0 %v3926
        %4441 = vmatmul.mubr.bf16.gmra.mrb[0].mxu0 %v3774
        %v4442 = vpop.f32.mrb[0].mxu0
        %v4443 = vadd.f32 0.0, %v4442
        %v4444 = vpop.f32.mrb[0].mxu0
        %v4445 = vpop.f32.mrb[0].mxu0
        %v4446 = vadd.f32 0.0, %v4445
        %v4447 = vpop.f32.mrb[0].mxu0
        %4448 = vmatprep.mubr.bf16.mxu0 %v3929
        %4449 = vmatmul.mubr.bf16.gmra.mrb[0].mxu0 %v3776
        %v4450 = vpop.f32.mrb[0].mxu0
        %v4451 = vadd.f32 0.0, %v4450
        %v4452 = vpop.f32.mrb[0].mxu0
        %v4453 = vpop.f32.mrb[0].mxu0
        %v4454 = vadd.f32 0.0, %v4453
        %v4455 = vpop.f32.mrb[0].mxu0
        %4456 = vmatprep.mubr.bf16.mxu0 %v3932
        %4457 = vmatmul.mubr.bf16.gmra.mrb[0].mxu0 %v3778
        %v4458 = vpop.f32.mrb[0].mxu0
        %v4459 = vadd.f32 0.0, %v4458
        %v4460 = vpop.f32.mrb[0].mxu0
        %v4461 = vpop.f32.mrb[0].mxu0
        %v4462 = vadd.f32 0.0, %v4461
        %v4463 = vpop.f32.mrb[0].mxu0
        %4464 = vmatprep.mubr.bf16.mxu0 %v3935
        %4465 = vmatmul.mubr.bf16.gmra.mrb[0].mxu0 %v3780
        %v4466 = vpop.f32.mrb[0].mxu0
        %v4467 = vadd.f32 0.0, %v4466
        %v4468 = vpop.f32.mrb[0].mxu0
        %v4469 = vpop.f32.mrb[0].mxu0
        %v4470 = vadd.f32 0.0, %v4469
        %v4471 = vpop.f32.mrb[0].mxu0
        %4472 = vmatprep.mubr.bf16.mxu0 %v3938
        %4473 = vmatmul.mubr.bf16.gmra.mrb[0].mxu0 %v3782
        %v4474 = vpop.f32.mrb[0].mxu0
        %v4475 = vadd.f32 0.0, %v4474
        %v4476 = vpop.f32.mrb[0].mxu0
        %v4477 = vpop.f32.mrb[0].mxu0
        %v4478 = vadd.f32 0.0, %v4477
        %v4479 = vpop.f32.mrb[0].mxu0
        %4480 = vmatprep.mubr.bf16.mxu0 %v3941
        %4481 = vmatmul.mubr.bf16.gmra.mrb[0].mxu0 %v3784
        %v4482 = vpop.f32.mrb[0].mxu0
        %v4483 = vadd.f32 0.0, %v4482
        %v4484 = vpop.f32.mrb[0].mxu0
        %v4485 = vpop.f32.mrb[0].mxu0
        %v4486 = vadd.f32 0.0, %v4485
        %v4487 = vpop.f32.mrb[0].mxu0
        %4488 = vmatprep.mubr.bf16.mxu0 %v3944
        %4489 = vmatmul.mubr.bf16.gmra.mrb[0].mxu0 %v3786
        %v4490 = vpop.f32.mrb[0].mxu0
        %v4491 = vadd.f32 0.0, %v4490
        %v4492 = vpop.f32.mrb[0].mxu0
        %v4493 = vpop.f32.mrb[0].mxu0
        %v4494 = vadd.f32 0.0, %v4493
        %v4495 = vpop.f32.mrb[0].mxu0
        %4496 = vmatprep.mubr.bf16.mxu0 %v3947
        %4497 = vmatmul.mubr.bf16.gmra.mrb[0].mxu0 %v3788
        %v4498 = vpop.f32.mrb[0].mxu0
        %v4499 = vadd.f32 0.0, %v4498
        %v4500 = vpop.f32.mrb[0].mxu0
        %v4501 = vpop.f32.mrb[0].mxu0
        %v4502 = vadd.f32 0.0, %v4501
        %v4503 = vpop.f32.mrb[0].mxu0
        %4504 = vmatprep.mubr.bf16.mxu0 %v3950
        %4505 = vmatmul.mubr.bf16.gmra.mrb[0].mxu0 %v3790
        %v4506 = vpop.f32.mrb[0].mxu0
        %v4507 = vadd.f32 0.0, %v4506
        %v4508 = vpop.f32.mrb[0].mxu0
        %v4509 = vpop.f32.mrb[0].mxu0
        %v4510 = vadd.f32 0.0, %v4509
        %v4511 = vpop.f32.mrb[0].mxu0
        %4512 = vmatprep.mubr.bf16.mxu0 %v3953
        %4513 = vmatmul.mubr.bf16.gmra.mrb[0].mxu0 %v3792
        %v4514 = vpop.f32.mrb[0].mxu0
        %v4515 = vadd.f32 0.0, %v4514
        %v4516 = vpop.f32.mrb[0].mxu0
        %v4517 = vpop.f32.mrb[0].mxu0
        %v4518 = vadd.f32 0.0, %v4517
        %v4519 = vpop.f32.mrb[0].mxu0
        %4520 = vmatprep.mubr.bf16.mxu0 %v3956
        %4521 = vmatmul.mubr.bf16.gmra.mrb[0].mxu0 %v3794
        %v4522 = vpop.f32.mrb[0].mxu0
        %v4523 = vadd.f32 0.0, %v4522
        %v4524 = vpop.f32.mrb[0].mxu0
        %v4525 = vpop.f32.mrb[0].mxu0
        %v4526 = vadd.f32 0.0, %v4525
        %v4527 = vpop.f32.mrb[0].mxu0
        %4528 = vmatprep.mubr.bf16.mxu0 %v3959
        %4529 = vmatmul.mubr.bf16.gmra.mrb[0].mxu0 %v3796
        %v4530 = vpop.f32.mrb[0].mxu0
        %v4531 = vadd.f32 0.0, %v4530
        %v4532 = vpop.f32.mrb[0].mxu0
        %v4533 = vpop.f32.mrb[0].mxu0
        %v4534 = vadd.f32 0.0, %v4533
        %v4535 = vpop.f32.mrb[0].mxu0
        %4536 = vmatprep.mubr.bf16.mxu0 %v3962
        %4537 = vmatmul.mubr.bf16.gmra.mrb[0].mxu0 %v3798
        %v4538 = vpop.f32.mrb[0].mxu0
        %v4539 = vadd.f32 0.0, %v4538
        %v4540 = vpop.f32.mrb[0].mxu0
        %v4541 = vpop.f32.mrb[0].mxu0
        %v4542 = vadd.f32 0.0, %v4541
        %v4543 = vpop.f32.mrb[0].mxu0
        %4544 = vmatprep.mubr.bf16.mxu0 %v3965
        %4545 = vmatmul.mubr.bf16.gmra.mrb[0].mxu0 %v3800
        %v4546 = vpop.f32.mrb[0].mxu0
        %v4547 = vadd.f32 0.0, %v4546
        %v4548 = vpop.f32.mrb[0].mxu0
        %v4549 = vpop.f32.mrb[0].mxu0
        %v4550 = vadd.f32 0.0, %v4549
        %v4551 = vpop.f32.mrb[0].mxu0
        %4552 = vmatprep.mubr.bf16.mxu0 %v3968
        %4553 = vmatmul.mubr.bf16.gmra.mrb[0].mxu0 %v3802
        %v4554 = vpop.f32.mrb[0].mxu0
        %v4555 = vadd.f32 0.0, %v4554
        %v4556 = vpop.f32.mrb[0].mxu0
        %v4557 = vpop.f32.mrb[0].mxu0
        %v4558 = vadd.f32 0.0, %v4557
        %v4559 = vpop.f32.mrb[0].mxu0
        %4560 = vmatprep.mubr.bf16.mxu0 %v3971
        %4561 = vmatmul.mubr.bf16.gmra.mrb[0].mxu0 %v3804
        %v4562 = vpop.f32.mrb[0].mxu0
        %v4563 = vadd.f32 0.0, %v4562
        %v4564 = vpop.f32.mrb[0].mxu0
        %v4565 = vpop.f32.mrb[0].mxu0
        %v4566 = vadd.f32 0.0, %v4565
        %v4567 = vpop.f32.mrb[0].mxu0
        %4568 = vmatprep.mubr.bf16.mxu0 %v3974
        %4569 = vmatmul.mubr.bf16.gmra.mrb[0].mxu0 %v3806
        %v4570 = vpop.f32.mrb[0].mxu0
        %v4571 = vadd.f32 0.0, %v4570
        %v4572 = vpop.f32.mrb[0].mxu0
        %v4573 = vpop.f32.mrb[0].mxu0
        %v4574 = vadd.f32 0.0, %v4573
        %v4575 = vpop.f32.mrb[0].mxu0
        %4576 = vmatprep.mubr.bf16.mxu0 %v3977
        %4577 = vmatmul.mubr.bf16.gmra.mrb[0].mxu0 %v3808
        %v4578 = vpop.f32.mrb[0].mxu0
        %v4579 = vadd.f32 0.0, %v4578
        %v4580 = vpop.f32.mrb[0].mxu0
        %v4581 = vpop.f32.mrb[0].mxu0
        %v4582 = vadd.f32 0.0, %v4581
        %v4583 = vpop.f32.mrb[0].mxu0
        %4584 = vdwg.mxu0
        %v4585 = vmax.f32 %v4018, %v4363
        %v4586 = vmax.f32 %v4021, %v4366
        %v4587 = vmax.f32 %v4026, %v4371
        %v4588 = vmax.f32 %v4029, %v4374
        %v4589 = vmax.f32 %v4034, %v4379
        %v4590 = vmax.f32 %v4037, %v4382
        %v4591 = vmax.f32 %v4042, %v4387
        %v4592 = vmax.f32 %v4045, %v4390
        %v4593 = vmax.f32 %v4050, %v4395
        %v4594 = vmax.f32 %v4053, %v4398
        %v4595 = vmax.f32 %v4058, %v4403
        %v4596 = vmax.f32 %v4061, %v4406
        %v4597 = vmax.f32 %v4066, %v4411
        %v4598 = vmax.f32 %v4069, %v4414
        %v4599 = vmax.f32 %v4074, %v4419
        %v4600 = vmax.f32 %v4077, %v4422
        %v4601 = vmax.f32 %v4082, %v4427
        %v4602 = vmax.f32 %v4085, %v4430
        %v4603 = vmax.f32 %v4090, %v4435
        %v4604 = vmax.f32 %v4093, %v4438
        %v4605 = vmax.f32 %v4098, %v4443
        %v4606 = vmax.f32 %v4101, %v4446
        %v4607 = vmax.f32 %v4106, %v4451
        %v4608 = vmax.f32 %v4109, %v4454
        %v4609 = vmax.f32 %v4114, %v4459
        %v4610 = vmax.f32 %v4117, %v4462
        %v4611 = vmax.f32 %v4122, %v4467
        %v4612 = vmax.f32 %v4125, %v4470
        %v4613 = vmax.f32 %v4130, %v4475
        %v4614 = vmax.f32 %v4133, %v4478
        %v4615 = vmax.f32 %v4138, %v4483
        %v4616 = vmax.f32 %v4141, %v4486
        %v4617 = vmax.f32 %v4146, %v4491
        %v4618 = vmax.f32 %v4149, %v4494
        %v4619 = vmax.f32 %v4154, %v4499
        %v4620 = vmax.f32 %v4157, %v4502
        %v4621 = vmax.f32 %v4162, %v4507
        %v4622 = vmax.f32 %v4165, %v4510
        %v4623 = vmax.f32 %v4170, %v4515
        %v4624 = vmax.f32 %v4173, %v4518
        %v4625 = vmax.f32 %v4178, %v4523
        %v4626 = vmax.f32 %v4181, %v4526
        %v4627 = vmax.f32 %v4186, %v4531
        %v4628 = vmax.f32 %v4189, %v4534
        %v4629 = vmax.f32 %v4194, %v4539
        %v4630 = vmax.f32 %v4197, %v4542
        %v4631 = vmax.f32 %v4202, %v4547
        %v4632 = vmax.f32 %v4205, %v4550
        %v4633 = vmax.f32 %v4210, %v4555
        %v4634 = vmax.f32 %v4213, %v4558
        %v4635 = vmax.f32 %v4218, %v4563
        %v4636 = vmax.f32 %v4221, %v4566
        %v4637 = vmax.f32 %v4226, %v4571
        %v4638 = vmax.f32 %v4229, %v4574
        %v4639 = vmax.f32 %v4234, %v4579
        %v4640 = vmax.f32 %v4237, %v4582
        %v4641 = vpack.c.bf16 %v4586, %v4585
        %v4642 = vpack.c.bf16 %v4588, %v4587
        %v4643 = vpack.c.bf16 %v4590, %v4589
        %v4644 = vpack.c.bf16 %v4592, %v4591
        %v4645 = vpack.c.bf16 %v4594, %v4593
        %v4646 = vpack.c.bf16 %v4596, %v4595
        %v4647 = vpack.c.bf16 %v4598, %v4597
        %v4648 = vpack.c.bf16 %v4600, %v4599
        %v4649 = vpack.c.bf16 %v4602, %v4601
        %v4650 = vpack.c.bf16 %v4604, %v4603
        %v4651 = vpack.c.bf16 %v4606, %v4605
        %v4652 = vpack.c.bf16 %v4608, %v4607
        %v4653 = vpack.c.bf16 %v4610, %v4609
        %v4654 = vpack.c.bf16 %v4612, %v4611
        %v4655 = vpack.c.bf16 %v4614, %v4613
        %v4656 = vpack.c.bf16 %v4616, %v4615
        %v4657 = vpack.c.bf16 %v4618, %v4617
        %v4658 = vpack.c.bf16 %v4620, %v4619
        %v4659 = vpack.c.bf16 %v4622, %v4621
        %v4660 = vpack.c.bf16 %v4624, %v4623
        %v4661 = vpack.c.bf16 %v4626, %v4625
        %v4662 = vpack.c.bf16 %v4628, %v4627
        %v4663 = vpack.c.bf16 %v4630, %v4629
        %v4664 = vpack.c.bf16 %v4632, %v4631
        %v4665 = vpack.c.bf16 %v4634, %v4633
        %v4666 = vpack.c.bf16 %v4636, %v4635
        %v4667 = vpack.c.bf16 %v4638, %v4637
        %v4668 = vpack.c.bf16 %v4640, %v4639
        %v4669 = vld [vmem:[%s4] sm:$0xff]
        %v4670 = vld [vmem:[%s4 + $0x8] sm:$0xff]
        %v4671 = vld [vmem:[%s4 + $0x10] sm:$0xff]
        %v4672 = vld [vmem:[%s4 + $0x18] sm:$0xff]
        %v4673 = vld [vmem:[%s4 + $0x20] sm:$0xff]
        %v4674 = vld [vmem:[%s4 + $0x28] sm:$0xff]
        %v4675 = vld [vmem:[%s4 + $0x30] sm:$0xff]
        %v4676 = vld [vmem:[%s4 + $0x38] sm:$0xff]
        %v4677 = vld [vmem:[%s4 + $0x40] sm:$0xff]
        %v4678 = vld [vmem:[%s4 + $0x48] sm:$0xff]
        %v4679 = vld [vmem:[%s4 + $0x50] sm:$0x33]
        %s4680 = scalar_lea.vmem %s4, 88
        %v4681 = vld [vmem:[%s4680] sm:$0xff]
        %v4682 = vld [vmem:[%s4680 + $0x8] sm:$0xff]
        %v4683 = vld [vmem:[%s4680 + $0x10] sm:$0xff]
        %v4684 = vld [vmem:[%s4680 + $0x18] sm:$0xff]
        %v4685 = vld [vmem:[%s4680 + $0x20] sm:$0xff]
        %v4686 = vld [vmem:[%s4680 + $0x28] sm:$0xff]
        %v4687 = vld [vmem:[%s4680 + $0x30] sm:$0xff]
        %v4688 = vld [vmem:[%s4680 + $0x38] sm:$0xff]
        %v4689 = vld [vmem:[%s4680 + $0x40] sm:$0xff]
        %v4690 = vld [vmem:[%s4680 + $0x48] sm:$0xff]
        %v4691 = vld [vmem:[%s4680 + $0x50] sm:$0x33]
        %v4703 = vunpack.c.l.b16 %v4681
        %v4704 = vunpack.c.h.b16 %v4681
        %v4705 = vunpack.c.l.b16 %v4682
        %v4706 = vunpack.c.h.b16 %v4682
        %v4707 = vunpack.c.l.b16 %v4683
        %v4708 = vunpack.c.h.b16 %v4683
        %v4709 = vunpack.c.l.b16 %v4684
        %v4710 = vunpack.c.h.b16 %v4684
        %v4711 = vunpack.c.l.b16 %v4685
        %v4712 = vunpack.c.h.b16 %v4685
        %v4713 = vunpack.c.l.b16 %v4686
        %v4714 = vunpack.c.h.b16 %v4686
        %v4715 = vunpack.c.l.b16 %v4687
        %v4716 = vunpack.c.h.b16 %v4687
        %v4717 = vunpack.c.l.b16 %v4688
        %v4718 = vunpack.c.h.b16 %v4688
        %v4719 = vunpack.c.l.b16 %v4689
        %v4720 = vunpack.c.h.b16 %v4689
        %v4721 = vunpack.c.l.b16 %v4690
        %v4722 = vunpack.c.h.b16 %v4690
        %v4723 = vunpack.c.l.b16 %v4691
        %v4724 = vunpack.c.h.b16 %v4691
        %v4725 = vpack.c.b16 %v4705, %v4703
        %v4726 = vpack.c.b16 %v4706, %v4704
        %v4727 = vpack.c.b16 %v4709, %v4707
        %v4728 = vpack.c.b16 %v4710, %v4708
        %v4729 = vpack.c.b16 %v4713, %v4711
        %v4730 = vpack.c.b16 %v4714, %v4712
        %v4731 = vpack.c.b16 %v4717, %v4715
        %v4732 = vpack.c.b16 %v4718, %v4716
        %v4733 = vpack.c.b16 %v4721, %v4719
        %v4734 = vpack.c.b16 %v4722, %v4720
        %v4735 = vpack.c.b16 %v4723, %v4723
        %v4736 = vpack.c.b16 %v4724, %v4724
        %vm4747 = vcmask 687104
        %v4749 = vsel %vm4747, %v4643, 0
        %v4752 = vsel %vm4747, %v4644, 0
        %v4755 = vsel %vm4747, %v4645, 0
        %v4758 = vsel %vm4747, %v4646, 0
        %v4761 = vsel %vm4747, %v4647, 0
        %v4764 = vsel %vm4747, %v4648, 0
        %v4767 = vsel %vm4747, %v4649, 0
        %v4770 = vsel %vm4747, %v4650, 0
        %v4773 = vsel %vm4747, %v4651, 0
        %v4776 = vsel %vm4747, %v4652, 0
        %v4779 = vsel %vm4747, %v4653, 0
        %v4782 = vsel %vm4747, %v4654, 0
        %v4785 = vsel %vm4747, %v4655, 0
        %v4788 = vsel %vm4747, %v4656, 0
        %v4791 = vsel %vm4747, %v4657, 0
        %v4794 = vsel %vm4747, %v4658, 0
        %v4797 = vsel %vm4747, %v4659, 0
        %v4800 = vsel %vm4747, %v4660, 0
        %v4803 = vsel %vm4747, %v4661, 0
        %v4806 = vsel %vm4747, %v4662, 0
        %vm4808 = vcmask 1041408
        %v4810 = vsel %vm4808, %v4735, 0
        %v4813 = vsel %vm4808, %v4736, 0
        %4815 = vmatprep.subr.bf16.mxu0 %v4726
        %4816 = vmatpush1.bf16.msra.mxu0 %v4725
        %4817 = vmatprep.subr.bf16.mxu0 %v4728
        %4818 = vmatpush1.bf16.msra.mxu0 %v4727
        %4819 = vmatprep.subr.bf16.mxu0 %v4730
        %4820 = vmatpush1.bf16.msra.mxu0 %v4729
        %4821 = vmatprep.subr.bf16.mxu0 %v4732
        %4822 = vmatpush1.bf16.msra.mxu0 %v4731
        %4823 = vmatprep.subr.bf16.mxu0 %v4734
        %4824 = vmatpush1.bf16.msra.mxu0 %v4733
        %4825 = vmatprep.subr.bf16.mxu0 %v4813
        %4826 = vmatpush1.bf16.msra.mxu0 %v4810
        %4827 = vmatprep.subr.bf16.mxu0 0
        %4828 = vmatpush1.bf16.msra.mxu0 0
        %4829 = vmatprep.subr.bf16.mxu0 0
        %4830 = vmatpush1.bf16.msra.mxu0 0
        %4831 = vmatprep.subr.bf16.mxu0 0
        %4832 = vmatpush1.bf16.msra.mxu0 0
        %4833 = vmatprep.subr.bf16.mxu0 0
        %4834 = vmatpush1.bf16.msra.mxu0 0
        %4835 = vmatprep.subr.bf16.mxu0 0
        %4836 = vmatpush1.bf16.msra.mxu0 0
        %4837 = vmatprep.subr.bf16.mxu0 0
        %4838 = vmatpush1.bf16.msra.mxu0 0
        %4839 = vmatprep.subr.bf16.mxu0 0
        %4840 = vmatpush1.bf16.msra.mxu0 0
        %4841 = vmatprep.subr.bf16.mxu0 0
        %4842 = vmatpush1.bf16.msra.mxu0 0
        %4843 = vmatprep.subr.bf16.mxu0 0
        %4844 = vmatpush1.bf16.msra.mxu0 0
        %4845 = vmatprep.subr.bf16.mxu0 0
        %4846 = vmatpush1.bf16.msra.mxu0 0
        %4847 = vmatprep.mubr.bf16.mxu0 0
        %4848 = vmatmul.mubr.bf16.gmra.mrb[0].mxu0 %v4749
        %v4849 = vpop.f32.mrb[0].mxu0
        %v4850 = vadd.f32 0.0, %v4849
        %v4851 = vpop.f32.mrb[0].mxu0
        %v4852 = vadd.f32 0.0, %v4851
        %v4853 = vpop.f32.mrb[0].mxu0
        %v4854 = vadd.f32 0.0, %v4853
        %v4855 = vpop.f32.mrb[0].mxu0
        %v4856 = vadd.f32 0.0, %v4855
        %4857 = vmatprep.mubr.bf16.mxu0 0
        %4858 = vmatmul.mubr.bf16.gmra.mrb[0].mxu0 %v4752
        %v4859 = vpop.f32.mrb[0].mxu0
        %v4860 = vadd.f32 0.0, %v4859
        %v4861 = vpop.f32.mrb[0].mxu0
        %v4862 = vadd.f32 0.0, %v4861
        %v4863 = vpop.f32.mrb[0].mxu0
        %v4864 = vadd.f32 0.0, %v4863
        %v4865 = vpop.f32.mrb[0].mxu0
        %v4866 = vadd.f32 0.0, %v4865
        %4867 = vmatprep.mubr.bf16.mxu0 0
        %4868 = vmatmul.mubr.bf16.gmra.mrb[0].mxu0 %v4755
        %v4869 = vpop.f32.mrb[0].mxu0
        %v4870 = vadd.f32 0.0, %v4869
        %v4871 = vpop.f32.mrb[0].mxu0
        %v4872 = vadd.f32 0.0, %v4871
        %v4873 = vpop.f32.mrb[0].mxu0
        %v4874 = vadd.f32 0.0, %v4873
        %v4875 = vpop.f32.mrb[0].mxu0
        %v4876 = vadd.f32 0.0, %v4875
        %4877 = vmatprep.mubr.bf16.mxu0 0
        %4878 = vmatmul.mubr.bf16.gmra.mrb[0].mxu0 %v4758
        %v4879 = vpop.f32.mrb[0].mxu0
        %v4880 = vadd.f32 0.0, %v4879
        %v4881 = vpop.f32.mrb[0].mxu0
        %v4882 = vadd.f32 0.0, %v4881
        %v4883 = vpop.f32.mrb[0].mxu0
        %v4884 = vadd.f32 0.0, %v4883
        %v4885 = vpop.f32.mrb[0].mxu0
        %v4886 = vadd.f32 0.0, %v4885
        %4887 = vmatprep.mubr.bf16.mxu0 0
        %4888 = vmatmul.mubr.bf16.gmra.mrb[0].mxu0 %v4761
        %v4889 = vpop.f32.mrb[0].mxu0
        %v4890 = vadd.f32 0.0, %v4889
        %v4891 = vpop.f32.mrb[0].mxu0
        %v4892 = vadd.f32 0.0, %v4891
        %v4893 = vpop.f32.mrb[0].mxu0
        %v4894 = vadd.f32 0.0, %v4893
        %v4895 = vpop.f32.mrb[0].mxu0
        %v4896 = vadd.f32 0.0, %v4895
        %4897 = vmatprep.mubr.bf16.mxu0 0
        %4898 = vmatmul.mubr.bf16.gmra.mrb[0].mxu0 %v4764
        %v4899 = vpop.f32.mrb[0].mxu0
        %v4900 = vadd.f32 0.0, %v4899
        %v4901 = vpop.f32.mrb[0].mxu0
        %v4902 = vadd.f32 0.0, %v4901
        %v4903 = vpop.f32.mrb[0].mxu0
        %v4904 = vadd.f32 0.0, %v4903
        %v4905 = vpop.f32.mrb[0].mxu0
        %v4906 = vadd.f32 0.0, %v4905
        %4907 = vmatprep.mubr.bf16.mxu0 0
        %4908 = vmatmul.mubr.bf16.gmra.mrb[0].mxu0 %v4767
        %v4909 = vpop.f32.mrb[0].mxu0
        %v4910 = vadd.f32 0.0, %v4909
        %v4911 = vpop.f32.mrb[0].mxu0
        %v4912 = vadd.f32 0.0, %v4911
        %v4913 = vpop.f32.mrb[0].mxu0
        %v4914 = vadd.f32 0.0, %v4913
        %v4915 = vpop.f32.mrb[0].mxu0
        %v4916 = vadd.f32 0.0, %v4915
        %4917 = vmatprep.mubr.bf16.mxu0 0
        %4918 = vmatmul.mubr.bf16.gmra.mrb[0].mxu0 %v4770
        %v4919 = vpop.f32.mrb[0].mxu0
        %v4920 = vadd.f32 0.0, %v4919
        %v4921 = vpop.f32.mrb[0].mxu0
        %v4922 = vadd.f32 0.0, %v4921
        %v4923 = vpop.f32.mrb[0].mxu0
        %v4924 = vadd.f32 0.0, %v4923
        %v4925 = vpop.f32.mrb[0].mxu0
        %v4926 = vadd.f32 0.0, %v4925
        %4927 = vmatprep.mubr.bf16.mxu0 0
        %4928 = vmatmul.mubr.bf16.gmra.mrb[0].mxu0 %v4773
        %v4929 = vpop.f32.mrb[0].mxu0
        %v4930 = vadd.f32 0.0, %v4929
        %v4931 = vpop.f32.mrb[0].mxu0
        %v4932 = vadd.f32 0.0, %v4931
        %v4933 = vpop.f32.mrb[0].mxu0
        %v4934 = vadd.f32 0.0, %v4933
        %v4935 = vpop.f32.mrb[0].mxu0
        %v4936 = vadd.f32 0.0, %v4935
        %4937 = vmatprep.mubr.bf16.mxu0 0
        %4938 = vmatmul.mubr.bf16.gmra.mrb[0].mxu0 %v4776
        %v4939 = vpop.f32.mrb[0].mxu0
        %v4940 = vadd.f32 0.0, %v4939
        %v4941 = vpop.f32.mrb[0].mxu0
        %v4942 = vadd.f32 0.0, %v4941
        %v4943 = vpop.f32.mrb[0].mxu0
        %v4944 = vadd.f32 0.0, %v4943
        %v4945 = vpop.f32.mrb[0].mxu0
        %v4946 = vadd.f32 0.0, %v4945
        %4947 = vmatprep.mubr.bf16.mxu0 0
        %4948 = vmatmul.mubr.bf16.gmra.mrb[0].mxu0 %v4779
        %v4949 = vpop.f32.mrb[0].mxu0
        %v4950 = vadd.f32 0.0, %v4949
        %v4951 = vpop.f32.mrb[0].mxu0
        %v4952 = vadd.f32 0.0, %v4951
        %v4953 = vpop.f32.mrb[0].mxu0
        %v4954 = vadd.f32 0.0, %v4953
        %v4955 = vpop.f32.mrb[0].mxu0
        %v4956 = vadd.f32 0.0, %v4955
        %4957 = vmatprep.mubr.bf16.mxu0 0
        %4958 = vmatmul.mubr.bf16.gmra.mrb[0].mxu0 %v4782
        %v4959 = vpop.f32.mrb[0].mxu0
        %v4960 = vadd.f32 0.0, %v4959
        %v4961 = vpop.f32.mrb[0].mxu0
        %v4962 = vadd.f32 0.0, %v4961
        %v4963 = vpop.f32.mrb[0].mxu0
        %v4964 = vadd.f32 0.0, %v4963
        %v4965 = vpop.f32.mrb[0].mxu0
        %v4966 = vadd.f32 0.0, %v4965
        %4967 = vmatprep.mubr.bf16.mxu0 0
        %4968 = vmatmul.mubr.bf16.gmra.mrb[0].mxu0 %v4785
        %v4969 = vpop.f32.mrb[0].mxu0
        %v4970 = vadd.f32 0.0, %v4969
        %v4971 = vpop.f32.mrb[0].mxu0
        %v4972 = vadd.f32 0.0, %v4971
        %v4973 = vpop.f32.mrb[0].mxu0
        %v4974 = vadd.f32 0.0, %v4973
        %v4975 = vpop.f32.mrb[0].mxu0
        %v4976 = vadd.f32 0.0, %v4975
        %4977 = vmatprep.mubr.bf16.mxu0 0
        %4978 = vmatmul.mubr.bf16.gmra.mrb[0].mxu0 %v4788
        %v4979 = vpop.f32.mrb[0].mxu0
        %v4980 = vadd.f32 0.0, %v4979
        %v4981 = vpop.f32.mrb[0].mxu0
        %v4982 = vadd.f32 0.0, %v4981
        %v4983 = vpop.f32.mrb[0].mxu0
        %v4984 = vadd.f32 0.0, %v4983
        %v4985 = vpop.f32.mrb[0].mxu0
        %v4986 = vadd.f32 0.0, %v4985
        %4987 = vmatprep.mubr.bf16.mxu0 0
        %4988 = vmatmul.mubr.bf16.gmra.mrb[0].mxu0 %v4791
        %v4989 = vpop.f32.mrb[0].mxu0
        %v4990 = vadd.f32 0.0, %v4989
        %v4991 = vpop.f32.mrb[0].mxu0
        %v4992 = vadd.f32 0.0, %v4991
        %v4993 = vpop.f32.mrb[0].mxu0
        %v4994 = vadd.f32 0.0, %v4993
        %v4995 = vpop.f32.mrb[0].mxu0
        %v4996 = vadd.f32 0.0, %v4995
        %4997 = vmatprep.mubr.bf16.mxu0 0
        %4998 = vmatmul.mubr.bf16.gmra.mrb[0].mxu0 %v4794
        %v4999 = vpop.f32.mrb[0].mxu0
        %v5000 = vadd.f32 0.0, %v4999
        %v5001 = vpop.f32.mrb[0].mxu0
        %v5002 = vadd.f32 0.0, %v5001
        %v5003 = vpop.f32.mrb[0].mxu0
        %v5004 = vadd.f32 0.0, %v5003
        %v5005 = vpop.f32.mrb[0].mxu0
        %v5006 = vadd.f32 0.0, %v5005
        %5007 = vmatprep.mubr.bf16.mxu0 0
        %5008 = vmatmul.mubr.bf16.gmra.mrb[0].mxu0 %v4797
        %v5009 = vpop.f32.mrb[0].mxu0
        %v5010 = vadd.f32 0.0, %v5009
        %v5011 = vpop.f32.mrb[0].mxu0
        %v5012 = vadd.f32 0.0, %v5011
        %v5013 = vpop.f32.mrb[0].mxu0
        %v5014 = vadd.f32 0.0, %v5013
        %v5015 = vpop.f32.mrb[0].mxu0
        %v5016 = vadd.f32 0.0, %v5015
        %5017 = vmatprep.mubr.bf16.mxu0 0
        %5018 = vmatmul.mubr.bf16.gmra.mrb[0].mxu0 %v4800
        %v5019 = vpop.f32.mrb[0].mxu0
        %v5020 = vadd.f32 0.0, %v5019
        %v5021 = vpop.f32.mrb[0].mxu0
        %v5022 = vadd.f32 0.0, %v5021
        %v5023 = vpop.f32.mrb[0].mxu0
        %v5024 = vadd.f32 0.0, %v5023
        %v5025 = vpop.f32.mrb[0].mxu0
        %v5026 = vadd.f32 0.0, %v5025
        %5027 = vmatprep.mubr.bf16.mxu0 0
        %5028 = vmatmul.mubr.bf16.gmra.mrb[0].mxu0 %v4803
        %v5029 = vpop.f32.mrb[0].mxu0
        %v5030 = vadd.f32 0.0, %v5029
        %v5031 = vpop.f32.mrb[0].mxu0
        %v5032 = vadd.f32 0.0, %v5031
        %v5033 = vpop.f32.mrb[0].mxu0
        %v5034 = vadd.f32 0.0, %v5033
        %v5035 = vpop.f32.mrb[0].mxu0
        %v5036 = vadd.f32 0.0, %v5035
        %5037 = vmatprep.mubr.bf16.mxu0 0
        %5038 = vmatmul.mubr.bf16.gmra.mrb[0].mxu0 %v4806
        %v5039 = vpop.f32.mrb[0].mxu0
        %v5040 = vadd.f32 0.0, %v5039
        %v5041 = vpop.f32.mrb[0].mxu0
        %v5042 = vadd.f32 0.0, %v5041
        %v5043 = vpop.f32.mrb[0].mxu0
        %v5044 = vadd.f32 0.0, %v5043
        %v5045 = vpop.f32.mrb[0].mxu0
        %v5046 = vadd.f32 0.0, %v5045
        %5047 = vdwg.mxu0
        %v5059 = vunpack.c.l.b16 %v4669
        %v5060 = vunpack.c.h.b16 %v4669
        %v5061 = vunpack.c.l.b16 %v4670
        %v5062 = vunpack.c.h.b16 %v4670
        %v5063 = vunpack.c.l.b16 %v4671
        %v5064 = vunpack.c.h.b16 %v4671
        %v5065 = vunpack.c.l.b16 %v4672
        %v5066 = vunpack.c.h.b16 %v4672
        %v5067 = vunpack.c.l.b16 %v4673
        %v5068 = vunpack.c.h.b16 %v4673
        %v5069 = vunpack.c.l.b16 %v4674
        %v5070 = vunpack.c.h.b16 %v4674
        %v5071 = vunpack.c.l.b16 %v4675
        %v5072 = vunpack.c.h.b16 %v4675
        %v5073 = vunpack.c.l.b16 %v4676
        %v5074 = vunpack.c.h.b16 %v4676
        %v5075 = vunpack.c.l.b16 %v4677
        %v5076 = vunpack.c.h.b16 %v4677
        %v5077 = vunpack.c.l.b16 %v4678
        %v5078 = vunpack.c.h.b16 %v4678
        %v5079 = vunpack.c.l.b16 %v4679
        %v5080 = vunpack.c.h.b16 %v4679
        %v5081 = vpack.c.b16 %v5061, %v5059
        %v5082 = vpack.c.b16 %v5062, %v5060
        %v5083 = vpack.c.b16 %v5065, %v5063
        %v5084 = vpack.c.b16 %v5066, %v5064
        %v5085 = vpack.c.b16 %v5069, %v5067
        %v5086 = vpack.c.b16 %v5070, %v5068
        %v5087 = vpack.c.b16 %v5073, %v5071
        %v5088 = vpack.c.b16 %v5074, %v5072
        %v5089 = vpack.c.b16 %v5077, %v5075
        %v5090 = vpack.c.b16 %v5078, %v5076
        %v5091 = vpack.c.b16 %v5079, %v5079
        %v5092 = vpack.c.b16 %v5080, %v5080
        %v5104 = vsel %vm4747, %v4641, 0
        %v5107 = vsel %vm4747, %v4642, 0
        %v5110 = vsel %vm4808, %v5091, 0
        %v5113 = vsel %vm4808, %v5092, 0
        %5115 = vmatprep.subr.bf16.mxu0 %v5082
        %5116 = vmatpush1.bf16.msra.mxu0 %v5081
        %5117 = vmatprep.subr.bf16.mxu0 %v5084
        %5118 = vmatpush1.bf16.msra.mxu0 %v5083
        %5119 = vmatprep.subr.bf16.mxu0 %v5086
        %5120 = vmatpush1.bf16.msra.mxu0 %v5085
        %5121 = vmatprep.subr.bf16.mxu0 %v5088
        %5122 = vmatpush1.bf16.msra.mxu0 %v5087
        %5123 = vmatprep.subr.bf16.mxu0 %v5090
        %5124 = vmatpush1.bf16.msra.mxu0 %v5089
        %5125 = vmatprep.subr.bf16.mxu0 %v5113
        %5126 = vmatpush1.bf16.msra.mxu0 %v5110
        %5127 = vmatprep.subr.bf16.mxu0 0
        %5128 = vmatpush1.bf16.msra.mxu0 0
        %5129 = vmatprep.subr.bf16.mxu0 0
        %5130 = vmatpush1.bf16.msra.mxu0 0
        %5131 = vmatprep.subr.bf16.mxu0 0
        %5132 = vmatpush1.bf16.msra.mxu0 0
        %5133 = vmatprep.subr.bf16.mxu0 0
        %5134 = vmatpush1.bf16.msra.mxu0 0
        %5135 = vmatprep.subr.bf16.mxu0 0
        %5136 = vmatpush1.bf16.msra.mxu0 0
        %5137 = vmatprep.subr.bf16.mxu0 0
        %5138 = vmatpush1.bf16.msra.mxu0 0
        %5139 = vmatprep.subr.bf16.mxu0 0
        %5140 = vmatpush1.bf16.msra.mxu0 0
        %5141 = vmatprep.subr.bf16.mxu0 0
        %5142 = vmatpush1.bf16.msra.mxu0 0
        %5143 = vmatprep.subr.bf16.mxu0 0
        %5144 = vmatpush1.bf16.msra.mxu0 0
        %5145 = vmatprep.subr.bf16.mxu0 0
        %5146 = vmatpush1.bf16.msra.mxu0 0
        %5147 = vmatprep.mubr.bf16.mxu0 0
        %5148 = vmatmul.mubr.bf16.gmra.mrb[0].mxu0 %v5104
        %v5149 = vpop.f32.mrb[0].mxu0
        %v5150 = vadd.f32 %v4850, %v5149
        %v5151 = vpop.f32.mrb[0].mxu0
        %v5152 = vadd.f32 %v4852, %v5151
        %v5153 = vpop.f32.mrb[0].mxu0
        %v5154 = vadd.f32 %v4854, %v5153
        %v5155 = vpop.f32.mrb[0].mxu0
        %v5156 = vadd.f32 %v4856, %v5155
        %5157 = vmatprep.mubr.bf16.mxu0 0
        %5158 = vmatmul.mubr.bf16.gmra.mrb[0].mxu0 %v5107
        %v5159 = vpop.f32.mrb[0].mxu0
        %v5160 = vadd.f32 %v4860, %v5159
        %v5161 = vpop.f32.mrb[0].mxu0
        %v5162 = vadd.f32 %v4862, %v5161
        %v5163 = vpop.f32.mrb[0].mxu0
        %v5164 = vadd.f32 %v4864, %v5163
        %v5165 = vpop.f32.mrb[0].mxu0
        %v5166 = vadd.f32 %v4866, %v5165
        %5167 = vmatprep.mubr.bf16.mxu0 0
        %5168 = vmatmul.mubr.bf16.gmra.mrb[0].mxu0 %v4749
        %v5169 = vpop.f32.mrb[0].mxu0
        %v5170 = vadd.f32 %v4870, %v5169
        %v5171 = vpop.f32.mrb[0].mxu0
        %v5172 = vadd.f32 %v4872, %v5171
        %v5173 = vpop.f32.mrb[0].mxu0
        %v5174 = vadd.f32 %v4874, %v5173
        %v5175 = vpop.f32.mrb[0].mxu0
        %v5176 = vadd.f32 %v4876, %v5175
        %5177 = vmatprep.mubr.bf16.mxu0 0
        %5178 = vmatmul.mubr.bf16.gmra.mrb[0].mxu0 %v4752
        %v5179 = vpop.f32.mrb[0].mxu0
        %v5180 = vadd.f32 %v4880, %v5179
        %v5181 = vpop.f32.mrb[0].mxu0
        %v5182 = vadd.f32 %v4882, %v5181
        %v5183 = vpop.f32.mrb[0].mxu0
        %v5184 = vadd.f32 %v4884, %v5183
        %v5185 = vpop.f32.mrb[0].mxu0
        %v5186 = vadd.f32 %v4886, %v5185
        %5187 = vmatprep.mubr.bf16.mxu0 0
        %5188 = vmatmul.mubr.bf16.gmra.mrb[0].mxu0 %v4755
        %v5189 = vpop.f32.mrb[0].mxu0
        %v5190 = vadd.f32 %v4890, %v5189
        %v5191 = vpop.f32.mrb[0].mxu0
        %v5192 = vadd.f32 %v4892, %v5191
        %v5193 = vpop.f32.mrb[0].mxu0
        %v5194 = vadd.f32 %v4894, %v5193
        %v5195 = vpop.f32.mrb[0].mxu0
        %v5196 = vadd.f32 %v4896, %v5195
        %5197 = vmatprep.mubr.bf16.mxu0 0
        %5198 = vmatmul.mubr.bf16.gmra.mrb[0].mxu0 %v4758
        %v5199 = vpop.f32.mrb[0].mxu0
        %v5200 = vadd.f32 %v4900, %v5199
        %v5201 = vpop.f32.mrb[0].mxu0
        %v5202 = vadd.f32 %v4902, %v5201
        %v5203 = vpop.f32.mrb[0].mxu0
        %v5204 = vadd.f32 %v4904, %v5203
        %v5205 = vpop.f32.mrb[0].mxu0
        %v5206 = vadd.f32 %v4906, %v5205
        %5207 = vmatprep.mubr.bf16.mxu0 0
        %5208 = vmatmul.mubr.bf16.gmra.mrb[0].mxu0 %v4761
        %v5209 = vpop.f32.mrb[0].mxu0
        %v5210 = vadd.f32 %v4910, %v5209
        %v5211 = vpop.f32.mrb[0].mxu0
        %v5212 = vadd.f32 %v4912, %v5211
        %v5213 = vpop.f32.mrb[0].mxu0
        %v5214 = vadd.f32 %v4914, %v5213
        %v5215 = vpop.f32.mrb[0].mxu0
        %v5216 = vadd.f32 %v4916, %v5215
        %5217 = vmatprep.mubr.bf16.mxu0 0
        %5218 = vmatmul.mubr.bf16.gmra.mrb[0].mxu0 %v4764
        %v5219 = vpop.f32.mrb[0].mxu0
        %v5220 = vadd.f32 %v4920, %v5219
        %v5221 = vpop.f32.mrb[0].mxu0
        %v5222 = vadd.f32 %v4922, %v5221
        %v5223 = vpop.f32.mrb[0].mxu0
        %v5224 = vadd.f32 %v4924, %v5223
        %v5225 = vpop.f32.mrb[0].mxu0
        %v5226 = vadd.f32 %v4926, %v5225
        %5227 = vmatprep.mubr.bf16.mxu0 0
        %5228 = vmatmul.mubr.bf16.gmra.mrb[0].mxu0 %v4767
        %v5229 = vpop.f32.mrb[0].mxu0
        %v5230 = vadd.f32 %v4930, %v5229
        %v5231 = vpop.f32.mrb[0].mxu0
        %v5232 = vadd.f32 %v4932, %v5231
        %v5233 = vpop.f32.mrb[0].mxu0
        %v5234 = vadd.f32 %v4934, %v5233
        %v5235 = vpop.f32.mrb[0].mxu0
        %v5236 = vadd.f32 %v4936, %v5235
        %5237 = vmatprep.mubr.bf16.mxu0 0
        %5238 = vmatmul.mubr.bf16.gmra.mrb[0].mxu0 %v4770
        %v5239 = vpop.f32.mrb[0].mxu0
        %v5240 = vadd.f32 %v4940, %v5239
        %v5241 = vpop.f32.mrb[0].mxu0
        %v5242 = vadd.f32 %v4942, %v5241
        %v5243 = vpop.f32.mrb[0].mxu0
        %v5244 = vadd.f32 %v4944, %v5243
        %v5245 = vpop.f32.mrb[0].mxu0
        %v5246 = vadd.f32 %v4946, %v5245
        %5247 = vmatprep.mubr.bf16.mxu0 0
        %5248 = vmatmul.mubr.bf16.gmra.mrb[0].mxu0 %v4773
        %v5249 = vpop.f32.mrb[0].mxu0
        %v5250 = vadd.f32 %v4950, %v5249
        %v5251 = vpop.f32.mrb[0].mxu0
        %v5252 = vadd.f32 %v4952, %v5251
        %v5253 = vpop.f32.mrb[0].mxu0
        %v5254 = vadd.f32 %v4954, %v5253
        %v5255 = vpop.f32.mrb[0].mxu0
        %v5256 = vadd.f32 %v4956, %v5255
        %5257 = vmatprep.mubr.bf16.mxu0 0
        %5258 = vmatmul.mubr.bf16.gmra.mrb[0].mxu0 %v4776
        %v5259 = vpop.f32.mrb[0].mxu0
        %v5260 = vadd.f32 %v4960, %v5259
        %v5261 = vpop.f32.mrb[0].mxu0
        %v5262 = vadd.f32 %v4962, %v5261
        %v5263 = vpop.f32.mrb[0].mxu0
        %v5264 = vadd.f32 %v4964, %v5263
        %v5265 = vpop.f32.mrb[0].mxu0
        %v5266 = vadd.f32 %v4966, %v5265
        %5267 = vmatprep.mubr.bf16.mxu0 0
        %5268 = vmatmul.mubr.bf16.gmra.mrb[0].mxu0 %v4779
        %v5269 = vpop.f32.mrb[0].mxu0
        %v5270 = vadd.f32 %v4970, %v5269
        %v5271 = vpop.f32.mrb[0].mxu0
        %v5272 = vadd.f32 %v4972, %v5271
        %v5273 = vpop.f32.mrb[0].mxu0
        %v5274 = vadd.f32 %v4974, %v5273
        %v5275 = vpop.f32.mrb[0].mxu0
        %v5276 = vadd.f32 %v4976, %v5275
        %5277 = vmatprep.mubr.bf16.mxu0 0
        %5278 = vmatmul.mubr.bf16.gmra.mrb[0].mxu0 %v4782
        %v5279 = vpop.f32.mrb[0].mxu0
        %v5280 = vadd.f32 %v4980, %v5279
        %v5281 = vpop.f32.mrb[0].mxu0
        %v5282 = vadd.f32 %v4982, %v5281
        %v5283 = vpop.f32.mrb[0].mxu0
        %v5284 = vadd.f32 %v4984, %v5283
        %v5285 = vpop.f32.mrb[0].mxu0
        %v5286 = vadd.f32 %v4986, %v5285
        %5287 = vmatprep.mubr.bf16.mxu0 0
        %5288 = vmatmul.mubr.bf16.gmra.mrb[0].mxu0 %v4785
        %v5289 = vpop.f32.mrb[0].mxu0
        %v5290 = vadd.f32 %v4990, %v5289
        %v5291 = vpop.f32.mrb[0].mxu0
        %v5292 = vadd.f32 %v4992, %v5291
        %v5293 = vpop.f32.mrb[0].mxu0
        %v5294 = vadd.f32 %v4994, %v5293
        %v5295 = vpop.f32.mrb[0].mxu0
        %v5296 = vadd.f32 %v4996, %v5295
        %5297 = vmatprep.mubr.bf16.mxu0 0
        %5298 = vmatmul.mubr.bf16.gmra.mrb[0].mxu0 %v4788
        %v5299 = vpop.f32.mrb[0].mxu0
        %v5300 = vadd.f32 %v5000, %v5299
        %v5301 = vpop.f32.mrb[0].mxu0
        %v5302 = vadd.f32 %v5002, %v5301
        %v5303 = vpop.f32.mrb[0].mxu0
        %v5304 = vadd.f32 %v5004, %v5303
        %v5305 = vpop.f32.mrb[0].mxu0
        %v5306 = vadd.f32 %v5006, %v5305
        %5307 = vmatprep.mubr.bf16.mxu0 0
        %5308 = vmatmul.mubr.bf16.gmra.mrb[0].mxu0 %v4791
        %v5309 = vpop.f32.mrb[0].mxu0
        %v5310 = vadd.f32 %v5010, %v5309
        %v5311 = vpop.f32.mrb[0].mxu0
        %v5312 = vadd.f32 %v5012, %v5311
        %v5313 = vpop.f32.mrb[0].mxu0
        %v5314 = vadd.f32 %v5014, %v5313
        %v5315 = vpop.f32.mrb[0].mxu0
        %v5316 = vadd.f32 %v5016, %v5315
        %5317 = vmatprep.mubr.bf16.mxu0 0
        %5318 = vmatmul.mubr.bf16.gmra.mrb[0].mxu0 %v4794
        %v5319 = vpop.f32.mrb[0].mxu0
        %v5320 = vadd.f32 %v5020, %v5319
        %v5321 = vpop.f32.mrb[0].mxu0
        %v5322 = vadd.f32 %v5022, %v5321
        %v5323 = vpop.f32.mrb[0].mxu0
        %v5324 = vadd.f32 %v5024, %v5323
        %v5325 = vpop.f32.mrb[0].mxu0
        %v5326 = vadd.f32 %v5026, %v5325
        %5327 = vmatprep.mubr.bf16.mxu0 0
        %5328 = vmatmul.mubr.bf16.gmra.mrb[0].mxu0 %v4797
        %v5329 = vpop.f32.mrb[0].mxu0
        %v5330 = vadd.f32 %v5030, %v5329
        %v5331 = vpop.f32.mrb[0].mxu0
        %v5332 = vadd.f32 %v5032, %v5331
        %v5333 = vpop.f32.mrb[0].mxu0
        %v5334 = vadd.f32 %v5034, %v5333
        %v5335 = vpop.f32.mrb[0].mxu0
        %v5336 = vadd.f32 %v5036, %v5335
        %5337 = vmatprep.mubr.bf16.mxu0 0
        %5338 = vmatmul.mubr.bf16.gmra.mrb[0].mxu0 %v4800
        %v5339 = vpop.f32.mrb[0].mxu0
        %v5340 = vadd.f32 %v5040, %v5339
        %v5341 = vpop.f32.mrb[0].mxu0
        %v5342 = vadd.f32 %v5042, %v5341
        %v5343 = vpop.f32.mrb[0].mxu0
        %v5344 = vadd.f32 %v5044, %v5343
        %v5345 = vpop.f32.mrb[0].mxu0
        %v5346 = vadd.f32 %v5046, %v5345
        %5347 = vdwg.mxu0
        %s5348 = scalar_lea.vmem %s4, 176
        %v5349 = vld [vmem:[%s5348] sm:$0xff]
        %v5350 = vld [vmem:[%s5348 + $0x8] sm:$0xff]
        %v5351 = vld [vmem:[%s5348 + $0x10] sm:$0xff]
        %v5352 = vld [vmem:[%s5348 + $0x18] sm:$0xff]
        %v5353 = vld [vmem:[%s5348 + $0x20] sm:$0xff]
        %v5354 = vld [vmem:[%s5348 + $0x28] sm:$0xff]
        %v5355 = vld [vmem:[%s5348 + $0x30] sm:$0xff]
        %v5356 = vld [vmem:[%s5348 + $0x38] sm:$0xff]
        %v5357 = vld [vmem:[%s5348 + $0x40] sm:$0xff]
        %v5358 = vld [vmem:[%s5348 + $0x48] sm:$0xff]
        %v5359 = vld [vmem:[%s5348 + $0x50] sm:$0x33]
        %v5371 = vunpack.c.l.b16 %v5349
        %v5372 = vunpack.c.h.b16 %v5349
        %v5373 = vunpack.c.l.b16 %v5350
        %v5374 = vunpack.c.h.b16 %v5350
        %v5375 = vunpack.c.l.b16 %v5351
        %v5376 = vunpack.c.h.b16 %v5351
        %v5377 = vunpack.c.l.b16 %v5352
        %v5378 = vunpack.c.h.b16 %v5352
        %v5379 = vunpack.c.l.b16 %v5353
        %v5380 = vunpack.c.h.b16 %v5353
        %v5381 = vunpack.c.l.b16 %v5354
        %v5382 = vunpack.c.h.b16 %v5354
        %v5383 = vunpack.c.l.b16 %v5355
        %v5384 = vunpack.c.h.b16 %v5355
        %v5385 = vunpack.c.l.b16 %v5356
        %v5386 = vunpack.c.h.b16 %v5356
        %v5387 = vunpack.c.l.b16 %v5357
        %v5388 = vunpack.c.h.b16 %v5357
        %v5389 = vunpack.c.l.b16 %v5358
        %v5390 = vunpack.c.h.b16 %v5358
        %v5391 = vunpack.c.l.b16 %v5359
        %v5392 = vunpack.c.h.b16 %v5359
        %v5393 = vpack.c.b16 %v5373, %v5371
        %v5394 = vpack.c.b16 %v5374, %v5372
        %v5395 = vpack.c.b16 %v5377, %v5375
        %v5396 = vpack.c.b16 %v5378, %v5376
        %v5397 = vpack.c.b16 %v5381, %v5379
        %v5398 = vpack.c.b16 %v5382, %v5380
        %v5399 = vpack.c.b16 %v5385, %v5383
        %v5400 = vpack.c.b16 %v5386, %v5384
        %v5401 = vpack.c.b16 %v5389, %v5387
        %v5402 = vpack.c.b16 %v5390, %v5388
        %v5403 = vpack.c.b16 %v5391, %v5391
        %v5404 = vpack.c.b16 %v5392, %v5392
        %v5416 = vsel %vm4747, %v4663, 0
        %v5419 = vsel %vm4747, %v4664, 0
        %v5422 = vsel %vm4808, %v5403, 0
        %v5425 = vsel %vm4808, %v5404, 0
        %5427 = vmatprep.subr.bf16.mxu0 %v5394
        %5428 = vmatpush1.bf16.msra.mxu0 %v5393
        %5429 = vmatprep.subr.bf16.mxu0 %v5396
        %5430 = vmatpush1.bf16.msra.mxu0 %v5395
        %5431 = vmatprep.subr.bf16.mxu0 %v5398
        %5432 = vmatpush1.bf16.msra.mxu0 %v5397
        %5433 = vmatprep.subr.bf16.mxu0 %v5400
        %5434 = vmatpush1.bf16.msra.mxu0 %v5399
        %5435 = vmatprep.subr.bf16.mxu0 %v5402
        %5436 = vmatpush1.bf16.msra.mxu0 %v5401
        %5437 = vmatprep.subr.bf16.mxu0 %v5425
        %5438 = vmatpush1.bf16.msra.mxu0 %v5422
        %5439 = vmatprep.subr.bf16.mxu0 0
        %5440 = vmatpush1.bf16.msra.mxu0 0
        %5441 = vmatprep.subr.bf16.mxu0 0
        %5442 = vmatpush1.bf16.msra.mxu0 0
        %5443 = vmatprep.subr.bf16.mxu0 0
        %5444 = vmatpush1.bf16.msra.mxu0 0
        %5445 = vmatprep.subr.bf16.mxu0 0
        %5446 = vmatpush1.bf16.msra.mxu0 0
        %5447 = vmatprep.subr.bf16.mxu0 0
        %5448 = vmatpush1.bf16.msra.mxu0 0
        %5449 = vmatprep.subr.bf16.mxu0 0
        %5450 = vmatpush1.bf16.msra.mxu0 0
        %5451 = vmatprep.subr.bf16.mxu0 0
        %5452 = vmatpush1.bf16.msra.mxu0 0
        %5453 = vmatprep.subr.bf16.mxu0 0
        %5454 = vmatpush1.bf16.msra.mxu0 0
        %5455 = vmatprep.subr.bf16.mxu0 0
        %5456 = vmatpush1.bf16.msra.mxu0 0
        %5457 = vmatprep.subr.bf16.mxu0 0
        %5458 = vmatpush1.bf16.msra.mxu0 0
        %5459 = vmatprep.mubr.bf16.mxu0 0
        %5460 = vmatmul.mubr.bf16.gmra.mrb[0].mxu0 %v4755
        %v5461 = vpop.f32.mrb[0].mxu0
        %v5462 = vadd.f32 0.0, %v5461
        %v5463 = vpop.f32.mrb[0].mxu0
        %v5464 = vadd.f32 0.0, %v5463
        %v5465 = vpop.f32.mrb[0].mxu0
        %v5466 = vadd.f32 0.0, %v5465
        %v5467 = vpop.f32.mrb[0].mxu0
        %v5468 = vadd.f32 0.0, %v5467
        %5469 = vmatprep.mubr.bf16.mxu0 0
        %5470 = vmatmul.mubr.bf16.gmra.mrb[0].mxu0 %v4758
        %v5471 = vpop.f32.mrb[0].mxu0
        %v5472 = vadd.f32 0.0, %v5471
        %v5473 = vpop.f32.mrb[0].mxu0
        %v5474 = vadd.f32 0.0, %v5473
        %v5475 = vpop.f32.mrb[0].mxu0
        %v5476 = vadd.f32 0.0, %v5475
        %v5477 = vpop.f32.mrb[0].mxu0
        %v5478 = vadd.f32 0.0, %v5477
        %5479 = vmatprep.mubr.bf16.mxu0 0
        %5480 = vmatmul.mubr.bf16.gmra.mrb[0].mxu0 %v4761
        %v5481 = vpop.f32.mrb[0].mxu0
        %v5482 = vadd.f32 0.0, %v5481
        %v5483 = vpop.f32.mrb[0].mxu0
        %v5484 = vadd.f32 0.0, %v5483
        %v5485 = vpop.f32.mrb[0].mxu0
        %v5486 = vadd.f32 0.0, %v5485
        %v5487 = vpop.f32.mrb[0].mxu0
        %v5488 = vadd.f32 0.0, %v5487
        %5489 = vmatprep.mubr.bf16.mxu0 0
        %5490 = vmatmul.mubr.bf16.gmra.mrb[0].mxu0 %v4764
        %v5491 = vpop.f32.mrb[0].mxu0
        %v5492 = vadd.f32 0.0, %v5491
        %v5493 = vpop.f32.mrb[0].mxu0
        %v5494 = vadd.f32 0.0, %v5493
        %v5495 = vpop.f32.mrb[0].mxu0
        %v5496 = vadd.f32 0.0, %v5495
        %v5497 = vpop.f32.mrb[0].mxu0
        %v5498 = vadd.f32 0.0, %v5497
        %5499 = vmatprep.mubr.bf16.mxu0 0
        %5500 = vmatmul.mubr.bf16.gmra.mrb[0].mxu0 %v4767
        %v5501 = vpop.f32.mrb[0].mxu0
        %v5502 = vadd.f32 0.0, %v5501
        %v5503 = vpop.f32.mrb[0].mxu0
        %v5504 = vadd.f32 0.0, %v5503
        %v5505 = vpop.f32.mrb[0].mxu0
        %v5506 = vadd.f32 0.0, %v5505
        %v5507 = vpop.f32.mrb[0].mxu0
        %v5508 = vadd.f32 0.0, %v5507
        %5509 = vmatprep.mubr.bf16.mxu0 0
        %5510 = vmatmul.mubr.bf16.gmra.mrb[0].mxu0 %v4770
        %v5511 = vpop.f32.mrb[0].mxu0
        %v5512 = vadd.f32 0.0, %v5511
        %v5513 = vpop.f32.mrb[0].mxu0
        %v5514 = vadd.f32 0.0, %v5513
        %v5515 = vpop.f32.mrb[0].mxu0
        %v5516 = vadd.f32 0.0, %v5515
        %v5517 = vpop.f32.mrb[0].mxu0
        %v5518 = vadd.f32 0.0, %v5517
        %5519 = vmatprep.mubr.bf16.mxu0 0
        %5520 = vmatmul.mubr.bf16.gmra.mrb[0].mxu0 %v4773
        %v5521 = vpop.f32.mrb[0].mxu0
        %v5522 = vadd.f32 0.0, %v5521
        %v5523 = vpop.f32.mrb[0].mxu0
        %v5524 = vadd.f32 0.0, %v5523
        %v5525 = vpop.f32.mrb[0].mxu0
        %v5526 = vadd.f32 0.0, %v5525
        %v5527 = vpop.f32.mrb[0].mxu0
        %v5528 = vadd.f32 0.0, %v5527
        %5529 = vmatprep.mubr.bf16.mxu0 0
        %5530 = vmatmul.mubr.bf16.gmra.mrb[0].mxu0 %v4776
        %v5531 = vpop.f32.mrb[0].mxu0
        %v5532 = vadd.f32 0.0, %v5531
        %v5533 = vpop.f32.mrb[0].mxu0
        %v5534 = vadd.f32 0.0, %v5533
        %v5535 = vpop.f32.mrb[0].mxu0
        %v5536 = vadd.f32 0.0, %v5535
        %v5537 = vpop.f32.mrb[0].mxu0
        %v5538 = vadd.f32 0.0, %v5537
        %5539 = vmatprep.mubr.bf16.mxu0 0
        %5540 = vmatmul.mubr.bf16.gmra.mrb[0].mxu0 %v4779
        %v5541 = vpop.f32.mrb[0].mxu0
        %v5542 = vadd.f32 0.0, %v5541
        %v5543 = vpop.f32.mrb[0].mxu0
        %v5544 = vadd.f32 0.0, %v5543
        %v5545 = vpop.f32.mrb[0].mxu0
        %v5546 = vadd.f32 0.0, %v5545
        %v5547 = vpop.f32.mrb[0].mxu0
        %v5548 = vadd.f32 0.0, %v5547
        %5549 = vmatprep.mubr.bf16.mxu0 0
        %5550 = vmatmul.mubr.bf16.gmra.mrb[0].mxu0 %v4782
        %v5551 = vpop.f32.mrb[0].mxu0
        %v5552 = vadd.f32 0.0, %v5551
        %v5553 = vpop.f32.mrb[0].mxu0
        %v5554 = vadd.f32 0.0, %v5553
        %v5555 = vpop.f32.mrb[0].mxu0
        %v5556 = vadd.f32 0.0, %v5555
        %v5557 = vpop.f32.mrb[0].mxu0
        %v5558 = vadd.f32 0.0, %v5557
        %5559 = vmatprep.mubr.bf16.mxu0 0
        %5560 = vmatmul.mubr.bf16.gmra.mrb[0].mxu0 %v4785
        %v5561 = vpop.f32.mrb[0].mxu0
        %v5562 = vadd.f32 0.0, %v5561
        %v5563 = vpop.f32.mrb[0].mxu0
        %v5564 = vadd.f32 0.0, %v5563
        %v5565 = vpop.f32.mrb[0].mxu0
        %v5566 = vadd.f32 0.0, %v5565
        %v5567 = vpop.f32.mrb[0].mxu0
        %v5568 = vadd.f32 0.0, %v5567
        %5569 = vmatprep.mubr.bf16.mxu0 0
        %5570 = vmatmul.mubr.bf16.gmra.mrb[0].mxu0 %v4788
        %v5571 = vpop.f32.mrb[0].mxu0
        %v5572 = vadd.f32 0.0, %v5571
        %v5573 = vpop.f32.mrb[0].mxu0
        %v5574 = vadd.f32 0.0, %v5573
        %v5575 = vpop.f32.mrb[0].mxu0
        %v5576 = vadd.f32 0.0, %v5575
        %v5577 = vpop.f32.mrb[0].mxu0
        %v5578 = vadd.f32 0.0, %v5577
        %5579 = vmatprep.mubr.bf16.mxu0 0
        %5580 = vmatmul.mubr.bf16.gmra.mrb[0].mxu0 %v4791
        %v5581 = vpop.f32.mrb[0].mxu0
        %v5582 = vadd.f32 0.0, %v5581
        %v5583 = vpop.f32.mrb[0].mxu0
        %v5584 = vadd.f32 0.0, %v5583
        %v5585 = vpop.f32.mrb[0].mxu0
        %v5586 = vadd.f32 0.0, %v5585
        %v5587 = vpop.f32.mrb[0].mxu0
        %v5588 = vadd.f32 0.0, %v5587
        %5589 = vmatprep.mubr.bf16.mxu0 0
        %5590 = vmatmul.mubr.bf16.gmra.mrb[0].mxu0 %v4794
        %v5591 = vpop.f32.mrb[0].mxu0
        %v5592 = vadd.f32 0.0, %v5591
        %v5593 = vpop.f32.mrb[0].mxu0
        %v5594 = vadd.f32 0.0, %v5593
        %v5595 = vpop.f32.mrb[0].mxu0
        %v5596 = vadd.f32 0.0, %v5595
        %v5597 = vpop.f32.mrb[0].mxu0
        %v5598 = vadd.f32 0.0, %v5597
        %5599 = vmatprep.mubr.bf16.mxu0 0
        %5600 = vmatmul.mubr.bf16.gmra.mrb[0].mxu0 %v4797
        %v5601 = vpop.f32.mrb[0].mxu0
        %v5602 = vadd.f32 0.0, %v5601
        %v5603 = vpop.f32.mrb[0].mxu0
        %v5604 = vadd.f32 0.0, %v5603
        %v5605 = vpop.f32.mrb[0].mxu0
        %v5606 = vadd.f32 0.0, %v5605
        %v5607 = vpop.f32.mrb[0].mxu0
        %v5608 = vadd.f32 0.0, %v5607
        %5609 = vmatprep.mubr.bf16.mxu0 0
        %5610 = vmatmul.mubr.bf16.gmra.mrb[0].mxu0 %v4800
        %v5611 = vpop.f32.mrb[0].mxu0
        %v5612 = vadd.f32 0.0, %v5611
        %v5613 = vpop.f32.mrb[0].mxu0
        %v5614 = vadd.f32 0.0, %v5613
        %v5615 = vpop.f32.mrb[0].mxu0
        %v5616 = vadd.f32 0.0, %v5615
        %v5617 = vpop.f32.mrb[0].mxu0
        %v5618 = vadd.f32 0.0, %v5617
        %5619 = vmatprep.mubr.bf16.mxu0 0
        %5620 = vmatmul.mubr.bf16.gmra.mrb[0].mxu0 %v4803
        %v5621 = vpop.f32.mrb[0].mxu0
        %v5622 = vadd.f32 0.0, %v5621
        %v5623 = vpop.f32.mrb[0].mxu0
        %v5624 = vadd.f32 0.0, %v5623
        %v5625 = vpop.f32.mrb[0].mxu0
        %v5626 = vadd.f32 0.0, %v5625
        %v5627 = vpop.f32.mrb[0].mxu0
        %v5628 = vadd.f32 0.0, %v5627
        %5629 = vmatprep.mubr.bf16.mxu0 0
        %5630 = vmatmul.mubr.bf16.gmra.mrb[0].mxu0 %v4806
        %v5631 = vpop.f32.mrb[0].mxu0
        %v5632 = vadd.f32 0.0, %v5631
        %v5633 = vpop.f32.mrb[0].mxu0
        %v5634 = vadd.f32 0.0, %v5633
        %v5635 = vpop.f32.mrb[0].mxu0
        %v5636 = vadd.f32 0.0, %v5635
        %v5637 = vpop.f32.mrb[0].mxu0
        %v5638 = vadd.f32 0.0, %v5637
        %5639 = vmatprep.mubr.bf16.mxu0 0
        %5640 = vmatmul.mubr.bf16.gmra.mrb[0].mxu0 %v5416
        %v5641 = vpop.f32.mrb[0].mxu0
        %v5642 = vadd.f32 0.0, %v5641
        %v5643 = vpop.f32.mrb[0].mxu0
        %v5644 = vadd.f32 0.0, %v5643
        %v5645 = vpop.f32.mrb[0].mxu0
        %v5646 = vadd.f32 0.0, %v5645
        %v5647 = vpop.f32.mrb[0].mxu0
        %v5648 = vadd.f32 0.0, %v5647
        %5649 = vmatprep.mubr.bf16.mxu0 0
        %5650 = vmatmul.mubr.bf16.gmra.mrb[0].mxu0 %v5419
        %v5651 = vpop.f32.mrb[0].mxu0
        %v5652 = vadd.f32 0.0, %v5651
        %v5653 = vpop.f32.mrb[0].mxu0
        %v5654 = vadd.f32 0.0, %v5653
        %v5655 = vpop.f32.mrb[0].mxu0
        %v5656 = vadd.f32 0.0, %v5655
        %v5657 = vpop.f32.mrb[0].mxu0
        %v5658 = vadd.f32 0.0, %v5657
        %5659 = vdwg.mxu0
        %v5660 = vadd.f32 %v5150, %v5462
        %v5661 = vadd.f32 %v5152, %v5464
        %v5662 = vadd.f32 %v5154, %v5466
        %v5663 = vadd.f32 %v5156, %v5468
        %v5664 = vadd.f32 %v5160, %v5472
        %v5665 = vadd.f32 %v5162, %v5474
        %v5666 = vadd.f32 %v5164, %v5476
        %v5667 = vadd.f32 %v5166, %v5478
        %v5668 = vadd.f32 %v5170, %v5482
        %v5669 = vadd.f32 %v5172, %v5484
        %v5670 = vadd.f32 %v5174, %v5486
        %v5671 = vadd.f32 %v5176, %v5488
        %v5672 = vadd.f32 %v5180, %v5492
        %v5673 = vadd.f32 %v5182, %v5494
        %v5674 = vadd.f32 %v5184, %v5496
        %v5675 = vadd.f32 %v5186, %v5498
        %v5676 = vadd.f32 %v5190, %v5502
        %v5677 = vadd.f32 %v5192, %v5504
        %v5678 = vadd.f32 %v5194, %v5506
        %v5679 = vadd.f32 %v5196, %v5508
        %v5680 = vadd.f32 %v5200, %v5512
        %v5681 = vadd.f32 %v5202, %v5514
        %v5682 = vadd.f32 %v5204, %v5516
        %v5683 = vadd.f32 %v5206, %v5518
        %v5684 = vadd.f32 %v5210, %v5522
        %v5685 = vadd.f32 %v5212, %v5524
        %v5686 = vadd.f32 %v5214, %v5526
        %v5687 = vadd.f32 %v5216, %v5528
        %v5688 = vadd.f32 %v5220, %v5532
        %v5689 = vadd.f32 %v5222, %v5534
        %v5690 = vadd.f32 %v5224, %v5536
        %v5691 = vadd.f32 %v5226, %v5538
        %v5692 = vadd.f32 %v5230, %v5542
        %v5693 = vadd.f32 %v5232, %v5544
        %v5694 = vadd.f32 %v5234, %v5546
        %v5695 = vadd.f32 %v5236, %v5548
        %v5696 = vadd.f32 %v5240, %v5552
        %v5697 = vadd.f32 %v5242, %v5554
        %v5698 = vadd.f32 %v5244, %v5556
        %v5699 = vadd.f32 %v5246, %v5558
        %v5700 = vadd.f32 %v5250, %v5562
        %v5701 = vadd.f32 %v5252, %v5564
        %v5702 = vadd.f32 %v5254, %v5566
        %v5703 = vadd.f32 %v5256, %v5568
        %v5704 = vadd.f32 %v5260, %v5572
        %v5705 = vadd.f32 %v5262, %v5574
        %v5706 = vadd.f32 %v5264, %v5576
        %v5707 = vadd.f32 %v5266, %v5578
        %v5708 = vadd.f32 %v5270, %v5582
        %v5709 = vadd.f32 %v5272, %v5584
        %v5710 = vadd.f32 %v5274, %v5586
        %v5711 = vadd.f32 %v5276, %v5588
        %v5712 = vadd.f32 %v5280, %v5592
        %v5713 = vadd.f32 %v5282, %v5594
        %v5714 = vadd.f32 %v5284, %v5596
        %v5715 = vadd.f32 %v5286, %v5598
        %v5716 = vadd.f32 %v5290, %v5602
        %v5717 = vadd.f32 %v5292, %v5604
        %v5718 = vadd.f32 %v5294, %v5606
        %v5719 = vadd.f32 %v5296, %v5608
        %v5720 = vadd.f32 %v5300, %v5612
        %v5721 = vadd.f32 %v5302, %v5614
        %v5722 = vadd.f32 %v5304, %v5616
        %v5723 = vadd.f32 %v5306, %v5618
        %v5724 = vadd.f32 %v5310, %v5622
        %v5725 = vadd.f32 %v5312, %v5624
        %v5726 = vadd.f32 %v5314, %v5626
        %v5727 = vadd.f32 %v5316, %v5628
        %v5728 = vadd.f32 %v5320, %v5632
        %v5729 = vadd.f32 %v5322, %v5634
        %v5730 = vadd.f32 %v5324, %v5636
        %v5731 = vadd.f32 %v5326, %v5638
        %v5732 = vadd.f32 %v5330, %v5642
        %v5733 = vadd.f32 %v5332, %v5644
        %v5734 = vadd.f32 %v5334, %v5646
        %v5735 = vadd.f32 %v5336, %v5648
        %v5736 = vadd.f32 %v5340, %v5652
        %v5737 = vadd.f32 %v5342, %v5654
        %v5738 = vadd.f32 %v5344, %v5656
        %v5739 = vadd.f32 %v5346, %v5658
        %s5740 = scalar_lea.vmem %s4, 264
        %v5741 = vld [vmem:[%s5740] sm:$0xff]
        %v5742 = vld [vmem:[%s5740 + $0x8] sm:$0xff]
        %v5743 = vld [vmem:[%s5740 + $0x10] sm:$0xff]
        %v5744 = vld [vmem:[%s5740 + $0x18] sm:$0xff]
        %v5745 = vld [vmem:[%s5740 + $0x20] sm:$0xff]
        %v5746 = vld [vmem:[%s5740 + $0x28] sm:$0xff]
        %v5747 = vld [vmem:[%s5740 + $0x30] sm:$0xff]
        %v5748 = vld [vmem:[%s5740 + $0x38] sm:$0xff]
        %v5749 = vld [vmem:[%s5740 + $0x40] sm:$0xff]
        %v5750 = vld [vmem:[%s5740 + $0x48] sm:$0xff]
        %v5751 = vld [vmem:[%s5740 + $0x50] sm:$0x33]
        %v5763 = vunpack.c.l.b16 %v5741
        %v5764 = vunpack.c.h.b16 %v5741
        %v5765 = vunpack.c.l.b16 %v5742
        %v5766 = vunpack.c.h.b16 %v5742
        %v5767 = vunpack.c.l.b16 %v5743
        %v5768 = vunpack.c.h.b16 %v5743
        %v5769 = vunpack.c.l.b16 %v5744
        %v5770 = vunpack.c.h.b16 %v5744
        %v5771 = vunpack.c.l.b16 %v5745
        %v5772 = vunpack.c.h.b16 %v5745
        %v5773 = vunpack.c.l.b16 %v5746
        %v5774 = vunpack.c.h.b16 %v5746
        %v5775 = vunpack.c.l.b16 %v5747
        %v5776 = vunpack.c.h.b16 %v5747
        %v5777 = vunpack.c.l.b16 %v5748
        %v5778 = vunpack.c.h.b16 %v5748
        %v5779 = vunpack.c.l.b16 %v5749
        %v5780 = vunpack.c.h.b16 %v5749
        %v5781 = vunpack.c.l.b16 %v5750
        %v5782 = vunpack.c.h.b16 %v5750
        %v5783 = vunpack.c.l.b16 %v5751
        %v5784 = vunpack.c.h.b16 %v5751
        %v5785 = vpack.c.b16 %v5765, %v5763
        %v5786 = vpack.c.b16 %v5766, %v5764
        %v5787 = vpack.c.b16 %v5769, %v5767
        %v5788 = vpack.c.b16 %v5770, %v5768
        %v5789 = vpack.c.b16 %v5773, %v5771
        %v5790 = vpack.c.b16 %v5774, %v5772
        %v5791 = vpack.c.b16 %v5777, %v5775
        %v5792 = vpack.c.b16 %v5778, %v5776
        %v5793 = vpack.c.b16 %v5781, %v5779
        %v5794 = vpack.c.b16 %v5782, %v5780
        %v5795 = vpack.c.b16 %v5783, %v5783
        %v5796 = vpack.c.b16 %v5784, %v5784
        %v5808 = vsel %vm4747, %v4665, 0
        %v5811 = vsel %vm4747, %v4666, 0
        %v5814 = vsel %vm4808, %v5795, 0
        %v5817 = vsel %vm4808, %v5796, 0
        %5819 = vmatprep.subr.bf16.mxu0 %v5786
        %5820 = vmatpush1.bf16.msra.mxu0 %v5785
        %5821 = vmatprep.subr.bf16.mxu0 %v5788
        %5822 = vmatpush1.bf16.msra.mxu0 %v5787
        %5823 = vmatprep.subr.bf16.mxu0 %v5790
        %5824 = vmatpush1.bf16.msra.mxu0 %v5789
        %5825 = vmatprep.subr.bf16.mxu0 %v5792
        %5826 = vmatpush1.bf16.msra.mxu0 %v5791
        %5827 = vmatprep.subr.bf16.mxu0 %v5794
        %5828 = vmatpush1.bf16.msra.mxu0 %v5793
        %5829 = vmatprep.subr.bf16.mxu0 %v5817
        %5830 = vmatpush1.bf16.msra.mxu0 %v5814
        %5831 = vmatprep.subr.bf16.mxu0 0
        %5832 = vmatpush1.bf16.msra.mxu0 0
        %5833 = vmatprep.subr.bf16.mxu0 0
        %5834 = vmatpush1.bf16.msra.mxu0 0
        %5835 = vmatprep.subr.bf16.mxu0 0
        %5836 = vmatpush1.bf16.msra.mxu0 0
        %5837 = vmatprep.subr.bf16.mxu0 0
        %5838 = vmatpush1.bf16.msra.mxu0 0
        %5839 = vmatprep.subr.bf16.mxu0 0
        %5840 = vmatpush1.bf16.msra.mxu0 0
        %5841 = vmatprep.subr.bf16.mxu0 0
        %5842 = vmatpush1.bf16.msra.mxu0 0
        %5843 = vmatprep.subr.bf16.mxu0 0
        %5844 = vmatpush1.bf16.msra.mxu0 0
        %5845 = vmatprep.subr.bf16.mxu0 0
        %5846 = vmatpush1.bf16.msra.mxu0 0
        %5847 = vmatprep.subr.bf16.mxu0 0
        %5848 = vmatpush1.bf16.msra.mxu0 0
        %5849 = vmatprep.subr.bf16.mxu0 0
        %5850 = vmatpush1.bf16.msra.mxu0 0
        %5851 = vmatprep.mubr.bf16.mxu0 0
        %5852 = vmatmul.mubr.bf16.gmra.mrb[0].mxu0 %v4761
        %v5853 = vpop.f32.mrb[0].mxu0
        %v5854 = vadd.f32 0.0, %v5853
        %v5855 = vpop.f32.mrb[0].mxu0
        %v5856 = vadd.f32 0.0, %v5855
        %v5857 = vpop.f32.mrb[0].mxu0
        %v5858 = vadd.f32 0.0, %v5857
        %v5859 = vpop.f32.mrb[0].mxu0
        %v5860 = vadd.f32 0.0, %v5859
        %5861 = vmatprep.mubr.bf16.mxu0 0
        %5862 = vmatmul.mubr.bf16.gmra.mrb[0].mxu0 %v4764
        %v5863 = vpop.f32.mrb[0].mxu0
        %v5864 = vadd.f32 0.0, %v5863
        %v5865 = vpop.f32.mrb[0].mxu0
        %v5866 = vadd.f32 0.0, %v5865
        %v5867 = vpop.f32.mrb[0].mxu0
        %v5868 = vadd.f32 0.0, %v5867
        %v5869 = vpop.f32.mrb[0].mxu0
        %v5870 = vadd.f32 0.0, %v5869
        %5871 = vmatprep.mubr.bf16.mxu0 0
        %5872 = vmatmul.mubr.bf16.gmra.mrb[0].mxu0 %v4767
        %v5873 = vpop.f32.mrb[0].mxu0
        %v5874 = vadd.f32 0.0, %v5873
        %v5875 = vpop.f32.mrb[0].mxu0
        %v5876 = vadd.f32 0.0, %v5875
        %v5877 = vpop.f32.mrb[0].mxu0
        %v5878 = vadd.f32 0.0, %v5877
        %v5879 = vpop.f32.mrb[0].mxu0
        %v5880 = vadd.f32 0.0, %v5879
        %5881 = vmatprep.mubr.bf16.mxu0 0
        %5882 = vmatmul.mubr.bf16.gmra.mrb[0].mxu0 %v4770
        %v5883 = vpop.f32.mrb[0].mxu0
        %v5884 = vadd.f32 0.0, %v5883
        %v5885 = vpop.f32.mrb[0].mxu0
        %v5886 = vadd.f32 0.0, %v5885
        %v5887 = vpop.f32.mrb[0].mxu0
        %v5888 = vadd.f32 0.0, %v5887
        %v5889 = vpop.f32.mrb[0].mxu0
        %v5890 = vadd.f32 0.0, %v5889
        %5891 = vmatprep.mubr.bf16.mxu0 0
        %5892 = vmatmul.mubr.bf16.gmra.mrb[0].mxu0 %v4773
        %v5893 = vpop.f32.mrb[0].mxu0
        %v5894 = vadd.f32 0.0, %v5893
        %v5895 = vpop.f32.mrb[0].mxu0
        %v5896 = vadd.f32 0.0, %v5895
        %v5897 = vpop.f32.mrb[0].mxu0
        %v5898 = vadd.f32 0.0, %v5897
        %v5899 = vpop.f32.mrb[0].mxu0
        %v5900 = vadd.f32 0.0, %v5899
        %5901 = vmatprep.mubr.bf16.mxu0 0
        %5902 = vmatmul.mubr.bf16.gmra.mrb[0].mxu0 %v4776
        %v5903 = vpop.f32.mrb[0].mxu0
        %v5904 = vadd.f32 0.0, %v5903
        %v5905 = vpop.f32.mrb[0].mxu0
        %v5906 = vadd.f32 0.0, %v5905
        %v5907 = vpop.f32.mrb[0].mxu0
        %v5908 = vadd.f32 0.0, %v5907
        %v5909 = vpop.f32.mrb[0].mxu0
        %v5910 = vadd.f32 0.0, %v5909
        %5911 = vmatprep.mubr.bf16.mxu0 0
        %5912 = vmatmul.mubr.bf16.gmra.mrb[0].mxu0 %v4779
        %v5913 = vpop.f32.mrb[0].mxu0
        %v5914 = vadd.f32 0.0, %v5913
        %v5915 = vpop.f32.mrb[0].mxu0
        %v5916 = vadd.f32 0.0, %v5915
        %v5917 = vpop.f32.mrb[0].mxu0
        %v5918 = vadd.f32 0.0, %v5917
        %v5919 = vpop.f32.mrb[0].mxu0
        %v5920 = vadd.f32 0.0, %v5919
        %5921 = vmatprep.mubr.bf16.mxu0 0
        %5922 = vmatmul.mubr.bf16.gmra.mrb[0].mxu0 %v4782
        %v5923 = vpop.f32.mrb[0].mxu0
        %v5924 = vadd.f32 0.0, %v5923
        %v5925 = vpop.f32.mrb[0].mxu0
        %v5926 = vadd.f32 0.0, %v5925
        %v5927 = vpop.f32.mrb[0].mxu0
        %v5928 = vadd.f32 0.0, %v5927
        %v5929 = vpop.f32.mrb[0].mxu0
        %v5930 = vadd.f32 0.0, %v5929
        %5931 = vmatprep.mubr.bf16.mxu0 0
        %5932 = vmatmul.mubr.bf16.gmra.mrb[0].mxu0 %v4785
        %v5933 = vpop.f32.mrb[0].mxu0
        %v5934 = vadd.f32 0.0, %v5933
        %v5935 = vpop.f32.mrb[0].mxu0
        %v5936 = vadd.f32 0.0, %v5935
        %v5937 = vpop.f32.mrb[0].mxu0
        %v5938 = vadd.f32 0.0, %v5937
        %v5939 = vpop.f32.mrb[0].mxu0
        %v5940 = vadd.f32 0.0, %v5939
        %5941 = vmatprep.mubr.bf16.mxu0 0
        %5942 = vmatmul.mubr.bf16.gmra.mrb[0].mxu0 %v4788
        %v5943 = vpop.f32.mrb[0].mxu0
        %v5944 = vadd.f32 0.0, %v5943
        %v5945 = vpop.f32.mrb[0].mxu0
        %v5946 = vadd.f32 0.0, %v5945
        %v5947 = vpop.f32.mrb[0].mxu0
        %v5948 = vadd.f32 0.0, %v5947
        %v5949 = vpop.f32.mrb[0].mxu0
        %v5950 = vadd.f32 0.0, %v5949
        %5951 = vmatprep.mubr.bf16.mxu0 0
        %5952 = vmatmul.mubr.bf16.gmra.mrb[0].mxu0 %v4791
        %v5953 = vpop.f32.mrb[0].mxu0
        %v5954 = vadd.f32 0.0, %v5953
        %v5955 = vpop.f32.mrb[0].mxu0
        %v5956 = vadd.f32 0.0, %v5955
        %v5957 = vpop.f32.mrb[0].mxu0
        %v5958 = vadd.f32 0.0, %v5957
        %v5959 = vpop.f32.mrb[0].mxu0
        %v5960 = vadd.f32 0.0, %v5959
        %5961 = vmatprep.mubr.bf16.mxu0 0
        %5962 = vmatmul.mubr.bf16.gmra.mrb[0].mxu0 %v4794
        %v5963 = vpop.f32.mrb[0].mxu0
        %v5964 = vadd.f32 0.0, %v5963
        %v5965 = vpop.f32.mrb[0].mxu0
        %v5966 = vadd.f32 0.0, %v5965
        %v5967 = vpop.f32.mrb[0].mxu0
        %v5968 = vadd.f32 0.0, %v5967
        %v5969 = vpop.f32.mrb[0].mxu0
        %v5970 = vadd.f32 0.0, %v5969
        %5971 = vmatprep.mubr.bf16.mxu0 0
        %5972 = vmatmul.mubr.bf16.gmra.mrb[0].mxu0 %v4797
        %v5973 = vpop.f32.mrb[0].mxu0
        %v5974 = vadd.f32 0.0, %v5973
        %v5975 = vpop.f32.mrb[0].mxu0
        %v5976 = vadd.f32 0.0, %v5975
        %v5977 = vpop.f32.mrb[0].mxu0
        %v5978 = vadd.f32 0.0, %v5977
        %v5979 = vpop.f32.mrb[0].mxu0
        %v5980 = vadd.f32 0.0, %v5979
        %5981 = vmatprep.mubr.bf16.mxu0 0
        %5982 = vmatmul.mubr.bf16.gmra.mrb[0].mxu0 %v4800
        %v5983 = vpop.f32.mrb[0].mxu0
        %v5984 = vadd.f32 0.0, %v5983
        %v5985 = vpop.f32.mrb[0].mxu0
        %v5986 = vadd.f32 0.0, %v5985
        %v5987 = vpop.f32.mrb[0].mxu0
        %v5988 = vadd.f32 0.0, %v5987
        %v5989 = vpop.f32.mrb[0].mxu0
        %v5990 = vadd.f32 0.0, %v5989
        %5991 = vmatprep.mubr.bf16.mxu0 0
        %5992 = vmatmul.mubr.bf16.gmra.mrb[0].mxu0 %v4803
        %v5993 = vpop.f32.mrb[0].mxu0
        %v5994 = vadd.f32 0.0, %v5993
        %v5995 = vpop.f32.mrb[0].mxu0
        %v5996 = vadd.f32 0.0, %v5995
        %v5997 = vpop.f32.mrb[0].mxu0
        %v5998 = vadd.f32 0.0, %v5997
        %v5999 = vpop.f32.mrb[0].mxu0
        %v6000 = vadd.f32 0.0, %v5999
        %6001 = vmatprep.mubr.bf16.mxu0 0
        %6002 = vmatmul.mubr.bf16.gmra.mrb[0].mxu0 %v4806
        %v6003 = vpop.f32.mrb[0].mxu0
        %v6004 = vadd.f32 0.0, %v6003
        %v6005 = vpop.f32.mrb[0].mxu0
        %v6006 = vadd.f32 0.0, %v6005
        %v6007 = vpop.f32.mrb[0].mxu0
        %v6008 = vadd.f32 0.0, %v6007
        %v6009 = vpop.f32.mrb[0].mxu0
        %v6010 = vadd.f32 0.0, %v6009
        %6011 = vmatprep.mubr.bf16.mxu0 0
        %6012 = vmatmul.mubr.bf16.gmra.mrb[0].mxu0 %v5416
        %v6013 = vpop.f32.mrb[0].mxu0
        %v6014 = vadd.f32 0.0, %v6013
        %v6015 = vpop.f32.mrb[0].mxu0
        %v6016 = vadd.f32 0.0, %v6015
        %v6017 = vpop.f32.mrb[0].mxu0
        %v6018 = vadd.f32 0.0, %v6017
        %v6019 = vpop.f32.mrb[0].mxu0
        %v6020 = vadd.f32 0.0, %v6019
        %6021 = vmatprep.mubr.bf16.mxu0 0
        %6022 = vmatmul.mubr.bf16.gmra.mrb[0].mxu0 %v5419
        %v6023 = vpop.f32.mrb[0].mxu0
        %v6024 = vadd.f32 0.0, %v6023
        %v6025 = vpop.f32.mrb[0].mxu0
        %v6026 = vadd.f32 0.0, %v6025
        %v6027 = vpop.f32.mrb[0].mxu0
        %v6028 = vadd.f32 0.0, %v6027
        %v6029 = vpop.f32.mrb[0].mxu0
        %v6030 = vadd.f32 0.0, %v6029
        %6031 = vmatprep.mubr.bf16.mxu0 0
        %6032 = vmatmul.mubr.bf16.gmra.mrb[0].mxu0 %v5808
        %v6033 = vpop.f32.mrb[0].mxu0
        %v6034 = vadd.f32 0.0, %v6033
        %v6035 = vpop.f32.mrb[0].mxu0
        %v6036 = vadd.f32 0.0, %v6035
        %v6037 = vpop.f32.mrb[0].mxu0
        %v6038 = vadd.f32 0.0, %v6037
        %v6039 = vpop.f32.mrb[0].mxu0
        %v6040 = vadd.f32 0.0, %v6039
        %6041 = vmatprep.mubr.bf16.mxu0 0
        %6042 = vmatmul.mubr.bf16.gmra.mrb[0].mxu0 %v5811
        %v6043 = vpop.f32.mrb[0].mxu0
        %v6044 = vadd.f32 0.0, %v6043
        %v6045 = vpop.f32.mrb[0].mxu0
        %v6046 = vadd.f32 0.0, %v6045
        %v6047 = vpop.f32.mrb[0].mxu0
        %v6048 = vadd.f32 0.0, %v6047
        %v6049 = vpop.f32.mrb[0].mxu0
        %v6050 = vadd.f32 0.0, %v6049
        %6051 = vdwg.mxu0
        %v6052 = vadd.f32 %v5660, %v5854
        %v6053 = vadd.f32 %v5661, %v5856
        %v6054 = vadd.f32 %v5662, %v5858
        %v6055 = vadd.f32 %v5663, %v5860
        %v6056 = vadd.f32 %v5664, %v5864
        %v6057 = vadd.f32 %v5665, %v5866
        %v6058 = vadd.f32 %v5666, %v5868
        %v6059 = vadd.f32 %v5667, %v5870
        %v6060 = vadd.f32 %v5668, %v5874
        %v6061 = vadd.f32 %v5669, %v5876
        %v6062 = vadd.f32 %v5670, %v5878
        %v6063 = vadd.f32 %v5671, %v5880
        %v6064 = vadd.f32 %v5672, %v5884
        %v6065 = vadd.f32 %v5673, %v5886
        %v6066 = vadd.f32 %v5674, %v5888
        %v6067 = vadd.f32 %v5675, %v5890
        %v6068 = vadd.f32 %v5676, %v5894
        %v6069 = vadd.f32 %v5677, %v5896
        %v6070 = vadd.f32 %v5678, %v5898
        %v6071 = vadd.f32 %v5679, %v5900
        %v6072 = vadd.f32 %v5680, %v5904
        %v6073 = vadd.f32 %v5681, %v5906
        %v6074 = vadd.f32 %v5682, %v5908
        %v6075 = vadd.f32 %v5683, %v5910
        %v6076 = vadd.f32 %v5684, %v5914
        %v6077 = vadd.f32 %v5685, %v5916
        %v6078 = vadd.f32 %v5686, %v5918
        %v6079 = vadd.f32 %v5687, %v5920
        %v6080 = vadd.f32 %v5688, %v5924
        %v6081 = vadd.f32 %v5689, %v5926
        %v6082 = vadd.f32 %v5690, %v5928
        %v6083 = vadd.f32 %v5691, %v5930
        %v6084 = vadd.f32 %v5692, %v5934
        %v6085 = vadd.f32 %v5693, %v5936
        %v6086 = vadd.f32 %v5694, %v5938
        %v6087 = vadd.f32 %v5695, %v5940
        %v6088 = vadd.f32 %v5696, %v5944
        %v6089 = vadd.f32 %v5697, %v5946
        %v6090 = vadd.f32 %v5698, %v5948
        %v6091 = vadd.f32 %v5699, %v5950
        %v6092 = vadd.f32 %v5700, %v5954
        %v6093 = vadd.f32 %v5701, %v5956
        %v6094 = vadd.f32 %v5702, %v5958
        %v6095 = vadd.f32 %v5703, %v5960
        %v6096 = vadd.f32 %v5704, %v5964
        %v6097 = vadd.f32 %v5705, %v5966
        %v6098 = vadd.f32 %v5706, %v5968
        %v6099 = vadd.f32 %v5707, %v5970
        %v6100 = vadd.f32 %v5708, %v5974
        %v6101 = vadd.f32 %v5709, %v5976
        %v6102 = vadd.f32 %v5710, %v5978
        %v6103 = vadd.f32 %v5711, %v5980
        %v6104 = vadd.f32 %v5712, %v5984
        %v6105 = vadd.f32 %v5713, %v5986
        %v6106 = vadd.f32 %v5714, %v5988
        %v6107 = vadd.f32 %v5715, %v5990
        %v6108 = vadd.f32 %v5716, %v5994
        %v6109 = vadd.f32 %v5717, %v5996
        %v6110 = vadd.f32 %v5718, %v5998
        %v6111 = vadd.f32 %v5719, %v6000
        %v6112 = vadd.f32 %v5720, %v6004
        %v6113 = vadd.f32 %v5721, %v6006
        %v6114 = vadd.f32 %v5722, %v6008
        %v6115 = vadd.f32 %v5723, %v6010
        %v6116 = vadd.f32 %v5724, %v6014
        %v6117 = vadd.f32 %v5725, %v6016
        %v6118 = vadd.f32 %v5726, %v6018
        %v6119 = vadd.f32 %v5727, %v6020
        %v6120 = vadd.f32 %v5728, %v6024
        %v6121 = vadd.f32 %v5729, %v6026
        %v6122 = vadd.f32 %v5730, %v6028
        %v6123 = vadd.f32 %v5731, %v6030
        %v6124 = vadd.f32 %v5732, %v6034
        %v6125 = vadd.f32 %v5733, %v6036
        %v6126 = vadd.f32 %v5734, %v6038
        %v6127 = vadd.f32 %v5735, %v6040
        %v6128 = vadd.f32 %v5736, %v6044
        %v6129 = vadd.f32 %v5737, %v6046
        %v6130 = vadd.f32 %v5738, %v6048
        %v6131 = vadd.f32 %v5739, %v6050
        %s6132 = scalar_lea.vmem %s4, 352
        %v6133 = vld [vmem:[%s6132] sm:$0xff]
        %v6134 = vld [vmem:[%s6132 + $0x8] sm:$0xff]
        %v6135 = vld [vmem:[%s6132 + $0x10] sm:$0xff]
        %v6136 = vld [vmem:[%s6132 + $0x18] sm:$0xff]
        %v6137 = vld [vmem:[%s6132 + $0x20] sm:$0xff]
        %v6138 = vld [vmem:[%s6132 + $0x28] sm:$0xff]
        %v6139 = vld [vmem:[%s6132 + $0x30] sm:$0xff]
        %v6140 = vld [vmem:[%s6132 + $0x38] sm:$0xff]
        %v6141 = vld [vmem:[%s6132 + $0x40] sm:$0xff]
        %v6142 = vld [vmem:[%s6132 + $0x48] sm:$0xff]
        %v6143 = vld [vmem:[%s6132 + $0x50] sm:$0x33]
        %v6155 = vunpack.c.l.b16 %v6133
        %v6156 = vunpack.c.h.b16 %v6133
        %v6157 = vunpack.c.l.b16 %v6134
        %v6158 = vunpack.c.h.b16 %v6134
        %v6159 = vunpack.c.l.b16 %v6135
        %v6160 = vunpack.c.h.b16 %v6135
        %v6161 = vunpack.c.l.b16 %v6136
        %v6162 = vunpack.c.h.b16 %v6136
        %v6163 = vunpack.c.l.b16 %v6137
        %v6164 = vunpack.c.h.b16 %v6137
        %v6165 = vunpack.c.l.b16 %v6138
        %v6166 = vunpack.c.h.b16 %v6138
        %v6167 = vunpack.c.l.b16 %v6139
        %v6168 = vunpack.c.h.b16 %v6139
        %v6169 = vunpack.c.l.b16 %v6140
        %v6170 = vunpack.c.h.b16 %v6140
        %v6171 = vunpack.c.l.b16 %v6141
        %v6172 = vunpack.c.h.b16 %v6141
        %v6173 = vunpack.c.l.b16 %v6142
        %v6174 = vunpack.c.h.b16 %v6142
        %v6175 = vunpack.c.l.b16 %v6143
        %v6176 = vunpack.c.h.b16 %v6143
        %v6177 = vpack.c.b16 %v6157, %v6155
        %v6178 = vpack.c.b16 %v6158, %v6156
        %v6179 = vpack.c.b16 %v6161, %v6159
        %v6180 = vpack.c.b16 %v6162, %v6160
        %v6181 = vpack.c.b16 %v6165, %v6163
        %v6182 = vpack.c.b16 %v6166, %v6164
        %v6183 = vpack.c.b16 %v6169, %v6167
        %v6184 = vpack.c.b16 %v6170, %v6168
        %v6185 = vpack.c.b16 %v6173, %v6171
        %v6186 = vpack.c.b16 %v6174, %v6172
        %v6187 = vpack.c.b16 %v6175, %v6175
        %v6188 = vpack.c.b16 %v6176, %v6176
        %v6200 = vsel %vm4747, %v4667, 0
        %v6203 = vsel %vm4747, %v4668, 0
        %v6206 = vsel %vm4808, %v6187, 0
        %v6209 = vsel %vm4808, %v6188, 0
        %6211 = vmatprep.subr.bf16.mxu0 %v6178
        %6212 = vmatpush1.bf16.msra.mxu0 %v6177
        %6213 = vmatprep.subr.bf16.mxu0 %v6180
        %6214 = vmatpush1.bf16.msra.mxu0 %v6179
        %6215 = vmatprep.subr.bf16.mxu0 %v6182
        %6216 = vmatpush1.bf16.msra.mxu0 %v6181
        %6217 = vmatprep.subr.bf16.mxu0 %v6184
        %6218 = vmatpush1.bf16.msra.mxu0 %v6183
        %6219 = vmatprep.subr.bf16.mxu0 %v6186
        %6220 = vmatpush1.bf16.msra.mxu0 %v6185
        %6221 = vmatprep.subr.bf16.mxu0 %v6209
        %6222 = vmatpush1.bf16.msra.mxu0 %v6206
        %6223 = vmatprep.subr.bf16.mxu0 0
        %6224 = vmatpush1.bf16.msra.mxu0 0
        %6225 = vmatprep.subr.bf16.mxu0 0
        %6226 = vmatpush1.bf16.msra.mxu0 0
        %6227 = vmatprep.subr.bf16.mxu0 0
        %6228 = vmatpush1.bf16.msra.mxu0 0
        %6229 = vmatprep.subr.bf16.mxu0 0
        %6230 = vmatpush1.bf16.msra.mxu0 0
        %6231 = vmatprep.subr.bf16.mxu0 0
        %6232 = vmatpush1.bf16.msra.mxu0 0
        %6233 = vmatprep.subr.bf16.mxu0 0
        %6234 = vmatpush1.bf16.msra.mxu0 0
        %6235 = vmatprep.subr.bf16.mxu0 0
        %6236 = vmatpush1.bf16.msra.mxu0 0
        %6237 = vmatprep.subr.bf16.mxu0 0
        %6238 = vmatpush1.bf16.msra.mxu0 0
        %6239 = vmatprep.subr.bf16.mxu0 0
        %6240 = vmatpush1.bf16.msra.mxu0 0
        %6241 = vmatprep.subr.bf16.mxu0 0
        %6242 = vmatpush1.bf16.msra.mxu0 0
        %6243 = vmatprep.mubr.bf16.mxu0 0
        %6244 = vmatmul.mubr.bf16.gmra.mrb[0].mxu0 %v4767
        %v6245 = vpop.f32.mrb[0].mxu0
        %v6246 = vadd.f32 0.0, %v6245
        %v6247 = vpop.f32.mrb[0].mxu0
        %v6248 = vadd.f32 0.0, %v6247
        %v6249 = vpop.f32.mrb[0].mxu0
        %v6250 = vadd.f32 0.0, %v6249
        %v6251 = vpop.f32.mrb[0].mxu0
        %v6252 = vadd.f32 0.0, %v6251
        %6253 = vmatprep.mubr.bf16.mxu0 0
        %6254 = vmatmul.mubr.bf16.gmra.mrb[0].mxu0 %v4770
        %v6255 = vpop.f32.mrb[0].mxu0
        %v6256 = vadd.f32 0.0, %v6255
        %v6257 = vpop.f32.mrb[0].mxu0
        %v6258 = vadd.f32 0.0, %v6257
        %v6259 = vpop.f32.mrb[0].mxu0
        %v6260 = vadd.f32 0.0, %v6259
        %v6261 = vpop.f32.mrb[0].mxu0
        %v6262 = vadd.f32 0.0, %v6261
        %6263 = vmatprep.mubr.bf16.mxu0 0
        %6264 = vmatmul.mubr.bf16.gmra.mrb[0].mxu0 %v4773
        %v6265 = vpop.f32.mrb[0].mxu0
        %v6266 = vadd.f32 0.0, %v6265
        %v6267 = vpop.f32.mrb[0].mxu0
        %v6268 = vadd.f32 0.0, %v6267
        %v6269 = vpop.f32.mrb[0].mxu0
        %v6270 = vadd.f32 0.0, %v6269
        %v6271 = vpop.f32.mrb[0].mxu0
        %v6272 = vadd.f32 0.0, %v6271
        %6273 = vmatprep.mubr.bf16.mxu0 0
        %6274 = vmatmul.mubr.bf16.gmra.mrb[0].mxu0 %v4776
        %v6275 = vpop.f32.mrb[0].mxu0
        %v6276 = vadd.f32 0.0, %v6275
        %v6277 = vpop.f32.mrb[0].mxu0
        %v6278 = vadd.f32 0.0, %v6277
        %v6279 = vpop.f32.mrb[0].mxu0
        %v6280 = vadd.f32 0.0, %v6279
        %v6281 = vpop.f32.mrb[0].mxu0
        %v6282 = vadd.f32 0.0, %v6281
        %6283 = vmatprep.mubr.bf16.mxu0 0
        %6284 = vmatmul.mubr.bf16.gmra.mrb[0].mxu0 %v4779
        %v6285 = vpop.f32.mrb[0].mxu0
        %v6286 = vadd.f32 0.0, %v6285
        %v6287 = vpop.f32.mrb[0].mxu0
        %v6288 = vadd.f32 0.0, %v6287
        %v6289 = vpop.f32.mrb[0].mxu0
        %v6290 = vadd.f32 0.0, %v6289
        %v6291 = vpop.f32.mrb[0].mxu0
        %v6292 = vadd.f32 0.0, %v6291
        %6293 = vmatprep.mubr.bf16.mxu0 0
        %6294 = vmatmul.mubr.bf16.gmra.mrb[0].mxu0 %v4782
        %v6295 = vpop.f32.mrb[0].mxu0
        %v6296 = vadd.f32 0.0, %v6295
        %v6297 = vpop.f32.mrb[0].mxu0
        %v6298 = vadd.f32 0.0, %v6297
        %v6299 = vpop.f32.mrb[0].mxu0
        %v6300 = vadd.f32 0.0, %v6299
        %v6301 = vpop.f32.mrb[0].mxu0
        %v6302 = vadd.f32 0.0, %v6301
        %6303 = vmatprep.mubr.bf16.mxu0 0
        %6304 = vmatmul.mubr.bf16.gmra.mrb[0].mxu0 %v4785
        %v6305 = vpop.f32.mrb[0].mxu0
        %v6306 = vadd.f32 0.0, %v6305
        %v6307 = vpop.f32.mrb[0].mxu0
        %v6308 = vadd.f32 0.0, %v6307
        %v6309 = vpop.f32.mrb[0].mxu0
        %v6310 = vadd.f32 0.0, %v6309
        %v6311 = vpop.f32.mrb[0].mxu0
        %v6312 = vadd.f32 0.0, %v6311
        %6313 = vmatprep.mubr.bf16.mxu0 0
        %6314 = vmatmul.mubr.bf16.gmra.mrb[0].mxu0 %v4788
        %v6315 = vpop.f32.mrb[0].mxu0
        %v6316 = vadd.f32 0.0, %v6315
        %v6317 = vpop.f32.mrb[0].mxu0
        %v6318 = vadd.f32 0.0, %v6317
        %v6319 = vpop.f32.mrb[0].mxu0
        %v6320 = vadd.f32 0.0, %v6319
        %v6321 = vpop.f32.mrb[0].mxu0
        %v6322 = vadd.f32 0.0, %v6321
        %6323 = vmatprep.mubr.bf16.mxu0 0
        %6324 = vmatmul.mubr.bf16.gmra.mrb[0].mxu0 %v4791
        %v6325 = vpop.f32.mrb[0].mxu0
        %v6326 = vadd.f32 0.0, %v6325
        %v6327 = vpop.f32.mrb[0].mxu0
        %v6328 = vadd.f32 0.0, %v6327
        %v6329 = vpop.f32.mrb[0].mxu0
        %v6330 = vadd.f32 0.0, %v6329
        %v6331 = vpop.f32.mrb[0].mxu0
        %v6332 = vadd.f32 0.0, %v6331
        %6333 = vmatprep.mubr.bf16.mxu0 0
        %6334 = vmatmul.mubr.bf16.gmra.mrb[0].mxu0 %v4794
        %v6335 = vpop.f32.mrb[0].mxu0
        %v6336 = vadd.f32 0.0, %v6335
        %v6337 = vpop.f32.mrb[0].mxu0
        %v6338 = vadd.f32 0.0, %v6337
        %v6339 = vpop.f32.mrb[0].mxu0
        %v6340 = vadd.f32 0.0, %v6339
        %v6341 = vpop.f32.mrb[0].mxu0
        %v6342 = vadd.f32 0.0, %v6341
        %6343 = vmatprep.mubr.bf16.mxu0 0
        %6344 = vmatmul.mubr.bf16.gmra.mrb[0].mxu0 %v4797
        %v6345 = vpop.f32.mrb[0].mxu0
        %v6346 = vadd.f32 0.0, %v6345
        %v6347 = vpop.f32.mrb[0].mxu0
        %v6348 = vadd.f32 0.0, %v6347
        %v6349 = vpop.f32.mrb[0].mxu0
        %v6350 = vadd.f32 0.0, %v6349
        %v6351 = vpop.f32.mrb[0].mxu0
        %v6352 = vadd.f32 0.0, %v6351
        %6353 = vmatprep.mubr.bf16.mxu0 0
        %6354 = vmatmul.mubr.bf16.gmra.mrb[0].mxu0 %v4800
        %v6355 = vpop.f32.mrb[0].mxu0
        %v6356 = vadd.f32 0.0, %v6355
        %v6357 = vpop.f32.mrb[0].mxu0
        %v6358 = vadd.f32 0.0, %v6357
        %v6359 = vpop.f32.mrb[0].mxu0
        %v6360 = vadd.f32 0.0, %v6359
        %v6361 = vpop.f32.mrb[0].mxu0
        %v6362 = vadd.f32 0.0, %v6361
        %6363 = vmatprep.mubr.bf16.mxu0 0
        %6364 = vmatmul.mubr.bf16.gmra.mrb[0].mxu0 %v4803
        %v6365 = vpop.f32.mrb[0].mxu0
        %v6366 = vadd.f32 0.0, %v6365
        %v6367 = vpop.f32.mrb[0].mxu0
        %v6368 = vadd.f32 0.0, %v6367
        %v6369 = vpop.f32.mrb[0].mxu0
        %v6370 = vadd.f32 0.0, %v6369
        %v6371 = vpop.f32.mrb[0].mxu0
        %v6372 = vadd.f32 0.0, %v6371
        %6373 = vmatprep.mubr.bf16.mxu0 0
        %6374 = vmatmul.mubr.bf16.gmra.mrb[0].mxu0 %v4806
        %v6375 = vpop.f32.mrb[0].mxu0
        %v6376 = vadd.f32 0.0, %v6375
        %v6377 = vpop.f32.mrb[0].mxu0
        %v6378 = vadd.f32 0.0, %v6377
        %v6379 = vpop.f32.mrb[0].mxu0
        %v6380 = vadd.f32 0.0, %v6379
        %v6381 = vpop.f32.mrb[0].mxu0
        %v6382 = vadd.f32 0.0, %v6381
        %6383 = vmatprep.mubr.bf16.mxu0 0
        %6384 = vmatmul.mubr.bf16.gmra.mrb[0].mxu0 %v5416
        %v6385 = vpop.f32.mrb[0].mxu0
        %v6386 = vadd.f32 0.0, %v6385
        %v6387 = vpop.f32.mrb[0].mxu0
        %v6388 = vadd.f32 0.0, %v6387
        %v6389 = vpop.f32.mrb[0].mxu0
        %v6390 = vadd.f32 0.0, %v6389
        %v6391 = vpop.f32.mrb[0].mxu0
        %v6392 = vadd.f32 0.0, %v6391
        %6393 = vmatprep.mubr.bf16.mxu0 0
        %6394 = vmatmul.mubr.bf16.gmra.mrb[0].mxu0 %v5419
        %v6395 = vpop.f32.mrb[0].mxu0
        %v6396 = vadd.f32 0.0, %v6395
        %v6397 = vpop.f32.mrb[0].mxu0
        %v6398 = vadd.f32 0.0, %v6397
        %v6399 = vpop.f32.mrb[0].mxu0
        %v6400 = vadd.f32 0.0, %v6399
        %v6401 = vpop.f32.mrb[0].mxu0
        %v6402 = vadd.f32 0.0, %v6401
        %6403 = vmatprep.mubr.bf16.mxu0 0
        %6404 = vmatmul.mubr.bf16.gmra.mrb[0].mxu0 %v5808
        %v6405 = vpop.f32.mrb[0].mxu0
        %v6406 = vadd.f32 0.0, %v6405
        %v6407 = vpop.f32.mrb[0].mxu0
        %v6408 = vadd.f32 0.0, %v6407
        %v6409 = vpop.f32.mrb[0].mxu0
        %v6410 = vadd.f32 0.0, %v6409
        %v6411 = vpop.f32.mrb[0].mxu0
        %v6412 = vadd.f32 0.0, %v6411
        %6413 = vmatprep.mubr.bf16.mxu0 0
        %6414 = vmatmul.mubr.bf16.gmra.mrb[0].mxu0 %v5811
        %v6415 = vpop.f32.mrb[0].mxu0
        %v6416 = vadd.f32 0.0, %v6415
        %v6417 = vpop.f32.mrb[0].mxu0
        %v6418 = vadd.f32 0.0, %v6417
        %v6419 = vpop.f32.mrb[0].mxu0
        %v6420 = vadd.f32 0.0, %v6419
        %v6421 = vpop.f32.mrb[0].mxu0
        %v6422 = vadd.f32 0.0, %v6421
        %6423 = vmatprep.mubr.bf16.mxu0 0
        %6424 = vmatmul.mubr.bf16.gmra.mrb[0].mxu0 %v6200
        %v6425 = vpop.f32.mrb[0].mxu0
        %v6426 = vadd.f32 0.0, %v6425
        %v6427 = vpop.f32.mrb[0].mxu0
        %v6428 = vadd.f32 0.0, %v6427
        %v6429 = vpop.f32.mrb[0].mxu0
        %v6430 = vadd.f32 0.0, %v6429
        %v6431 = vpop.f32.mrb[0].mxu0
        %v6432 = vadd.f32 0.0, %v6431
        %6433 = vmatprep.mubr.bf16.mxu0 0
        %6434 = vmatmul.mubr.bf16.gmra.mrb[0].mxu0 %v6203
        %v6435 = vpop.f32.mrb[0].mxu0
        %v6436 = vadd.f32 0.0, %v6435
        %v6437 = vpop.f32.mrb[0].mxu0
        %v6438 = vadd.f32 0.0, %v6437
        %v6439 = vpop.f32.mrb[0].mxu0
        %v6440 = vadd.f32 0.0, %v6439
        %v6441 = vpop.f32.mrb[0].mxu0
        %v6442 = vadd.f32 0.0, %v6441
        %6443 = vdwg.mxu0
        %v6444 = vadd.f32 %v6052, %v6246
        %v6445 = vadd.f32 %v6053, %v6248
        %v6446 = vadd.f32 %v6054, %v6250
        %v6447 = vadd.f32 %v6055, %v6252
        %v6448 = vadd.f32 %v6056, %v6256
        %v6449 = vadd.f32 %v6057, %v6258
        %v6450 = vadd.f32 %v6058, %v6260
        %v6451 = vadd.f32 %v6059, %v6262
        %v6452 = vadd.f32 %v6060, %v6266
        %v6453 = vadd.f32 %v6061, %v6268
        %v6454 = vadd.f32 %v6062, %v6270
        %v6455 = vadd.f32 %v6063, %v6272
        %v6456 = vadd.f32 %v6064, %v6276
        %v6457 = vadd.f32 %v6065, %v6278
        %v6458 = vadd.f32 %v6066, %v6280
        %v6459 = vadd.f32 %v6067, %v6282
        %v6460 = vadd.f32 %v6068, %v6286
        %v6461 = vadd.f32 %v6069, %v6288
        %v6462 = vadd.f32 %v6070, %v6290
        %v6463 = vadd.f32 %v6071, %v6292
        %v6464 = vadd.f32 %v6072, %v6296
        %v6465 = vadd.f32 %v6073, %v6298
        %v6466 = vadd.f32 %v6074, %v6300
        %v6467 = vadd.f32 %v6075, %v6302
        %v6468 = vadd.f32 %v6076, %v6306
        %v6469 = vadd.f32 %v6077, %v6308
        %v6470 = vadd.f32 %v6078, %v6310
        %v6471 = vadd.f32 %v6079, %v6312
        %v6472 = vadd.f32 %v6080, %v6316
        %v6473 = vadd.f32 %v6081, %v6318
        %v6474 = vadd.f32 %v6082, %v6320
        %v6475 = vadd.f32 %v6083, %v6322
        %v6476 = vadd.f32 %v6084, %v6326
        %v6477 = vadd.f32 %v6085, %v6328
        %v6478 = vadd.f32 %v6086, %v6330
        %v6479 = vadd.f32 %v6087, %v6332
        %v6480 = vadd.f32 %v6088, %v6336
        %v6481 = vadd.f32 %v6089, %v6338
        %v6482 = vadd.f32 %v6090, %v6340
        %v6483 = vadd.f32 %v6091, %v6342
        %v6484 = vadd.f32 %v6092, %v6346
        %v6485 = vadd.f32 %v6093, %v6348
        %v6486 = vadd.f32 %v6094, %v6350
        %v6487 = vadd.f32 %v6095, %v6352
        %v6488 = vadd.f32 %v6096, %v6356
        %v6489 = vadd.f32 %v6097, %v6358
        %v6490 = vadd.f32 %v6098, %v6360
        %v6491 = vadd.f32 %v6099, %v6362
        %v6492 = vadd.f32 %v6100, %v6366
        %v6493 = vadd.f32 %v6101, %v6368
        %v6494 = vadd.f32 %v6102, %v6370
        %v6495 = vadd.f32 %v6103, %v6372
        %v6496 = vadd.f32 %v6104, %v6376
        %v6497 = vadd.f32 %v6105, %v6378
        %v6498 = vadd.f32 %v6106, %v6380
        %v6499 = vadd.f32 %v6107, %v6382
        %v6500 = vadd.f32 %v6108, %v6386
        %v6501 = vadd.f32 %v6109, %v6388
        %v6502 = vadd.f32 %v6110, %v6390
        %v6503 = vadd.f32 %v6111, %v6392
        %v6504 = vadd.f32 %v6112, %v6396
        %v6505 = vadd.f32 %v6113, %v6398
        %v6506 = vadd.f32 %v6114, %v6400
        %v6507 = vadd.f32 %v6115, %v6402
        %v6508 = vadd.f32 %v6116, %v6406
        %v6509 = vadd.f32 %v6117, %v6408
        %v6510 = vadd.f32 %v6118, %v6410
        %v6511 = vadd.f32 %v6119, %v6412
        %v6512 = vadd.f32 %v6120, %v6416
        %v6513 = vadd.f32 %v6121, %v6418
        %v6514 = vadd.f32 %v6122, %v6420
        %v6515 = vadd.f32 %v6123, %v6422
        %v6516 = vadd.f32 %v6124, %v6426
        %v6517 = vadd.f32 %v6125, %v6428
        %v6518 = vadd.f32 %v6126, %v6430
        %v6519 = vadd.f32 %v6127, %v6432
        %v6520 = vadd.f32 %v6128, %v6436
        %v6521 = vadd.f32 %v6129, %v6438
        %v6522 = vadd.f32 %v6130, %v6440
        %v6523 = vadd.f32 %v6131, %v6442
        %v6524 = vld [vmem:[%s5] sm:$0x3]
        %v6526 = vlaneseq
        %v6527 = vshrl.u32 %v6526, 7
        %v6528 = vsub.s32 0, %v6527
        %v6529 = vrot.slane %v6524, %v6528
        %v6530 = vlaneseq
        %v6531 = vshrl.u32 %v6530, 7
        %v6532 = vsub.s32 1, %v6531
        %v6533 = vrot.slane %v6524, %v6532
        %v6536 = vadd.f32 %v6444, %v6529
        %v6537 = vadd.f32 %v6445, %v6533
        %v6538 = vadd.f32 %v6446, %v6529
        %v6539 = vadd.f32 %v6447, %v6533
        %v6540 = vadd.f32 %v6448, %v6529
        %v6541 = vadd.f32 %v6449, %v6533
        %v6542 = vadd.f32 %v6450, %v6529
        %v6543 = vadd.f32 %v6451, %v6533
        %v6544 = vadd.f32 %v6452, %v6529
        %v6545 = vadd.f32 %v6453, %v6533
        %v6546 = vadd.f32 %v6454, %v6529
        %v6547 = vadd.f32 %v6455, %v6533
        %v6548 = vadd.f32 %v6456, %v6529
        %v6549 = vadd.f32 %v6457, %v6533
        %v6550 = vadd.f32 %v6458, %v6529
        %v6551 = vadd.f32 %v6459, %v6533
        %v6552 = vadd.f32 %v6460, %v6529
        %v6553 = vadd.f32 %v6461, %v6533
        %v6554 = vadd.f32 %v6462, %v6529
        %v6555 = vadd.f32 %v6463, %v6533
        %v6556 = vadd.f32 %v6464, %v6529
        %v6557 = vadd.f32 %v6465, %v6533
        %v6558 = vadd.f32 %v6466, %v6529
        %v6559 = vadd.f32 %v6467, %v6533
        %v6560 = vadd.f32 %v6468, %v6529
        %v6561 = vadd.f32 %v6469, %v6533
        %v6562 = vadd.f32 %v6470, %v6529
        %v6563 = vadd.f32 %v6471, %v6533
        %v6564 = vadd.f32 %v6472, %v6529
        %v6565 = vadd.f32 %v6473, %v6533
        %v6566 = vadd.f32 %v6474, %v6529
        %v6567 = vadd.f32 %v6475, %v6533
        %v6568 = vadd.f32 %v6476, %v6529
        %v6569 = vadd.f32 %v6477, %v6533
        %v6570 = vadd.f32 %v6478, %v6529
        %v6571 = vadd.f32 %v6479, %v6533
        %v6572 = vadd.f32 %v6480, %v6529
        %v6573 = vadd.f32 %v6481, %v6533
        %v6574 = vadd.f32 %v6482, %v6529
        %v6575 = vadd.f32 %v6483, %v6533
        %v6576 = vadd.f32 %v6484, %v6529
        %v6577 = vadd.f32 %v6485, %v6533
        %v6578 = vadd.f32 %v6486, %v6529
        %v6579 = vadd.f32 %v6487, %v6533
        %v6580 = vadd.f32 %v6488, %v6529
        %v6581 = vadd.f32 %v6489, %v6533
        %v6582 = vadd.f32 %v6490, %v6529
        %v6583 = vadd.f32 %v6491, %v6533
        %v6584 = vadd.f32 %v6492, %v6529
        %v6585 = vadd.f32 %v6493, %v6533
        %v6586 = vadd.f32 %v6494, %v6529
        %v6587 = vadd.f32 %v6495, %v6533
        %v6588 = vadd.f32 %v6496, %v6529
        %v6589 = vadd.f32 %v6497, %v6533
        %v6590 = vadd.f32 %v6498, %v6529
        %v6591 = vadd.f32 %v6499, %v6533
        %v6592 = vadd.f32 %v6500, %v6529
        %v6593 = vadd.f32 %v6501, %v6533
        %v6594 = vadd.f32 %v6502, %v6529
        %v6595 = vadd.f32 %v6503, %v6533
        %v6596 = vadd.f32 %v6504, %v6529
        %v6597 = vadd.f32 %v6505, %v6533
        %v6598 = vadd.f32 %v6506, %v6529
        %v6599 = vadd.f32 %v6507, %v6533
        %v6600 = vadd.f32 %v6508, %v6529
        %v6601 = vadd.f32 %v6509, %v6533
        %v6602 = vadd.f32 %v6510, %v6529
        %v6603 = vadd.f32 %v6511, %v6533
        %v6604 = vadd.f32 %v6512, %v6529
        %v6605 = vadd.f32 %v6513, %v6533
        %v6606 = vadd.f32 %v6514, %v6529
        %v6607 = vadd.f32 %v6515, %v6533
        %v6608 = vadd.f32 %v6516, %v6529
        %v6609 = vadd.f32 %v6517, %v6533
        %v6610 = vadd.f32 %v6518, %v6529
        %v6611 = vadd.f32 %v6519, %v6533
        %v6612 = vadd.f32 %v6520, %v6529
        %v6613 = vadd.f32 %v6521, %v6533
        %v6614 = vadd.f32 %v6522, %v6529
        %v6615 = vadd.f32 %v6523, %v6533
        %v6616 = vmax.f32 %v6536, %v6544
        %v6617 = vmax.f32 %v6537, %v6545
        %v6618 = vmax.f32 %v6538, %v6546
        %v6619 = vmax.f32 %v6539, %v6547
        %v6620 = vmax.f32 %v6540, %v6548
        %v6621 = vmax.f32 %v6541, %v6549
        %v6622 = vmax.f32 %v6542, %v6550
        %v6623 = vmax.f32 %v6543, %v6551
        %v6624 = vmax.f32 %v6552, %v6560
        %v6625 = vmax.f32 %v6553, %v6561
        %v6626 = vmax.f32 %v6554, %v6562
        %v6627 = vmax.f32 %v6555, %v6563
        %v6628 = vmax.f32 %v6556, %v6564
        %v6629 = vmax.f32 %v6557, %v6565
        %v6630 = vmax.f32 %v6558, %v6566
        %v6631 = vmax.f32 %v6559, %v6567
        %v6632 = vmax.f32 %v6568, %v6576
        %v6633 = vmax.f32 %v6569, %v6577
        %v6634 = vmax.f32 %v6570, %v6578
        %v6635 = vmax.f32 %v6571, %v6579
        %v6636 = vmax.f32 %v6572, %v6580
        %v6637 = vmax.f32 %v6573, %v6581
        %v6638 = vmax.f32 %v6574, %v6582
        %v6639 = vmax.f32 %v6575, %v6583
        %v6640 = vmax.f32 %v6584, %v6592
        %v6641 = vmax.f32 %v6585, %v6593
        %v6642 = vmax.f32 %v6586, %v6594
        %v6643 = vmax.f32 %v6587, %v6595
        %v6644 = vmax.f32 %v6588, %v6596
        %v6645 = vmax.f32 %v6589, %v6597
        %v6646 = vmax.f32 %v6590, %v6598
        %v6647 = vmax.f32 %v6591, %v6599
        %v6648 = vmax.f32 %v6600, %v6608
        %v6649 = vmax.f32 %v6601, %v6609
        %v6650 = vmax.f32 %v6602, %v6610
        %v6651 = vmax.f32 %v6603, %v6611
        %v6652 = vmax.f32 %v6604, %v6612
        %v6653 = vmax.f32 %v6605, %v6613
        %v6654 = vmax.f32 %v6606, %v6614
        %v6655 = vmax.f32 %v6607, %v6615
        %v6656 = vpack.c.bf16 %v6618, %v6616
        %v6657 = vpack.c.bf16 %v6619, %v6617
        %v6658 = vpack.c.bf16 %v6622, %v6620
        %v6659 = vpack.c.bf16 %v6623, %v6621
        %v6660 = vpack.c.bf16 %v6626, %v6624
        %v6661 = vpack.c.bf16 %v6627, %v6625
        %v6662 = vpack.c.bf16 %v6630, %v6628
        %v6663 = vpack.c.bf16 %v6631, %v6629
        %v6664 = vpack.c.bf16 %v6634, %v6632
        %v6665 = vpack.c.bf16 %v6635, %v6633
        %v6666 = vpack.c.bf16 %v6638, %v6636
        %v6667 = vpack.c.bf16 %v6639, %v6637
        %v6668 = vpack.c.bf16 %v6642, %v6640
        %v6669 = vpack.c.bf16 %v6643, %v6641
        %v6670 = vpack.c.bf16 %v6646, %v6644
        %v6671 = vpack.c.bf16 %v6647, %v6645
        %v6672 = vpack.c.bf16 %v6650, %v6648
        %v6673 = vpack.c.bf16 %v6651, %v6649
        %v6674 = vpack.c.bf16 %v6654, %v6652
        %v6675 = vpack.c.bf16 %v6655, %v6653
        %v6676 = vld [vmem:[%s6] sm:$0xf]
        %v6677 = vld [vmem:[%s6 + $0x4] sm:$0xf]
        %v6678 = vld [vmem:[%s6 + $0x8] sm:$0xf]
        %v6679 = vld [vmem:[%s6 + $0xc] sm:$0xf]
        %v6680 = vld [vmem:[%s6 + $0x10] sm:$0xf]
        %v6681 = vld [vmem:[%s6 + $0x14] sm:$0xf]
        %v6682 = vld [vmem:[%s6 + $0x18] sm:$0xf]
        %v6683 = vld [vmem:[%s6 + $0x1c] sm:$0xf]
        %v6684 = vld [vmem:[%s6 + $0x20] sm:$0xf]
        %v6685 = vld [vmem:[%s6 + $0x24] sm:$0xf]
        %v6686 = vld [vmem:[%s6 + $0x28] sm:$0xf]
        %v6687 = vld [vmem:[%s6 + $0x2c] sm:$0xf]
        %v6688 = vld [vmem:[%s6 + $0x30] sm:$0xf]
        %v6689 = vld [vmem:[%s6 + $0x34] sm:$0xf]
        %v6690 = vld [vmem:[%s6 + $0x38] sm:$0xf]
        %v6691 = vld [vmem:[%s6 + $0x3c] sm:$0xf]
        %v6692 = vld [vmem:[%s6 + $0x40] sm:$0xf]
        %v6693 = vld [vmem:[%s6 + $0x44] sm:$0xf]
        %v6694 = vld [vmem:[%s6 + $0x48] sm:$0xf]
        %v6695 = vld [vmem:[%s6 + $0x4c] sm:$0xf]
        %v6716 = vunpack.c.l.b16 %v6676
        %v6717 = vunpack.c.l.b16 %v6677
        %v6718 = vunpack.c.l.b16 %v6678
        %v6719 = vunpack.c.l.b16 %v6679
        %v6720 = vunpack.c.l.b16 %v6680
        %v6721 = vunpack.c.l.b16 %v6681
        %v6722 = vunpack.c.l.b16 %v6682
        %v6723 = vunpack.c.l.b16 %v6683
        %v6724 = vunpack.c.l.b16 %v6684
        %v6725 = vunpack.c.l.b16 %v6685
        %v6726 = vunpack.c.l.b16 %v6686
        %v6727 = vunpack.c.l.b16 %v6687
        %v6728 = vunpack.c.l.b16 %v6688
        %v6729 = vunpack.c.l.b16 %v6689
        %v6730 = vunpack.c.l.b16 %v6690
        %v6731 = vunpack.c.l.b16 %v6691
        %v6732 = vunpack.c.l.b16 %v6692
        %v6733 = vunpack.c.l.b16 %v6693
        %v6734 = vunpack.c.l.b16 %v6694
        %v6735 = vunpack.c.l.b16 %v6695
        %v6736 = vpack.c.b16 %v6717, %v6716
        %v6737 = vpack.c.b16 %v6719, %v6718
        %v6738 = vpack.c.b16 %v6721, %v6720
        %v6739 = vpack.c.b16 %v6723, %v6722
        %v6740 = vpack.c.b16 %v6725, %v6724
        %v6741 = vpack.c.b16 %v6727, %v6726
        %v6742 = vpack.c.b16 %v6729, %v6728
        %v6743 = vpack.c.b16 %v6731, %v6730
        %v6744 = vpack.c.b16 %v6733, %v6732
        %v6745 = vpack.c.b16 %v6735, %v6734
        %vm6756 = vcmask 261120
        %v6758 = vsel %vm6756, %v6657, 0
        %v6761 = vsel %vm6756, %v6659, 0
        %v6764 = vsel %vm6756, %v6661, 0
        %v6767 = vsel %vm6756, %v6663, 0
        %v6770 = vsel %vm6756, %v6665, 0
        %v6773 = vsel %vm6756, %v6667, 0
        %v6776 = vsel %vm6756, %v6669, 0
        %v6779 = vsel %vm6756, %v6671, 0
        %v6782 = vsel %vm6756, %v6673, 0
        %v6785 = vsel %vm6756, %v6675, 0
        %6787 = vmatprep.subr.bf16.mxu0 0
        %6788 = vmatpush1.bf16.msra.mxu0 %v6736
        %6789 = vmatprep.subr.bf16.mxu0 0
        %6790 = vmatpush1.bf16.msra.mxu0 %v6737
        %6791 = vmatprep.subr.bf16.mxu0 0
        %6792 = vmatpush1.bf16.msra.mxu0 %v6738
        %6793 = vmatprep.subr.bf16.mxu0 0
        %6794 = vmatpush1.bf16.msra.mxu0 %v6739
        %6795 = vmatprep.subr.bf16.mxu0 0
        %6796 = vmatpush1.bf16.msra.mxu0 %v6740
        %6797 = vmatprep.subr.bf16.mxu0 0
        %6798 = vmatpush1.bf16.msra.mxu0 %v6741
        %6799 = vmatprep.subr.bf16.mxu0 0
        %6800 = vmatpush1.bf16.msra.mxu0 %v6742
        %6801 = vmatprep.subr.bf16.mxu0 0
        %6802 = vmatpush1.bf16.msra.mxu0 %v6743
        %6803 = vmatprep.subr.bf16.mxu0 0
        %6804 = vmatpush1.bf16.msra.mxu0 %v6744
        %6805 = vmatprep.subr.bf16.mxu0 0
        %6806 = vmatpush1.bf16.msra.mxu0 %v6745
        %6807 = vmatprep.subr.bf16.mxu0 0
        %6808 = vmatpush1.bf16.msra.mxu0 0
        %6809 = vmatprep.subr.bf16.mxu0 0
        %6810 = vmatpush1.bf16.msra.mxu0 0
        %6811 = vmatprep.subr.bf16.mxu0 0
        %6812 = vmatpush1.bf16.msra.mxu0 0
        %6813 = vmatprep.subr.bf16.mxu0 0
        %6814 = vmatpush1.bf16.msra.mxu0 0
        %6815 = vmatprep.subr.bf16.mxu0 0
        %6816 = vmatpush1.bf16.msra.mxu0 0
        %6817 = vmatprep.subr.bf16.mxu0 0
        %6818 = vmatpush1.bf16.msra.mxu0 0
        %6819 = vmatprep.mubr.bf16.mxu0 %v6758
        %6820 = vmatmul.mubr.bf16.gmra.mrb[0].mxu0 %v6656
        %v6821 = vpop.f32.mrb[0].mxu0
        %v6822 = vadd.f32 0.0, %v6821
        %v6823 = vpop.f32.mrb[0].mxu0
        %v6824 = vpop.f32.mrb[0].mxu0
        %v6825 = vadd.f32 0.0, %v6824
        %v6826 = vpop.f32.mrb[0].mxu0
        %6827 = vmatprep.mubr.bf16.mxu0 %v6761
        %6828 = vmatmul.mubr.bf16.gmra.mrb[0].mxu0 %v6658
        %v6829 = vpop.f32.mrb[0].mxu0
        %v6830 = vadd.f32 0.0, %v6829
        %v6831 = vpop.f32.mrb[0].mxu0
        %v6832 = vpop.f32.mrb[0].mxu0
        %v6833 = vadd.f32 0.0, %v6832
        %v6834 = vpop.f32.mrb[0].mxu0
        %6835 = vmatprep.mubr.bf16.mxu0 %v6764
        %6836 = vmatmul.mubr.bf16.gmra.mrb[0].mxu0 %v6660
        %v6837 = vpop.f32.mrb[0].mxu0
        %v6838 = vadd.f32 0.0, %v6837
        %v6839 = vpop.f32.mrb[0].mxu0
        %v6840 = vpop.f32.mrb[0].mxu0
        %v6841 = vadd.f32 0.0, %v6840
        %v6842 = vpop.f32.mrb[0].mxu0
        %6843 = vmatprep.mubr.bf16.mxu0 %v6767
        %6844 = vmatmul.mubr.bf16.gmra.mrb[0].mxu0 %v6662
        %v6845 = vpop.f32.mrb[0].mxu0
        %v6846 = vadd.f32 0.0, %v6845
        %v6847 = vpop.f32.mrb[0].mxu0
        %v6848 = vpop.f32.mrb[0].mxu0
        %v6849 = vadd.f32 0.0, %v6848
        %v6850 = vpop.f32.mrb[0].mxu0
        %6851 = vmatprep.mubr.bf16.mxu0 %v6770
        %6852 = vmatmul.mubr.bf16.gmra.mrb[0].mxu0 %v6664
        %v6853 = vpop.f32.mrb[0].mxu0
        %v6854 = vadd.f32 0.0, %v6853
        %v6855 = vpop.f32.mrb[0].mxu0
        %v6856 = vpop.f32.mrb[0].mxu0
        %v6857 = vadd.f32 0.0, %v6856
        %v6858 = vpop.f32.mrb[0].mxu0
        %6859 = vmatprep.mubr.bf16.mxu0 %v6773
        %6860 = vmatmul.mubr.bf16.gmra.mrb[0].mxu0 %v6666
        %v6861 = vpop.f32.mrb[0].mxu0
        %v6862 = vadd.f32 0.0, %v6861
        %v6863 = vpop.f32.mrb[0].mxu0
        %v6864 = vpop.f32.mrb[0].mxu0
        %v6865 = vadd.f32 0.0, %v6864
        %v6866 = vpop.f32.mrb[0].mxu0
        %6867 = vmatprep.mubr.bf16.mxu0 %v6776
        %6868 = vmatmul.mubr.bf16.gmra.mrb[0].mxu0 %v6668
        %v6869 = vpop.f32.mrb[0].mxu0
        %v6870 = vadd.f32 0.0, %v6869
        %v6871 = vpop.f32.mrb[0].mxu0
        %v6872 = vpop.f32.mrb[0].mxu0
        %v6873 = vadd.f32 0.0, %v6872
        %v6874 = vpop.f32.mrb[0].mxu0
        %6875 = vmatprep.mubr.bf16.mxu0 %v6779
        %6876 = vmatmul.mubr.bf16.gmra.mrb[0].mxu0 %v6670
        %v6877 = vpop.f32.mrb[0].mxu0
        %v6878 = vadd.f32 0.0, %v6877
        %v6879 = vpop.f32.mrb[0].mxu0
        %v6880 = vpop.f32.mrb[0].mxu0
        %v6881 = vadd.f32 0.0, %v6880
        %v6882 = vpop.f32.mrb[0].mxu0
        %6883 = vmatprep.mubr.bf16.mxu0 %v6782
        %6884 = vmatmul.mubr.bf16.gmra.mrb[0].mxu0 %v6672
        %v6885 = vpop.f32.mrb[0].mxu0
        %v6886 = vadd.f32 0.0, %v6885
        %v6887 = vpop.f32.mrb[0].mxu0
        %v6888 = vpop.f32.mrb[0].mxu0
        %v6889 = vadd.f32 0.0, %v6888
        %v6890 = vpop.f32.mrb[0].mxu0
        %6891 = vmatprep.mubr.bf16.mxu0 %v6785
        %6892 = vmatmul.mubr.bf16.gmra.mrb[0].mxu0 %v6674
        %v6893 = vpop.f32.mrb[0].mxu0
        %v6894 = vadd.f32 0.0, %v6893
        %v6895 = vpop.f32.mrb[0].mxu0
        %v6896 = vpop.f32.mrb[0].mxu0
        %v6897 = vadd.f32 0.0, %v6896
        %v6898 = vpop.f32.mrb[0].mxu0
        %6899 = vdwg.mxu0
        %s6900 = scalar_lea.vmem %s6, 80
        %v6901 = vld [vmem:[%s6900] sm:$0xf]
        %v6902 = vld [vmem:[%s6900 + $0x4] sm:$0xf]
        %v6903 = vld [vmem:[%s6900 + $0x8] sm:$0xf]
        %v6904 = vld [vmem:[%s6900 + $0xc] sm:$0xf]
        %v6905 = vld [vmem:[%s6900 + $0x10] sm:$0xf]
        %v6906 = vld [vmem:[%s6900 + $0x14] sm:$0xf]
        %v6907 = vld [vmem:[%s6900 + $0x18] sm:$0xf]
        %v6908 = vld [vmem:[%s6900 + $0x1c] sm:$0xf]
        %v6909 = vld [vmem:[%s6900 + $0x20] sm:$0xf]
        %v6910 = vld [vmem:[%s6900 + $0x24] sm:$0xf]
        %v6911 = vld [vmem:[%s6900 + $0x28] sm:$0xf]
        %v6912 = vld [vmem:[%s6900 + $0x2c] sm:$0xf]
        %v6913 = vld [vmem:[%s6900 + $0x30] sm:$0xf]
        %v6914 = vld [vmem:[%s6900 + $0x34] sm:$0xf]
        %v6915 = vld [vmem:[%s6900 + $0x38] sm:$0xf]
        %v6916 = vld [vmem:[%s6900 + $0x3c] sm:$0xf]
        %v6917 = vld [vmem:[%s6900 + $0x40] sm:$0xf]
        %v6918 = vld [vmem:[%s6900 + $0x44] sm:$0xf]
        %v6919 = vld [vmem:[%s6900 + $0x48] sm:$0xf]
        %v6920 = vld [vmem:[%s6900 + $0x4c] sm:$0xf]
        %v6941 = vunpack.c.l.b16 %v6901
        %v6942 = vunpack.c.l.b16 %v6902
        %v6943 = vunpack.c.l.b16 %v6903
        %v6944 = vunpack.c.l.b16 %v6904
        %v6945 = vunpack.c.l.b16 %v6905
        %v6946 = vunpack.c.l.b16 %v6906
        %v6947 = vunpack.c.l.b16 %v6907
        %v6948 = vunpack.c.l.b16 %v6908
        %v6949 = vunpack.c.l.b16 %v6909
        %v6950 = vunpack.c.l.b16 %v6910
        %v6951 = vunpack.c.l.b16 %v6911
        %v6952 = vunpack.c.l.b16 %v6912
        %v6953 = vunpack.c.l.b16 %v6913
        %v6954 = vunpack.c.l.b16 %v6914
        %v6955 = vunpack.c.l.b16 %v6915
        %v6956 = vunpack.c.l.b16 %v6916
        %v6957 = vunpack.c.l.b16 %v6917
        %v6958 = vunpack.c.l.b16 %v6918
        %v6959 = vunpack.c.l.b16 %v6919
        %v6960 = vunpack.c.l.b16 %v6920
        %v6961 = vpack.c.b16 %v6942, %v6941
        %v6962 = vpack.c.b16 %v6944, %v6943
        %v6963 = vpack.c.b16 %v6946, %v6945
        %v6964 = vpack.c.b16 %v6948, %v6947
        %v6965 = vpack.c.b16 %v6950, %v6949
        %v6966 = vpack.c.b16 %v6952, %v6951
        %v6967 = vpack.c.b16 %v6954, %v6953
        %v6968 = vpack.c.b16 %v6956, %v6955
        %v6969 = vpack.c.b16 %v6958, %v6957
        %v6970 = vpack.c.b16 %v6960, %v6959
        %6981 = vmatprep.subr.bf16.mxu0 0
        %6982 = vmatpush1.bf16.msra.mxu0 %v6961
        %6983 = vmatprep.subr.bf16.mxu0 0
        %6984 = vmatpush1.bf16.msra.mxu0 %v6962
        %6985 = vmatprep.subr.bf16.mxu0 0
        %6986 = vmatpush1.bf16.msra.mxu0 %v6963
        %6987 = vmatprep.subr.bf16.mxu0 0
        %6988 = vmatpush1.bf16.msra.mxu0 %v6964
        %6989 = vmatprep.subr.bf16.mxu0 0
        %6990 = vmatpush1.bf16.msra.mxu0 %v6965
        %6991 = vmatprep.subr.bf16.mxu0 0
        %6992 = vmatpush1.bf16.msra.mxu0 %v6966
        %6993 = vmatprep.subr.bf16.mxu0 0
        %6994 = vmatpush1.bf16.msra.mxu0 %v6967
        %6995 = vmatprep.subr.bf16.mxu0 0
        %6996 = vmatpush1.bf16.msra.mxu0 %v6968
        %6997 = vmatprep.subr.bf16.mxu0 0
        %6998 = vmatpush1.bf16.msra.mxu0 %v6969
        %6999 = vmatprep.subr.bf16.mxu0 0
        %7000 = vmatpush1.bf16.msra.mxu0 %v6970
        %7001 = vmatprep.subr.bf16.mxu0 0
        %7002 = vmatpush1.bf16.msra.mxu0 0
        %7003 = vmatprep.subr.bf16.mxu0 0
        %7004 = vmatpush1.bf16.msra.mxu0 0
        %7005 = vmatprep.subr.bf16.mxu0 0
        %7006 = vmatpush1.bf16.msra.mxu0 0
        %7007 = vmatprep.subr.bf16.mxu0 0
        %7008 = vmatpush1.bf16.msra.mxu0 0
        %7009 = vmatprep.subr.bf16.mxu0 0
        %7010 = vmatpush1.bf16.msra.mxu0 0
        %7011 = vmatprep.subr.bf16.mxu0 0
        %7012 = vmatpush1.bf16.msra.mxu0 0
        %7013 = vmatprep.mubr.bf16.mxu0 %v6758
        %7014 = vmatmul.mubr.bf16.gmra.mrb[0].mxu0 %v6656
        %v7015 = vpop.f32.mrb[0].mxu0
        %v7016 = vadd.f32 0.0, %v7015
        %v7017 = vpop.f32.mrb[0].mxu0
        %v7018 = vpop.f32.mrb[0].mxu0
        %v7019 = vadd.f32 0.0, %v7018
        %v7020 = vpop.f32.mrb[0].mxu0
        %7021 = vmatprep.mubr.bf16.mxu0 %v6761
        %7022 = vmatmul.mubr.bf16.gmra.mrb[0].mxu0 %v6658
        %v7023 = vpop.f32.mrb[0].mxu0
        %v7024 = vadd.f32 0.0, %v7023
        %v7025 = vpop.f32.mrb[0].mxu0
        %v7026 = vpop.f32.mrb[0].mxu0
        %v7027 = vadd.f32 0.0, %v7026
        %v7028 = vpop.f32.mrb[0].mxu0
        %7029 = vmatprep.mubr.bf16.mxu0 %v6764
        %7030 = vmatmul.mubr.bf16.gmra.mrb[0].mxu0 %v6660
        %v7031 = vpop.f32.mrb[0].mxu0
        %v7032 = vadd.f32 0.0, %v7031
        %v7033 = vpop.f32.mrb[0].mxu0
        %v7034 = vpop.f32.mrb[0].mxu0
        %v7035 = vadd.f32 0.0, %v7034
        %v7036 = vpop.f32.mrb[0].mxu0
        %7037 = vmatprep.mubr.bf16.mxu0 %v6767
        %7038 = vmatmul.mubr.bf16.gmra.mrb[0].mxu0 %v6662
        %v7039 = vpop.f32.mrb[0].mxu0
        %v7040 = vadd.f32 0.0, %v7039
        %v7041 = vpop.f32.mrb[0].mxu0
        %v7042 = vpop.f32.mrb[0].mxu0
        %v7043 = vadd.f32 0.0, %v7042
        %v7044 = vpop.f32.mrb[0].mxu0
        %7045 = vmatprep.mubr.bf16.mxu0 %v6770
        %7046 = vmatmul.mubr.bf16.gmra.mrb[0].mxu0 %v6664
        %v7047 = vpop.f32.mrb[0].mxu0
        %v7048 = vadd.f32 0.0, %v7047
        %v7049 = vpop.f32.mrb[0].mxu0
        %v7050 = vpop.f32.mrb[0].mxu0
        %v7051 = vadd.f32 0.0, %v7050
        %v7052 = vpop.f32.mrb[0].mxu0
        %7053 = vmatprep.mubr.bf16.mxu0 %v6773
        %7054 = vmatmul.mubr.bf16.gmra.mrb[0].mxu0 %v6666
        %v7055 = vpop.f32.mrb[0].mxu0
        %v7056 = vadd.f32 0.0, %v7055
        %v7057 = vpop.f32.mrb[0].mxu0
        %v7058 = vpop.f32.mrb[0].mxu0
        %v7059 = vadd.f32 0.0, %v7058
        %v7060 = vpop.f32.mrb[0].mxu0
        %7061 = vmatprep.mubr.bf16.mxu0 %v6776
        %7062 = vmatmul.mubr.bf16.gmra.mrb[0].mxu0 %v6668
        %v7063 = vpop.f32.mrb[0].mxu0
        %v7064 = vadd.f32 0.0, %v7063
        %v7065 = vpop.f32.mrb[0].mxu0
        %v7066 = vpop.f32.mrb[0].mxu0
        %v7067 = vadd.f32 0.0, %v7066
        %v7068 = vpop.f32.mrb[0].mxu0
        %7069 = vmatprep.mubr.bf16.mxu0 %v6779
        %7070 = vmatmul.mubr.bf16.gmra.mrb[0].mxu0 %v6670
        %v7071 = vpop.f32.mrb[0].mxu0
        %v7072 = vadd.f32 0.0, %v7071
        %v7073 = vpop.f32.mrb[0].mxu0
        %v7074 = vpop.f32.mrb[0].mxu0
        %v7075 = vadd.f32 0.0, %v7074
        %v7076 = vpop.f32.mrb[0].mxu0
        %7077 = vmatprep.mubr.bf16.mxu0 %v6782
        %7078 = vmatmul.mubr.bf16.gmra.mrb[0].mxu0 %v6672
        %v7079 = vpop.f32.mrb[0].mxu0
        %v7080 = vadd.f32 0.0, %v7079
        %v7081 = vpop.f32.mrb[0].mxu0
        %v7082 = vpop.f32.mrb[0].mxu0
        %v7083 = vadd.f32 0.0, %v7082
        %v7084 = vpop.f32.mrb[0].mxu0
        %7085 = vmatprep.mubr.bf16.mxu0 %v6785
        %7086 = vmatmul.mubr.bf16.gmra.mrb[0].mxu0 %v6674
        %v7087 = vpop.f32.mrb[0].mxu0
        %v7088 = vadd.f32 0.0, %v7087
        %v7089 = vpop.f32.mrb[0].mxu0
        %v7090 = vpop.f32.mrb[0].mxu0
        %v7091 = vadd.f32 0.0, %v7090
        %v7092 = vpop.f32.mrb[0].mxu0
        %7093 = vdwg.mxu0
        %v7094 = vmax.f32 %v6822, %v7016
        %v7095 = vmax.f32 %v6825, %v7019
        %v7096 = vmax.f32 %v6830, %v7024
        %v7097 = vmax.f32 %v6833, %v7027
        %v7098 = vmax.f32 %v6838, %v7032
        %v7099 = vmax.f32 %v6841, %v7035
        %v7100 = vmax.f32 %v6846, %v7040
        %v7101 = vmax.f32 %v6849, %v7043
        %v7102 = vmax.f32 %v6854, %v7048
        %v7103 = vmax.f32 %v6857, %v7051
        %v7104 = vmax.f32 %v6862, %v7056
        %v7105 = vmax.f32 %v6865, %v7059
        %v7106 = vmax.f32 %v6870, %v7064
        %v7107 = vmax.f32 %v6873, %v7067
        %v7108 = vmax.f32 %v6878, %v7072
        %v7109 = vmax.f32 %v6881, %v7075
        %v7110 = vmax.f32 %v6886, %v7080
        %v7111 = vmax.f32 %v6889, %v7083
        %v7112 = vmax.f32 %v6894, %v7088
        %v7113 = vmax.f32 %v6897, %v7091
        %v7114 = vpack.c.bf16 %v7095, %v7094
        %v7115 = vpack.c.bf16 %v7097, %v7096
        %v7116 = vpack.c.bf16 %v7099, %v7098
        %v7117 = vpack.c.bf16 %v7101, %v7100
        %v7118 = vpack.c.bf16 %v7103, %v7102
        %v7119 = vpack.c.bf16 %v7105, %v7104
        %v7120 = vpack.c.bf16 %v7107, %v7106
        %v7121 = vpack.c.bf16 %v7109, %v7108
        %v7122 = vpack.c.bf16 %v7111, %v7110
        %v7123 = vpack.c.bf16 %v7113, %v7112
        %v7124 = vld [vmem:[%s7] sm:$0xf]
        %v7125 = vld [vmem:[%s7 + $0x4] sm:$0xf]
        %v7126 = vld [vmem:[%s7 + $0x8] sm:$0xf]
        %v7127 = vld [vmem:[%s7 + $0xc] sm:$0xf]
        %v7128 = vld [vmem:[%s7 + $0x10] sm:$0xf]
        %v7129 = vld [vmem:[%s7 + $0x14] sm:$0xf]
        %v7130 = vld [vmem:[%s7 + $0x18] sm:$0xf]
        %v7131 = vld [vmem:[%s7 + $0x1c] sm:$0xf]
        %v7132 = vld [vmem:[%s7 + $0x20] sm:$0xf]
        %v7133 = vld [vmem:[%s7 + $0x24] sm:$0xf]
        %s7134 = scalar_lea.vmem %s7, 40
        %v7135 = vld [vmem:[%s7134] sm:$0xf]
        %v7136 = vld [vmem:[%s7134 + $0x4] sm:$0xf]
        %v7137 = vld [vmem:[%s7134 + $0x8] sm:$0xf]
        %v7138 = vld [vmem:[%s7134 + $0xc] sm:$0xf]
        %v7139 = vld [vmem:[%s7134 + $0x10] sm:$0xf]
        %v7140 = vld [vmem:[%s7134 + $0x14] sm:$0xf]
        %v7141 = vld [vmem:[%s7134 + $0x18] sm:$0xf]
        %v7142 = vld [vmem:[%s7134 + $0x1c] sm:$0xf]
        %v7143 = vld [vmem:[%s7134 + $0x20] sm:$0xf]
        %v7144 = vld [vmem:[%s7134 + $0x24] sm:$0xf]
        %v7155 = vunpack.c.l.b16 %v7135
        %v7156 = vunpack.c.l.b16 %v7136
        %v7157 = vunpack.c.l.b16 %v7137
        %v7158 = vunpack.c.l.b16 %v7138
        %v7159 = vunpack.c.l.b16 %v7139
        %v7160 = vunpack.c.l.b16 %v7140
        %v7161 = vunpack.c.l.b16 %v7141
        %v7162 = vunpack.c.l.b16 %v7142
        %v7163 = vunpack.c.l.b16 %v7143
        %v7164 = vunpack.c.l.b16 %v7144
        %v7165 = vpack.c.b16 %v7156, %v7155
        %v7166 = vpack.c.b16 %v7158, %v7157
        %v7167 = vpack.c.b16 %v7160, %v7159
        %v7168 = vpack.c.b16 %v7162, %v7161
        %v7169 = vpack.c.b16 %v7164, %v7163
        %vm7175 = vcmask 654336
        %v7177 = vsel %vm7175, %v7116, 0
        %v7180 = vsel %vm7175, %v7117, 0
        %7182 = vmatprep.subr.bf16.mxu0 0
        %7183 = vmatpush1.bf16.msra.mxu0 %v7165
        %7184 = vmatprep.subr.bf16.mxu0 0
        %7185 = vmatpush1.bf16.msra.mxu0 %v7166
        %7186 = vmatprep.subr.bf16.mxu0 0
        %7187 = vmatpush1.bf16.msra.mxu0 %v7167
        %7188 = vmatprep.subr.bf16.mxu0 0
        %7189 = vmatpush1.bf16.msra.mxu0 %v7168
        %7190 = vmatprep.subr.bf16.mxu0 0
        %7191 = vmatpush1.bf16.msra.mxu0 %v7169
        %7192 = vmatprep.subr.bf16.mxu0 0
        %7193 = vmatpush1.bf16.msra.mxu0 0
        %7194 = vmatprep.subr.bf16.mxu0 0
        %7195 = vmatpush1.bf16.msra.mxu0 0
        %7196 = vmatprep.subr.bf16.mxu0 0
        %7197 = vmatpush1.bf16.msra.mxu0 0
        %7198 = vmatprep.subr.bf16.mxu0 0
        %7199 = vmatpush1.bf16.msra.mxu0 0
        %7200 = vmatprep.subr.bf16.mxu0 0
        %7201 = vmatpush1.bf16.msra.mxu0 0
        %7202 = vmatprep.subr.bf16.mxu0 0
        %7203 = vmatpush1.bf16.msra.mxu0 0
        %7204 = vmatprep.subr.bf16.mxu0 0
        %7205 = vmatpush1.bf16.msra.mxu0 0
        %7206 = vmatprep.subr.bf16.mxu0 0
        %7207 = vmatpush1.bf16.msra.mxu0 0
        %7208 = vmatprep.subr.bf16.mxu0 0
        %7209 = vmatpush1.bf16.msra.mxu0 0
        %7210 = vmatprep.subr.bf16.mxu0 0
        %7211 = vmatpush1.bf16.msra.mxu0 0
        %7212 = vmatprep.subr.bf16.mxu0 0
        %7213 = vmatpush1.bf16.msra.mxu0 0
        %7214 = vmatprep.mubr.bf16.mxu0 0
        %7215 = vmatmul.mubr.bf16.gmra.mrb[0].mxu0 %v7177
        %v7216 = vpop.f32.mrb[0].mxu0
        %v7217 = vadd.f32 0.0, %v7216
        %v7218 = vpop.f32.mrb[0].mxu0
        %v7219 = vpop.f32.mrb[0].mxu0
        %v7220 = vadd.f32 0.0, %v7219
        %v7221 = vpop.f32.mrb[0].mxu0
        %7222 = vmatprep.mubr.bf16.mxu0 0
        %7223 = vmatmul.mubr.bf16.gmra.mrb[0].mxu0 %v7180
        %v7224 = vpop.f32.mrb[0].mxu0
        %v7225 = vadd.f32 0.0, %v7224
        %v7226 = vpop.f32.mrb[0].mxu0
        %v7227 = vpop.f32.mrb[0].mxu0
        %v7228 = vadd.f32 0.0, %v7227
        %v7229 = vpop.f32.mrb[0].mxu0
        %7230 = vdwg.mxu0
        %v7241 = vunpack.c.l.b16 %v7124
        %v7242 = vunpack.c.l.b16 %v7125
        %v7243 = vunpack.c.l.b16 %v7126
        %v7244 = vunpack.c.l.b16 %v7127
        %v7245 = vunpack.c.l.b16 %v7128
        %v7246 = vunpack.c.l.b16 %v7129
        %v7247 = vunpack.c.l.b16 %v7130
        %v7248 = vunpack.c.l.b16 %v7131
        %v7249 = vunpack.c.l.b16 %v7132
        %v7250 = vunpack.c.l.b16 %v7133
        %v7251 = vpack.c.b16 %v7242, %v7241
        %v7252 = vpack.c.b16 %v7244, %v7243
        %v7253 = vpack.c.b16 %v7246, %v7245
        %v7254 = vpack.c.b16 %v7248, %v7247
        %v7255 = vpack.c.b16 %v7250, %v7249
        %v7262 = vsel %vm7175, %v7114, 0
        %v7265 = vsel %vm7175, %v7115, 0
        %7267 = vmatprep.subr.bf16.mxu0 0
        %7268 = vmatpush1.bf16.msra.mxu0 %v7251
        %7269 = vmatprep.subr.bf16.mxu0 0
        %7270 = vmatpush1.bf16.msra.mxu0 %v7252
        %7271 = vmatprep.subr.bf16.mxu0 0
        %7272 = vmatpush1.bf16.msra.mxu0 %v7253
        %7273 = vmatprep.subr.bf16.mxu0 0
        %7274 = vmatpush1.bf16.msra.mxu0 %v7254
        %7275 = vmatprep.subr.bf16.mxu0 0
        %7276 = vmatpush1.bf16.msra.mxu0 %v7255
        %7277 = vmatprep.subr.bf16.mxu0 0
        %7278 = vmatpush1.bf16.msra.mxu0 0
        %7279 = vmatprep.subr.bf16.mxu0 0
        %7280 = vmatpush1.bf16.msra.mxu0 0
        %7281 = vmatprep.subr.bf16.mxu0 0
        %7282 = vmatpush1.bf16.msra.mxu0 0
        %7283 = vmatprep.subr.bf16.mxu0 0
        %7284 = vmatpush1.bf16.msra.mxu0 0
        %7285 = vmatprep.subr.bf16.mxu0 0
        %7286 = vmatpush1.bf16.msra.mxu0 0
        %7287 = vmatprep.subr.bf16.mxu0 0
        %7288 = vmatpush1.bf16.msra.mxu0 0
        %7289 = vmatprep.subr.bf16.mxu0 0
        %7290 = vmatpush1.bf16.msra.mxu0 0
        %7291 = vmatprep.subr.bf16.mxu0 0
        %7292 = vmatpush1.bf16.msra.mxu0 0
        %7293 = vmatprep.subr.bf16.mxu0 0
        %7294 = vmatpush1.bf16.msra.mxu0 0
        %7295 = vmatprep.subr.bf16.mxu0 0
        %7296 = vmatpush1.bf16.msra.mxu0 0
        %7297 = vmatprep.subr.bf16.mxu0 0
        %7298 = vmatpush1.bf16.msra.mxu0 0
        %7299 = vmatprep.mubr.bf16.mxu0 0
        %7300 = vmatmul.mubr.bf16.gmra.mrb[0].mxu0 %v7262
        %v7301 = vpop.f32.mrb[0].mxu0
        %v7302 = vadd.f32 %v7217, %v7301
        %v7303 = vpop.f32.mrb[0].mxu0
        %v7304 = vpop.f32.mrb[0].mxu0
        %v7305 = vadd.f32 %v7220, %v7304
        %v7306 = vpop.f32.mrb[0].mxu0
        %7307 = vmatprep.mubr.bf16.mxu0 0
        %7308 = vmatmul.mubr.bf16.gmra.mrb[0].mxu0 %v7265
        %v7309 = vpop.f32.mrb[0].mxu0
        %v7310 = vadd.f32 %v7225, %v7309
        %v7311 = vpop.f32.mrb[0].mxu0
        %v7312 = vpop.f32.mrb[0].mxu0
        %v7313 = vadd.f32 %v7228, %v7312
        %v7314 = vpop.f32.mrb[0].mxu0
        %7315 = vdwg.mxu0
        %s7316 = scalar_lea.vmem %s7, 80
        %v7317 = vld [vmem:[%s7316] sm:$0xf]
        %v7318 = vld [vmem:[%s7316 + $0x4] sm:$0xf]
        %v7319 = vld [vmem:[%s7316 + $0x8] sm:$0xf]
        %v7320 = vld [vmem:[%s7316 + $0xc] sm:$0xf]
        %v7321 = vld [vmem:[%s7316 + $0x10] sm:$0xf]
        %v7322 = vld [vmem:[%s7316 + $0x14] sm:$0xf]
        %v7323 = vld [vmem:[%s7316 + $0x18] sm:$0xf]
        %v7324 = vld [vmem:[%s7316 + $0x1c] sm:$0xf]
        %v7325 = vld [vmem:[%s7316 + $0x20] sm:$0xf]
        %v7326 = vld [vmem:[%s7316 + $0x24] sm:$0xf]
        %v7337 = vunpack.c.l.b16 %v7317
        %v7338 = vunpack.c.l.b16 %v7318
        %v7339 = vunpack.c.l.b16 %v7319
        %v7340 = vunpack.c.l.b16 %v7320
        %v7341 = vunpack.c.l.b16 %v7321
        %v7342 = vunpack.c.l.b16 %v7322
        %v7343 = vunpack.c.l.b16 %v7323
        %v7344 = vunpack.c.l.b16 %v7324
        %v7345 = vunpack.c.l.b16 %v7325
        %v7346 = vunpack.c.l.b16 %v7326
        %v7347 = vpack.c.b16 %v7338, %v7337
        %v7348 = vpack.c.b16 %v7340, %v7339
        %v7349 = vpack.c.b16 %v7342, %v7341
        %v7350 = vpack.c.b16 %v7344, %v7343
        %v7351 = vpack.c.b16 %v7346, %v7345
        %v7358 = vsel %vm7175, %v7118, 0
        %v7361 = vsel %vm7175, %v7119, 0
        %7363 = vmatprep.subr.bf16.mxu0 0
        %7364 = vmatpush1.bf16.msra.mxu0 %v7347
        %7365 = vmatprep.subr.bf16.mxu0 0
        %7366 = vmatpush1.bf16.msra.mxu0 %v7348
        %7367 = vmatprep.subr.bf16.mxu0 0
        %7368 = vmatpush1.bf16.msra.mxu0 %v7349
        %7369 = vmatprep.subr.bf16.mxu0 0
        %7370 = vmatpush1.bf16.msra.mxu0 %v7350
        %7371 = vmatprep.subr.bf16.mxu0 0
        %7372 = vmatpush1.bf16.msra.mxu0 %v7351
        %7373 = vmatprep.subr.bf16.mxu0 0
        %7374 = vmatpush1.bf16.msra.mxu0 0
        %7375 = vmatprep.subr.bf16.mxu0 0
        %7376 = vmatpush1.bf16.msra.mxu0 0
        %7377 = vmatprep.subr.bf16.mxu0 0
        %7378 = vmatpush1.bf16.msra.mxu0 0
        %7379 = vmatprep.subr.bf16.mxu0 0
        %7380 = vmatpush1.bf16.msra.mxu0 0
        %7381 = vmatprep.subr.bf16.mxu0 0
        %7382 = vmatpush1.bf16.msra.mxu0 0
        %7383 = vmatprep.subr.bf16.mxu0 0
        %7384 = vmatpush1.bf16.msra.mxu0 0
        %7385 = vmatprep.subr.bf16.mxu0 0
        %7386 = vmatpush1.bf16.msra.mxu0 0
        %7387 = vmatprep.subr.bf16.mxu0 0
        %7388 = vmatpush1.bf16.msra.mxu0 0
        %7389 = vmatprep.subr.bf16.mxu0 0
        %7390 = vmatpush1.bf16.msra.mxu0 0
        %7391 = vmatprep.subr.bf16.mxu0 0
        %7392 = vmatpush1.bf16.msra.mxu0 0
        %7393 = vmatprep.subr.bf16.mxu0 0
        %7394 = vmatpush1.bf16.msra.mxu0 0
        %7395 = vmatprep.mubr.bf16.mxu0 0
        %7396 = vmatmul.mubr.bf16.gmra.mrb[0].mxu0 %v7358
        %v7397 = vpop.f32.mrb[0].mxu0
        %v7398 = vadd.f32 0.0, %v7397
        %v7399 = vpop.f32.mrb[0].mxu0
        %v7400 = vpop.f32.mrb[0].mxu0
        %v7401 = vadd.f32 0.0, %v7400
        %v7402 = vpop.f32.mrb[0].mxu0
        %7403 = vmatprep.mubr.bf16.mxu0 0
        %7404 = vmatmul.mubr.bf16.gmra.mrb[0].mxu0 %v7361
        %v7405 = vpop.f32.mrb[0].mxu0
        %v7406 = vadd.f32 0.0, %v7405
        %v7407 = vpop.f32.mrb[0].mxu0
        %v7408 = vpop.f32.mrb[0].mxu0
        %v7409 = vadd.f32 0.0, %v7408
        %v7410 = vpop.f32.mrb[0].mxu0
        %7411 = vdwg.mxu0
        %v7412 = vadd.f32 %v7302, %v7398
        %v7413 = vadd.f32 %v7305, %v7401
        %v7414 = vadd.f32 %v7310, %v7406
        %v7415 = vadd.f32 %v7313, %v7409
        %s7416 = scalar_lea.vmem %s7, 120
        %v7417 = vld [vmem:[%s7416] sm:$0xf]
        %v7418 = vld [vmem:[%s7416 + $0x4] sm:$0xf]
        %v7419 = vld [vmem:[%s7416 + $0x8] sm:$0xf]
        %v7420 = vld [vmem:[%s7416 + $0xc] sm:$0xf]
        %v7421 = vld [vmem:[%s7416 + $0x10] sm:$0xf]
        %v7422 = vld [vmem:[%s7416 + $0x14] sm:$0xf]
        %v7423 = vld [vmem:[%s7416 + $0x18] sm:$0xf]
        %v7424 = vld [vmem:[%s7416 + $0x1c] sm:$0xf]
        %v7425 = vld [vmem:[%s7416 + $0x20] sm:$0xf]
        %v7426 = vld [vmem:[%s7416 + $0x24] sm:$0xf]
        %v7437 = vunpack.c.l.b16 %v7417
        %v7438 = vunpack.c.l.b16 %v7418
        %v7439 = vunpack.c.l.b16 %v7419
        %v7440 = vunpack.c.l.b16 %v7420
        %v7441 = vunpack.c.l.b16 %v7421
        %v7442 = vunpack.c.l.b16 %v7422
        %v7443 = vunpack.c.l.b16 %v7423
        %v7444 = vunpack.c.l.b16 %v7424
        %v7445 = vunpack.c.l.b16 %v7425
        %v7446 = vunpack.c.l.b16 %v7426
        %v7447 = vpack.c.b16 %v7438, %v7437
        %v7448 = vpack.c.b16 %v7440, %v7439
        %v7449 = vpack.c.b16 %v7442, %v7441
        %v7450 = vpack.c.b16 %v7444, %v7443
        %v7451 = vpack.c.b16 %v7446, %v7445
        %v7458 = vsel %vm7175, %v7120, 0
        %v7461 = vsel %vm7175, %v7121, 0
        %7463 = vmatprep.subr.bf16.mxu0 0
        %7464 = vmatpush1.bf16.msra.mxu0 %v7447
        %7465 = vmatprep.subr.bf16.mxu0 0
        %7466 = vmatpush1.bf16.msra.mxu0 %v7448
        %7467 = vmatprep.subr.bf16.mxu0 0
        %7468 = vmatpush1.bf16.msra.mxu0 %v7449
        %7469 = vmatprep.subr.bf16.mxu0 0
        %7470 = vmatpush1.bf16.msra.mxu0 %v7450
        %7471 = vmatprep.subr.bf16.mxu0 0
        %7472 = vmatpush1.bf16.msra.mxu0 %v7451
        %7473 = vmatprep.subr.bf16.mxu0 0
        %7474 = vmatpush1.bf16.msra.mxu0 0
        %7475 = vmatprep.subr.bf16.mxu0 0
        %7476 = vmatpush1.bf16.msra.mxu0 0
        %7477 = vmatprep.subr.bf16.mxu0 0
        %7478 = vmatpush1.bf16.msra.mxu0 0
        %7479 = vmatprep.subr.bf16.mxu0 0
        %7480 = vmatpush1.bf16.msra.mxu0 0
        %7481 = vmatprep.subr.bf16.mxu0 0
        %7482 = vmatpush1.bf16.msra.mxu0 0
        %7483 = vmatprep.subr.bf16.mxu0 0
        %7484 = vmatpush1.bf16.msra.mxu0 0
        %7485 = vmatprep.subr.bf16.mxu0 0
        %7486 = vmatpush1.bf16.msra.mxu0 0
        %7487 = vmatprep.subr.bf16.mxu0 0
        %7488 = vmatpush1.bf16.msra.mxu0 0
        %7489 = vmatprep.subr.bf16.mxu0 0
        %7490 = vmatpush1.bf16.msra.mxu0 0
        %7491 = vmatprep.subr.bf16.mxu0 0
        %7492 = vmatpush1.bf16.msra.mxu0 0
        %7493 = vmatprep.subr.bf16.mxu0 0
        %7494 = vmatpush1.bf16.msra.mxu0 0
        %7495 = vmatprep.mubr.bf16.mxu0 0
        %7496 = vmatmul.mubr.bf16.gmra.mrb[0].mxu0 %v7458
        %v7497 = vpop.f32.mrb[0].mxu0
        %v7498 = vadd.f32 0.0, %v7497
        %v7499 = vpop.f32.mrb[0].mxu0
        %v7500 = vpop.f32.mrb[0].mxu0
        %v7501 = vadd.f32 0.0, %v7500
        %v7502 = vpop.f32.mrb[0].mxu0
        %7503 = vmatprep.mubr.bf16.mxu0 0
        %7504 = vmatmul.mubr.bf16.gmra.mrb[0].mxu0 %v7461
        %v7505 = vpop.f32.mrb[0].mxu0
        %v7506 = vadd.f32 0.0, %v7505
        %v7507 = vpop.f32.mrb[0].mxu0
        %v7508 = vpop.f32.mrb[0].mxu0
        %v7509 = vadd.f32 0.0, %v7508
        %v7510 = vpop.f32.mrb[0].mxu0
        %7511 = vdwg.mxu0
        %v7512 = vadd.f32 %v7412, %v7498
        %v7513 = vadd.f32 %v7413, %v7501
        %v7514 = vadd.f32 %v7414, %v7506
        %v7515 = vadd.f32 %v7415, %v7509
        %s7516 = scalar_lea.vmem %s7, 160
        %v7517 = vld [vmem:[%s7516] sm:$0xf]
        %v7518 = vld [vmem:[%s7516 + $0x4] sm:$0xf]
        %v7519 = vld [vmem:[%s7516 + $0x8] sm:$0xf]
        %v7520 = vld [vmem:[%s7516 + $0xc] sm:$0xf]
        %v7521 = vld [vmem:[%s7516 + $0x10] sm:$0xf]
        %v7522 = vld [vmem:[%s7516 + $0x14] sm:$0xf]
        %v7523 = vld [vmem:[%s7516 + $0x18] sm:$0xf]
        %v7524 = vld [vmem:[%s7516 + $0x1c] sm:$0xf]
        %v7525 = vld [vmem:[%s7516 + $0x20] sm:$0xf]
        %v7526 = vld [vmem:[%s7516 + $0x24] sm:$0xf]
        %v7537 = vunpack.c.l.b16 %v7517
        %v7538 = vunpack.c.l.b16 %v7518
        %v7539 = vunpack.c.l.b16 %v7519
        %v7540 = vunpack.c.l.b16 %v7520
        %v7541 = vunpack.c.l.b16 %v7521
        %v7542 = vunpack.c.l.b16 %v7522
        %v7543 = vunpack.c.l.b16 %v7523
        %v7544 = vunpack.c.l.b16 %v7524
        %v7545 = vunpack.c.l.b16 %v7525
        %v7546 = vunpack.c.l.b16 %v7526
        %v7547 = vpack.c.b16 %v7538, %v7537
        %v7548 = vpack.c.b16 %v7540, %v7539
        %v7549 = vpack.c.b16 %v7542, %v7541
        %v7550 = vpack.c.b16 %v7544, %v7543
        %v7551 = vpack.c.b16 %v7546, %v7545
        %v7558 = vsel %vm7175, %v7122, 0
        %v7561 = vsel %vm7175, %v7123, 0
        %7563 = vmatprep.subr.bf16.mxu0 0
        %7564 = vmatpush1.bf16.msra.mxu0 %v7547
        %7565 = vmatprep.subr.bf16.mxu0 0
        %7566 = vmatpush1.bf16.msra.mxu0 %v7548
        %7567 = vmatprep.subr.bf16.mxu0 0
        %7568 = vmatpush1.bf16.msra.mxu0 %v7549
        %7569 = vmatprep.subr.bf16.mxu0 0
        %7570 = vmatpush1.bf16.msra.mxu0 %v7550
        %7571 = vmatprep.subr.bf16.mxu0 0
        %7572 = vmatpush1.bf16.msra.mxu0 %v7551
        %7573 = vmatprep.subr.bf16.mxu0 0
        %7574 = vmatpush1.bf16.msra.mxu0 0
        %7575 = vmatprep.subr.bf16.mxu0 0
        %7576 = vmatpush1.bf16.msra.mxu0 0
        %7577 = vmatprep.subr.bf16.mxu0 0
        %7578 = vmatpush1.bf16.msra.mxu0 0
        %7579 = vmatprep.subr.bf16.mxu0 0
        %7580 = vmatpush1.bf16.msra.mxu0 0
        %7581 = vmatprep.subr.bf16.mxu0 0
        %7582 = vmatpush1.bf16.msra.mxu0 0
        %7583 = vmatprep.subr.bf16.mxu0 0
        %7584 = vmatpush1.bf16.msra.mxu0 0
        %7585 = vmatprep.subr.bf16.mxu0 0
        %7586 = vmatpush1.bf16.msra.mxu0 0
        %7587 = vmatprep.subr.bf16.mxu0 0
        %7588 = vmatpush1.bf16.msra.mxu0 0
        %7589 = vmatprep.subr.bf16.mxu0 0
        %7590 = vmatpush1.bf16.msra.mxu0 0
        %7591 = vmatprep.subr.bf16.mxu0 0
        %7592 = vmatpush1.bf16.msra.mxu0 0
        %7593 = vmatprep.subr.bf16.mxu0 0
        %7594 = vmatpush1.bf16.msra.mxu0 0
        %7595 = vmatprep.mubr.bf16.mxu0 0
        %7596 = vmatmul.mubr.bf16.gmra.mrb[0].mxu0 %v7558
        %v7597 = vpop.f32.mrb[0].mxu0
        %v7598 = vadd.f32 0.0, %v7597
        %v7599 = vpop.f32.mrb[0].mxu0
        %v7600 = vpop.f32.mrb[0].mxu0
        %v7601 = vadd.f32 0.0, %v7600
        %v7602 = vpop.f32.mrb[0].mxu0
        %7603 = vmatprep.mubr.bf16.mxu0 0
        %7604 = vmatmul.mubr.bf16.gmra.mrb[0].mxu0 %v7561
        %v7605 = vpop.f32.mrb[0].mxu0
        %v7606 = vadd.f32 0.0, %v7605
        %v7607 = vpop.f32.mrb[0].mxu0
        %v7608 = vpop.f32.mrb[0].mxu0
        %v7609 = vadd.f32 0.0, %v7608
        %v7610 = vpop.f32.mrb[0].mxu0
        %7611 = vdwg.mxu0
        %v7612 = vadd.f32 %v7512, %v7598
        %v7613 = vadd.f32 %v7513, %v7601
        %v7614 = vadd.f32 %v7514, %v7606
        %v7615 = vadd.f32 %v7515, %v7609
        %v7616 = vld [vmem:[%s8] sm:$0x1]
        %v7618 = vlaneseq
        %v7619 = vshrl.u32 %v7618, 7
        %v7620 = vsub.s32 0, %v7619
        %v7621 = vrot.slane %v7616, %v7620
        %v7623 = vadd.f32 %v7612, %v7621
        %v7624 = vadd.f32 %v7613, %v7621
        %v7625 = vadd.f32 %v7614, %v7621
        %v7626 = vadd.f32 %v7615, %v7621
        %v7627 = vpack.c.bf16 %v7624, %v7623
        %v7628 = vpack.c.bf16 %v7626, %v7625
        %v7629 = vld [vmem:[%s9] sm:$0xf]
        %v7630 = vld [vmem:[%s9 + $0x4] sm:$0xf]
        %v7631 = vld [vmem:[%s9 + $0x8] sm:$0xf]
        %v7632 = vld [vmem:[%s9 + $0xc] sm:$0xf]
        %v7633 = vld [vmem:[%s9 + $0x10] sm:$0xf]
        %v7634 = vld [vmem:[%s9 + $0x14] sm:$0xf]
        %v7635 = vld [vmem:[%s9 + $0x18] sm:$0xf]
        %v7636 = vld [vmem:[%s9 + $0x1c] sm:$0xf]
        %v7637 = vld [vmem:[%s9 + $0x20] sm:$0xf]
        %v7638 = vld [vmem:[%s9 + $0x24] sm:$0xf]
        %v7639 = vld [vmem:[%s9 + $0x28] sm:$0xf]
        %v7640 = vld [vmem:[%s9 + $0x2c] sm:$0xf]
        %v7641 = vld [vmem:[%s9 + $0x30] sm:$0xf]
        %v7642 = vld [vmem:[%s9 + $0x34] sm:$0xf]
        %v7643 = vld [vmem:[%s9 + $0x38] sm:$0xf]
        %v7644 = vld [vmem:[%s10] sm:$0x1]
        %v7646 = vlaneseq
        %v7647 = vshrl.u32 %v7646, 7
        %v7648 = vsub.s32 0, %v7647
        %v7649 = vrot.slane %v7644, %v7648
        %v7666 = vunpack.c.l.b16 %v7629
        %v7667 = vunpack.c.l.b16 %v7630
        %v7668 = vunpack.c.l.b16 %v7631
        %v7669 = vunpack.c.l.b16 %v7632
        %v7670 = vunpack.c.l.b16 %v7633
        %v7671 = vunpack.c.l.b16 %v7634
        %v7672 = vunpack.c.l.b16 %v7635
        %v7673 = vunpack.c.l.b16 %v7636
        %v7674 = vunpack.c.l.b16 %v7637
        %v7675 = vunpack.c.l.b16 %v7638
        %v7676 = vunpack.c.l.b16 %v7639
        %v7677 = vunpack.c.l.b16 %v7640
        %v7678 = vunpack.c.l.b16 %v7641
        %v7679 = vunpack.c.l.b16 %v7642
        %v7680 = vunpack.c.l.b16 %v7643
        %v7681 = vpack.c.b16 %v7667, %v7666
        %v7682 = vpack.c.b16 %v7669, %v7668
        %v7683 = vpack.c.b16 %v7671, %v7670
        %v7684 = vpack.c.b16 %v7673, %v7672
        %v7685 = vpack.c.b16 %v7675, %v7674
        %v7686 = vpack.c.b16 %v7677, %v7676
        %v7687 = vpack.c.b16 %v7679, %v7678
        %v7688 = vpack.c.b16 %v7680, %v7680
        %vm7696 = vcmask 982016
        %v7698 = vsel %vm7696, %v7627, 0
        %v7701 = vsel %vm7696, %v7628, 0
        %v7704 = vsel %vm3979, %v7688, 0
        %7706 = vmatprep.subr.bf16.mxu0 0
        %7707 = vmatpush1.bf16.msra.mxu0 %v7681
        %7708 = vmatprep.subr.bf16.mxu0 0
        %7709 = vmatpush1.bf16.msra.mxu0 %v7682
        %7710 = vmatprep.subr.bf16.mxu0 0
        %7711 = vmatpush1.bf16.msra.mxu0 %v7683
        %7712 = vmatprep.subr.bf16.mxu0 0
        %7713 = vmatpush1.bf16.msra.mxu0 %v7684
        %7714 = vmatprep.subr.bf16.mxu0 0
        %7715 = vmatpush1.bf16.msra.mxu0 %v7685
        %7716 = vmatprep.subr.bf16.mxu0 0
        %7717 = vmatpush1.bf16.msra.mxu0 %v7686
        %7718 = vmatprep.subr.bf16.mxu0 0
        %7719 = vmatpush1.bf16.msra.mxu0 %v7687
        %7720 = vmatprep.subr.bf16.mxu0 0
        %7721 = vmatpush1.bf16.msra.mxu0 %v7704
        %7722 = vmatprep.subr.bf16.mxu0 0
        %7723 = vmatpush1.bf16.msra.mxu0 0
        %7724 = vmatprep.subr.bf16.mxu0 0
        %7725 = vmatpush1.bf16.msra.mxu0 0
        %7726 = vmatprep.subr.bf16.mxu0 0
        %7727 = vmatpush1.bf16.msra.mxu0 0
        %7728 = vmatprep.subr.bf16.mxu0 0
        %7729 = vmatpush1.bf16.msra.mxu0 0
        %7730 = vmatprep.subr.bf16.mxu0 0
        %7731 = vmatpush1.bf16.msra.mxu0 0
        %7732 = vmatprep.subr.bf16.mxu0 0
        %7733 = vmatpush1.bf16.msra.mxu0 0
        %7734 = vmatprep.subr.bf16.mxu0 0
        %7735 = vmatpush1.bf16.msra.mxu0 0
        %7736 = vmatprep.subr.bf16.mxu0 0
        %7737 = vmatpush1.bf16.msra.mxu0 0
        %7738 = vmatprep.mubr.bf16.mxu0 0
        %7739 = vmatmul.mubr.bf16.gmra.mrb[0].mxu0 %v7698
        %v7740 = vpop.f32.mrb[0].mxu0
        %v7741 = vadd.f32 %v7649, %v7740
        %v7742 = vpop.f32.mrb[0].mxu0
        %v7743 = vpop.f32.mrb[0].mxu0
        %v7744 = vadd.f32 %v7649, %v7743
        %v7745 = vpop.f32.mrb[0].mxu0
        %7746 = vmatprep.mubr.bf16.mxu0 0
        %7747 = vmatmul.mubr.bf16.gmra.mrb[0].mxu0 %v7701
        %v7748 = vpop.f32.mrb[0].mxu0
        %v7749 = vadd.f32 %v7649, %v7748
        %v7750 = vpop.f32.mrb[0].mxu0
        %v7751 = vpop.f32.mrb[0].mxu0
        %v7752 = vadd.f32 %v7649, %v7751
        %v7753 = vpop.f32.mrb[0].mxu0
        %7754 = vdwg.mxu0
        %v7755 = vpack.c.bf16 %v7744, %v7741
        %v7756 = vpack.c.bf16 %v7752, %v7749
        %v7757 = vld [vmem:[%s11] sm:$0xf]
        %v7758 = vld [vmem:[%s11 + $0x4] sm:$0xf]
        %v7759 = vld [vmem:[%s11 + $0x8] sm:$0xf]
        %v7760 = vld [vmem:[%s11 + $0xc] sm:$0xf]
        %v7761 = vld [vmem:[%s11 + $0x10] sm:$0xf]
        %v7762 = vld [vmem:[%s11 + $0x14] sm:$0xf]
        %v7763 = vld [vmem:[%s11 + $0x18] sm:$0xf]
        %v7764 = vld [vmem:[%s11 + $0x1c] sm:$0xf]
        %v7765 = vld [vmem:[%s11 + $0x20] sm:$0xf]
        %v7766 = vld [vmem:[%s11 + $0x24] sm:$0xf]
        %v7767 = vld [vmem:[%s11 + $0x28] sm:$0x3]
        %v7768 = vld [vmem:[%s12] sm:$0x1]
        %v7770 = vlaneseq
        %v7771 = vshrl.u32 %v7770, 7
        %v7772 = vsub.s32 0, %v7771
        %v7773 = vrot.slane %v7768, %v7772
        %v7786 = vunpack.c.l.b16 %v7757
        %v7787 = vunpack.c.l.b16 %v7758
        %v7788 = vunpack.c.l.b16 %v7759
        %v7789 = vunpack.c.l.b16 %v7760
        %v7790 = vunpack.c.l.b16 %v7761
        %v7791 = vunpack.c.l.b16 %v7762
        %v7792 = vunpack.c.l.b16 %v7763
        %v7793 = vunpack.c.l.b16 %v7764
        %v7794 = vunpack.c.l.b16 %v7765
        %v7795 = vunpack.c.l.b16 %v7766
        %v7796 = vunpack.c.l.b16 %v7767
        %v7797 = vpack.c.b16 %v7787, %v7786
        %v7798 = vpack.c.b16 %v7789, %v7788
        %v7799 = vpack.c.b16 %v7791, %v7790
        %v7800 = vpack.c.b16 %v7793, %v7792
        %v7801 = vpack.c.b16 %v7795, %v7794
        %v7802 = vpack.c.b16 %v7796, %v7796
        %v7809 = vsel %vm4747, %v7755, 0
        %v7812 = vsel %vm4747, %v7756, 0
        %v7815 = vsel %vm4808, %v7802, 0
        %7817 = vmatprep.subr.bf16.mxu0 0
        %7818 = vmatpush1.bf16.msra.mxu0 %v7797
        %7819 = vmatprep.subr.bf16.mxu0 0
        %7820 = vmatpush1.bf16.msra.mxu0 %v7798
        %7821 = vmatprep.subr.bf16.mxu0 0
        %7822 = vmatpush1.bf16.msra.mxu0 %v7799
        %7823 = vmatprep.subr.bf16.mxu0 0
        %7824 = vmatpush1.bf16.msra.mxu0 %v7800
        %7825 = vmatprep.subr.bf16.mxu0 0
        %7826 = vmatpush1.bf16.msra.mxu0 %v7801
        %7827 = vmatprep.subr.bf16.mxu0 0
        %7828 = vmatpush1.bf16.msra.mxu0 %v7815
        %7829 = vmatprep.subr.bf16.mxu0 0
        %7830 = vmatpush1.bf16.msra.mxu0 0
        %7831 = vmatprep.subr.bf16.mxu0 0
        %7832 = vmatpush1.bf16.msra.mxu0 0
        %7833 = vmatprep.subr.bf16.mxu0 0
        %7834 = vmatpush1.bf16.msra.mxu0 0
        %7835 = vmatprep.subr.bf16.mxu0 0
        %7836 = vmatpush1.bf16.msra.mxu0 0
        %7837 = vmatprep.subr.bf16.mxu0 0
        %7838 = vmatpush1.bf16.msra.mxu0 0
        %7839 = vmatprep.subr.bf16.mxu0 0
        %7840 = vmatpush1.bf16.msra.mxu0 0
        %7841 = vmatprep.subr.bf16.mxu0 0
        %7842 = vmatpush1.bf16.msra.mxu0 0
        %7843 = vmatprep.subr.bf16.mxu0 0
        %7844 = vmatpush1.bf16.msra.mxu0 0
        %7845 = vmatprep.subr.bf16.mxu0 0
        %7846 = vmatpush1.bf16.msra.mxu0 0
        %7847 = vmatprep.subr.bf16.mxu0 0
        %7848 = vmatpush1.bf16.msra.mxu0 0
        %7849 = vmatprep.mubr.bf16.mxu0 0
        %7850 = vmatmul.mubr.bf16.gmra.mrb[0].mxu0 %v7809
        %v7851 = vpop.f32.mrb[0].mxu0
        %v7852 = vadd.f32 %v7773, %v7851
        %v7853 = vpop.f32.mrb[0].mxu0
        %v7854 = vpop.f32.mrb[0].mxu0
        %v7855 = vadd.f32 %v7773, %v7854
        %v7856 = vpop.f32.mrb[0].mxu0
        %7857 = vmatprep.mubr.bf16.mxu0 0
        %7858 = vmatmul.mubr.bf16.gmra.mrb[0].mxu0 %v7812
        %v7859 = vpop.f32.mrb[0].mxu0
        %v7860 = vadd.f32 %v7773, %v7859
        %v7861 = vpop.f32.mrb[0].mxu0
        %v7862 = vpop.f32.mrb[0].mxu0
        %v7863 = vadd.f32 %v7773, %v7862
        %v7864 = vpop.f32.mrb[0].mxu0
        %7865 = vdwg.mxu0
        %vm7866 = vcmask 80896
        %7867 = vst.msk [vmem:[%s952] sm:$0xff] %vm7866, %v7852
        %7868 = vst.msk [vmem:[%s952 + $0x8] sm:$0xff] %vm7866, %v7855
        %7869 = vst.msk [vmem:[%s952 + $0x10] sm:$0xff] %vm7866, %v7860
        %7870 = vst.msk [vmem:[%s952 + $0x18] sm:$0xff] %vm7866, %v7863
        %s7871 = smul.u32 4, %s24
        %p7872 = scmp.lt.s32.totalorder %s7871, 7
        %s7873 = scalar_select %p7872, %s7871, 7
        %s7874 = smul.addr %s7873, 8
        %s7875 = scalar_lea.vmem %s13, %s7874
        // Predicated region
        $region111: #{_lambda_.1} parent=105 // pred_check
          %p7876 = pneg %p320
        $region112: #{_lambda_.1} parent=105 // pred_check_branch
          %7878 = sbr.rel (%p7876) target = $region114
        $region113: #{_lambda_.1} parent=105 // pred_region
          %s7879 = smul.u32 4, %s24
        $region114: #{_lambda_.1} parent=105 // pred_fallthru
          _
      $region106: #{_lambda_.1} parent=5 // pred_fallthru
        _
      %p7880 = scmp.le.s32.totalorder 2, %s19
      // Predicated region
      $region115: #{_lambda_.1} parent=5 // pred_check
        %p7881 = pneg %p7880
      $region116: #{_lambda_.1} parent=5 // pred_check_branch
        %7883 = sbr.rel (%p7881) target = $region118
      $region117: #{_lambda_.1} parent=5 // pred_region
        %s7884 = ssub.s32 %s19, 2
        // Predicated region
        $region119: #{_lambda_.1} parent=117 // pred_check
          %p7885 = pneg %p326
        $region120: #{_lambda_.1} parent=117 // pred_check_branch
          %7887 = sbr.rel (%p7885) target = $region122
        $region121: #{_lambda_.1} parent=117 // pred_region
          %s7888 = smul.u32 4, %s25
          %p7889 = scmp.lt.s32.totalorder %s7888, 7
          %s7890 = scalar_select %p7889, %s7888, 7
          %s7891 = smul.addr %s7890, 8
          %s7892 = scalar_lea.vmem %s13, %s7891
        $region122: #{_lambda_.1} parent=117 // pred_fallthru
          _
      $region118: #{_lambda_.1} parent=5 // pred_fallthru
        _
    $region6: #{_lambda_.1} parent=1 // loop_footer
      %s23 = sadd.s32 1, %s19
    $region7: #{_lambda_.1} parent=1 // loop_footer_branch
      %18 = sbr.rel target = $region3
    $region8: #{_lambda_.1} parent=1 // loop_exit
      _

</llo_original>
